<compile_context>
chip_gen: v6e
topology: v6e:2x2x1
jax: 0.10.0
libtpu: 0.0.40
codegen_flags: <defaults>
</compile_context>

<pallas_src>
import functools

import jax
import jax.numpy as jnp
import numpy as np
from jax.experimental import pallas as pl
from jax.experimental.pallas import tpu as pltpu


# ----------------------------------------------------------------------------
# Static relative-position index (pure function of window_size; computed once).
# ----------------------------------------------------------------------------
@functools.lru_cache(maxsize=None)
def _relative_position_index(window_size):
    wh, ww = window_size
    coords = np.stack(np.meshgrid(np.arange(wh), np.arange(ww), indexing="ij"))
    coords_flat = coords.reshape(2, -1)                              # (2, N)
    rel = coords_flat[:, :, None] - coords_flat[:, None, :]          # (2, N, N)
    rel = rel.transpose(1, 2, 0).astype(np.int32)                    # (N, N, 2) copy
    rel[:, :, 0] += wh - 1
    rel[:, :, 1] += ww - 1
    rel[:, :, 0] *= 2 * ww - 1
    return rel.sum(-1)                                               # (N, N) numpy


# ----------------------------------------------------------------------------
# One-time parameter preparation (head split, scale/bias folding, bias gather).
# ----------------------------------------------------------------------------
def prepare_attention_params(raw, *, window_size, num_heads, qk_scale=None):
    C = raw["w_q"].shape[0]
    hd = C // num_heads
    scale = qk_scale if qk_scale is not None else hd ** (-0.5)
    N = window_size[0] * window_size[1]

    idx = _relative_position_index(tuple(window_size))               # numpy, cached
    rel_bias = raw["rel_bias_table"][idx.reshape(-1)]                # (N*N, nh)
    rel_bias = rel_bias.reshape(N, N, num_heads).transpose(2, 0, 1)  # (nh, N, N)
    rel_bias = rel_bias.astype(jnp.float32)

    def split_cols(w):  # (C, nh*hd) -> (nh, C, hd); head h == columns [h*hd,(h+1)*hd)
        return jnp.transpose(w.reshape(C, num_heads, hd), (1, 0, 2))

    w_kv, b_kv = raw["w_kv"], raw["b_kv"]                            # (C,2C), (1,2C)

    # Output projection split by head rows so head-concat folds into an accumulate.
    w_p = raw["w_proj"].reshape(num_heads, hd, C)                    # (nh, hd, C)

    # Fold the v-bias through the output projection into b_proj:
    #   out = sum_h (p_h @ (x W_v_h + 1 b_v_h)) W_p_h + b_proj
    #       = sum_h (p_h @ x W_v_h) W_p_h + [b_proj + sum_h b_v_h W_p_h]
    # (rows of p_h sum to 1 after softmax).  The k-bias is dropped entirely since it
    # only shifts each score row by a constant and softmax is shift-invariant.
    b_v = b_kv[0, C:].reshape(num_heads, hd)                         # (nh, hd)
    b_p_eff = raw["b_proj"] + jnp.einsum("hd,hdc->c", b_v, w_p)[None, :]

    params = {
        "w_k": split_cols(w_kv[:, :C]),                              # (nh, C, hd)
        "w_v": split_cols(w_kv[:, C:]),                              # (nh, C, hd)
        # qk scale folded into the (resident) q projection weights/bias.
        "w_q": split_cols(raw["w_q"] * scale),                       # (nh, C, hd)
        "b_q": (raw["b_q"][0] * scale).reshape(num_heads, 1, hd),    # (nh, 1, hd)
        "w_p": w_p,                                                  # (nh, hd, C)
        "b_p": b_p_eff,                                              # (1, C)
        "rel_bias": rel_bias,                                        # (nh, N, N)
    }
    return params


# ----------------------------------------------------------------------------
# Pallas kernel: one grid step == BW windows.
# ----------------------------------------------------------------------------
def _cross_window_attn_kernel(
    x_ref,      # (BW, N, C)   features for k, v
    y_ref,      # (BW, N, C)   features for q
    wk_ref,     # (nh, C, hd)
    wv_ref,     # (nh, C, hd)
    wq_ref,     # (nh, C, hd)  (scale already folded in)
    bq_ref,     # (nh, 1, hd)  (scale already folded in)
    wp_ref,     # (nh, hd, C)
    bp_ref,     # (1, C)       (v-bias folded in)
    bias_ref,   # (nh, N, N)   relative position bias (already gathered)
    o_ref,      # (BW, N, C)
    *,
    num_heads: int,
    compute_dtype,
):
    BW, N, C = x_ref.shape
    hd = C // num_heads
    T = BW * N

    # (BW, N, C) -> (BW*N, C): fills the MXU M dimension for the projections.
    # (leading-dim merge only; last dim untouched -> no relayout)
    x2d = x_ref[...].reshape(T, C).astype(compute_dtype)
    y2d = y_ref[...].reshape(T, C).astype(compute_dtype)

    acc = jnp.zeros((T, C), jnp.float32)

    # Trace-time-unrolled head loop; no lane slicing / transpose / concat inside.
    for h in range(num_heads):
        k = jnp.dot(x2d, wk_ref[h].astype(compute_dtype),
                    preferred_element_type=jnp.float32)              # (T, hd), no bias
        v = jnp.dot(x2d, wv_ref[h].astype(compute_dtype),
                    preferred_element_type=jnp.float32)              # (T, hd), no bias
        q = jnp.dot(y2d, wq_ref[h].astype(compute_dtype),
                    preferred_element_type=jnp.float32) + bq_ref[h]  # (T, hd)

        qb = q.reshape(BW, N, hd)
        kb = k.reshape(BW, N, hd)
        vb = v.reshape(BW, N, hd)

        # scores: (BW, N, N), batched over windows.
        s = jnp.einsum("bnd,bmd->bnm",
                       qb.astype(compute_dtype), kb.astype(compute_dtype),
                       preferred_element_type=jnp.float32)
        s = s + bias_ref[h][None]

        # numerically-stable softmax (f32); denom reciprocal on the EUP.
        s = s - jnp.max(s, axis=-1, keepdims=True)
        p = jnp.exp(s)
        denom = jnp.sum(p, axis=-1, keepdims=True)
        p = p * pl.reciprocal(denom, approx=True)

        # attn @ v: (BW, N, hd)
        pv = jnp.einsum("bnm,bmd->bnd",
                        p.astype(compute_dtype), vb.astype(compute_dtype),
                        preferred_element_type=jnp.float32)

        # Head-concat folded into the output projection as an accumulation.
        acc = acc + jnp.dot(pv.reshape(T, hd).astype(compute_dtype),
                            wp_ref[h].astype(compute_dtype),
                            preferred_element_type=jnp.float32)

    res = acc + bp_ref[...]
    o_ref[...] = res.reshape(BW, N, C).astype(o_ref.dtype)


# ----------------------------------------------------------------------------
# Wrapper
# ----------------------------------------------------------------------------
def cross_window_attention(x, y, params, *, num_heads, windows_per_block=8,
                           use_bf16_mxu=False):
    """x, y: (B_, N, C) with B_ = num_windows * batch.  Returns (B_, N, C).

    `params` must come from `prepare_attention_params`.  mask is not supported.
    Set use_bf16_mxu=True on v6e/v7x to feed the MXU bf16 inputs (f32 accumulation).
    Increase `windows_per_block` for large B_ (BW*N >= 128 fills the MXU rows; keep
    the grid length >= 2 so both v7x TensorCores get work).
    """
    B_, N, C = x.shape
    nh = num_heads
    hd = C // nh
    out_dtype = x.dtype

    BW = min(windows_per_block, B_)
    grid_b = pl.cdiv(B_, BW)
    B_pad = grid_b * BW
    if B_pad != B_:
        pad = B_pad - B_
        x = jnp.pad(x, ((0, pad), (0, 0), (0, 0)))
        y = jnp.pad(y, ((0, pad), (0, 0), (0, 0)))

    w_k, w_v, w_q, w_p = params["w_k"], params["w_v"], params["w_q"], params["w_p"]
    if use_bf16_mxu:
        # bf16 MXU inputs (halves activation/weight DMA bytes); biases, bias table
        # and all softmax math stay float32.
        x = x.astype(jnp.bfloat16)
        y = y.astype(jnp.bfloat16)
        w_k = w_k.astype(jnp.bfloat16)
        w_v = w_v.astype(jnp.bfloat16)
        w_q = w_q.astype(jnp.bfloat16)
        w_p = w_p.astype(jnp.bfloat16)
        compute_dtype = jnp.bfloat16
    else:
        compute_dtype = jnp.float32

    kernel = functools.partial(
        _cross_window_attn_kernel, num_heads=nh, compute_dtype=compute_dtype
    )

    out = pl.pallas_call(
        kernel,
        out_shape=jax.ShapeDtypeStruct((B_pad, N, C), out_dtype),
        grid_spec=pltpu.PrefetchScalarGridSpec(
            num_scalar_prefetch=0,
            grid=(grid_b,),
            in_specs=[
                pl.BlockSpec((BW, N, C), lambda b: (b, 0, 0)),     # x
                pl.BlockSpec((BW, N, C), lambda b: (b, 0, 0)),     # y
                pl.BlockSpec((nh, C, hd), lambda b: (0, 0, 0)),    # w_k  (resident)
                pl.BlockSpec((nh, C, hd), lambda b: (0, 0, 0)),    # w_v
                pl.BlockSpec((nh, C, hd), lambda b: (0, 0, 0)),    # w_q (scale folded)
                pl.BlockSpec((nh, 1, hd), lambda b: (0, 0, 0)),    # b_q
                pl.BlockSpec((nh, hd, C), lambda b: (0, 0, 0)),    # w_proj per head
                pl.BlockSpec((1, C), lambda b: (0, 0)),            # b_proj (+ folded b_v)
                pl.BlockSpec((nh, N, N), lambda b: (0, 0, 0)),     # rel. pos. bias
            ],
            out_specs=pl.BlockSpec((BW, N, C), lambda b: (b, 0, 0)),
        ),
        compiler_params=pltpu.CompilerParams(
            dimension_semantics=("parallel",),
        ),
    )(
        x, y,
        w_k, w_v, w_q, params["b_q"], w_p, params["b_p"],
        params["rel_bias"],
    )

    return out[:B_] if B_pad != B_ else out


# ----------------------------------------------------------------------------
# Pure-JAX reference (mirrors the PyTorch forward exactly) for verification.
# ----------------------------------------------------------------------------
def reference_forward(x, y, raw, *, window_size, num_heads, qk_scale=None):
    B_, N, C = x.shape
    hd = C // num_heads
    scale = qk_scale if qk_scale is not None else hd ** (-0.5)

    kv = x @ raw["w_kv"] + raw["b_kv"][0]                            # (B_, N, 2C)
    kv = kv.reshape(B_, N, 2, num_heads, hd).transpose(2, 0, 3, 1, 4)
    k, v = kv[0], kv[1]                                              # (B_, nh, N, hd)
    q = (y @ raw["w_q"] + raw["b_q"][0]).reshape(B_, N, num_heads, hd)
    q = q.transpose(0, 2, 1, 3) * scale                              # (B_, nh, N, hd)

    attn = jnp.einsum("bhnd,bhmd->bhnm", q, k)                       # (B_, nh, N, N)

    idx = _relative_position_index(tuple(window_size))
    rpb = raw["rel_bias_table"][idx.reshape(-1)].reshape(N, N, num_heads)
    rpb = rpb.transpose(2, 0, 1)                                     # (nh, N, N)
    attn = attn + rpb[None]
    attn = jax.nn.softmax(attn, axis=-1)

    out = jnp.einsum("bhnm,bhmd->bhnd", attn, v)
    out = out.transpose(0, 2, 1, 3).reshape(B_, N, C)
    return out @ raw["w_proj"] + raw["b_proj"][0]


# ----------------------------------------------------------------------------
if __name__ == "__main__":
    # Module-consistent small shapes:
    #   dim = 32, window_size = (4, 4) -> N = 16, num_heads = 4,
    #   B_ = 16 windows -> 2 grid steps of 8 windows (M = 8*16 = 128 per matmul).
    dim = 32
    window_size = (4, 4)
    num_heads = 4
    N = window_size[0] * window_size[1]
    B_ = 16

    key = jax.random.PRNGKey(0)
    ks = jax.random.split(key, 9)

    # Deterministic synthetic parameters (shapes follow the module's __init__).
    raw = {
        "rel_bias_table": 0.02 * jax.random.normal(
            ks[0], ((2 * window_size[0] - 1) * (2 * window_size[1] - 1), num_heads),
            jnp.float32),
        "w_kv": 0.05 * jax.random.normal(ks[1], (dim, 2 * dim), jnp.float32),
        "b_kv": 0.01 * jax.random.normal(ks[2], (1, 2 * dim), jnp.float32),
        "w_q": 0.05 * jax.random.normal(ks[3], (dim, dim), jnp.float32),
        "b_q": 0.01 * jax.random.normal(ks[4], (1, dim), jnp.float32),
        "w_proj": 0.05 * jax.random.normal(ks[5], (dim, dim), jnp.float32),
        "b_proj": 0.01 * jax.random.normal(ks[6], (1, dim), jnp.float32),
    }

    x = jax.random.normal(ks[7], (B_, N, dim), jnp.float32)
    y = jax.random.normal(ks[8], (B_, N, dim), jnp.float32)

    # One-time parameter prep (head split, scale/bias folding, bias gather).
    params = prepare_attention_params(
        raw, window_size=window_size, num_heads=num_heads
    )
    ref = reference_forward(
        x, y, raw, window_size=window_size, num_heads=num_heads
    )

    # f32-MXU path (works on all generations, incl. v5e).
    out = cross_window_attention(
        x, y, params, num_heads=num_heads, windows_per_block=8
    )
    out = jax.block_until_ready(out)
    # Tolerance slightly loosened vs. exact f32 because of the approximate EUP
    # reciprocal in the softmax normalization (and the algebraic bias folding).
    np.testing.assert_allclose(np.asarray(out), np.asarray(ref),
                               rtol=5e-3, atol=5e-4)

    # bf16-MXU path (v6e/v7x): bf16 MXU inputs, f32 accumulation, f32 softmax.
    out_bf16 = cross_window_attention(
        x, y, params, num_heads=num_heads, windows_per_block=8, use_bf16_mxu=True
    )
    out_bf16 = jax.block_until_ready(out_bf16)
    np.testing.assert_allclose(np.asarray(out_bf16), np.asarray(ref),
                               rtol=5e-2, atol=1e-2)

    print("KERNEL_OK")
</pallas_src>

<mosaic_0001>
module attributes {stable_mosaic.version = 11 : i64} {
  func.func @_cross_window_attn_kernel(%arg0: i32, %arg1: memref<8x16x32xf32, #tpu.memory_space<vmem>>, %arg2: memref<8x16x32xf32, #tpu.memory_space<vmem>>, %arg3: memref<4x32x8xf32, #tpu.memory_space<vmem>>, %arg4: memref<4x32x8xf32, #tpu.memory_space<vmem>>, %arg5: memref<4x32x8xf32, #tpu.memory_space<vmem>>, %arg6: memref<4x1x8xf32, #tpu.memory_space<vmem>>, %arg7: memref<4x8x32xf32, #tpu.memory_space<vmem>>, %arg8: memref<1x32xf32, #tpu.memory_space<vmem>>, %arg9: memref<4x16x16xf32, #tpu.memory_space<vmem>>, %arg10: memref<8x16x32xf32, #tpu.memory_space<vmem>>) attributes {dimension_semantics = [#tpu.dimension_semantics<parallel>], iteration_bounds = array<i64: 2>, scalar_prefetch = 0 : i64, scratch_operands = 0 : i64, tpu.core_type = #tpu.core_type<tc>, window_params = [{transform_indices = @transform_0, window_bounds = array<i64: 8, 16, 32>}, {transform_indices = @transform_1, window_bounds = array<i64: 8, 16, 32>}, {pipeline_mode = #tpu.pipeline_mode<synchronous>, transform_indices = @transform_2, window_bounds = array<i64: 4, 32, 8>}, {pipeline_mode = #tpu.pipeline_mode<synchronous>, transform_indices = @transform_3, window_bounds = array<i64: 4, 32, 8>}, {pipeline_mode = #tpu.pipeline_mode<synchronous>, transform_indices = @transform_4, window_bounds = array<i64: 4, 32, 8>}, {pipeline_mode = #tpu.pipeline_mode<synchronous>, transform_indices = @transform_5, window_bounds = array<i64: 4, 1, 8>}, {pipeline_mode = #tpu.pipeline_mode<synchronous>, transform_indices = @transform_6, window_bounds = array<i64: 4, 8, 32>}, {pipeline_mode = #tpu.pipeline_mode<synchronous>, transform_indices = @transform_7, window_bounds = array<i64: 1, 32>}, {pipeline_mode = #tpu.pipeline_mode<synchronous>, transform_indices = @transform_8, window_bounds = array<i64: 4, 16, 16>}, {transform_indices = @transform_9, window_bounds = array<i64: 8, 16, 32>}]} {
    %c0 = arith.constant 0 : index
    %c0_0 = arith.constant 0 : index
    %c0_1 = arith.constant 0 : index
    %0 = vector.load %arg1[%c0, %c0_0, %c0_1] : memref<8x16x32xf32, #tpu.memory_space<vmem>>, vector<8x16x32xf32>
    %1 = vector.shape_cast %0 : vector<8x16x32xf32> to vector<128x32xf32>
    %c0_2 = arith.constant 0 : index
    %c0_3 = arith.constant 0 : index
    %c0_4 = arith.constant 0 : index
    %2 = vector.load %arg2[%c0_2, %c0_3, %c0_4] : memref<8x16x32xf32, #tpu.memory_space<vmem>>, vector<8x16x32xf32>
    %3 = vector.shape_cast %2 : vector<8x16x32xf32> to vector<128x32xf32>
    %cst = arith.constant 0.000000e+00 : f32
    %4 = vector.broadcast %cst : f32 to vector<128x32xf32>
    %c0_5 = arith.constant 0 : index
    %c0_6 = arith.constant 0 : index
    %c0_7 = arith.constant 0 : index
    %5 = vector.load %arg3[%c0_5, %c0_6, %c0_7] : memref<4x32x8xf32, #tpu.memory_space<vmem>>, vector<1x32x8xf32>
    %6 = vector.shape_cast %5 : vector<1x32x8xf32> to vector<32x8xf32>
    %cst_8 = arith.constant dense<0.000000e+00> : vector<128x8xf32>
    %7 = tpu.matmul %1, %6, %cst_8 {dimension_numbers = #tpu.dot_dimension_numbers<[1], [0], [0], [1], [0, 0, 1, 1], [], []>} : vector<128x32xf32>, vector<32x8xf32>, vector<128x8xf32> -> vector<128x8xf32>
    %c0_9 = arith.constant 0 : index
    %c0_10 = arith.constant 0 : index
    %c0_11 = arith.constant 0 : index
    %8 = vector.load %arg4[%c0_9, %c0_10, %c0_11] : memref<4x32x8xf32, #tpu.memory_space<vmem>>, vector<1x32x8xf32>
    %9 = vector.shape_cast %8 : vector<1x32x8xf32> to vector<32x8xf32>
    %cst_12 = arith.constant dense<0.000000e+00> : vector<128x8xf32>
    %10 = tpu.matmul %1, %9, %cst_12 {dimension_numbers = #tpu.dot_dimension_numbers<[1], [0], [0], [1], [0, 0, 1, 1], [], []>} : vector<128x32xf32>, vector<32x8xf32>, vector<128x8xf32> -> vector<128x8xf32>
    %c0_13 = arith.constant 0 : index
    %c0_14 = arith.constant 0 : index
    %c0_15 = arith.constant 0 : index
    %11 = vector.load %arg5[%c0_13, %c0_14, %c0_15] : memref<4x32x8xf32, #tpu.memory_space<vmem>>, vector<1x32x8xf32>
    %12 = vector.shape_cast %11 : vector<1x32x8xf32> to vector<32x8xf32>
    %cst_16 = arith.constant dense<0.000000e+00> : vector<128x8xf32>
    %13 = tpu.matmul %3, %12, %cst_16 {dimension_numbers = #tpu.dot_dimension_numbers<[1], [0], [0], [1], [0, 0, 1, 1], [], []>} : vector<128x32xf32>, vector<32x8xf32>, vector<128x8xf32> -> vector<128x8xf32>
    %c0_17 = arith.constant 0 : index
    %c0_18 = arith.constant 0 : index
    %c0_19 = arith.constant 0 : index
    %14 = vector.load %arg6[%c0_17, %c0_18, %c0_19] : memref<4x1x8xf32, #tpu.memory_space<vmem>>, vector<1x1x8xf32>
    %15 = vector.shape_cast %14 : vector<1x1x8xf32> to vector<1x8xf32>
    %16 = vector.broadcast %15 : vector<1x8xf32> to vector<128x8xf32>
    %17 = arith.addf %13, %16 : vector<128x8xf32>
    %18 = vector.shape_cast %17 : vector<128x8xf32> to vector<8x16x8xf32>
    %19 = vector.shape_cast %7 : vector<128x8xf32> to vector<8x16x8xf32>
    %20 = vector.shape_cast %10 : vector<128x8xf32> to vector<8x16x8xf32>
    "tpu.trace_start"() <{level = 10 : i32, message = "bnd,bmd->bnm"}> : () -> ()
    %cst_20 = arith.constant dense<0.000000e+00> : vector<8x16x16xf32>
    %21 = tpu.matmul %18, %19, %cst_20 {dimension_numbers = #tpu.dot_dimension_numbers<[2], [2], [1], [1], [0, 0, 0, 1, 1, 1], [0], [0]>} : vector<8x16x8xf32>, vector<8x16x8xf32>, vector<8x16x16xf32> -> vector<8x16x16xf32>
    "tpu.trace_stop"() : () -> ()
    %c0_21 = arith.constant 0 : index
    %c0_22 = arith.constant 0 : index
    %c0_23 = arith.constant 0 : index
    %22 = vector.load %arg9[%c0_21, %c0_22, %c0_23] : memref<4x16x16xf32, #tpu.memory_space<vmem>>, vector<1x16x16xf32>
    %23 = vector.shape_cast %22 : vector<1x16x16xf32> to vector<16x16xf32>
    %24 = vector.shape_cast %23 : vector<16x16xf32> to vector<1x16x16xf32>
    %25 = vector.broadcast %24 : vector<1x16x16xf32> to vector<8x16x16xf32>
    %26 = arith.addf %21, %25 : vector<8x16x16xf32>
    %cst_24 = arith.constant dense<0xFF800000> : vector<8x16xf32>
    %27 = vector.multi_reduction <maximumf>, %26, %cst_24 [2] : vector<8x16x16xf32> to vector<8x16xf32>
    %28 = vector.shape_cast %27 : vector<8x16xf32> to vector<8x16x1xf32>
    %29 = vector.broadcast %28 : vector<8x16x1xf32> to vector<8x16x16xf32>
    %30 = arith.subf %26, %29 : vector<8x16x16xf32>
    %31 = math.exp %30 : vector<8x16x16xf32>
    %cst_25 = arith.constant dense<0.000000e+00> : vector<8x16xf32>
    %32 = vector.multi_reduction <add>, %31, %cst_25 [2] : vector<8x16x16xf32> to vector<8x16xf32>
    %33 = vector.shape_cast %32 : vector<8x16xf32> to vector<8x16x1xf32>
    %34 = tpu.reciprocal %33 {approx = true} : vector<8x16x1xf32> -> vector<8x16x1xf32>
    %35 = vector.broadcast %34 : vector<8x16x1xf32> to vector<8x16x16xf32>
    %36 = arith.mulf %31, %35 : vector<8x16x16xf32>
    "tpu.trace_start"() <{level = 10 : i32, message = "bnm,bmd->bnd"}> : () -> ()
    %cst_26 = arith.constant dense<0.000000e+00> : vector<8x16x8xf32>
    %37 = tpu.matmul %36, %20, %cst_26 {dimension_numbers = #tpu.dot_dimension_numbers<[2], [1], [1], [2], [0, 0, 0, 1, 1, 2], [0], [0]>} : vector<8x16x16xf32>, vector<8x16x8xf32>, vector<8x16x8xf32> -> vector<8x16x8xf32>
    "tpu.trace_stop"() : () -> ()
    %38 = vector.shape_cast %37 : vector<8x16x8xf32> to vector<128x8xf32>
    %c0_27 = arith.constant 0 : index
    %c0_28 = arith.constant 0 : index
    %c0_29 = arith.constant 0 : index
    %39 = vector.load %arg7[%c0_27, %c0_28, %c0_29] : memref<4x8x32xf32, #tpu.memory_space<vmem>>, vector<1x8x32xf32>
    %40 = vector.shape_cast %39 : vector<1x8x32xf32> to vector<8x32xf32>
    %cst_30 = arith.constant dense<0.000000e+00> : vector<128x32xf32>
    %41 = tpu.matmul %38, %40, %cst_30 {dimension_numbers = #tpu.dot_dimension_numbers<[1], [0], [0], [1], [0, 0, 1, 1], [], []>} : vector<128x8xf32>, vector<8x32xf32>, vector<128x32xf32> -> vector<128x32xf32>
    %42 = arith.addf %4, %41 : vector<128x32xf32>
    %c1 = arith.constant 1 : index
    %c0_31 = arith.constant 0 : index
    %c0_32 = arith.constant 0 : index
    %43 = vector.load %arg3[%c1, %c0_31, %c0_32] : memref<4x32x8xf32, #tpu.memory_space<vmem>>, vector<1x32x8xf32>
    %44 = vector.shape_cast %43 : vector<1x32x8xf32> to vector<32x8xf32>
    %cst_33 = arith.constant dense<0.000000e+00> : vector<128x8xf32>
    %45 = tpu.matmul %1, %44, %cst_33 {dimension_numbers = #tpu.dot_dimension_numbers<[1], [0], [0], [1], [0, 0, 1, 1], [], []>} : vector<128x32xf32>, vector<32x8xf32>, vector<128x8xf32> -> vector<128x8xf32>
    %c1_34 = arith.constant 1 : index
    %c0_35 = arith.constant 0 : index
    %c0_36 = arith.constant 0 : index
    %46 = vector.load %arg4[%c1_34, %c0_35, %c0_36] : memref<4x32x8xf32, #tpu.memory_space<vmem>>, vector<1x32x8xf32>
    %47 = vector.shape_cast %46 : vector<1x32x8xf32> to vector<32x8xf32>
    %cst_37 = arith.constant dense<0.000000e+00> : vector<128x8xf32>
    %48 = tpu.matmul %1, %47, %cst_37 {dimension_numbers = #tpu.dot_dimension_numbers<[1], [0], [0], [1], [0, 0, 1, 1], [], []>} : vector<128x32xf32>, vector<32x8xf32>, vector<128x8xf32> -> vector<128x8xf32>
    %c1_38 = arith.constant 1 : index
    %c0_39 = arith.constant 0 : index
    %c0_40 = arith.constant 0 : index
    %49 = vector.load %arg5[%c1_38, %c0_39, %c0_40] : memref<4x32x8xf32, #tpu.memory_space<vmem>>, vector<1x32x8xf32>
    %50 = vector.shape_cast %49 : vector<1x32x8xf32> to vector<32x8xf32>
    %cst_41 = arith.constant dense<0.000000e+00> : vector<128x8xf32>
    %51 = tpu.matmul %3, %50, %cst_41 {dimension_numbers = #tpu.dot_dimension_numbers<[1], [0], [0], [1], [0, 0, 1, 1], [], []>} : vector<128x32xf32>, vector<32x8xf32>, vector<128x8xf32> -> vector<128x8xf32>
    %c1_42 = arith.constant 1 : index
    %c0_43 = arith.constant 0 : index
    %c0_44 = arith.constant 0 : index
    %52 = vector.load %arg6[%c1_42, %c0_43, %c0_44] : memref<4x1x8xf32, #tpu.memory_space<vmem>>, vector<1x1x8xf32>
    %53 = vector.shape_cast %52 : vector<1x1x8xf32> to vector<1x8xf32>
    %54 = vector.broadcast %53 : vector<1x8xf32> to vector<128x8xf32>
    %55 = arith.addf %51, %54 : vector<128x8xf32>
    %56 = vector.shape_cast %55 : vector<128x8xf32> to vector<8x16x8xf32>
    %57 = vector.shape_cast %45 : vector<128x8xf32> to vector<8x16x8xf32>
    %58 = vector.shape_cast %48 : vector<128x8xf32> to vector<8x16x8xf32>
    "tpu.trace_start"() <{level = 10 : i32, message = "bnd,bmd->bnm"}> : () -> ()
    %cst_45 = arith.constant dense<0.000000e+00> : vector<8x16x16xf32>
    %59 = tpu.matmul %56, %57, %cst_45 {dimension_numbers = #tpu.dot_dimension_numbers<[2], [2], [1], [1], [0, 0, 0, 1, 1, 1], [0], [0]>} : vector<8x16x8xf32>, vector<8x16x8xf32>, vector<8x16x16xf32> -> vector<8x16x16xf32>
    "tpu.trace_stop"() : () -> ()
    %c1_46 = arith.constant 1 : index
    %c0_47 = arith.constant 0 : index
    %c0_48 = arith.constant 0 : index
    %60 = vector.load %arg9[%c1_46, %c0_47, %c0_48] : memref<4x16x16xf32, #tpu.memory_space<vmem>>, vector<1x16x16xf32>
    %61 = vector.shape_cast %60 : vector<1x16x16xf32> to vector<16x16xf32>
    %62 = vector.shape_cast %61 : vector<16x16xf32> to vector<1x16x16xf32>
    %63 = vector.broadcast %62 : vector<1x16x16xf32> to vector<8x16x16xf32>
    %64 = arith.addf %59, %63 : vector<8x16x16xf32>
    %cst_49 = arith.constant dense<0xFF800000> : vector<8x16xf32>
    %65 = vector.multi_reduction <maximumf>, %64, %cst_49 [2] : vector<8x16x16xf32> to vector<8x16xf32>
    %66 = vector.shape_cast %65 : vector<8x16xf32> to vector<8x16x1xf32>
    %67 = vector.broadcast %66 : vector<8x16x1xf32> to vector<8x16x16xf32>
    %68 = arith.subf %64, %67 : vector<8x16x16xf32>
    %69 = math.exp %68 : vector<8x16x16xf32>
    %cst_50 = arith.constant dense<0.000000e+00> : vector<8x16xf32>
    %70 = vector.multi_reduction <add>, %69, %cst_50 [2] : vector<8x16x16xf32> to vector<8x16xf32>
    %71 = vector.shape_cast %70 : vector<8x16xf32> to vector<8x16x1xf32>
    %72 = tpu.reciprocal %71 {approx = true} : vector<8x16x1xf32> -> vector<8x16x1xf32>
    %73 = vector.broadcast %72 : vector<8x16x1xf32> to vector<8x16x16xf32>
    %74 = arith.mulf %69, %73 : vector<8x16x16xf32>
    "tpu.trace_start"() <{level = 10 : i32, message = "bnm,bmd->bnd"}> : () -> ()
    %cst_51 = arith.constant dense<0.000000e+00> : vector<8x16x8xf32>
    %75 = tpu.matmul %74, %58, %cst_51 {dimension_numbers = #tpu.dot_dimension_numbers<[2], [1], [1], [2], [0, 0, 0, 1, 1, 2], [0], [0]>} : vector<8x16x16xf32>, vector<8x16x8xf32>, vector<8x16x8xf32> -> vector<8x16x8xf32>
    "tpu.trace_stop"() : () -> ()
    %76 = vector.shape_cast %75 : vector<8x16x8xf32> to vector<128x8xf32>
    %c1_52 = arith.constant 1 : index
    %c0_53 = arith.constant 0 : index
    %c0_54 = arith.constant 0 : index
    %77 = vector.load %arg7[%c1_52, %c0_53, %c0_54] : memref<4x8x32xf32, #tpu.memory_space<vmem>>, vector<1x8x32xf32>
    %78 = vector.shape_cast %77 : vector<1x8x32xf32> to vector<8x32xf32>
    %cst_55 = arith.constant dense<0.000000e+00> : vector<128x32xf32>
    %79 = tpu.matmul %76, %78, %cst_55 {dimension_numbers = #tpu.dot_dimension_numbers<[1], [0], [0], [1], [0, 0, 1, 1], [], []>} : vector<128x8xf32>, vector<8x32xf32>, vector<128x32xf32> -> vector<128x32xf32>
    %80 = arith.addf %42, %79 : vector<128x32xf32>
    %c2 = arith.constant 2 : index
    %c0_56 = arith.constant 0 : index
    %c0_57 = arith.constant 0 : index
    %81 = vector.load %arg3[%c2, %c0_56, %c0_57] : memref<4x32x8xf32, #tpu.memory_space<vmem>>, vector<1x32x8xf32>
    %82 = vector.shape_cast %81 : vector<1x32x8xf32> to vector<32x8xf32>
    %cst_58 = arith.constant dense<0.000000e+00> : vector<128x8xf32>
    %83 = tpu.matmul %1, %82, %cst_58 {dimension_numbers = #tpu.dot_dimension_numbers<[1], [0], [0], [1], [0, 0, 1, 1], [], []>} : vector<128x32xf32>, vector<32x8xf32>, vector<128x8xf32> -> vector<128x8xf32>
    %c2_59 = arith.constant 2 : index
    %c0_60 = arith.constant 0 : index
    %c0_61 = arith.constant 0 : index
    %84 = vector.load %arg4[%c2_59, %c0_60, %c0_61] : memref<4x32x8xf32, #tpu.memory_space<vmem>>, vector<1x32x8xf32>
    %85 = vector.shape_cast %84 : vector<1x32x8xf32> to vector<32x8xf32>
    %cst_62 = arith.constant dense<0.000000e+00> : vector<128x8xf32>
    %86 = tpu.matmul %1, %85, %cst_62 {dimension_numbers = #tpu.dot_dimension_numbers<[1], [0], [0], [1], [0, 0, 1, 1], [], []>} : vector<128x32xf32>, vector<32x8xf32>, vector<128x8xf32> -> vector<128x8xf32>
    %c2_63 = arith.constant 2 : index
    %c0_64 = arith.constant 0 : index
    %c0_65 = arith.constant 0 : index
    %87 = vector.load %arg5[%c2_63, %c0_64, %c0_65] : memref<4x32x8xf32, #tpu.memory_space<vmem>>, vector<1x32x8xf32>
    %88 = vector.shape_cast %87 : vector<1x32x8xf32> to vector<32x8xf32>
    %cst_66 = arith.constant dense<0.000000e+00> : vector<128x8xf32>
    %89 = tpu.matmul %3, %88, %cst_66 {dimension_numbers = #tpu.dot_dimension_numbers<[1], [0], [0], [1], [0, 0, 1, 1], [], []>} : vector<128x32xf32>, vector<32x8xf32>, vector<128x8xf32> -> vector<128x8xf32>
    %c2_67 = arith.constant 2 : index
    %c0_68 = arith.constant 0 : index
    %c0_69 = arith.constant 0 : index
    %90 = vector.load %arg6[%c2_67, %c0_68, %c0_69] : memref<4x1x8xf32, #tpu.memory_space<vmem>>, vector<1x1x8xf32>
    %91 = vector.shape_cast %90 : vector<1x1x8xf32> to vector<1x8xf32>
    %92 = vector.broadcast %91 : vector<1x8xf32> to vector<128x8xf32>
    %93 = arith.addf %89, %92 : vector<128x8xf32>
    %94 = vector.shape_cast %93 : vector<128x8xf32> to vector<8x16x8xf32>
    %95 = vector.shape_cast %83 : vector<128x8xf32> to vector<8x16x8xf32>
    %96 = vector.shape_cast %86 : vector<128x8xf32> to vector<8x16x8xf32>
    "tpu.trace_start"() <{level = 10 : i32, message = "bnd,bmd->bnm"}> : () -> ()
    %cst_70 = arith.constant dense<0.000000e+00> : vector<8x16x16xf32>
    %97 = tpu.matmul %94, %95, %cst_70 {dimension_numbers = #tpu.dot_dimension_numbers<[2], [2], [1], [1], [0, 0, 0, 1, 1, 1], [0], [0]>} : vector<8x16x8xf32>, vector<8x16x8xf32>, vector<8x16x16xf32> -> vector<8x16x16xf32>
    "tpu.trace_stop"() : () -> ()
    %c2_71 = arith.constant 2 : index
    %c0_72 = arith.constant 0 : index
    %c0_73 = arith.constant 0 : index
    %98 = vector.load %arg9[%c2_71, %c0_72, %c0_73] : memref<4x16x16xf32, #tpu.memory_space<vmem>>, vector<1x16x16xf32>
    %99 = vector.shape_cast %98 : vector<1x16x16xf32> to vector<16x16xf32>
    %100 = vector.shape_cast %99 : vector<16x16xf32> to vector<1x16x16xf32>
    %101 = vector.broadcast %100 : vector<1x16x16xf32> to vector<8x16x16xf32>
    %102 = arith.addf %97, %101 : vector<8x16x16xf32>
    %cst_74 = arith.constant dense<0xFF800000> : vector<8x16xf32>
    %103 = vector.multi_reduction <maximumf>, %102, %cst_74 [2] : vector<8x16x16xf32> to vector<8x16xf32>
    %104 = vector.shape_cast %103 : vector<8x16xf32> to vector<8x16x1xf32>
    %105 = vector.broadcast %104 : vector<8x16x1xf32> to vector<8x16x16xf32>
    %106 = arith.subf %102, %105 : vector<8x16x16xf32>
    %107 = math.exp %106 : vector<8x16x16xf32>
    %cst_75 = arith.constant dense<0.000000e+00> : vector<8x16xf32>
    %108 = vector.multi_reduction <add>, %107, %cst_75 [2] : vector<8x16x16xf32> to vector<8x16xf32>
    %109 = vector.shape_cast %108 : vector<8x16xf32> to vector<8x16x1xf32>
    %110 = tpu.reciprocal %109 {approx = true} : vector<8x16x1xf32> -> vector<8x16x1xf32>
    %111 = vector.broadcast %110 : vector<8x16x1xf32> to vector<8x16x16xf32>
    %112 = arith.mulf %107, %111 : vector<8x16x16xf32>
    "tpu.trace_start"() <{level = 10 : i32, message = "bnm,bmd->bnd"}> : () -> ()
    %cst_76 = arith.constant dense<0.000000e+00> : vector<8x16x8xf32>
    %113 = tpu.matmul %112, %96, %cst_76 {dimension_numbers = #tpu.dot_dimension_numbers<[2], [1], [1], [2], [0, 0, 0, 1, 1, 2], [0], [0]>} : vector<8x16x16xf32>, vector<8x16x8xf32>, vector<8x16x8xf32> -> vector<8x16x8xf32>
    "tpu.trace_stop"() : () -> ()
    %114 = vector.shape_cast %113 : vector<8x16x8xf32> to vector<128x8xf32>
    %c2_77 = arith.constant 2 : index
    %c0_78 = arith.constant 0 : index
    %c0_79 = arith.constant 0 : index
    %115 = vector.load %arg7[%c2_77, %c0_78, %c0_79] : memref<4x8x32xf32, #tpu.memory_space<vmem>>, vector<1x8x32xf32>
    %116 = vector.shape_cast %115 : vector<1x8x32xf32> to vector<8x32xf32>
    %cst_80 = arith.constant dense<0.000000e+00> : vector<128x32xf32>
    %117 = tpu.matmul %114, %116, %cst_80 {dimension_numbers = #tpu.dot_dimension_numbers<[1], [0], [0], [1], [0, 0, 1, 1], [], []>} : vector<128x8xf32>, vector<8x32xf32>, vector<128x32xf32> -> vector<128x32xf32>
    %118 = arith.addf %80, %117 : vector<128x32xf32>
    %c3 = arith.constant 3 : index
    %c0_81 = arith.constant 0 : index
    %c0_82 = arith.constant 0 : index
    %119 = vector.load %arg3[%c3, %c0_81, %c0_82] : memref<4x32x8xf32, #tpu.memory_space<vmem>>, vector<1x32x8xf32>
    %120 = vector.shape_cast %119 : vector<1x32x8xf32> to vector<32x8xf32>
    %cst_83 = arith.constant dense<0.000000e+00> : vector<128x8xf32>
    %121 = tpu.matmul %1, %120, %cst_83 {dimension_numbers = #tpu.dot_dimension_numbers<[1], [0], [0], [1], [0, 0, 1, 1], [], []>} : vector<128x32xf32>, vector<32x8xf32>, vector<128x8xf32> -> vector<128x8xf32>
    %c3_84 = arith.constant 3 : index
    %c0_85 = arith.constant 0 : index
    %c0_86 = arith.constant 0 : index
    %122 = vector.load %arg4[%c3_84, %c0_85, %c0_86] : memref<4x32x8xf32, #tpu.memory_space<vmem>>, vector<1x32x8xf32>
    %123 = vector.shape_cast %122 : vector<1x32x8xf32> to vector<32x8xf32>
    %cst_87 = arith.constant dense<0.000000e+00> : vector<128x8xf32>
    %124 = tpu.matmul %1, %123, %cst_87 {dimension_numbers = #tpu.dot_dimension_numbers<[1], [0], [0], [1], [0, 0, 1, 1], [], []>} : vector<128x32xf32>, vector<32x8xf32>, vector<128x8xf32> -> vector<128x8xf32>
    %c3_88 = arith.constant 3 : index
    %c0_89 = arith.constant 0 : index
    %c0_90 = arith.constant 0 : index
    %125 = vector.load %arg5[%c3_88, %c0_89, %c0_90] : memref<4x32x8xf32, #tpu.memory_space<vmem>>, vector<1x32x8xf32>
    %126 = vector.shape_cast %125 : vector<1x32x8xf32> to vector<32x8xf32>
    %cst_91 = arith.constant dense<0.000000e+00> : vector<128x8xf32>
    %127 = tpu.matmul %3, %126, %cst_91 {dimension_numbers = #tpu.dot_dimension_numbers<[1], [0], [0], [1], [0, 0, 1, 1], [], []>} : vector<128x32xf32>, vector<32x8xf32>, vector<128x8xf32> -> vector<128x8xf32>
    %c3_92 = arith.constant 3 : index
    %c0_93 = arith.constant 0 : index
    %c0_94 = arith.constant 0 : index
    %128 = vector.load %arg6[%c3_92, %c0_93, %c0_94] : memref<4x1x8xf32, #tpu.memory_space<vmem>>, vector<1x1x8xf32>
    %129 = vector.shape_cast %128 : vector<1x1x8xf32> to vector<1x8xf32>
    %130 = vector.broadcast %129 : vector<1x8xf32> to vector<128x8xf32>
    %131 = arith.addf %127, %130 : vector<128x8xf32>
    %132 = vector.shape_cast %131 : vector<128x8xf32> to vector<8x16x8xf32>
    %133 = vector.shape_cast %121 : vector<128x8xf32> to vector<8x16x8xf32>
    %134 = vector.shape_cast %124 : vector<128x8xf32> to vector<8x16x8xf32>
    "tpu.trace_start"() <{level = 10 : i32, message = "bnd,bmd->bnm"}> : () -> ()
    %cst_95 = arith.constant dense<0.000000e+00> : vector<8x16x16xf32>
    %135 = tpu.matmul %132, %133, %cst_95 {dimension_numbers = #tpu.dot_dimension_numbers<[2], [2], [1], [1], [0, 0, 0, 1, 1, 1], [0], [0]>} : vector<8x16x8xf32>, vector<8x16x8xf32>, vector<8x16x16xf32> -> vector<8x16x16xf32>
    "tpu.trace_stop"() : () -> ()
    %c3_96 = arith.constant 3 : index
    %c0_97 = arith.constant 0 : index
    %c0_98 = arith.constant 0 : index
    %136 = vector.load %arg9[%c3_96, %c0_97, %c0_98] : memref<4x16x16xf32, #tpu.memory_space<vmem>>, vector<1x16x16xf32>
    %137 = vector.shape_cast %136 : vector<1x16x16xf32> to vector<16x16xf32>
    %138 = vector.shape_cast %137 : vector<16x16xf32> to vector<1x16x16xf32>
    %139 = vector.broadcast %138 : vector<1x16x16xf32> to vector<8x16x16xf32>
    %140 = arith.addf %135, %139 : vector<8x16x16xf32>
    %cst_99 = arith.constant dense<0xFF800000> : vector<8x16xf32>
    %141 = vector.multi_reduction <maximumf>, %140, %cst_99 [2] : vector<8x16x16xf32> to vector<8x16xf32>
    %142 = vector.shape_cast %141 : vector<8x16xf32> to vector<8x16x1xf32>
    %143 = vector.broadcast %142 : vector<8x16x1xf32> to vector<8x16x16xf32>
    %144 = arith.subf %140, %143 : vector<8x16x16xf32>
    %145 = math.exp %144 : vector<8x16x16xf32>
    %cst_100 = arith.constant dense<0.000000e+00> : vector<8x16xf32>
    %146 = vector.multi_reduction <add>, %145, %cst_100 [2] : vector<8x16x16xf32> to vector<8x16xf32>
    %147 = vector.shape_cast %146 : vector<8x16xf32> to vector<8x16x1xf32>
    %148 = tpu.reciprocal %147 {approx = true} : vector<8x16x1xf32> -> vector<8x16x1xf32>
    %149 = vector.broadcast %148 : vector<8x16x1xf32> to vector<8x16x16xf32>
    %150 = arith.mulf %145, %149 : vector<8x16x16xf32>
    "tpu.trace_start"() <{level = 10 : i32, message = "bnm,bmd->bnd"}> : () -> ()
    %cst_101 = arith.constant dense<0.000000e+00> : vector<8x16x8xf32>
    %151 = tpu.matmul %150, %134, %cst_101 {dimension_numbers = #tpu.dot_dimension_numbers<[2], [1], [1], [2], [0, 0, 0, 1, 1, 2], [0], [0]>} : vector<8x16x16xf32>, vector<8x16x8xf32>, vector<8x16x8xf32> -> vector<8x16x8xf32>
    "tpu.trace_stop"() : () -> ()
    %152 = vector.shape_cast %151 : vector<8x16x8xf32> to vector<128x8xf32>
    %c3_102 = arith.constant 3 : index
    %c0_103 = arith.constant 0 : index
    %c0_104 = arith.constant 0 : index
    %153 = vector.load %arg7[%c3_102, %c0_103, %c0_104] : memref<4x8x32xf32, #tpu.memory_space<vmem>>, vector<1x8x32xf32>
    %154 = vector.shape_cast %153 : vector<1x8x32xf32> to vector<8x32xf32>
    %cst_105 = arith.constant dense<0.000000e+00> : vector<128x32xf32>
    %155 = tpu.matmul %152, %154, %cst_105 {dimension_numbers = #tpu.dot_dimension_numbers<[1], [0], [0], [1], [0, 0, 1, 1], [], []>} : vector<128x8xf32>, vector<8x32xf32>, vector<128x32xf32> -> vector<128x32xf32>
    %156 = arith.addf %118, %155 : vector<128x32xf32>
    %c0_106 = arith.constant 0 : index
    %c0_107 = arith.constant 0 : index
    %157 = vector.load %arg8[%c0_106, %c0_107] : memref<1x32xf32, #tpu.memory_space<vmem>>, vector<1x32xf32>
    %158 = vector.broadcast %157 : vector<1x32xf32> to vector<128x32xf32>
    %159 = arith.addf %156, %158 : vector<128x32xf32>
    %160 = vector.shape_cast %159 : vector<128x32xf32> to vector<8x16x32xf32>
    %c0_108 = arith.constant 0 : index
    %c0_109 = arith.constant 0 : index
    %c0_110 = arith.constant 0 : index
    %161 = vector.load %arg10[%c0_108, %c0_109, %c0_110] : memref<8x16x32xf32, #tpu.memory_space<vmem>>, vector<8x16x32xf32>
    tpu.vector_store %arg10[%c0_108, %c0_109, %c0_110], %160 {strides = array<i32>} : memref<8x16x32xf32, #tpu.memory_space<vmem>>, vector<8x16x32xf32>,
    return
  }
  func.func @transform_0(%arg0: i32) -> (i32, i32, i32) {
    %c0_i32 = arith.constant 0 : i32
    %c0_i32_0 = arith.constant 0 : i32
    %c0_i32_1 = arith.constant 0 : i32
    return %arg0, %c0_i32, %c0_i32_0 : i32, i32, i32
  }
  func.func @transform_1(%arg0: i32) -> (i32, i32, i32) {
    %c0_i32 = arith.constant 0 : i32
    %c0_i32_0 = arith.constant 0 : i32
    %c0_i32_1 = arith.constant 0 : i32
    return %arg0, %c0_i32, %c0_i32_0 : i32, i32, i32
  }
  func.func @transform_2(%arg0: i32) -> (i32, i32, i32) {
    %c0_i32 = arith.constant 0 : i32
    %c0_i32_0 = arith.constant 0 : i32
    %c0_i32_1 = arith.constant 0 : i32
    %c0_i32_2 = arith.constant 0 : i32
    return %c0_i32, %c0_i32_0, %c0_i32_1 : i32, i32, i32
  }
  func.func @transform_3(%arg0: i32) -> (i32, i32, i32) {
    %c0_i32 = arith.constant 0 : i32
    %c0_i32_0 = arith.constant 0 : i32
    %c0_i32_1 = arith.constant 0 : i32
    %c0_i32_2 = arith.constant 0 : i32
    return %c0_i32, %c0_i32_0, %c0_i32_1 : i32, i32, i32
  }
  func.func @transform_4(%arg0: i32) -> (i32, i32, i32) {
    %c0_i32 = arith.constant 0 : i32
    %c0_i32_0 = arith.constant 0 : i32
    %c0_i32_1 = arith.constant 0 : i32
    %c0_i32_2 = arith.constant 0 : i32
    return %c0_i32, %c0_i32_0, %c0_i32_1 : i32, i32, i32
  }
  func.func @transform_5(%arg0: i32) -> (i32, i32, i32) {
    %c0_i32 = arith.constant 0 : i32
    %c0_i32_0 = arith.constant 0 : i32
    %c0_i32_1 = arith.constant 0 : i32
    %c0_i32_2 = arith.constant 0 : i32
    return %c0_i32, %c0_i32_0, %c0_i32_1 : i32, i32, i32
  }
  func.func @transform_6(%arg0: i32) -> (i32, i32, i32) {
    %c0_i32 = arith.constant 0 : i32
    %c0_i32_0 = arith.constant 0 : i32
    %c0_i32_1 = arith.constant 0 : i32
    %c0_i32_2 = arith.constant 0 : i32
    return %c0_i32, %c0_i32_0, %c0_i32_1 : i32, i32, i32
  }
  func.func @transform_7(%arg0: i32) -> (i32, i32) {
    %c0_i32 = arith.constant 0 : i32
    %c0_i32_0 = arith.constant 0 : i32
    %c0_i32_1 = arith.constant 0 : i32
    return %c0_i32, %c0_i32_0 : i32, i32
  }
  func.func @transform_8(%arg0: i32) -> (i32, i32, i32) {
    %c0_i32 = arith.constant 0 : i32
    %c0_i32_0 = arith.constant 0 : i32
    %c0_i32_1 = arith.constant 0 : i32
    %c0_i32_2 = arith.constant 0 : i32
    return %c0_i32, %c0_i32_0, %c0_i32_1 : i32, i32, i32
  }
  func.func @transform_9(%arg0: i32) -> (i32, i32, i32) {
    %c0_i32 = arith.constant 0 : i32
    %c0_i32_0 = arith.constant 0 : i32
    %c0_i32_1 = arith.constant 0 : i32
    return %arg0, %c0_i32, %c0_i32_0 : i32, i32, i32
  }
}

</mosaic_0001>

<llo_original>
// kernel: tpu_custom_call.1
$region0: #{tpu_custom_call.1}
  #allocation0 [shape = 'u32[]', space=smem, size = 0x4, offset = 0x4, fixed_abs, tag = 'smem constant byte address 0x4 - core index']
  #allocation1 [shape = 'u32[144,128]{1,0:T(1,128)}', space=vmem, size = 0x12000, scoped, tag = 'internal scratch']
  %s0 = inlined_call_operand.vmem [shape: f32[16,16,32], index: 0, kind: input, shape index: {}]
  %s1 = inlined_call_operand.hbm [shape: f32[16,16,32], index: 1, kind: input, shape index: {}]
  %s2 = inlined_call_operand.vmem [shape: f32[4,32,8], index: 2, kind: input, shape index: {}]
  %s3 = inlined_call_operand.vmem [shape: f32[4,32,8], index: 3, kind: input, shape index: {}]
  %s4 = inlined_call_operand.vmem [shape: f32[4,32,8], index: 4, kind: input, shape index: {}]
  %s5 = inlined_call_operand.vmem [shape: f32[4,1,8], index: 5, kind: input, shape index: {}]
  %s6 = inlined_call_operand.vmem [shape: f32[4,8,32], index: 6, kind: input, shape index: {}]
  %s7 = inlined_call_operand.vmem [shape: f32[1,32], index: 7, kind: input, shape index: {}]
  %s8 = inlined_call_operand.vmem [shape: f32[4,16,16], index: 8, kind: input, shape index: {}]
  %s9 = inlined_call_operand.hbm [shape: f32[16,16,32], index: 9, kind: output, shape index: {}]
  %s10 = sld [smem:[#allocation0]]
  $region73: #{tpu_custom_call.1} parent=0
    _
  %s12 = ssub.s32 1, %s10
  %s13 = scalar_select 0, %s12, %s10
  $region1: #{tpu_custom_call.1} parent=0
    #allocation2 [shape = 'u8[131072]{0}', space=vmem, size = 0x20000, scoped, tag = 'input window, operand 1']
    #allocation3 [shape = 's32[2]{0}', space=sflag, size = 0x8, scoped, tag = 'scoped memory for tpu_custom_call.1']
    #allocation4 [shape = 's32[2]{0}', space=sflag, size = 0x8, scoped, tag = 'scoped memory for tpu_custom_call.1']
    #allocation5 [shape = 'u8[131072]{0}', space=vmem, size = 0x20000, scoped, tag = 'output window, operand 0']
    %14 = vsyncpa [#allocation3], 0
    %s15 = scalar_lea.sflag [#allocation3], 1
    %16 = vsyncpa %s15, 0
    %17 = vsyncpa [#allocation4], 0
    %s18 = scalar_lea.sflag [#allocation4], 1
    %19 = vsyncpa %s18, 0
    loop: start=0, step=1, limit=4
    $region2: #{tpu_custom_call.1} parent=1 // loop_pre_header
      _
    $region3: #{tpu_custom_call.1} parent=1 // loop_header
      %s21 = sphi 0, %s25
      %p22 = scmp.ge.s32.totalorder %s21, 4
      %s31 = sphi 0, %s33
      %s34 = sphi 0, %s31
      %s35 = sphi 0, %s34
      %s51 = sphi 0, %s35
      %s57 = sphi 0, %s59
      %s60 = sphi 0, %s57
      %s61 = sphi 0, %s60
      %s77 = sphi 0, %s61
      %s81 = sphi 0, %s81
      %s83 = sphi 0, %s81
      %s84 = sphi 0, %s83
      %s98 = sphi 0, %s84
      %s102 = sphi 0, %s102
      %s104 = sphi 0, %s102
      %s105 = sphi 0, %s104
      %s119 = sphi 0, %s105
      %s123 = sphi 0, %s123
      %s125 = sphi 0, %s123
      %s126 = sphi 0, %s125
      %s140 = sphi 0, %s126
      %s144 = sphi 0, %s144
      %s146 = sphi 0, %s144
      %s147 = sphi 0, %s146
      %s161 = sphi 0, %s147
      %s165 = sphi 0, %s165
      %s167 = sphi 0, %s165
      %s168 = sphi 0, %s167
      %s182 = sphi 0, %s168
      %s186 = sphi 0, %s186
      %s188 = sphi 0, %s186
      %s189 = sphi 0, %s188
      %s203 = sphi 0, %s189
      %s207 = sphi 0, %s207
      %s209 = sphi 0, %s207
      %s210 = sphi 0, %s209
      %s224 = sphi 0, %s210
      %s230 = sphi 0, %s232
      %s233 = sphi 0, %s230
      %s234 = sphi 0, %s233
      %s250 = sphi 0, %s234
    $region4: #{tpu_custom_call.1} parent=1 // loop_header_branch
      %24 = sbr.rel (%p22) target = $region8
    $region5: #{tpu_custom_call.1} parent=1 // loop_body
      %s26 = ssub.s32 %s21, 1
      %s27 = ssub.s32 %s21, 2
      %s28 = sadd.s32 %s21, 1
      %s29 = ssub.s32 %s21, %s28
      %p30 = scmp.eq.s32.totalorder %s29, 0
      %s32 = sadd.s32 %s31, 1
      %s33 = scalar_select %p30, %s31, %s32
      %p36 = pneg %p30
      %p37 = scmp.eq.s32.totalorder %s21, 1
      %p38 = por %p36, %p37
      %p39 = scmp.ne.s32.totalorder %s31, %s34
      %p40 = scmp.eq.s32.totalorder %s21, 0
      %p41 = por %p39, %p40
      %p42 = scmp.ne.s32.totalorder %s31, %s34
      %p43 = scmp.eq.s32.totalorder %s26, 1
      %p44 = por %p42, %p43
      %p45 = scmp.ne.s32.totalorder %s34, %s35
      %p46 = scmp.eq.s32.totalorder %s26, 0
      %p47 = por %p45, %p46
      %p48 = scmp.ne.s32.totalorder %s34, %s35
      %p49 = scmp.eq.s32.totalorder %s27, 1
      %p50 = por %p48, %p49
      %p52 = scmp.ne.s32.totalorder %s35, %s51
      %p53 = scmp.eq.s32.totalorder %s27, 0
      %p54 = por %p52, %p53
      %s55 = ssub.s32 %s21, %s28
      %p56 = scmp.eq.s32.totalorder %s55, 0
      %s58 = sadd.s32 %s57, 1
      %s59 = scalar_select %p56, %s57, %s58
      %p62 = pneg %p56
      %p63 = scmp.eq.s32.totalorder %s21, 1
      %p64 = por %p62, %p63
      %p65 = scmp.ne.s32.totalorder %s57, %s60
      %p66 = scmp.eq.s32.totalorder %s21, 0
      %p67 = por %p65, %p66
      %p68 = scmp.ne.s32.totalorder %s57, %s60
      %p69 = scmp.eq.s32.totalorder %s26, 1
      %p70 = por %p68, %p69
      %p71 = scmp.ne.s32.totalorder %s60, %s61
      %p72 = scmp.eq.s32.totalorder %s26, 0
      %p73 = por %p71, %p72
      %p74 = scmp.ne.s32.totalorder %s60, %s61
      %p75 = scmp.eq.s32.totalorder %s27, 1
      %p76 = por %p74, %p75
      %p78 = scmp.ne.s32.totalorder %s61, %s77
      %p79 = scmp.eq.s32.totalorder %s27, 0
      %p80 = por %p78, %p79
      %s82 = sadd.s32 %s81, 1
      %p85 = scmp.eq.s32.totalorder %s21, 1
      %p86 = scmp.ne.s32.totalorder %s81, %s83
      %p87 = scmp.eq.s32.totalorder %s21, 0
      %p88 = por %p86, %p87
      %p89 = scmp.ne.s32.totalorder %s81, %s83
      %p90 = scmp.eq.s32.totalorder %s26, 1
      %p91 = por %p89, %p90
      %p92 = scmp.ne.s32.totalorder %s83, %s84
      %p93 = scmp.eq.s32.totalorder %s26, 0
      %p94 = por %p92, %p93
      %p95 = scmp.ne.s32.totalorder %s83, %s84
      %p96 = scmp.eq.s32.totalorder %s27, 1
      %p97 = por %p95, %p96
      %p99 = scmp.ne.s32.totalorder %s84, %s98
      %p100 = scmp.eq.s32.totalorder %s27, 0
      %p101 = por %p99, %p100
      %s103 = sadd.s32 %s102, 1
      %p106 = scmp.eq.s32.totalorder %s21, 1
      %p107 = scmp.ne.s32.totalorder %s102, %s104
      %p108 = scmp.eq.s32.totalorder %s21, 0
      %p109 = por %p107, %p108
      %p110 = scmp.ne.s32.totalorder %s102, %s104
      %p111 = scmp.eq.s32.totalorder %s26, 1
      %p112 = por %p110, %p111
      %p113 = scmp.ne.s32.totalorder %s104, %s105
      %p114 = scmp.eq.s32.totalorder %s26, 0
      %p115 = por %p113, %p114
      %p116 = scmp.ne.s32.totalorder %s104, %s105
      %p117 = scmp.eq.s32.totalorder %s27, 1
      %p118 = por %p116, %p117
      %p120 = scmp.ne.s32.totalorder %s105, %s119
      %p121 = scmp.eq.s32.totalorder %s27, 0
      %p122 = por %p120, %p121
      %s124 = sadd.s32 %s123, 1
      %p127 = scmp.eq.s32.totalorder %s21, 1
      %p128 = scmp.ne.s32.totalorder %s123, %s125
      %p129 = scmp.eq.s32.totalorder %s21, 0
      %p130 = por %p128, %p129
      %p131 = scmp.ne.s32.totalorder %s123, %s125
      %p132 = scmp.eq.s32.totalorder %s26, 1
      %p133 = por %p131, %p132
      %p134 = scmp.ne.s32.totalorder %s125, %s126
      %p135 = scmp.eq.s32.totalorder %s26, 0
      %p136 = por %p134, %p135
      %p137 = scmp.ne.s32.totalorder %s125, %s126
      %p138 = scmp.eq.s32.totalorder %s27, 1
      %p139 = por %p137, %p138
      %p141 = scmp.ne.s32.totalorder %s126, %s140
      %p142 = scmp.eq.s32.totalorder %s27, 0
      %p143 = por %p141, %p142
      %s145 = sadd.s32 %s144, 1
      %p148 = scmp.eq.s32.totalorder %s21, 1
      %p149 = scmp.ne.s32.totalorder %s144, %s146
      %p150 = scmp.eq.s32.totalorder %s21, 0
      %p151 = por %p149, %p150
      %p152 = scmp.ne.s32.totalorder %s144, %s146
      %p153 = scmp.eq.s32.totalorder %s26, 1
      %p154 = por %p152, %p153
      %p155 = scmp.ne.s32.totalorder %s146, %s147
      %p156 = scmp.eq.s32.totalorder %s26, 0
      %p157 = por %p155, %p156
      %p158 = scmp.ne.s32.totalorder %s146, %s147
      %p159 = scmp.eq.s32.totalorder %s27, 1
      %p160 = por %p158, %p159
      %p162 = scmp.ne.s32.totalorder %s147, %s161
      %p163 = scmp.eq.s32.totalorder %s27, 0
      %p164 = por %p162, %p163
      %s166 = sadd.s32 %s165, 1
      %p169 = scmp.eq.s32.totalorder %s21, 1
      %p170 = scmp.ne.s32.totalorder %s165, %s167
      %p171 = scmp.eq.s32.totalorder %s21, 0
      %p172 = por %p170, %p171
      %p173 = scmp.ne.s32.totalorder %s165, %s167
      %p174 = scmp.eq.s32.totalorder %s26, 1
      %p175 = por %p173, %p174
      %p176 = scmp.ne.s32.totalorder %s167, %s168
      %p177 = scmp.eq.s32.totalorder %s26, 0
      %p178 = por %p176, %p177
      %p179 = scmp.ne.s32.totalorder %s167, %s168
      %p180 = scmp.eq.s32.totalorder %s27, 1
      %p181 = por %p179, %p180
      %p183 = scmp.ne.s32.totalorder %s168, %s182
      %p184 = scmp.eq.s32.totalorder %s27, 0
      %p185 = por %p183, %p184
      %s187 = sadd.s32 %s186, 1
      %p190 = scmp.eq.s32.totalorder %s21, 1
      %p191 = scmp.ne.s32.totalorder %s186, %s188
      %p192 = scmp.eq.s32.totalorder %s21, 0
      %p193 = por %p191, %p192
      %p194 = scmp.ne.s32.totalorder %s186, %s188
      %p195 = scmp.eq.s32.totalorder %s26, 1
      %p196 = por %p194, %p195
      %p197 = scmp.ne.s32.totalorder %s188, %s189
      %p198 = scmp.eq.s32.totalorder %s26, 0
      %p199 = por %p197, %p198
      %p200 = scmp.ne.s32.totalorder %s188, %s189
      %p201 = scmp.eq.s32.totalorder %s27, 1
      %p202 = por %p200, %p201
      %p204 = scmp.ne.s32.totalorder %s189, %s203
      %p205 = scmp.eq.s32.totalorder %s27, 0
      %p206 = por %p204, %p205
      %s208 = sadd.s32 %s207, 1
      %p211 = scmp.eq.s32.totalorder %s21, 1
      %p212 = scmp.ne.s32.totalorder %s207, %s209
      %p213 = scmp.eq.s32.totalorder %s21, 0
      %p214 = por %p212, %p213
      %p215 = scmp.ne.s32.totalorder %s207, %s209
      %p216 = scmp.eq.s32.totalorder %s26, 1
      %p217 = por %p215, %p216
      %p218 = scmp.ne.s32.totalorder %s209, %s210
      %p219 = scmp.eq.s32.totalorder %s26, 0
      %p220 = por %p218, %p219
      %p221 = scmp.ne.s32.totalorder %s209, %s210
      %p222 = scmp.eq.s32.totalorder %s27, 1
      %p223 = por %p221, %p222
      %p225 = scmp.ne.s32.totalorder %s210, %s224
      %p226 = scmp.eq.s32.totalorder %s27, 0
      %p227 = por %p225, %p226
      %s228 = ssub.s32 %s21, %s28
      %p229 = scmp.eq.s32.totalorder %s228, 0
      %s231 = sadd.s32 %s230, 1
      %s232 = scalar_select %p229, %s230, %s231
      %p235 = pneg %p229
      %p236 = scmp.eq.s32.totalorder %s21, 1
      %p237 = por %p235, %p236
      %p238 = scmp.ne.s32.totalorder %s230, %s233
      %p239 = scmp.eq.s32.totalorder %s21, 0
      %p240 = por %p238, %p239
      %p241 = scmp.ne.s32.totalorder %s230, %s233
      %p242 = scmp.eq.s32.totalorder %s26, 1
      %p243 = por %p241, %p242
      %p244 = scmp.ne.s32.totalorder %s233, %s234
      %p245 = scmp.eq.s32.totalorder %s26, 0
      %p246 = por %p244, %p245
      %p247 = scmp.ne.s32.totalorder %s233, %s234
      %p248 = scmp.eq.s32.totalorder %s27, 1
      %p249 = por %p247, %p248
      %p251 = scmp.ne.s32.totalorder %s234, %s250
      %p252 = scmp.eq.s32.totalorder %s27, 0
      %p253 = por %p251, %p252
      %p254 = scmp.le.s32.totalorder 1, %s21
      %p255 = scmp.lt.s32.totalorder %s21, 3
      %p256 = pnand %p254, %p255
      %p257 = pneg %p256
      // Predicated region
      $region9: #{tpu_custom_call.1} parent=5 // pred_check
        _
      $region10: #{tpu_custom_call.1} parent=5 // pred_check_branch
        %259 = sbr.rel (%p256) target = $region12
      $region11: #{tpu_custom_call.1} parent=5 // pred_region
        %s260 = ssub.s32 %s21, 1
        // Predicated region
        $region13: #{tpu_custom_call.1} parent=11 // pred_check
          %p261 = pneg %p94
        $region14: #{tpu_custom_call.1} parent=11 // pred_check_branch
          %263 = sbr.rel (%p261) target = $region16
        $region15: #{tpu_custom_call.1} parent=11 // pred_region
          _
        $region16: #{tpu_custom_call.1} parent=11 // pred_fallthru
          _
        // Predicated region
        $region17: #{tpu_custom_call.1} parent=11 // pred_check
          %p264 = pneg %p115
        $region18: #{tpu_custom_call.1} parent=11 // pred_check_branch
          %266 = sbr.rel (%p264) target = $region20
        $region19: #{tpu_custom_call.1} parent=11 // pred_region
          _
        $region20: #{tpu_custom_call.1} parent=11 // pred_fallthru
          _
        // Predicated region
        $region21: #{tpu_custom_call.1} parent=11 // pred_check
          %p267 = pneg %p136
        $region22: #{tpu_custom_call.1} parent=11 // pred_check_branch
          %269 = sbr.rel (%p267) target = $region24
        $region23: #{tpu_custom_call.1} parent=11 // pred_region
          _
        $region24: #{tpu_custom_call.1} parent=11 // pred_fallthru
          _
        // Predicated region
        $region25: #{tpu_custom_call.1} parent=11 // pred_check
          %p270 = pneg %p157
        $region26: #{tpu_custom_call.1} parent=11 // pred_check_branch
          %272 = sbr.rel (%p270) target = $region28
        $region27: #{tpu_custom_call.1} parent=11 // pred_region
          _
        $region28: #{tpu_custom_call.1} parent=11 // pred_fallthru
          _
        // Predicated region
        $region29: #{tpu_custom_call.1} parent=11 // pred_check
          %p273 = pneg %p178
        $region30: #{tpu_custom_call.1} parent=11 // pred_check_branch
          %275 = sbr.rel (%p273) target = $region32
        $region31: #{tpu_custom_call.1} parent=11 // pred_region
          _
        $region32: #{tpu_custom_call.1} parent=11 // pred_fallthru
          _
        // Predicated region
        $region33: #{tpu_custom_call.1} parent=11 // pred_check
          %p276 = pneg %p199
        $region34: #{tpu_custom_call.1} parent=11 // pred_check_branch
          %278 = sbr.rel (%p276) target = $region36
        $region35: #{tpu_custom_call.1} parent=11 // pred_region
          _
        $region36: #{tpu_custom_call.1} parent=11 // pred_fallthru
          _
        // Predicated region
        $region37: #{tpu_custom_call.1} parent=11 // pred_check
          %p279 = pneg %p220
        $region38: #{tpu_custom_call.1} parent=11 // pred_check_branch
          %281 = sbr.rel (%p279) target = $region40
        $region39: #{tpu_custom_call.1} parent=11 // pred_region
          _
        $region40: #{tpu_custom_call.1} parent=11 // pred_fallthru
          _
      $region12: #{tpu_custom_call.1} parent=5 // pred_fallthru
        _
      %p282 = scmp.lt.s32.totalorder %s21, 2
      // Predicated region
      $region41: #{tpu_custom_call.1} parent=5 // pred_check
        %p283 = pneg %p282
      $region42: #{tpu_custom_call.1} parent=5 // pred_check_branch
        %285 = sbr.rel (%p283) target = $region44
      $region43: #{tpu_custom_call.1} parent=5 // pred_region
        // Predicated region
        $region45: #{tpu_custom_call.1} parent=43 // pred_check
          %p286 = pneg %p41
        $region46: #{tpu_custom_call.1} parent=43 // pred_check_branch
          %288 = sbr.rel (%p286) target = $region48
        $region47: #{tpu_custom_call.1} parent=43 // pred_region
          %s289 = smul.u32 8, %s21
          %p290 = scmp.lt.s32.totalorder %s289, 15
          %s291 = scalar_select %p290, %s289, 15
          %s292 = smul.addr %s291, 2
          %s293 = smul.addr %s292, 8
          %s294 = scalar_lea.vmem %s0, %s293
          %s295 = smul.u32 8, %s21
        $region48: #{tpu_custom_call.1} parent=43 // pred_fallthru
          _
        // Predicated region
        $region49: #{tpu_custom_call.1} parent=43 // pred_check
          %p296 = pneg %p67
        $region50: #{tpu_custom_call.1} parent=43 // pred_check_branch
          %298 = sbr.rel (%p296) target = $region52
        $region51: #{tpu_custom_call.1} parent=43 // pred_region
          %s299 = sand.u32 %s57, 1
          %s300 = scalar_lea.sflag [#allocation3], %s299
          %s301 = sand.u32 %s57, 1
          %s302 = smul.addr %s301, 128
          %s303 = scalar_lea.vmem [#allocation2], %s302
          %s304 = smul.u32 8, %s21
          %s306 = ssub.s32 2048, 2048
          %307 = vsyncadd %s300, %s306
          %s308 = smul.addr %s304, 2
          %s309 = smul.addr %s308, 128
          %s310 = scalar_lea.hbm %s1, %s309
          %s311 = sshll.u32 %s303, 4
          %s312 = int_to_ptr.vmem [resolvable:$true] %s311
          %317 = dma.hbm_to_vmem [thread:$0]  %s310, 2048, %s312, %s300, 128, 128, 8
        $region52: #{tpu_custom_call.1} parent=43 // pred_fallthru
          _
      $region44: #{tpu_custom_call.1} parent=5 // pred_fallthru
        _
      %p318 = scmp.le.s32.totalorder 1, %s21
      %p319 = scmp.lt.s32.totalorder %s21, 3
      %p320 = pnand %p318, %p319
      %p321 = pneg %p320
      // Predicated region
      $region53: #{tpu_custom_call.1} parent=5 // pred_check
        _
      $region54: #{tpu_custom_call.1} parent=5 // pred_check_branch
        %323 = sbr.rel (%p320) target = $region56
      $region55: #{tpu_custom_call.1} parent=5 // pred_region
        %s324 = ssub.s32 %s21, 1
        %s325 = sand.u32 %s60, 1
        %s326 = scalar_lea.sflag [#allocation3], %s325
        %s327 = sand.u32 %s60, 1
        %s328 = smul.addr %s327, 128
        %s329 = scalar_lea.vmem [#allocation2], %s328
        // Predicated region
        $region57: #{tpu_custom_call.1} parent=55 // pred_check
          %p330 = pneg %p73
        $region58: #{tpu_custom_call.1} parent=55 // pred_check_branch
          %332 = sbr.rel (%p330) target = $region60
        $region59: #{tpu_custom_call.1} parent=55 // pred_region
          %333 = dma.done %s326, 2048
        $region60: #{tpu_custom_call.1} parent=55 // pred_fallthru
          _
        %s334 = smul.u32 8, %s26
        %p335 = scmp.lt.s32.totalorder %s334, 15
        %s336 = scalar_select %p335, %s334, 15
        %s337 = smul.addr %s336, 2
        %s338 = smul.addr %s337, 8
        %s339 = scalar_lea.vmem %s0, %s338
        %p340 = pneg %p47
        %p341 = pneg %p44
        %s342 = sand.u32 %s60, 1
        %s343 = scalar_lea.sflag [#allocation3], %s342
        %s344 = sand.u32 %s60, 1
        %s345 = smul.addr %s344, 128
        %s346 = scalar_lea.vmem [#allocation2], %s345
        %p347 = pneg %p73
        %p348 = pneg %p70
        %p349 = pneg %p94
        %p350 = pneg %p91
        %p351 = pneg %p115
        %p352 = pneg %p112
        %p353 = pneg %p136
        %p354 = pneg %p133
        %p355 = pneg %p157
        %p356 = pneg %p154
        %p357 = pneg %p178
        %p358 = pneg %p175
        %p359 = pneg %p199
        %p360 = pneg %p196
        %p361 = pneg %p220
        %p362 = pneg %p217
        %p363 = pneg %p246
        %p364 = pneg %p243
        %s365 = sand.u32 %s233, 1
        %s366 = scalar_lea.sflag [#allocation4], %s365
        %s367 = sand.u32 %s233, 1
        %s368 = smul.addr %s367, 128
        %s369 = scalar_lea.vmem [#allocation5], %s368
        %s370 = smul.u32 8, %s26
        %p371 = scmp.lt.s32.totalorder %s370, 15
        %s372 = scalar_select %p371, %s370, 15
        %s373 = smul.addr %s372, 2
        %s374 = smul.addr %s373, 8
        %s375 = scalar_lea.vmem %s0, %s374
        %s376 = smul.u32 8, %s26
        %s377 = smul.u32 8, %s26
        %s378 = smul.u32 8, %s26
        %v379 = vld [vmem:[%s375] sm:$0xff]
        %v380 = vld [vmem:[%s375 + $0x8] sm:$0xff]
        %v381 = vld [vmem:[%s375 + $0x10] sm:$0xff]
        %v382 = vld [vmem:[%s375 + $0x18] sm:$0xff]
        %v383 = vld [vmem:[%s375 + $0x20] sm:$0xff]
        %v384 = vld [vmem:[%s375 + $0x28] sm:$0xff]
        %v385 = vld [vmem:[%s375 + $0x30] sm:$0xff]
        %v386 = vld [vmem:[%s375 + $0x38] sm:$0xff]
        %v387 = vld [vmem:[%s375 + $0x40] sm:$0xff]
        %v388 = vld [vmem:[%s375 + $0x48] sm:$0xff]
        %v389 = vld [vmem:[%s375 + $0x50] sm:$0xff]
        %v390 = vld [vmem:[%s375 + $0x58] sm:$0xff]
        %v391 = vld [vmem:[%s375 + $0x60] sm:$0xff]
        %v392 = vld [vmem:[%s375 + $0x68] sm:$0xff]
        %v393 = vld [vmem:[%s375 + $0x70] sm:$0xff]
        %v394 = vld [vmem:[%s375 + $0x78] sm:$0xff]
        %v395 = vld [vmem:[%s329] sm:$0xff]
        %v396 = vld [vmem:[%s329 + $0x8] sm:$0xff]
        %v397 = vld [vmem:[%s329 + $0x10] sm:$0xff]
        %v398 = vld [vmem:[%s329 + $0x18] sm:$0xff]
        %v399 = vld [vmem:[%s329 + $0x20] sm:$0xff]
        %v400 = vld [vmem:[%s329 + $0x28] sm:$0xff]
        %v401 = vld [vmem:[%s329 + $0x30] sm:$0xff]
        %v402 = vld [vmem:[%s329 + $0x38] sm:$0xff]
        %v403 = vld [vmem:[%s329 + $0x40] sm:$0xff]
        %v404 = vld [vmem:[%s329 + $0x48] sm:$0xff]
        %v405 = vld [vmem:[%s329 + $0x50] sm:$0xff]
        %v406 = vld [vmem:[%s329 + $0x58] sm:$0xff]
        %v407 = vld [vmem:[%s329 + $0x60] sm:$0xff]
        %v408 = vld [vmem:[%s329 + $0x68] sm:$0xff]
        %v409 = vld [vmem:[%s329 + $0x70] sm:$0xff]
        %v410 = vld [vmem:[%s329 + $0x78] sm:$0xff]
        %v411 = vld [vmem:[%s2] sm:$0xff]
        %v412 = vld [vmem:[%s2 + $0x8] sm:$0xff]
        %v413 = vld [vmem:[%s2 + $0x10] sm:$0xff]
        %v414 = vld [vmem:[%s2 + $0x18] sm:$0xff]
        %vm415 = vcmask 261120
        %v417 = vsel %vm415, %v379, 0
        %v420 = vsel %vm415, %v380, 0
        %v423 = vsel %vm415, %v381, 0
        %v426 = vsel %vm415, %v382, 0
        %v429 = vsel %vm415, %v383, 0
        %v432 = vsel %vm415, %v384, 0
        %v435 = vsel %vm415, %v385, 0
        %v438 = vsel %vm415, %v386, 0
        %v441 = vsel %vm415, %v387, 0
        %v444 = vsel %vm415, %v388, 0
        %v447 = vsel %vm415, %v389, 0
        %v450 = vsel %vm415, %v390, 0
        %v453 = vsel %vm415, %v391, 0
        %v456 = vsel %vm415, %v392, 0
        %v459 = vsel %vm415, %v393, 0
        %v462 = vsel %vm415, %v394, 0
        %464 = vmatprep.subr.mxu0 0.0
        %465 = vmatpush1.msra.mxu0 0.0
        %466 = vmatprep.subr.mxu0 0.0
        %467 = vmatpush1.msra.mxu0 0.0
        %468 = vmatprep.subr.mxu0 0.0
        %469 = vmatpush1.msra.mxu0 0.0
        %470 = vmatprep.subr.mxu0 0.0
        %471 = vmatpush1.msra.mxu0 0.0
        %472 = vmatprep.subr.mxu0 0.0
        %473 = vmatpush1.msra.mxu0 0.0
        %474 = vmatprep.subr.mxu0 0.0
        %475 = vmatpush1.msra.mxu0 0.0
        %476 = vmatprep.subr.mxu0 0.0
        %477 = vmatpush1.msra.mxu0 0.0
        %478 = vmatprep.subr.mxu0 0.0
        %479 = vmatpush1.msra.mxu0 0.0
        %480 = vmatprep.subr.mxu0 0.0
        %481 = vmatpush1.msra.mxu0 0.0
        %482 = vmatprep.subr.mxu0 0.0
        %483 = vmatpush1.msra.mxu0 0.0
        %484 = vmatprep.subr.mxu0 0.0
        %485 = vmatpush1.msra.mxu0 0.0
        %486 = vmatprep.subr.mxu0 0.0
        %487 = vmatpush1.msra.mxu0 0.0
        %488 = vmatprep.subr.mxu0 0.0
        %489 = vmatpush1.msra.mxu0 %v414
        %490 = vmatprep.subr.mxu0 0.0
        %491 = vmatpush1.msra.mxu0 %v413
        %492 = vmatprep.subr.mxu0 0.0
        %493 = vmatpush1.msra.mxu0 %v412
        %494 = vmatprep.subr.mxu0 0.0
        %495 = vmatpush1.msra.mxu0 %v411
        %496 = vmatprep.subr.mxu0 0.0
        %497 = vmatpush2.msra.mxu0 0.0
        %498 = vmatprep.subr.mxu0 0.0
        %499 = vmatpush2.msra.mxu0 0.0
        %500 = vmatprep.subr.mxu0 0.0
        %501 = vmatpush2.msra.mxu0 0.0
        %502 = vmatprep.subr.mxu0 0.0
        %503 = vmatpush2.msra.mxu0 0.0
        %504 = vmatprep.subr.mxu0 0.0
        %505 = vmatpush2.msra.mxu0 0.0
        %506 = vmatprep.subr.mxu0 0.0
        %507 = vmatpush2.msra.mxu0 0.0
        %508 = vmatprep.subr.mxu0 0.0
        %509 = vmatpush2.msra.mxu0 0.0
        %510 = vmatprep.subr.mxu0 0.0
        %511 = vmatpush2.msra.mxu0 0.0
        %512 = vmatprep.subr.mxu0 0.0
        %513 = vmatpush2.msra.mxu0 0.0
        %514 = vmatprep.subr.mxu0 0.0
        %515 = vmatpush2.msra.mxu0 0.0
        %516 = vmatprep.subr.mxu0 0.0
        %517 = vmatpush2.msra.mxu0 0.0
        %518 = vmatprep.subr.mxu0 0.0
        %519 = vmatpush2.msra.mxu0 0.0
        %520 = vmatprep.subr.mxu0 0.0
        %521 = vmatpush2.msra.mxu0 0.0
        %522 = vmatprep.subr.mxu0 0.0
        %523 = vmatpush2.msra.mxu0 0.0
        %524 = vmatprep.subr.mxu0 0.0
        %525 = vmatpush2.msra.mxu0 0.0
        %526 = vmatprep.subr.mxu0 0.0
        %527 = vmatpush2.msra.mxu0 0.0
        %528 = vmatprep.mubr.f32.mxu0 0.0
        %529 = vmatmul.mubr.f32.gmra.mxu0 %v417
        %v530 = vpop.f32.mrf.mxu0
        %v531 = vadd.f32 0.0, %v530
        %v532 = vpop.f32.mrf.mxu0
        %533 = vmatprep.mubr.f32.mxu0 0.0
        %534 = vmatmul.mubr.f32.gmra.mxu0 %v420
        %v535 = vpop.f32.mrf.mxu0
        %v536 = vadd.f32 0.0, %v535
        %v537 = vpop.f32.mrf.mxu0
        %538 = vmatprep.mubr.f32.mxu0 0.0
        %539 = vmatmul.mubr.f32.gmra.mxu0 %v423
        %v540 = vpop.f32.mrf.mxu0
        %v541 = vadd.f32 0.0, %v540
        %v542 = vpop.f32.mrf.mxu0
        %543 = vmatprep.mubr.f32.mxu0 0.0
        %544 = vmatmul.mubr.f32.gmra.mxu0 %v426
        %v545 = vpop.f32.mrf.mxu0
        %v546 = vadd.f32 0.0, %v545
        %v547 = vpop.f32.mrf.mxu0
        %548 = vmatprep.mubr.f32.mxu0 0.0
        %549 = vmatmul.mubr.f32.gmra.mxu0 %v429
        %v550 = vpop.f32.mrf.mxu0
        %v551 = vadd.f32 0.0, %v550
        %v552 = vpop.f32.mrf.mxu0
        %553 = vmatprep.mubr.f32.mxu0 0.0
        %554 = vmatmul.mubr.f32.gmra.mxu0 %v432
        %v555 = vpop.f32.mrf.mxu0
        %v556 = vadd.f32 0.0, %v555
        %v557 = vpop.f32.mrf.mxu0
        %558 = vmatprep.mubr.f32.mxu0 0.0
        %559 = vmatmul.mubr.f32.gmra.mxu0 %v435
        %v560 = vpop.f32.mrf.mxu0
        %v561 = vadd.f32 0.0, %v560
        %v562 = vpop.f32.mrf.mxu0
        %563 = vmatprep.mubr.f32.mxu0 0.0
        %564 = vmatmul.mubr.f32.gmra.mxu0 %v438
        %v565 = vpop.f32.mrf.mxu0
        %v566 = vadd.f32 0.0, %v565
        %v567 = vpop.f32.mrf.mxu0
        %568 = vmatprep.mubr.f32.mxu0 0.0
        %569 = vmatmul.mubr.f32.gmra.mxu0 %v441
        %v570 = vpop.f32.mrf.mxu0
        %v571 = vadd.f32 0.0, %v570
        %v572 = vpop.f32.mrf.mxu0
        %573 = vmatprep.mubr.f32.mxu0 0.0
        %574 = vmatmul.mubr.f32.gmra.mxu0 %v444
        %v575 = vpop.f32.mrf.mxu0
        %v576 = vadd.f32 0.0, %v575
        %v577 = vpop.f32.mrf.mxu0
        %578 = vmatprep.mubr.f32.mxu0 0.0
        %579 = vmatmul.mubr.f32.gmra.mxu0 %v447
        %v580 = vpop.f32.mrf.mxu0
        %v581 = vadd.f32 0.0, %v580
        %v582 = vpop.f32.mrf.mxu0
        %583 = vmatprep.mubr.f32.mxu0 0.0
        %584 = vmatmul.mubr.f32.gmra.mxu0 %v450
        %v585 = vpop.f32.mrf.mxu0
        %v586 = vadd.f32 0.0, %v585
        %v587 = vpop.f32.mrf.mxu0
        %588 = vmatprep.mubr.f32.mxu0 0.0
        %589 = vmatmul.mubr.f32.gmra.mxu0 %v453
        %v590 = vpop.f32.mrf.mxu0
        %v591 = vadd.f32 0.0, %v590
        %v592 = vpop.f32.mrf.mxu0
        %593 = vmatprep.mubr.f32.mxu0 0.0
        %594 = vmatmul.mubr.f32.gmra.mxu0 %v456
        %v595 = vpop.f32.mrf.mxu0
        %v596 = vadd.f32 0.0, %v595
        %v597 = vpop.f32.mrf.mxu0
        %598 = vmatprep.mubr.f32.mxu0 0.0
        %599 = vmatmul.mubr.f32.gmra.mxu0 %v459
        %v600 = vpop.f32.mrf.mxu0
        %v601 = vadd.f32 0.0, %v600
        %v602 = vpop.f32.mrf.mxu0
        %603 = vmatprep.mubr.f32.mxu0 0.0
        %604 = vmatmul.mubr.f32.gmra.mxu0 %v462
        %v605 = vpop.f32.mrf.mxu0
        %v606 = vadd.f32 0.0, %v605
        %v607 = vpop.f32.mrf.mxu0
        %608 = vdwg.mxu0
        %v609 = vld [vmem:[%s3] sm:$0xff]
        %v610 = vld [vmem:[%s3 + $0x8] sm:$0xff]
        %v611 = vld [vmem:[%s3 + $0x10] sm:$0xff]
        %v612 = vld [vmem:[%s3 + $0x18] sm:$0xff]
        %613 = vmatprep.subr.mxu0 0.0
        %614 = vmatpush1.msra.mxu0 0.0
        %615 = vmatprep.subr.mxu0 0.0
        %616 = vmatpush1.msra.mxu0 0.0
        %617 = vmatprep.subr.mxu0 0.0
        %618 = vmatpush1.msra.mxu0 0.0
        %619 = vmatprep.subr.mxu0 0.0
        %620 = vmatpush1.msra.mxu0 0.0
        %621 = vmatprep.subr.mxu0 0.0
        %622 = vmatpush1.msra.mxu0 0.0
        %623 = vmatprep.subr.mxu0 0.0
        %624 = vmatpush1.msra.mxu0 0.0
        %625 = vmatprep.subr.mxu0 0.0
        %626 = vmatpush1.msra.mxu0 0.0
        %627 = vmatprep.subr.mxu0 0.0
        %628 = vmatpush1.msra.mxu0 0.0
        %629 = vmatprep.subr.mxu0 0.0
        %630 = vmatpush1.msra.mxu0 0.0
        %631 = vmatprep.subr.mxu0 0.0
        %632 = vmatpush1.msra.mxu0 0.0
        %633 = vmatprep.subr.mxu0 0.0
        %634 = vmatpush1.msra.mxu0 0.0
        %635 = vmatprep.subr.mxu0 0.0
        %636 = vmatpush1.msra.mxu0 0.0
        %637 = vmatprep.subr.mxu0 0.0
        %638 = vmatpush1.msra.mxu0 %v612
        %639 = vmatprep.subr.mxu0 0.0
        %640 = vmatpush1.msra.mxu0 %v611
        %641 = vmatprep.subr.mxu0 0.0
        %642 = vmatpush1.msra.mxu0 %v610
        %643 = vmatprep.subr.mxu0 0.0
        %644 = vmatpush1.msra.mxu0 %v609
        %645 = vmatprep.subr.mxu0 0.0
        %646 = vmatpush2.msra.mxu0 0.0
        %647 = vmatprep.subr.mxu0 0.0
        %648 = vmatpush2.msra.mxu0 0.0
        %649 = vmatprep.subr.mxu0 0.0
        %650 = vmatpush2.msra.mxu0 0.0
        %651 = vmatprep.subr.mxu0 0.0
        %652 = vmatpush2.msra.mxu0 0.0
        %653 = vmatprep.subr.mxu0 0.0
        %654 = vmatpush2.msra.mxu0 0.0
        %655 = vmatprep.subr.mxu0 0.0
        %656 = vmatpush2.msra.mxu0 0.0
        %657 = vmatprep.subr.mxu0 0.0
        %658 = vmatpush2.msra.mxu0 0.0
        %659 = vmatprep.subr.mxu0 0.0
        %660 = vmatpush2.msra.mxu0 0.0
        %661 = vmatprep.subr.mxu0 0.0
        %662 = vmatpush2.msra.mxu0 0.0
        %663 = vmatprep.subr.mxu0 0.0
        %664 = vmatpush2.msra.mxu0 0.0
        %665 = vmatprep.subr.mxu0 0.0
        %666 = vmatpush2.msra.mxu0 0.0
        %667 = vmatprep.subr.mxu0 0.0
        %668 = vmatpush2.msra.mxu0 0.0
        %669 = vmatprep.subr.mxu0 0.0
        %670 = vmatpush2.msra.mxu0 0.0
        %671 = vmatprep.subr.mxu0 0.0
        %672 = vmatpush2.msra.mxu0 0.0
        %673 = vmatprep.subr.mxu0 0.0
        %674 = vmatpush2.msra.mxu0 0.0
        %675 = vmatprep.subr.mxu0 0.0
        %676 = vmatpush2.msra.mxu0 0.0
        %677 = vmatprep.mubr.f32.mxu0 0.0
        %678 = vmatmul.mubr.f32.gmra.mxu0 %v417
        %v679 = vpop.f32.mrf.mxu0
        %v680 = vadd.f32 0.0, %v679
        %v681 = vpop.f32.mrf.mxu0
        %682 = vmatprep.mubr.f32.mxu0 0.0
        %683 = vmatmul.mubr.f32.gmra.mxu0 %v420
        %v684 = vpop.f32.mrf.mxu0
        %v685 = vadd.f32 0.0, %v684
        %v686 = vpop.f32.mrf.mxu0
        %687 = vmatprep.mubr.f32.mxu0 0.0
        %688 = vmatmul.mubr.f32.gmra.mxu0 %v423
        %v689 = vpop.f32.mrf.mxu0
        %v690 = vadd.f32 0.0, %v689
        %v691 = vpop.f32.mrf.mxu0
        %692 = vmatprep.mubr.f32.mxu0 0.0
        %693 = vmatmul.mubr.f32.gmra.mxu0 %v426
        %v694 = vpop.f32.mrf.mxu0
        %v695 = vadd.f32 0.0, %v694
        %v696 = vpop.f32.mrf.mxu0
        %697 = vmatprep.mubr.f32.mxu0 0.0
        %698 = vmatmul.mubr.f32.gmra.mxu0 %v429
        %v699 = vpop.f32.mrf.mxu0
        %v700 = vadd.f32 0.0, %v699
        %v701 = vpop.f32.mrf.mxu0
        %702 = vmatprep.mubr.f32.mxu0 0.0
        %703 = vmatmul.mubr.f32.gmra.mxu0 %v432
        %v704 = vpop.f32.mrf.mxu0
        %v705 = vadd.f32 0.0, %v704
        %v706 = vpop.f32.mrf.mxu0
        %707 = vmatprep.mubr.f32.mxu0 0.0
        %708 = vmatmul.mubr.f32.gmra.mxu0 %v435
        %v709 = vpop.f32.mrf.mxu0
        %v710 = vadd.f32 0.0, %v709
        %v711 = vpop.f32.mrf.mxu0
        %712 = vmatprep.mubr.f32.mxu0 0.0
        %713 = vmatmul.mubr.f32.gmra.mxu0 %v438
        %v714 = vpop.f32.mrf.mxu0
        %v715 = vadd.f32 0.0, %v714
        %v716 = vpop.f32.mrf.mxu0
        %717 = vmatprep.mubr.f32.mxu0 0.0
        %718 = vmatmul.mubr.f32.gmra.mxu0 %v441
        %v719 = vpop.f32.mrf.mxu0
        %v720 = vadd.f32 0.0, %v719
        %v721 = vpop.f32.mrf.mxu0
        %722 = vmatprep.mubr.f32.mxu0 0.0
        %723 = vmatmul.mubr.f32.gmra.mxu0 %v444
        %v724 = vpop.f32.mrf.mxu0
        %v725 = vadd.f32 0.0, %v724
        %v726 = vpop.f32.mrf.mxu0
        %727 = vmatprep.mubr.f32.mxu0 0.0
        %728 = vmatmul.mubr.f32.gmra.mxu0 %v447
        %v729 = vpop.f32.mrf.mxu0
        %v730 = vadd.f32 0.0, %v729
        %v731 = vpop.f32.mrf.mxu0
        %732 = vmatprep.mubr.f32.mxu0 0.0
        %733 = vmatmul.mubr.f32.gmra.mxu0 %v450
        %v734 = vpop.f32.mrf.mxu0
        %v735 = vadd.f32 0.0, %v734
        %v736 = vpop.f32.mrf.mxu0
        %737 = vmatprep.mubr.f32.mxu0 0.0
        %738 = vmatmul.mubr.f32.gmra.mxu0 %v453
        %v739 = vpop.f32.mrf.mxu0
        %v740 = vadd.f32 0.0, %v739
        %v741 = vpop.f32.mrf.mxu0
        %742 = vmatprep.mubr.f32.mxu0 0.0
        %743 = vmatmul.mubr.f32.gmra.mxu0 %v456
        %v744 = vpop.f32.mrf.mxu0
        %v745 = vadd.f32 0.0, %v744
        %v746 = vpop.f32.mrf.mxu0
        %747 = vmatprep.mubr.f32.mxu0 0.0
        %748 = vmatmul.mubr.f32.gmra.mxu0 %v459
        %v749 = vpop.f32.mrf.mxu0
        %v750 = vadd.f32 0.0, %v749
        %v751 = vpop.f32.mrf.mxu0
        %752 = vmatprep.mubr.f32.mxu0 0.0
        %753 = vmatmul.mubr.f32.gmra.mxu0 %v462
        %v754 = vpop.f32.mrf.mxu0
        %v755 = vadd.f32 0.0, %v754
        %v756 = vpop.f32.mrf.mxu0
        %757 = vdwg.mxu0
        %v758 = vld [vmem:[%s4] sm:$0xff]
        %v759 = vld [vmem:[%s4 + $0x8] sm:$0xff]
        %v760 = vld [vmem:[%s4 + $0x10] sm:$0xff]
        %v761 = vld [vmem:[%s4 + $0x18] sm:$0xff]
        %v762 = vld [vmem:[%s5] sm:$0x1]
        %v764 = vlaneseq
        %v765 = vshrl.u32 %v764, 7
        %v766 = vsub.s32 0, %v765
        %v767 = vrot.slane %v762, %v766
        %v770 = vsel %vm415, %v395, 0
        %v773 = vsel %vm415, %v396, 0
        %v776 = vsel %vm415, %v397, 0
        %v779 = vsel %vm415, %v398, 0
        %v782 = vsel %vm415, %v399, 0
        %v785 = vsel %vm415, %v400, 0
        %v788 = vsel %vm415, %v401, 0
        %v791 = vsel %vm415, %v402, 0
        %v794 = vsel %vm415, %v403, 0
        %v797 = vsel %vm415, %v404, 0
        %v800 = vsel %vm415, %v405, 0
        %v803 = vsel %vm415, %v406, 0
        %v806 = vsel %vm415, %v407, 0
        %v809 = vsel %vm415, %v408, 0
        %v812 = vsel %vm415, %v409, 0
        %v815 = vsel %vm415, %v410, 0
        %817 = vmatprep.subr.mxu0 0.0
        %818 = vmatpush1.msra.mxu0 0.0
        %819 = vmatprep.subr.mxu0 0.0
        %820 = vmatpush1.msra.mxu0 0.0
        %821 = vmatprep.subr.mxu0 0.0
        %822 = vmatpush1.msra.mxu0 0.0
        %823 = vmatprep.subr.mxu0 0.0
        %824 = vmatpush1.msra.mxu0 0.0
        %825 = vmatprep.subr.mxu0 0.0
        %826 = vmatpush1.msra.mxu0 0.0
        %827 = vmatprep.subr.mxu0 0.0
        %828 = vmatpush1.msra.mxu0 0.0
        %829 = vmatprep.subr.mxu0 0.0
        %830 = vmatpush1.msra.mxu0 0.0
        %831 = vmatprep.subr.mxu0 0.0
        %832 = vmatpush1.msra.mxu0 0.0
        %833 = vmatprep.subr.mxu0 0.0
        %834 = vmatpush1.msra.mxu0 0.0
        %835 = vmatprep.subr.mxu0 0.0
        %836 = vmatpush1.msra.mxu0 0.0
        %837 = vmatprep.subr.mxu0 0.0
        %838 = vmatpush1.msra.mxu0 0.0
        %839 = vmatprep.subr.mxu0 0.0
        %840 = vmatpush1.msra.mxu0 0.0
        %841 = vmatprep.subr.mxu0 0.0
        %842 = vmatpush1.msra.mxu0 %v761
        %843 = vmatprep.subr.mxu0 0.0
        %844 = vmatpush1.msra.mxu0 %v760
        %845 = vmatprep.subr.mxu0 0.0
        %846 = vmatpush1.msra.mxu0 %v759
        %847 = vmatprep.subr.mxu0 0.0
        %848 = vmatpush1.msra.mxu0 %v758
        %849 = vmatprep.subr.mxu0 0.0
        %850 = vmatpush2.msra.mxu0 0.0
        %851 = vmatprep.subr.mxu0 0.0
        %852 = vmatpush2.msra.mxu0 0.0
        %853 = vmatprep.subr.mxu0 0.0
        %854 = vmatpush2.msra.mxu0 0.0
        %855 = vmatprep.subr.mxu0 0.0
        %856 = vmatpush2.msra.mxu0 0.0
        %857 = vmatprep.subr.mxu0 0.0
        %858 = vmatpush2.msra.mxu0 0.0
        %859 = vmatprep.subr.mxu0 0.0
        %860 = vmatpush2.msra.mxu0 0.0
        %861 = vmatprep.subr.mxu0 0.0
        %862 = vmatpush2.msra.mxu0 0.0
        %863 = vmatprep.subr.mxu0 0.0
        %864 = vmatpush2.msra.mxu0 0.0
        %865 = vmatprep.subr.mxu0 0.0
        %866 = vmatpush2.msra.mxu0 0.0
        %867 = vmatprep.subr.mxu0 0.0
        %868 = vmatpush2.msra.mxu0 0.0
        %869 = vmatprep.subr.mxu0 0.0
        %870 = vmatpush2.msra.mxu0 0.0
        %871 = vmatprep.subr.mxu0 0.0
        %872 = vmatpush2.msra.mxu0 0.0
        %873 = vmatprep.subr.mxu0 0.0
        %874 = vmatpush2.msra.mxu0 0.0
        %875 = vmatprep.subr.mxu0 0.0
        %876 = vmatpush2.msra.mxu0 0.0
        %877 = vmatprep.subr.mxu0 0.0
        %878 = vmatpush2.msra.mxu0 0.0
        %879 = vmatprep.subr.mxu0 0.0
        %880 = vmatpush2.msra.mxu0 0.0
        %881 = vmatprep.mubr.f32.mxu0 0.0
        %882 = vmatmul.mubr.f32.gmra.mxu0 %v770
        %v883 = vpop.f32.mrf.mxu0
        %v884 = vadd.f32 %v767, %v883
        %v885 = vpop.f32.mrf.mxu0
        %886 = vmatprep.mubr.f32.mxu0 0.0
        %887 = vmatmul.mubr.f32.gmra.mxu0 %v773
        %v888 = vpop.f32.mrf.mxu0
        %v889 = vadd.f32 %v767, %v888
        %v890 = vpop.f32.mrf.mxu0
        %891 = vmatprep.mubr.f32.mxu0 0.0
        %892 = vmatmul.mubr.f32.gmra.mxu0 %v776
        %v893 = vpop.f32.mrf.mxu0
        %v894 = vadd.f32 %v767, %v893
        %v895 = vpop.f32.mrf.mxu0
        %896 = vmatprep.mubr.f32.mxu0 0.0
        %897 = vmatmul.mubr.f32.gmra.mxu0 %v779
        %v898 = vpop.f32.mrf.mxu0
        %v899 = vadd.f32 %v767, %v898
        %v900 = vpop.f32.mrf.mxu0
        %901 = vmatprep.mubr.f32.mxu0 0.0
        %902 = vmatmul.mubr.f32.gmra.mxu0 %v782
        %v903 = vpop.f32.mrf.mxu0
        %v904 = vadd.f32 %v767, %v903
        %v905 = vpop.f32.mrf.mxu0
        %906 = vmatprep.mubr.f32.mxu0 0.0
        %907 = vmatmul.mubr.f32.gmra.mxu0 %v785
        %v908 = vpop.f32.mrf.mxu0
        %v909 = vadd.f32 %v767, %v908
        %v910 = vpop.f32.mrf.mxu0
        %911 = vmatprep.mubr.f32.mxu0 0.0
        %912 = vmatmul.mubr.f32.gmra.mxu0 %v788
        %v913 = vpop.f32.mrf.mxu0
        %v914 = vadd.f32 %v767, %v913
        %v915 = vpop.f32.mrf.mxu0
        %916 = vmatprep.mubr.f32.mxu0 0.0
        %917 = vmatmul.mubr.f32.gmra.mxu0 %v791
        %v918 = vpop.f32.mrf.mxu0
        %v919 = vadd.f32 %v767, %v918
        %v920 = vpop.f32.mrf.mxu0
        %921 = vmatprep.mubr.f32.mxu0 0.0
        %922 = vmatmul.mubr.f32.gmra.mxu0 %v794
        %v923 = vpop.f32.mrf.mxu0
        %v924 = vadd.f32 %v767, %v923
        %v925 = vpop.f32.mrf.mxu0
        %926 = vmatprep.mubr.f32.mxu0 0.0
        %927 = vmatmul.mubr.f32.gmra.mxu0 %v797
        %v928 = vpop.f32.mrf.mxu0
        %v929 = vadd.f32 %v767, %v928
        %v930 = vpop.f32.mrf.mxu0
        %931 = vmatprep.mubr.f32.mxu0 0.0
        %932 = vmatmul.mubr.f32.gmra.mxu0 %v800
        %v933 = vpop.f32.mrf.mxu0
        %v934 = vadd.f32 %v767, %v933
        %v935 = vpop.f32.mrf.mxu0
        %936 = vmatprep.mubr.f32.mxu0 0.0
        %937 = vmatmul.mubr.f32.gmra.mxu0 %v803
        %v938 = vpop.f32.mrf.mxu0
        %v939 = vadd.f32 %v767, %v938
        %v940 = vpop.f32.mrf.mxu0
        %941 = vmatprep.mubr.f32.mxu0 0.0
        %942 = vmatmul.mubr.f32.gmra.mxu0 %v806
        %v943 = vpop.f32.mrf.mxu0
        %v944 = vadd.f32 %v767, %v943
        %v945 = vpop.f32.mrf.mxu0
        %946 = vmatprep.mubr.f32.mxu0 0.0
        %947 = vmatmul.mubr.f32.gmra.mxu0 %v809
        %v948 = vpop.f32.mrf.mxu0
        %v949 = vadd.f32 %v767, %v948
        %v950 = vpop.f32.mrf.mxu0
        %951 = vmatprep.mubr.f32.mxu0 0.0
        %952 = vmatmul.mubr.f32.gmra.mxu0 %v812
        %v953 = vpop.f32.mrf.mxu0
        %v954 = vadd.f32 %v767, %v953
        %v955 = vpop.f32.mrf.mxu0
        %956 = vmatprep.mubr.f32.mxu0 0.0
        %957 = vmatmul.mubr.f32.gmra.mxu0 %v815
        %v958 = vpop.f32.mrf.mxu0
        %v959 = vadd.f32 %v767, %v958
        %v960 = vpop.f32.mrf.mxu0
        %961 = vdwg.mxu0
        %v962 = vld [vmem:[%s8] sm:$0xff]
        %v963 = vld [vmem:[%s8 + $0x8] sm:$0xff]
        %vm964 = vcmask 64512
        %v966 = vsel %vm964, %v884, 0
        %v969 = vsel %vm964, %v889, 0
        %v972 = vsel %vm964, %v531, 0
        %v975 = vsel %vm964, %v536, 0
        %977 = vmatprep.subr.mxu0 0.0
        %978 = vmatpush1.xpose.msra.mxu0 0.0
        %979 = vmatprep.subr.mxu0 0.0
        %980 = vmatpush1.xpose.msra.mxu0 0.0
        %981 = vmatprep.subr.mxu0 0.0
        %982 = vmatpush1.xpose.msra.mxu0 0.0
        %983 = vmatprep.subr.mxu0 0.0
        %984 = vmatpush1.xpose.msra.mxu0 0.0
        %985 = vmatprep.subr.mxu0 0.0
        %986 = vmatpush1.xpose.msra.mxu0 0.0
        %987 = vmatprep.subr.mxu0 0.0
        %988 = vmatpush1.xpose.msra.mxu0 0.0
        %989 = vmatprep.subr.mxu0 0.0
        %990 = vmatpush1.xpose.msra.mxu0 0.0
        %991 = vmatprep.subr.mxu0 0.0
        %992 = vmatpush1.xpose.msra.mxu0 0.0
        %993 = vmatprep.subr.mxu0 0.0
        %994 = vmatpush1.xpose.msra.mxu0 0.0
        %995 = vmatprep.subr.mxu0 0.0
        %996 = vmatpush1.xpose.msra.mxu0 0.0
        %997 = vmatprep.subr.mxu0 0.0
        %998 = vmatpush1.xpose.msra.mxu0 0.0
        %999 = vmatprep.subr.mxu0 0.0
        %1000 = vmatpush1.xpose.msra.mxu0 0.0
        %1001 = vmatprep.subr.mxu0 0.0
        %1002 = vmatpush1.xpose.msra.mxu0 0.0
        %1003 = vmatprep.subr.mxu0 0.0
        %1004 = vmatpush1.xpose.msra.mxu0 0.0
        %1005 = vmatprep.subr.mxu0 0.0
        %1006 = vmatpush1.xpose.msra.mxu0 %v975
        %1007 = vmatprep.subr.mxu0 0.0
        %1008 = vmatpush1.xpose.msra.mxu0 %v972
        %1009 = vmatprep.subr.mxu0 0.0
        %1010 = vmatpush2.xpose.msra.mxu0 0.0
        %1011 = vmatprep.subr.mxu0 0.0
        %1012 = vmatpush2.xpose.msra.mxu0 0.0
        %1013 = vmatprep.subr.mxu0 0.0
        %1014 = vmatpush2.xpose.msra.mxu0 0.0
        %1015 = vmatprep.subr.mxu0 0.0
        %1016 = vmatpush2.xpose.msra.mxu0 0.0
        %1017 = vmatprep.subr.mxu0 0.0
        %1018 = vmatpush2.xpose.msra.mxu0 0.0
        %1019 = vmatprep.subr.mxu0 0.0
        %1020 = vmatpush2.xpose.msra.mxu0 0.0
        %1021 = vmatprep.subr.mxu0 0.0
        %1022 = vmatpush2.xpose.msra.mxu0 0.0
        %1023 = vmatprep.subr.mxu0 0.0
        %1024 = vmatpush2.xpose.msra.mxu0 0.0
        %1025 = vmatprep.subr.mxu0 0.0
        %1026 = vmatpush2.xpose.msra.mxu0 0.0
        %1027 = vmatprep.subr.mxu0 0.0
        %1028 = vmatpush2.xpose.msra.mxu0 0.0
        %1029 = vmatprep.subr.mxu0 0.0
        %1030 = vmatpush2.xpose.msra.mxu0 0.0
        %1031 = vmatprep.subr.mxu0 0.0
        %1032 = vmatpush2.xpose.msra.mxu0 0.0
        %1033 = vmatprep.subr.mxu0 0.0
        %1034 = vmatpush2.xpose.msra.mxu0 0.0
        %1035 = vmatprep.subr.mxu0 0.0
        %1036 = vmatpush2.xpose.msra.mxu0 0.0
        %1037 = vmatprep.subr.mxu0 0.0
        %1038 = vmatpush2.xpose.msra.mxu0 0.0
        %1039 = vmatprep.subr.mxu0 0.0
        %1040 = vmatpush2.xpose.msra.mxu0 0.0
        %1041 = vmatprep.mubr.f32.mxu0 0.0
        %1042 = vmatmul.mubr.f32.gmra.mxu0 %v966
        %v1043 = vpop.f32.mrf.mxu0
        %v1044 = vadd.f32 %v962, %v1043
        %v1045 = vpop.f32.mrf.mxu0
        %1046 = vmatprep.mubr.f32.mxu0 0.0
        %1047 = vmatmul.mubr.f32.gmra.mxu0 %v969
        %v1048 = vpop.f32.mrf.mxu0
        %v1049 = vadd.f32 %v963, %v1048
        %v1050 = vpop.f32.mrf.mxu0
        %1051 = vdwg.mxu0
        %v1053 = vsel %vm964, %v894, 0
        %v1056 = vsel %vm964, %v899, 0
        %v1059 = vsel %vm964, %v541, 0
        %v1062 = vsel %vm964, %v546, 0
        %1064 = vmatprep.subr.mxu0 0.0
        %1065 = vmatpush1.xpose.msra.mxu0 0.0
        %1066 = vmatprep.subr.mxu0 0.0
        %1067 = vmatpush1.xpose.msra.mxu0 0.0
        %1068 = vmatprep.subr.mxu0 0.0
        %1069 = vmatpush1.xpose.msra.mxu0 0.0
        %1070 = vmatprep.subr.mxu0 0.0
        %1071 = vmatpush1.xpose.msra.mxu0 0.0
        %1072 = vmatprep.subr.mxu0 0.0
        %1073 = vmatpush1.xpose.msra.mxu0 0.0
        %1074 = vmatprep.subr.mxu0 0.0
        %1075 = vmatpush1.xpose.msra.mxu0 0.0
        %1076 = vmatprep.subr.mxu0 0.0
        %1077 = vmatpush1.xpose.msra.mxu0 0.0
        %1078 = vmatprep.subr.mxu0 0.0
        %1079 = vmatpush1.xpose.msra.mxu0 0.0
        %1080 = vmatprep.subr.mxu0 0.0
        %1081 = vmatpush1.xpose.msra.mxu0 0.0
        %1082 = vmatprep.subr.mxu0 0.0
        %1083 = vmatpush1.xpose.msra.mxu0 0.0
        %1084 = vmatprep.subr.mxu0 0.0
        %1085 = vmatpush1.xpose.msra.mxu0 0.0
        %1086 = vmatprep.subr.mxu0 0.0
        %1087 = vmatpush1.xpose.msra.mxu0 0.0
        %1088 = vmatprep.subr.mxu0 0.0
        %1089 = vmatpush1.xpose.msra.mxu0 0.0
        %1090 = vmatprep.subr.mxu0 0.0
        %1091 = vmatpush1.xpose.msra.mxu0 0.0
        %1092 = vmatprep.subr.mxu0 0.0
        %1093 = vmatpush1.xpose.msra.mxu0 %v1062
        %1094 = vmatprep.subr.mxu0 0.0
        %1095 = vmatpush1.xpose.msra.mxu0 %v1059
        %1096 = vmatprep.subr.mxu0 0.0
        %1097 = vmatpush2.xpose.msra.mxu0 0.0
        %1098 = vmatprep.subr.mxu0 0.0
        %1099 = vmatpush2.xpose.msra.mxu0 0.0
        %1100 = vmatprep.subr.mxu0 0.0
        %1101 = vmatpush2.xpose.msra.mxu0 0.0
        %1102 = vmatprep.subr.mxu0 0.0
        %1103 = vmatpush2.xpose.msra.mxu0 0.0
        %1104 = vmatprep.subr.mxu0 0.0
        %1105 = vmatpush2.xpose.msra.mxu0 0.0
        %1106 = vmatprep.subr.mxu0 0.0
        %1107 = vmatpush2.xpose.msra.mxu0 0.0
        %1108 = vmatprep.subr.mxu0 0.0
        %1109 = vmatpush2.xpose.msra.mxu0 0.0
        %1110 = vmatprep.subr.mxu0 0.0
        %1111 = vmatpush2.xpose.msra.mxu0 0.0
        %1112 = vmatprep.subr.mxu0 0.0
        %1113 = vmatpush2.xpose.msra.mxu0 0.0
        %1114 = vmatprep.subr.mxu0 0.0
        %1115 = vmatpush2.xpose.msra.mxu0 0.0
        %1116 = vmatprep.subr.mxu0 0.0
        %1117 = vmatpush2.xpose.msra.mxu0 0.0
        %1118 = vmatprep.subr.mxu0 0.0
        %1119 = vmatpush2.xpose.msra.mxu0 0.0
        %1120 = vmatprep.subr.mxu0 0.0
        %1121 = vmatpush2.xpose.msra.mxu0 0.0
        %1122 = vmatprep.subr.mxu0 0.0
        %1123 = vmatpush2.xpose.msra.mxu0 0.0
        %1124 = vmatprep.subr.mxu0 0.0
        %1125 = vmatpush2.xpose.msra.mxu0 0.0
        %1126 = vmatprep.subr.mxu0 0.0
        %1127 = vmatpush2.xpose.msra.mxu0 0.0
        %1128 = vmatprep.mubr.f32.mxu0 0.0
        %1129 = vmatmul.mubr.f32.gmra.mxu0 %v1053
        %v1130 = vpop.f32.mrf.mxu0
        %v1131 = vadd.f32 %v962, %v1130
        %v1132 = vpop.f32.mrf.mxu0
        %1133 = vmatprep.mubr.f32.mxu0 0.0
        %1134 = vmatmul.mubr.f32.gmra.mxu0 %v1056
        %v1135 = vpop.f32.mrf.mxu0
        %v1136 = vadd.f32 %v963, %v1135
        %v1137 = vpop.f32.mrf.mxu0
        %1138 = vdwg.mxu0
        %v1140 = vsel %vm964, %v904, 0
        %v1143 = vsel %vm964, %v909, 0
        %v1146 = vsel %vm964, %v551, 0
        %v1149 = vsel %vm964, %v556, 0
        %1151 = vmatprep.subr.mxu0 0.0
        %1152 = vmatpush1.xpose.msra.mxu0 0.0
        %1153 = vmatprep.subr.mxu0 0.0
        %1154 = vmatpush1.xpose.msra.mxu0 0.0
        %1155 = vmatprep.subr.mxu0 0.0
        %1156 = vmatpush1.xpose.msra.mxu0 0.0
        %1157 = vmatprep.subr.mxu0 0.0
        %1158 = vmatpush1.xpose.msra.mxu0 0.0
        %1159 = vmatprep.subr.mxu0 0.0
        %1160 = vmatpush1.xpose.msra.mxu0 0.0
        %1161 = vmatprep.subr.mxu0 0.0
        %1162 = vmatpush1.xpose.msra.mxu0 0.0
        %1163 = vmatprep.subr.mxu0 0.0
        %1164 = vmatpush1.xpose.msra.mxu0 0.0
        %1165 = vmatprep.subr.mxu0 0.0
        %1166 = vmatpush1.xpose.msra.mxu0 0.0
        %1167 = vmatprep.subr.mxu0 0.0
        %1168 = vmatpush1.xpose.msra.mxu0 0.0
        %1169 = vmatprep.subr.mxu0 0.0
        %1170 = vmatpush1.xpose.msra.mxu0 0.0
        %1171 = vmatprep.subr.mxu0 0.0
        %1172 = vmatpush1.xpose.msra.mxu0 0.0
        %1173 = vmatprep.subr.mxu0 0.0
        %1174 = vmatpush1.xpose.msra.mxu0 0.0
        %1175 = vmatprep.subr.mxu0 0.0
        %1176 = vmatpush1.xpose.msra.mxu0 0.0
        %1177 = vmatprep.subr.mxu0 0.0
        %1178 = vmatpush1.xpose.msra.mxu0 0.0
        %1179 = vmatprep.subr.mxu0 0.0
        %1180 = vmatpush1.xpose.msra.mxu0 %v1149
        %1181 = vmatprep.subr.mxu0 0.0
        %1182 = vmatpush1.xpose.msra.mxu0 %v1146
        %1183 = vmatprep.subr.mxu0 0.0
        %1184 = vmatpush2.xpose.msra.mxu0 0.0
        %1185 = vmatprep.subr.mxu0 0.0
        %1186 = vmatpush2.xpose.msra.mxu0 0.0
        %1187 = vmatprep.subr.mxu0 0.0
        %1188 = vmatpush2.xpose.msra.mxu0 0.0
        %1189 = vmatprep.subr.mxu0 0.0
        %1190 = vmatpush2.xpose.msra.mxu0 0.0
        %1191 = vmatprep.subr.mxu0 0.0
        %1192 = vmatpush2.xpose.msra.mxu0 0.0
        %1193 = vmatprep.subr.mxu0 0.0
        %1194 = vmatpush2.xpose.msra.mxu0 0.0
        %1195 = vmatprep.subr.mxu0 0.0
        %1196 = vmatpush2.xpose.msra.mxu0 0.0
        %1197 = vmatprep.subr.mxu0 0.0
        %1198 = vmatpush2.xpose.msra.mxu0 0.0
        %1199 = vmatprep.subr.mxu0 0.0
        %1200 = vmatpush2.xpose.msra.mxu0 0.0
        %1201 = vmatprep.subr.mxu0 0.0
        %1202 = vmatpush2.xpose.msra.mxu0 0.0
        %1203 = vmatprep.subr.mxu0 0.0
        %1204 = vmatpush2.xpose.msra.mxu0 0.0
        %1205 = vmatprep.subr.mxu0 0.0
        %1206 = vmatpush2.xpose.msra.mxu0 0.0
        %1207 = vmatprep.subr.mxu0 0.0
        %1208 = vmatpush2.xpose.msra.mxu0 0.0
        %1209 = vmatprep.subr.mxu0 0.0
        %1210 = vmatpush2.xpose.msra.mxu0 0.0
        %1211 = vmatprep.subr.mxu0 0.0
        %1212 = vmatpush2.xpose.msra.mxu0 0.0
        %1213 = vmatprep.subr.mxu0 0.0
        %1214 = vmatpush2.xpose.msra.mxu0 0.0
        %1215 = vmatprep.mubr.f32.mxu0 0.0
        %1216 = vmatmul.mubr.f32.gmra.mxu0 %v1140
        %v1217 = vpop.f32.mrf.mxu0
        %v1218 = vadd.f32 %v962, %v1217
        %v1219 = vpop.f32.mrf.mxu0
        %1220 = vmatprep.mubr.f32.mxu0 0.0
        %1221 = vmatmul.mubr.f32.gmra.mxu0 %v1143
        %v1222 = vpop.f32.mrf.mxu0
        %v1223 = vadd.f32 %v963, %v1222
        %v1224 = vpop.f32.mrf.mxu0
        %1225 = vdwg.mxu0
        %v1227 = vsel %vm964, %v914, 0
        %v1230 = vsel %vm964, %v919, 0
        %v1233 = vsel %vm964, %v561, 0
        %v1236 = vsel %vm964, %v566, 0
        %1238 = vmatprep.subr.mxu0 0.0
        %1239 = vmatpush1.xpose.msra.mxu0 0.0
        %1240 = vmatprep.subr.mxu0 0.0
        %1241 = vmatpush1.xpose.msra.mxu0 0.0
        %1242 = vmatprep.subr.mxu0 0.0
        %1243 = vmatpush1.xpose.msra.mxu0 0.0
        %1244 = vmatprep.subr.mxu0 0.0
        %1245 = vmatpush1.xpose.msra.mxu0 0.0
        %1246 = vmatprep.subr.mxu0 0.0
        %1247 = vmatpush1.xpose.msra.mxu0 0.0
        %1248 = vmatprep.subr.mxu0 0.0
        %1249 = vmatpush1.xpose.msra.mxu0 0.0
        %1250 = vmatprep.subr.mxu0 0.0
        %1251 = vmatpush1.xpose.msra.mxu0 0.0
        %1252 = vmatprep.subr.mxu0 0.0
        %1253 = vmatpush1.xpose.msra.mxu0 0.0
        %1254 = vmatprep.subr.mxu0 0.0
        %1255 = vmatpush1.xpose.msra.mxu0 0.0
        %1256 = vmatprep.subr.mxu0 0.0
        %1257 = vmatpush1.xpose.msra.mxu0 0.0
        %1258 = vmatprep.subr.mxu0 0.0
        %1259 = vmatpush1.xpose.msra.mxu0 0.0
        %1260 = vmatprep.subr.mxu0 0.0
        %1261 = vmatpush1.xpose.msra.mxu0 0.0
        %1262 = vmatprep.subr.mxu0 0.0
        %1263 = vmatpush1.xpose.msra.mxu0 0.0
        %1264 = vmatprep.subr.mxu0 0.0
        %1265 = vmatpush1.xpose.msra.mxu0 0.0
        %1266 = vmatprep.subr.mxu0 0.0
        %1267 = vmatpush1.xpose.msra.mxu0 %v1236
        %1268 = vmatprep.subr.mxu0 0.0
        %1269 = vmatpush1.xpose.msra.mxu0 %v1233
        %1270 = vmatprep.subr.mxu0 0.0
        %1271 = vmatpush2.xpose.msra.mxu0 0.0
        %1272 = vmatprep.subr.mxu0 0.0
        %1273 = vmatpush2.xpose.msra.mxu0 0.0
        %1274 = vmatprep.subr.mxu0 0.0
        %1275 = vmatpush2.xpose.msra.mxu0 0.0
        %1276 = vmatprep.subr.mxu0 0.0
        %1277 = vmatpush2.xpose.msra.mxu0 0.0
        %1278 = vmatprep.subr.mxu0 0.0
        %1279 = vmatpush2.xpose.msra.mxu0 0.0
        %1280 = vmatprep.subr.mxu0 0.0
        %1281 = vmatpush2.xpose.msra.mxu0 0.0
        %1282 = vmatprep.subr.mxu0 0.0
        %1283 = vmatpush2.xpose.msra.mxu0 0.0
        %1284 = vmatprep.subr.mxu0 0.0
        %1285 = vmatpush2.xpose.msra.mxu0 0.0
        %1286 = vmatprep.subr.mxu0 0.0
        %1287 = vmatpush2.xpose.msra.mxu0 0.0
        %1288 = vmatprep.subr.mxu0 0.0
        %1289 = vmatpush2.xpose.msra.mxu0 0.0
        %1290 = vmatprep.subr.mxu0 0.0
        %1291 = vmatpush2.xpose.msra.mxu0 0.0
        %1292 = vmatprep.subr.mxu0 0.0
        %1293 = vmatpush2.xpose.msra.mxu0 0.0
        %1294 = vmatprep.subr.mxu0 0.0
        %1295 = vmatpush2.xpose.msra.mxu0 0.0
        %1296 = vmatprep.subr.mxu0 0.0
        %1297 = vmatpush2.xpose.msra.mxu0 0.0
        %1298 = vmatprep.subr.mxu0 0.0
        %1299 = vmatpush2.xpose.msra.mxu0 0.0
        %1300 = vmatprep.subr.mxu0 0.0
        %1301 = vmatpush2.xpose.msra.mxu0 0.0
        %1302 = vmatprep.mubr.f32.mxu0 0.0
        %1303 = vmatmul.mubr.f32.gmra.mxu0 %v1227
        %v1304 = vpop.f32.mrf.mxu0
        %v1305 = vadd.f32 %v962, %v1304
        %v1306 = vpop.f32.mrf.mxu0
        %1307 = vmatprep.mubr.f32.mxu0 0.0
        %1308 = vmatmul.mubr.f32.gmra.mxu0 %v1230
        %v1309 = vpop.f32.mrf.mxu0
        %v1310 = vadd.f32 %v963, %v1309
        %v1311 = vpop.f32.mrf.mxu0
        %1312 = vdwg.mxu0
        %v1314 = vsel %vm964, %v924, 0
        %v1317 = vsel %vm964, %v929, 0
        %v1320 = vsel %vm964, %v571, 0
        %v1323 = vsel %vm964, %v576, 0
        %1325 = vmatprep.subr.mxu0 0.0
        %1326 = vmatpush1.xpose.msra.mxu0 0.0
        %1327 = vmatprep.subr.mxu0 0.0
        %1328 = vmatpush1.xpose.msra.mxu0 0.0
        %1329 = vmatprep.subr.mxu0 0.0
        %1330 = vmatpush1.xpose.msra.mxu0 0.0
        %1331 = vmatprep.subr.mxu0 0.0
        %1332 = vmatpush1.xpose.msra.mxu0 0.0
        %1333 = vmatprep.subr.mxu0 0.0
        %1334 = vmatpush1.xpose.msra.mxu0 0.0
        %1335 = vmatprep.subr.mxu0 0.0
        %1336 = vmatpush1.xpose.msra.mxu0 0.0
        %1337 = vmatprep.subr.mxu0 0.0
        %1338 = vmatpush1.xpose.msra.mxu0 0.0
        %1339 = vmatprep.subr.mxu0 0.0
        %1340 = vmatpush1.xpose.msra.mxu0 0.0
        %1341 = vmatprep.subr.mxu0 0.0
        %1342 = vmatpush1.xpose.msra.mxu0 0.0
        %1343 = vmatprep.subr.mxu0 0.0
        %1344 = vmatpush1.xpose.msra.mxu0 0.0
        %1345 = vmatprep.subr.mxu0 0.0
        %1346 = vmatpush1.xpose.msra.mxu0 0.0
        %1347 = vmatprep.subr.mxu0 0.0
        %1348 = vmatpush1.xpose.msra.mxu0 0.0
        %1349 = vmatprep.subr.mxu0 0.0
        %1350 = vmatpush1.xpose.msra.mxu0 0.0
        %1351 = vmatprep.subr.mxu0 0.0
        %1352 = vmatpush1.xpose.msra.mxu0 0.0
        %1353 = vmatprep.subr.mxu0 0.0
        %1354 = vmatpush1.xpose.msra.mxu0 %v1323
        %1355 = vmatprep.subr.mxu0 0.0
        %1356 = vmatpush1.xpose.msra.mxu0 %v1320
        %1357 = vmatprep.subr.mxu0 0.0
        %1358 = vmatpush2.xpose.msra.mxu0 0.0
        %1359 = vmatprep.subr.mxu0 0.0
        %1360 = vmatpush2.xpose.msra.mxu0 0.0
        %1361 = vmatprep.subr.mxu0 0.0
        %1362 = vmatpush2.xpose.msra.mxu0 0.0
        %1363 = vmatprep.subr.mxu0 0.0
        %1364 = vmatpush2.xpose.msra.mxu0 0.0
        %1365 = vmatprep.subr.mxu0 0.0
        %1366 = vmatpush2.xpose.msra.mxu0 0.0
        %1367 = vmatprep.subr.mxu0 0.0
        %1368 = vmatpush2.xpose.msra.mxu0 0.0
        %1369 = vmatprep.subr.mxu0 0.0
        %1370 = vmatpush2.xpose.msra.mxu0 0.0
        %1371 = vmatprep.subr.mxu0 0.0
        %1372 = vmatpush2.xpose.msra.mxu0 0.0
        %1373 = vmatprep.subr.mxu0 0.0
        %1374 = vmatpush2.xpose.msra.mxu0 0.0
        %1375 = vmatprep.subr.mxu0 0.0
        %1376 = vmatpush2.xpose.msra.mxu0 0.0
        %1377 = vmatprep.subr.mxu0 0.0
        %1378 = vmatpush2.xpose.msra.mxu0 0.0
        %1379 = vmatprep.subr.mxu0 0.0
        %1380 = vmatpush2.xpose.msra.mxu0 0.0
        %1381 = vmatprep.subr.mxu0 0.0
        %1382 = vmatpush2.xpose.msra.mxu0 0.0
        %1383 = vmatprep.subr.mxu0 0.0
        %1384 = vmatpush2.xpose.msra.mxu0 0.0
        %1385 = vmatprep.subr.mxu0 0.0
        %1386 = vmatpush2.xpose.msra.mxu0 0.0
        %1387 = vmatprep.subr.mxu0 0.0
        %1388 = vmatpush2.xpose.msra.mxu0 0.0
        %1389 = vmatprep.mubr.f32.mxu0 0.0
        %1390 = vmatmul.mubr.f32.gmra.mxu0 %v1314
        %v1391 = vpop.f32.mrf.mxu0
        %v1392 = vadd.f32 %v962, %v1391
        %v1393 = vpop.f32.mrf.mxu0
        %1394 = vmatprep.mubr.f32.mxu0 0.0
        %1395 = vmatmul.mubr.f32.gmra.mxu0 %v1317
        %v1396 = vpop.f32.mrf.mxu0
        %v1397 = vadd.f32 %v963, %v1396
        %v1398 = vpop.f32.mrf.mxu0
        %1399 = vdwg.mxu0
        %v1401 = vsel %vm964, %v934, 0
        %v1404 = vsel %vm964, %v939, 0
        %v1407 = vsel %vm964, %v581, 0
        %v1410 = vsel %vm964, %v586, 0
        %1412 = vmatprep.subr.mxu0 0.0
        %1413 = vmatpush1.xpose.msra.mxu0 0.0
        %1414 = vmatprep.subr.mxu0 0.0
        %1415 = vmatpush1.xpose.msra.mxu0 0.0
        %1416 = vmatprep.subr.mxu0 0.0
        %1417 = vmatpush1.xpose.msra.mxu0 0.0
        %1418 = vmatprep.subr.mxu0 0.0
        %1419 = vmatpush1.xpose.msra.mxu0 0.0
        %1420 = vmatprep.subr.mxu0 0.0
        %1421 = vmatpush1.xpose.msra.mxu0 0.0
        %1422 = vmatprep.subr.mxu0 0.0
        %1423 = vmatpush1.xpose.msra.mxu0 0.0
        %1424 = vmatprep.subr.mxu0 0.0
        %1425 = vmatpush1.xpose.msra.mxu0 0.0
        %1426 = vmatprep.subr.mxu0 0.0
        %1427 = vmatpush1.xpose.msra.mxu0 0.0
        %1428 = vmatprep.subr.mxu0 0.0
        %1429 = vmatpush1.xpose.msra.mxu0 0.0
        %1430 = vmatprep.subr.mxu0 0.0
        %1431 = vmatpush1.xpose.msra.mxu0 0.0
        %1432 = vmatprep.subr.mxu0 0.0
        %1433 = vmatpush1.xpose.msra.mxu0 0.0
        %1434 = vmatprep.subr.mxu0 0.0
        %1435 = vmatpush1.xpose.msra.mxu0 0.0
        %1436 = vmatprep.subr.mxu0 0.0
        %1437 = vmatpush1.xpose.msra.mxu0 0.0
        %1438 = vmatprep.subr.mxu0 0.0
        %1439 = vmatpush1.xpose.msra.mxu0 0.0
        %1440 = vmatprep.subr.mxu0 0.0
        %1441 = vmatpush1.xpose.msra.mxu0 %v1410
        %1442 = vmatprep.subr.mxu0 0.0
        %1443 = vmatpush1.xpose.msra.mxu0 %v1407
        %1444 = vmatprep.subr.mxu0 0.0
        %1445 = vmatpush2.xpose.msra.mxu0 0.0
        %1446 = vmatprep.subr.mxu0 0.0
        %1447 = vmatpush2.xpose.msra.mxu0 0.0
        %1448 = vmatprep.subr.mxu0 0.0
        %1449 = vmatpush2.xpose.msra.mxu0 0.0
        %1450 = vmatprep.subr.mxu0 0.0
        %1451 = vmatpush2.xpose.msra.mxu0 0.0
        %1452 = vmatprep.subr.mxu0 0.0
        %1453 = vmatpush2.xpose.msra.mxu0 0.0
        %1454 = vmatprep.subr.mxu0 0.0
        %1455 = vmatpush2.xpose.msra.mxu0 0.0
        %1456 = vmatprep.subr.mxu0 0.0
        %1457 = vmatpush2.xpose.msra.mxu0 0.0
        %1458 = vmatprep.subr.mxu0 0.0
        %1459 = vmatpush2.xpose.msra.mxu0 0.0
        %1460 = vmatprep.subr.mxu0 0.0
        %1461 = vmatpush2.xpose.msra.mxu0 0.0
        %1462 = vmatprep.subr.mxu0 0.0
        %1463 = vmatpush2.xpose.msra.mxu0 0.0
        %1464 = vmatprep.subr.mxu0 0.0
        %1465 = vmatpush2.xpose.msra.mxu0 0.0
        %1466 = vmatprep.subr.mxu0 0.0
        %1467 = vmatpush2.xpose.msra.mxu0 0.0
        %1468 = vmatprep.subr.mxu0 0.0
        %1469 = vmatpush2.xpose.msra.mxu0 0.0
        %1470 = vmatprep.subr.mxu0 0.0
        %1471 = vmatpush2.xpose.msra.mxu0 0.0
        %1472 = vmatprep.subr.mxu0 0.0
        %1473 = vmatpush2.xpose.msra.mxu0 0.0
        %1474 = vmatprep.subr.mxu0 0.0
        %1475 = vmatpush2.xpose.msra.mxu0 0.0
        %1476 = vmatprep.mubr.f32.mxu0 0.0
        %1477 = vmatmul.mubr.f32.gmra.mxu0 %v1401
        %v1478 = vpop.f32.mrf.mxu0
        %v1479 = vadd.f32 %v962, %v1478
        %v1480 = vpop.f32.mrf.mxu0
        %1481 = vmatprep.mubr.f32.mxu0 0.0
        %1482 = vmatmul.mubr.f32.gmra.mxu0 %v1404
        %v1483 = vpop.f32.mrf.mxu0
        %v1484 = vadd.f32 %v963, %v1483
        %v1485 = vpop.f32.mrf.mxu0
        %1486 = vdwg.mxu0
        %v1488 = vsel %vm964, %v944, 0
        %v1491 = vsel %vm964, %v949, 0
        %v1494 = vsel %vm964, %v591, 0
        %v1497 = vsel %vm964, %v596, 0
        %1499 = vmatprep.subr.mxu0 0.0
        %1500 = vmatpush1.xpose.msra.mxu0 0.0
        %1501 = vmatprep.subr.mxu0 0.0
        %1502 = vmatpush1.xpose.msra.mxu0 0.0
        %1503 = vmatprep.subr.mxu0 0.0
        %1504 = vmatpush1.xpose.msra.mxu0 0.0
        %1505 = vmatprep.subr.mxu0 0.0
        %1506 = vmatpush1.xpose.msra.mxu0 0.0
        %1507 = vmatprep.subr.mxu0 0.0
        %1508 = vmatpush1.xpose.msra.mxu0 0.0
        %1509 = vmatprep.subr.mxu0 0.0
        %1510 = vmatpush1.xpose.msra.mxu0 0.0
        %1511 = vmatprep.subr.mxu0 0.0
        %1512 = vmatpush1.xpose.msra.mxu0 0.0
        %1513 = vmatprep.subr.mxu0 0.0
        %1514 = vmatpush1.xpose.msra.mxu0 0.0
        %1515 = vmatprep.subr.mxu0 0.0
        %1516 = vmatpush1.xpose.msra.mxu0 0.0
        %1517 = vmatprep.subr.mxu0 0.0
        %1518 = vmatpush1.xpose.msra.mxu0 0.0
        %1519 = vmatprep.subr.mxu0 0.0
        %1520 = vmatpush1.xpose.msra.mxu0 0.0
        %1521 = vmatprep.subr.mxu0 0.0
        %1522 = vmatpush1.xpose.msra.mxu0 0.0
        %1523 = vmatprep.subr.mxu0 0.0
        %1524 = vmatpush1.xpose.msra.mxu0 0.0
        %1525 = vmatprep.subr.mxu0 0.0
        %1526 = vmatpush1.xpose.msra.mxu0 0.0
        %1527 = vmatprep.subr.mxu0 0.0
        %1528 = vmatpush1.xpose.msra.mxu0 %v1497
        %1529 = vmatprep.subr.mxu0 0.0
        %1530 = vmatpush1.xpose.msra.mxu0 %v1494
        %1531 = vmatprep.subr.mxu0 0.0
        %1532 = vmatpush2.xpose.msra.mxu0 0.0
        %1533 = vmatprep.subr.mxu0 0.0
        %1534 = vmatpush2.xpose.msra.mxu0 0.0
        %1535 = vmatprep.subr.mxu0 0.0
        %1536 = vmatpush2.xpose.msra.mxu0 0.0
        %1537 = vmatprep.subr.mxu0 0.0
        %1538 = vmatpush2.xpose.msra.mxu0 0.0
        %1539 = vmatprep.subr.mxu0 0.0
        %1540 = vmatpush2.xpose.msra.mxu0 0.0
        %1541 = vmatprep.subr.mxu0 0.0
        %1542 = vmatpush2.xpose.msra.mxu0 0.0
        %1543 = vmatprep.subr.mxu0 0.0
        %1544 = vmatpush2.xpose.msra.mxu0 0.0
        %1545 = vmatprep.subr.mxu0 0.0
        %1546 = vmatpush2.xpose.msra.mxu0 0.0
        %1547 = vmatprep.subr.mxu0 0.0
        %1548 = vmatpush2.xpose.msra.mxu0 0.0
        %1549 = vmatprep.subr.mxu0 0.0
        %1550 = vmatpush2.xpose.msra.mxu0 0.0
        %1551 = vmatprep.subr.mxu0 0.0
        %1552 = vmatpush2.xpose.msra.mxu0 0.0
        %1553 = vmatprep.subr.mxu0 0.0
        %1554 = vmatpush2.xpose.msra.mxu0 0.0
        %1555 = vmatprep.subr.mxu0 0.0
        %1556 = vmatpush2.xpose.msra.mxu0 0.0
        %1557 = vmatprep.subr.mxu0 0.0
        %1558 = vmatpush2.xpose.msra.mxu0 0.0
        %1559 = vmatprep.subr.mxu0 0.0
        %1560 = vmatpush2.xpose.msra.mxu0 0.0
        %1561 = vmatprep.subr.mxu0 0.0
        %1562 = vmatpush2.xpose.msra.mxu0 0.0
        %1563 = vmatprep.mubr.f32.mxu0 0.0
        %1564 = vmatmul.mubr.f32.gmra.mxu0 %v1488
        %v1565 = vpop.f32.mrf.mxu0
        %v1566 = vadd.f32 %v962, %v1565
        %v1567 = vpop.f32.mrf.mxu0
        %1568 = vmatprep.mubr.f32.mxu0 0.0
        %1569 = vmatmul.mubr.f32.gmra.mxu0 %v1491
        %v1570 = vpop.f32.mrf.mxu0
        %v1571 = vadd.f32 %v963, %v1570
        %v1572 = vpop.f32.mrf.mxu0
        %1573 = vdwg.mxu0
        %v1575 = vsel %vm964, %v954, 0
        %v1578 = vsel %vm964, %v959, 0
        %v1581 = vsel %vm964, %v601, 0
        %v1584 = vsel %vm964, %v606, 0
        %1586 = vmatprep.subr.mxu0 0.0
        %1587 = vmatpush1.xpose.msra.mxu0 0.0
        %1588 = vmatprep.subr.mxu0 0.0
        %1589 = vmatpush1.xpose.msra.mxu0 0.0
        %1590 = vmatprep.subr.mxu0 0.0
        %1591 = vmatpush1.xpose.msra.mxu0 0.0
        %1592 = vmatprep.subr.mxu0 0.0
        %1593 = vmatpush1.xpose.msra.mxu0 0.0
        %1594 = vmatprep.subr.mxu0 0.0
        %1595 = vmatpush1.xpose.msra.mxu0 0.0
        %1596 = vmatprep.subr.mxu0 0.0
        %1597 = vmatpush1.xpose.msra.mxu0 0.0
        %1598 = vmatprep.subr.mxu0 0.0
        %1599 = vmatpush1.xpose.msra.mxu0 0.0
        %1600 = vmatprep.subr.mxu0 0.0
        %1601 = vmatpush1.xpose.msra.mxu0 0.0
        %1602 = vmatprep.subr.mxu0 0.0
        %1603 = vmatpush1.xpose.msra.mxu0 0.0
        %1604 = vmatprep.subr.mxu0 0.0
        %1605 = vmatpush1.xpose.msra.mxu0 0.0
        %1606 = vmatprep.subr.mxu0 0.0
        %1607 = vmatpush1.xpose.msra.mxu0 0.0
        %1608 = vmatprep.subr.mxu0 0.0
        %1609 = vmatpush1.xpose.msra.mxu0 0.0
        %1610 = vmatprep.subr.mxu0 0.0
        %1611 = vmatpush1.xpose.msra.mxu0 0.0
        %1612 = vmatprep.subr.mxu0 0.0
        %1613 = vmatpush1.xpose.msra.mxu0 0.0
        %1614 = vmatprep.subr.mxu0 0.0
        %1615 = vmatpush1.xpose.msra.mxu0 %v1584
        %1616 = vmatprep.subr.mxu0 0.0
        %1617 = vmatpush1.xpose.msra.mxu0 %v1581
        %1618 = vmatprep.subr.mxu0 0.0
        %1619 = vmatpush2.xpose.msra.mxu0 0.0
        %1620 = vmatprep.subr.mxu0 0.0
        %1621 = vmatpush2.xpose.msra.mxu0 0.0
        %1622 = vmatprep.subr.mxu0 0.0
        %1623 = vmatpush2.xpose.msra.mxu0 0.0
        %1624 = vmatprep.subr.mxu0 0.0
        %1625 = vmatpush2.xpose.msra.mxu0 0.0
        %1626 = vmatprep.subr.mxu0 0.0
        %1627 = vmatpush2.xpose.msra.mxu0 0.0
        %1628 = vmatprep.subr.mxu0 0.0
        %1629 = vmatpush2.xpose.msra.mxu0 0.0
        %1630 = vmatprep.subr.mxu0 0.0
        %1631 = vmatpush2.xpose.msra.mxu0 0.0
        %1632 = vmatprep.subr.mxu0 0.0
        %1633 = vmatpush2.xpose.msra.mxu0 0.0
        %1634 = vmatprep.subr.mxu0 0.0
        %1635 = vmatpush2.xpose.msra.mxu0 0.0
        %1636 = vmatprep.subr.mxu0 0.0
        %1637 = vmatpush2.xpose.msra.mxu0 0.0
        %1638 = vmatprep.subr.mxu0 0.0
        %1639 = vmatpush2.xpose.msra.mxu0 0.0
        %1640 = vmatprep.subr.mxu0 0.0
        %1641 = vmatpush2.xpose.msra.mxu0 0.0
        %1642 = vmatprep.subr.mxu0 0.0
        %1643 = vmatpush2.xpose.msra.mxu0 0.0
        %1644 = vmatprep.subr.mxu0 0.0
        %1645 = vmatpush2.xpose.msra.mxu0 0.0
        %1646 = vmatprep.subr.mxu0 0.0
        %1647 = vmatpush2.xpose.msra.mxu0 0.0
        %1648 = vmatprep.subr.mxu0 0.0
        %1649 = vmatpush2.xpose.msra.mxu0 0.0
        %1650 = vmatprep.mubr.f32.mxu0 0.0
        %1651 = vmatmul.mubr.f32.gmra.mxu0 %v1575
        %v1652 = vpop.f32.mrf.mxu0
        %v1653 = vadd.f32 %v962, %v1652
        %v1654 = vpop.f32.mrf.mxu0
        %1655 = vmatprep.mubr.f32.mxu0 0.0
        %1656 = vmatmul.mubr.f32.gmra.mxu0 %v1578
        %v1657 = vpop.f32.mrf.mxu0
        %v1658 = vadd.f32 %v963, %v1657
        %v1659 = vpop.f32.mrf.mxu0
        %1660 = vdwg.mxu0
        %vm1661 = vcmask 130048
        %v1662 = vsel %vm1661, %v1044, -inf
        %1663 = vmax.xlane.f32.xlu0 %v1662
        %v1664 = vpop.xlane.xlu0 %1663
        %v1665 = vsel %vm1661, %v1049, -inf
        %1666 = vmax.xlane.f32.xlu0 %v1665
        %v1667 = vpop.xlane.xlu0 %1666
        %v1668 = vsel %vm1661, %v1131, -inf
        %1669 = vmax.xlane.f32.xlu0 %v1668
        %v1670 = vpop.xlane.xlu0 %1669
        %v1671 = vsel %vm1661, %v1136, -inf
        %1672 = vmax.xlane.f32.xlu0 %v1671
        %v1673 = vpop.xlane.xlu0 %1672
        %v1674 = vsel %vm1661, %v1218, -inf
        %1675 = vmax.xlane.f32.xlu0 %v1674
        %v1676 = vpop.xlane.xlu0 %1675
        %v1677 = vsel %vm1661, %v1223, -inf
        %1678 = vmax.xlane.f32.xlu0 %v1677
        %v1679 = vpop.xlane.xlu0 %1678
        %v1680 = vsel %vm1661, %v1305, -inf
        %1681 = vmax.xlane.f32.xlu0 %v1680
        %v1682 = vpop.xlane.xlu0 %1681
        %v1683 = vsel %vm1661, %v1310, -inf
        %1684 = vmax.xlane.f32.xlu0 %v1683
        %v1685 = vpop.xlane.xlu0 %1684
        %v1686 = vsel %vm1661, %v1392, -inf
        %1687 = vmax.xlane.f32.xlu0 %v1686
        %v1688 = vpop.xlane.xlu0 %1687
        %v1689 = vsel %vm1661, %v1397, -inf
        %1690 = vmax.xlane.f32.xlu0 %v1689
        %v1691 = vpop.xlane.xlu0 %1690
        %v1692 = vsel %vm1661, %v1479, -inf
        %1693 = vmax.xlane.f32.xlu0 %v1692
        %v1694 = vpop.xlane.xlu0 %1693
        %v1695 = vsel %vm1661, %v1484, -inf
        %1696 = vmax.xlane.f32.xlu0 %v1695
        %v1697 = vpop.xlane.xlu0 %1696
        %v1698 = vsel %vm1661, %v1566, -inf
        %1699 = vmax.xlane.f32.xlu0 %v1698
        %v1700 = vpop.xlane.xlu0 %1699
        %v1701 = vsel %vm1661, %v1571, -inf
        %1702 = vmax.xlane.f32.xlu0 %v1701
        %v1703 = vpop.xlane.xlu0 %1702
        %v1704 = vsel %vm1661, %v1653, -inf
        %1705 = vmax.xlane.f32.xlu0 %v1704
        %v1706 = vpop.xlane.xlu0 %1705
        %v1707 = vsel %vm1661, %v1658, -inf
        %1708 = vmax.xlane.f32.xlu0 %v1707
        %v1709 = vpop.xlane.xlu0 %1708
        %v1710 = vsub.f32 %v1044, %v1664
        %v1711 = vsub.f32 %v1049, %v1667
        %v1712 = vsub.f32 %v1131, %v1670
        %v1713 = vsub.f32 %v1136, %v1673
        %v1714 = vsub.f32 %v1218, %v1676
        %v1715 = vsub.f32 %v1223, %v1679
        %v1716 = vsub.f32 %v1305, %v1682
        %v1717 = vsub.f32 %v1310, %v1685
        %v1718 = vsub.f32 %v1392, %v1688
        %v1719 = vsub.f32 %v1397, %v1691
        %v1720 = vsub.f32 %v1479, %v1694
        %v1721 = vsub.f32 %v1484, %v1697
        %v1722 = vsub.f32 %v1566, %v1700
        %v1723 = vsub.f32 %v1571, %v1703
        %v1724 = vsub.f32 %v1653, %v1706
        %v1725 = vsub.f32 %v1658, %v1709
        %v1726 = vmul.f32 %v1710, 1.442695
        %v1727 = vpow.pop %v1726
        %v1728 = vmul.f32 %v1711, 1.442695
        %v1729 = vpow.pop %v1728
        %v1730 = vmul.f32 %v1712, 1.442695
        %v1731 = vpow.pop %v1730
        %v1732 = vmul.f32 %v1713, 1.442695
        %v1733 = vpow.pop %v1732
        %v1734 = vmul.f32 %v1714, 1.442695
        %v1735 = vpow.pop %v1734
        %v1736 = vmul.f32 %v1715, 1.442695
        %v1737 = vpow.pop %v1736
        %v1738 = vmul.f32 %v1716, 1.442695
        %v1739 = vpow.pop %v1738
        %v1740 = vmul.f32 %v1717, 1.442695
        %v1741 = vpow.pop %v1740
        %v1742 = vmul.f32 %v1718, 1.442695
        %v1743 = vpow.pop %v1742
        %v1744 = vmul.f32 %v1719, 1.442695
        %v1745 = vpow.pop %v1744
        %v1746 = vmul.f32 %v1720, 1.442695
        %v1747 = vpow.pop %v1746
        %v1748 = vmul.f32 %v1721, 1.442695
        %v1749 = vpow.pop %v1748
        %v1750 = vmul.f32 %v1722, 1.442695
        %v1751 = vpow.pop %v1750
        %v1752 = vmul.f32 %v1723, 1.442695
        %v1753 = vpow.pop %v1752
        %v1754 = vmul.f32 %v1724, 1.442695
        %v1755 = vpow.pop %v1754
        %v1756 = vmul.f32 %v1725, 1.442695
        %v1757 = vpow.pop %v1756
        %v1758 = vsel %vm1661, %v1727, 0.0
        %1759 = vadd.xlane.f32.xlu0 %v1758
        %v1760 = vpop.xlane.xlu0 %1759
        %v1761 = vsel %vm1661, %v1729, 0.0
        %1762 = vadd.xlane.f32.xlu0 %v1761
        %v1763 = vpop.xlane.xlu0 %1762
        %v1764 = vsel %vm1661, %v1731, 0.0
        %1765 = vadd.xlane.f32.xlu0 %v1764
        %v1766 = vpop.xlane.xlu0 %1765
        %v1767 = vsel %vm1661, %v1733, 0.0
        %1768 = vadd.xlane.f32.xlu0 %v1767
        %v1769 = vpop.xlane.xlu0 %1768
        %v1770 = vsel %vm1661, %v1735, 0.0
        %1771 = vadd.xlane.f32.xlu0 %v1770
        %v1772 = vpop.xlane.xlu0 %1771
        %v1773 = vsel %vm1661, %v1737, 0.0
        %1774 = vadd.xlane.f32.xlu0 %v1773
        %v1775 = vpop.xlane.xlu0 %1774
        %v1776 = vsel %vm1661, %v1739, 0.0
        %1777 = vadd.xlane.f32.xlu0 %v1776
        %v1778 = vpop.xlane.xlu0 %1777
        %v1779 = vsel %vm1661, %v1741, 0.0
        %1780 = vadd.xlane.f32.xlu0 %v1779
        %v1781 = vpop.xlane.xlu0 %1780
        %v1782 = vsel %vm1661, %v1743, 0.0
        %1783 = vadd.xlane.f32.xlu0 %v1782
        %v1784 = vpop.xlane.xlu0 %1783
        %v1785 = vsel %vm1661, %v1745, 0.0
        %1786 = vadd.xlane.f32.xlu0 %v1785
        %v1787 = vpop.xlane.xlu0 %1786
        %v1788 = vsel %vm1661, %v1747, 0.0
        %1789 = vadd.xlane.f32.xlu0 %v1788
        %v1790 = vpop.xlane.xlu0 %1789
        %v1791 = vsel %vm1661, %v1749, 0.0
        %1792 = vadd.xlane.f32.xlu0 %v1791
        %v1793 = vpop.xlane.xlu0 %1792
        %v1794 = vsel %vm1661, %v1751, 0.0
        %1795 = vadd.xlane.f32.xlu0 %v1794
        %v1796 = vpop.xlane.xlu0 %1795
        %v1797 = vsel %vm1661, %v1753, 0.0
        %1798 = vadd.xlane.f32.xlu0 %v1797
        %v1799 = vpop.xlane.xlu0 %1798
        %v1800 = vsel %vm1661, %v1755, 0.0
        %1801 = vadd.xlane.f32.xlu0 %v1800
        %v1802 = vpop.xlane.xlu0 %1801
        %v1803 = vsel %vm1661, %v1757, 0.0
        %1804 = vadd.xlane.f32.xlu0 %v1803
        %v1805 = vpop.xlane.xlu0 %1804
        %v1806 = vrcp.pop %v1760
        %v1807 = vrcp.pop %v1763
        %v1808 = vrcp.pop %v1766
        %v1809 = vrcp.pop %v1769
        %v1810 = vrcp.pop %v1772
        %v1811 = vrcp.pop %v1775
        %v1812 = vrcp.pop %v1778
        %v1813 = vrcp.pop %v1781
        %v1814 = vrcp.pop %v1784
        %v1815 = vrcp.pop %v1787
        %v1816 = vrcp.pop %v1790
        %v1817 = vrcp.pop %v1793
        %v1818 = vrcp.pop %v1796
        %v1819 = vrcp.pop %v1799
        %v1820 = vrcp.pop %v1802
        %v1821 = vrcp.pop %v1805
        %v1822 = vmul.f32 %v1727, %v1806
        %v1823 = vmul.f32 %v1729, %v1807
        %v1824 = vmul.f32 %v1731, %v1808
        %v1825 = vmul.f32 %v1733, %v1809
        %v1826 = vmul.f32 %v1735, %v1810
        %v1827 = vmul.f32 %v1737, %v1811
        %v1828 = vmul.f32 %v1739, %v1812
        %v1829 = vmul.f32 %v1741, %v1813
        %v1830 = vmul.f32 %v1743, %v1814
        %v1831 = vmul.f32 %v1745, %v1815
        %v1832 = vmul.f32 %v1747, %v1816
        %v1833 = vmul.f32 %v1749, %v1817
        %v1834 = vmul.f32 %v1751, %v1818
        %v1835 = vmul.f32 %v1753, %v1819
        %v1836 = vmul.f32 %v1755, %v1820
        %v1837 = vmul.f32 %v1757, %v1821
        %v1839 = vsel %vm1661, %v1822, 0
        %v1842 = vsel %vm1661, %v1823, 0
        %1844 = vmatprep.subr.mxu0 0.0
        %1845 = vmatpush1.msra.mxu0 0.0
        %1846 = vmatprep.subr.mxu0 0.0
        %1847 = vmatpush1.msra.mxu0 0.0
        %1848 = vmatprep.subr.mxu0 0.0
        %1849 = vmatpush1.msra.mxu0 0.0
        %1850 = vmatprep.subr.mxu0 0.0
        %1851 = vmatpush1.msra.mxu0 0.0
        %1852 = vmatprep.subr.mxu0 0.0
        %1853 = vmatpush1.msra.mxu0 0.0
        %1854 = vmatprep.subr.mxu0 0.0
        %1855 = vmatpush1.msra.mxu0 0.0
        %1856 = vmatprep.subr.mxu0 0.0
        %1857 = vmatpush1.msra.mxu0 0.0
        %1858 = vmatprep.subr.mxu0 0.0
        %1859 = vmatpush1.msra.mxu0 0.0
        %1860 = vmatprep.subr.mxu0 0.0
        %1861 = vmatpush1.msra.mxu0 0.0
        %1862 = vmatprep.subr.mxu0 0.0
        %1863 = vmatpush1.msra.mxu0 0.0
        %1864 = vmatprep.subr.mxu0 0.0
        %1865 = vmatpush1.msra.mxu0 0.0
        %1866 = vmatprep.subr.mxu0 0.0
        %1867 = vmatpush1.msra.mxu0 0.0
        %1868 = vmatprep.subr.mxu0 0.0
        %1869 = vmatpush1.msra.mxu0 0.0
        %1870 = vmatprep.subr.mxu0 0.0
        %1871 = vmatpush1.msra.mxu0 0.0
        %1872 = vmatprep.subr.mxu0 0.0
        %1873 = vmatpush1.msra.mxu0 %v685
        %1874 = vmatprep.subr.mxu0 0.0
        %1875 = vmatpush1.msra.mxu0 %v680
        %1876 = vmatprep.subr.mxu0 0.0
        %1877 = vmatpush2.msra.mxu0 0.0
        %1878 = vmatprep.subr.mxu0 0.0
        %1879 = vmatpush2.msra.mxu0 0.0
        %1880 = vmatprep.subr.mxu0 0.0
        %1881 = vmatpush2.msra.mxu0 0.0
        %1882 = vmatprep.subr.mxu0 0.0
        %1883 = vmatpush2.msra.mxu0 0.0
        %1884 = vmatprep.subr.mxu0 0.0
        %1885 = vmatpush2.msra.mxu0 0.0
        %1886 = vmatprep.subr.mxu0 0.0
        %1887 = vmatpush2.msra.mxu0 0.0
        %1888 = vmatprep.subr.mxu0 0.0
        %1889 = vmatpush2.msra.mxu0 0.0
        %1890 = vmatprep.subr.mxu0 0.0
        %1891 = vmatpush2.msra.mxu0 0.0
        %1892 = vmatprep.subr.mxu0 0.0
        %1893 = vmatpush2.msra.mxu0 0.0
        %1894 = vmatprep.subr.mxu0 0.0
        %1895 = vmatpush2.msra.mxu0 0.0
        %1896 = vmatprep.subr.mxu0 0.0
        %1897 = vmatpush2.msra.mxu0 0.0
        %1898 = vmatprep.subr.mxu0 0.0
        %1899 = vmatpush2.msra.mxu0 0.0
        %1900 = vmatprep.subr.mxu0 0.0
        %1901 = vmatpush2.msra.mxu0 0.0
        %1902 = vmatprep.subr.mxu0 0.0
        %1903 = vmatpush2.msra.mxu0 0.0
        %1904 = vmatprep.subr.mxu0 0.0
        %1905 = vmatpush2.msra.mxu0 0.0
        %1906 = vmatprep.subr.mxu0 0.0
        %1907 = vmatpush2.msra.mxu0 0.0
        %1908 = vmatprep.mubr.f32.mxu0 0.0
        %1909 = vmatmul.mubr.f32.gmra.mxu0 %v1839
        %v1910 = vpop.f32.mrf.mxu0
        %v1911 = vadd.f32 0.0, %v1910
        %v1912 = vpop.f32.mrf.mxu0
        %1913 = vmatprep.mubr.f32.mxu0 0.0
        %1914 = vmatmul.mubr.f32.gmra.mxu0 %v1842
        %v1915 = vpop.f32.mrf.mxu0
        %v1916 = vadd.f32 0.0, %v1915
        %v1917 = vpop.f32.mrf.mxu0
        %1918 = vdwg.mxu0
        %v1920 = vsel %vm1661, %v1824, 0
        %v1923 = vsel %vm1661, %v1825, 0
        %1925 = vmatprep.subr.mxu0 0.0
        %1926 = vmatpush1.msra.mxu0 0.0
        %1927 = vmatprep.subr.mxu0 0.0
        %1928 = vmatpush1.msra.mxu0 0.0
        %1929 = vmatprep.subr.mxu0 0.0
        %1930 = vmatpush1.msra.mxu0 0.0
        %1931 = vmatprep.subr.mxu0 0.0
        %1932 = vmatpush1.msra.mxu0 0.0
        %1933 = vmatprep.subr.mxu0 0.0
        %1934 = vmatpush1.msra.mxu0 0.0
        %1935 = vmatprep.subr.mxu0 0.0
        %1936 = vmatpush1.msra.mxu0 0.0
        %1937 = vmatprep.subr.mxu0 0.0
        %1938 = vmatpush1.msra.mxu0 0.0
        %1939 = vmatprep.subr.mxu0 0.0
        %1940 = vmatpush1.msra.mxu0 0.0
        %1941 = vmatprep.subr.mxu0 0.0
        %1942 = vmatpush1.msra.mxu0 0.0
        %1943 = vmatprep.subr.mxu0 0.0
        %1944 = vmatpush1.msra.mxu0 0.0
        %1945 = vmatprep.subr.mxu0 0.0
        %1946 = vmatpush1.msra.mxu0 0.0
        %1947 = vmatprep.subr.mxu0 0.0
        %1948 = vmatpush1.msra.mxu0 0.0
        %1949 = vmatprep.subr.mxu0 0.0
        %1950 = vmatpush1.msra.mxu0 0.0
        %1951 = vmatprep.subr.mxu0 0.0
        %1952 = vmatpush1.msra.mxu0 0.0
        %1953 = vmatprep.subr.mxu0 0.0
        %1954 = vmatpush1.msra.mxu0 %v695
        %1955 = vmatprep.subr.mxu0 0.0
        %1956 = vmatpush1.msra.mxu0 %v690
        %1957 = vmatprep.subr.mxu0 0.0
        %1958 = vmatpush2.msra.mxu0 0.0
        %1959 = vmatprep.subr.mxu0 0.0
        %1960 = vmatpush2.msra.mxu0 0.0
        %1961 = vmatprep.subr.mxu0 0.0
        %1962 = vmatpush2.msra.mxu0 0.0
        %1963 = vmatprep.subr.mxu0 0.0
        %1964 = vmatpush2.msra.mxu0 0.0
        %1965 = vmatprep.subr.mxu0 0.0
        %1966 = vmatpush2.msra.mxu0 0.0
        %1967 = vmatprep.subr.mxu0 0.0
        %1968 = vmatpush2.msra.mxu0 0.0
        %1969 = vmatprep.subr.mxu0 0.0
        %1970 = vmatpush2.msra.mxu0 0.0
        %1971 = vmatprep.subr.mxu0 0.0
        %1972 = vmatpush2.msra.mxu0 0.0
        %1973 = vmatprep.subr.mxu0 0.0
        %1974 = vmatpush2.msra.mxu0 0.0
        %1975 = vmatprep.subr.mxu0 0.0
        %1976 = vmatpush2.msra.mxu0 0.0
        %1977 = vmatprep.subr.mxu0 0.0
        %1978 = vmatpush2.msra.mxu0 0.0
        %1979 = vmatprep.subr.mxu0 0.0
        %1980 = vmatpush2.msra.mxu0 0.0
        %1981 = vmatprep.subr.mxu0 0.0
        %1982 = vmatpush2.msra.mxu0 0.0
        %1983 = vmatprep.subr.mxu0 0.0
        %1984 = vmatpush2.msra.mxu0 0.0
        %1985 = vmatprep.subr.mxu0 0.0
        %1986 = vmatpush2.msra.mxu0 0.0
        %1987 = vmatprep.subr.mxu0 0.0
        %1988 = vmatpush2.msra.mxu0 0.0
        %1989 = vmatprep.mubr.f32.mxu0 0.0
        %1990 = vmatmul.mubr.f32.gmra.mxu0 %v1920
        %v1991 = vpop.f32.mrf.mxu0
        %v1992 = vadd.f32 0.0, %v1991
        %v1993 = vpop.f32.mrf.mxu0
        %1994 = vmatprep.mubr.f32.mxu0 0.0
        %1995 = vmatmul.mubr.f32.gmra.mxu0 %v1923
        %v1996 = vpop.f32.mrf.mxu0
        %v1997 = vadd.f32 0.0, %v1996
        %v1998 = vpop.f32.mrf.mxu0
        %1999 = vdwg.mxu0
        %v2001 = vsel %vm1661, %v1826, 0
        %v2004 = vsel %vm1661, %v1827, 0
        %2006 = vmatprep.subr.mxu0 0.0
        %2007 = vmatpush1.msra.mxu0 0.0
        %2008 = vmatprep.subr.mxu0 0.0
        %2009 = vmatpush1.msra.mxu0 0.0
        %2010 = vmatprep.subr.mxu0 0.0
        %2011 = vmatpush1.msra.mxu0 0.0
        %2012 = vmatprep.subr.mxu0 0.0
        %2013 = vmatpush1.msra.mxu0 0.0
        %2014 = vmatprep.subr.mxu0 0.0
        %2015 = vmatpush1.msra.mxu0 0.0
        %2016 = vmatprep.subr.mxu0 0.0
        %2017 = vmatpush1.msra.mxu0 0.0
        %2018 = vmatprep.subr.mxu0 0.0
        %2019 = vmatpush1.msra.mxu0 0.0
        %2020 = vmatprep.subr.mxu0 0.0
        %2021 = vmatpush1.msra.mxu0 0.0
        %2022 = vmatprep.subr.mxu0 0.0
        %2023 = vmatpush1.msra.mxu0 0.0
        %2024 = vmatprep.subr.mxu0 0.0
        %2025 = vmatpush1.msra.mxu0 0.0
        %2026 = vmatprep.subr.mxu0 0.0
        %2027 = vmatpush1.msra.mxu0 0.0
        %2028 = vmatprep.subr.mxu0 0.0
        %2029 = vmatpush1.msra.mxu0 0.0
        %2030 = vmatprep.subr.mxu0 0.0
        %2031 = vmatpush1.msra.mxu0 0.0
        %2032 = vmatprep.subr.mxu0 0.0
        %2033 = vmatpush1.msra.mxu0 0.0
        %2034 = vmatprep.subr.mxu0 0.0
        %2035 = vmatpush1.msra.mxu0 %v705
        %2036 = vmatprep.subr.mxu0 0.0
        %2037 = vmatpush1.msra.mxu0 %v700
        %2038 = vmatprep.subr.mxu0 0.0
        %2039 = vmatpush2.msra.mxu0 0.0
        %2040 = vmatprep.subr.mxu0 0.0
        %2041 = vmatpush2.msra.mxu0 0.0
        %2042 = vmatprep.subr.mxu0 0.0
        %2043 = vmatpush2.msra.mxu0 0.0
        %2044 = vmatprep.subr.mxu0 0.0
        %2045 = vmatpush2.msra.mxu0 0.0
        %2046 = vmatprep.subr.mxu0 0.0
        %2047 = vmatpush2.msra.mxu0 0.0
        %2048 = vmatprep.subr.mxu0 0.0
        %2049 = vmatpush2.msra.mxu0 0.0
        %2050 = vmatprep.subr.mxu0 0.0
        %2051 = vmatpush2.msra.mxu0 0.0
        %2052 = vmatprep.subr.mxu0 0.0
        %2053 = vmatpush2.msra.mxu0 0.0
        %2054 = vmatprep.subr.mxu0 0.0
        %2055 = vmatpush2.msra.mxu0 0.0
        %2056 = vmatprep.subr.mxu0 0.0
        %2057 = vmatpush2.msra.mxu0 0.0
        %2058 = vmatprep.subr.mxu0 0.0
        %2059 = vmatpush2.msra.mxu0 0.0
        %2060 = vmatprep.subr.mxu0 0.0
        %2061 = vmatpush2.msra.mxu0 0.0
        %2062 = vmatprep.subr.mxu0 0.0
        %2063 = vmatpush2.msra.mxu0 0.0
        %2064 = vmatprep.subr.mxu0 0.0
        %2065 = vmatpush2.msra.mxu0 0.0
        %2066 = vmatprep.subr.mxu0 0.0
        %2067 = vmatpush2.msra.mxu0 0.0
        %2068 = vmatprep.subr.mxu0 0.0
        %2069 = vmatpush2.msra.mxu0 0.0
        %2070 = vmatprep.mubr.f32.mxu0 0.0
        %2071 = vmatmul.mubr.f32.gmra.mxu0 %v2001
        %v2072 = vpop.f32.mrf.mxu0
        %v2073 = vadd.f32 0.0, %v2072
        %v2074 = vpop.f32.mrf.mxu0
        %2075 = vmatprep.mubr.f32.mxu0 0.0
        %2076 = vmatmul.mubr.f32.gmra.mxu0 %v2004
        %v2077 = vpop.f32.mrf.mxu0
        %v2078 = vadd.f32 0.0, %v2077
        %v2079 = vpop.f32.mrf.mxu0
        %2080 = vdwg.mxu0
        %v2082 = vsel %vm1661, %v1828, 0
        %v2085 = vsel %vm1661, %v1829, 0
        %2087 = vmatprep.subr.mxu0 0.0
        %2088 = vmatpush1.msra.mxu0 0.0
        %2089 = vmatprep.subr.mxu0 0.0
        %2090 = vmatpush1.msra.mxu0 0.0
        %2091 = vmatprep.subr.mxu0 0.0
        %2092 = vmatpush1.msra.mxu0 0.0
        %2093 = vmatprep.subr.mxu0 0.0
        %2094 = vmatpush1.msra.mxu0 0.0
        %2095 = vmatprep.subr.mxu0 0.0
        %2096 = vmatpush1.msra.mxu0 0.0
        %2097 = vmatprep.subr.mxu0 0.0
        %2098 = vmatpush1.msra.mxu0 0.0
        %2099 = vmatprep.subr.mxu0 0.0
        %2100 = vmatpush1.msra.mxu0 0.0
        %2101 = vmatprep.subr.mxu0 0.0
        %2102 = vmatpush1.msra.mxu0 0.0
        %2103 = vmatprep.subr.mxu0 0.0
        %2104 = vmatpush1.msra.mxu0 0.0
        %2105 = vmatprep.subr.mxu0 0.0
        %2106 = vmatpush1.msra.mxu0 0.0
        %2107 = vmatprep.subr.mxu0 0.0
        %2108 = vmatpush1.msra.mxu0 0.0
        %2109 = vmatprep.subr.mxu0 0.0
        %2110 = vmatpush1.msra.mxu0 0.0
        %2111 = vmatprep.subr.mxu0 0.0
        %2112 = vmatpush1.msra.mxu0 0.0
        %2113 = vmatprep.subr.mxu0 0.0
        %2114 = vmatpush1.msra.mxu0 0.0
        %2115 = vmatprep.subr.mxu0 0.0
        %2116 = vmatpush1.msra.mxu0 %v715
        %2117 = vmatprep.subr.mxu0 0.0
        %2118 = vmatpush1.msra.mxu0 %v710
        %2119 = vmatprep.subr.mxu0 0.0
        %2120 = vmatpush2.msra.mxu0 0.0
        %2121 = vmatprep.subr.mxu0 0.0
        %2122 = vmatpush2.msra.mxu0 0.0
        %2123 = vmatprep.subr.mxu0 0.0
        %2124 = vmatpush2.msra.mxu0 0.0
        %2125 = vmatprep.subr.mxu0 0.0
        %2126 = vmatpush2.msra.mxu0 0.0
        %2127 = vmatprep.subr.mxu0 0.0
        %2128 = vmatpush2.msra.mxu0 0.0
        %2129 = vmatprep.subr.mxu0 0.0
        %2130 = vmatpush2.msra.mxu0 0.0
        %2131 = vmatprep.subr.mxu0 0.0
        %2132 = vmatpush2.msra.mxu0 0.0
        %2133 = vmatprep.subr.mxu0 0.0
        %2134 = vmatpush2.msra.mxu0 0.0
        %2135 = vmatprep.subr.mxu0 0.0
        %2136 = vmatpush2.msra.mxu0 0.0
        %2137 = vmatprep.subr.mxu0 0.0
        %2138 = vmatpush2.msra.mxu0 0.0
        %2139 = vmatprep.subr.mxu0 0.0
        %2140 = vmatpush2.msra.mxu0 0.0
        %2141 = vmatprep.subr.mxu0 0.0
        %2142 = vmatpush2.msra.mxu0 0.0
        %2143 = vmatprep.subr.mxu0 0.0
        %2144 = vmatpush2.msra.mxu0 0.0
        %2145 = vmatprep.subr.mxu0 0.0
        %2146 = vmatpush2.msra.mxu0 0.0
        %2147 = vmatprep.subr.mxu0 0.0
        %2148 = vmatpush2.msra.mxu0 0.0
        %2149 = vmatprep.subr.mxu0 0.0
        %2150 = vmatpush2.msra.mxu0 0.0
        %2151 = vmatprep.mubr.f32.mxu0 0.0
        %2152 = vmatmul.mubr.f32.gmra.mxu0 %v2082
        %v2153 = vpop.f32.mrf.mxu0
        %v2154 = vadd.f32 0.0, %v2153
        %v2155 = vpop.f32.mrf.mxu0
        %2156 = vmatprep.mubr.f32.mxu0 0.0
        %2157 = vmatmul.mubr.f32.gmra.mxu0 %v2085
        %v2158 = vpop.f32.mrf.mxu0
        %v2159 = vadd.f32 0.0, %v2158
        %v2160 = vpop.f32.mrf.mxu0
        %2161 = vdwg.mxu0
        %v2163 = vsel %vm1661, %v1830, 0
        %v2166 = vsel %vm1661, %v1831, 0
        %2168 = vmatprep.subr.mxu0 0.0
        %2169 = vmatpush1.msra.mxu0 0.0
        %2170 = vmatprep.subr.mxu0 0.0
        %2171 = vmatpush1.msra.mxu0 0.0
        %2172 = vmatprep.subr.mxu0 0.0
        %2173 = vmatpush1.msra.mxu0 0.0
        %2174 = vmatprep.subr.mxu0 0.0
        %2175 = vmatpush1.msra.mxu0 0.0
        %2176 = vmatprep.subr.mxu0 0.0
        %2177 = vmatpush1.msra.mxu0 0.0
        %2178 = vmatprep.subr.mxu0 0.0
        %2179 = vmatpush1.msra.mxu0 0.0
        %2180 = vmatprep.subr.mxu0 0.0
        %2181 = vmatpush1.msra.mxu0 0.0
        %2182 = vmatprep.subr.mxu0 0.0
        %2183 = vmatpush1.msra.mxu0 0.0
        %2184 = vmatprep.subr.mxu0 0.0
        %2185 = vmatpush1.msra.mxu0 0.0
        %2186 = vmatprep.subr.mxu0 0.0
        %2187 = vmatpush1.msra.mxu0 0.0
        %2188 = vmatprep.subr.mxu0 0.0
        %2189 = vmatpush1.msra.mxu0 0.0
        %2190 = vmatprep.subr.mxu0 0.0
        %2191 = vmatpush1.msra.mxu0 0.0
        %2192 = vmatprep.subr.mxu0 0.0
        %2193 = vmatpush1.msra.mxu0 0.0
        %2194 = vmatprep.subr.mxu0 0.0
        %2195 = vmatpush1.msra.mxu0 0.0
        %2196 = vmatprep.subr.mxu0 0.0
        %2197 = vmatpush1.msra.mxu0 %v725
        %2198 = vmatprep.subr.mxu0 0.0
        %2199 = vmatpush1.msra.mxu0 %v720
        %2200 = vmatprep.subr.mxu0 0.0
        %2201 = vmatpush2.msra.mxu0 0.0
        %2202 = vmatprep.subr.mxu0 0.0
        %2203 = vmatpush2.msra.mxu0 0.0
        %2204 = vmatprep.subr.mxu0 0.0
        %2205 = vmatpush2.msra.mxu0 0.0
        %2206 = vmatprep.subr.mxu0 0.0
        %2207 = vmatpush2.msra.mxu0 0.0
        %2208 = vmatprep.subr.mxu0 0.0
        %2209 = vmatpush2.msra.mxu0 0.0
        %2210 = vmatprep.subr.mxu0 0.0
        %2211 = vmatpush2.msra.mxu0 0.0
        %2212 = vmatprep.subr.mxu0 0.0
        %2213 = vmatpush2.msra.mxu0 0.0
        %2214 = vmatprep.subr.mxu0 0.0
        %2215 = vmatpush2.msra.mxu0 0.0
        %2216 = vmatprep.subr.mxu0 0.0
        %2217 = vmatpush2.msra.mxu0 0.0
        %2218 = vmatprep.subr.mxu0 0.0
        %2219 = vmatpush2.msra.mxu0 0.0
        %2220 = vmatprep.subr.mxu0 0.0
        %2221 = vmatpush2.msra.mxu0 0.0
        %2222 = vmatprep.subr.mxu0 0.0
        %2223 = vmatpush2.msra.mxu0 0.0
        %2224 = vmatprep.subr.mxu0 0.0
        %2225 = vmatpush2.msra.mxu0 0.0
        %2226 = vmatprep.subr.mxu0 0.0
        %2227 = vmatpush2.msra.mxu0 0.0
        %2228 = vmatprep.subr.mxu0 0.0
        %2229 = vmatpush2.msra.mxu0 0.0
        %2230 = vmatprep.subr.mxu0 0.0
        %2231 = vmatpush2.msra.mxu0 0.0
        %2232 = vmatprep.mubr.f32.mxu0 0.0
        %2233 = vmatmul.mubr.f32.gmra.mxu0 %v2163
        %v2234 = vpop.f32.mrf.mxu0
        %v2235 = vadd.f32 0.0, %v2234
        %v2236 = vpop.f32.mrf.mxu0
        %2237 = vmatprep.mubr.f32.mxu0 0.0
        %2238 = vmatmul.mubr.f32.gmra.mxu0 %v2166
        %v2239 = vpop.f32.mrf.mxu0
        %v2240 = vadd.f32 0.0, %v2239
        %v2241 = vpop.f32.mrf.mxu0
        %2242 = vdwg.mxu0
        %v2244 = vsel %vm1661, %v1832, 0
        %v2247 = vsel %vm1661, %v1833, 0
        %2249 = vmatprep.subr.mxu0 0.0
        %2250 = vmatpush1.msra.mxu0 0.0
        %2251 = vmatprep.subr.mxu0 0.0
        %2252 = vmatpush1.msra.mxu0 0.0
        %2253 = vmatprep.subr.mxu0 0.0
        %2254 = vmatpush1.msra.mxu0 0.0
        %2255 = vmatprep.subr.mxu0 0.0
        %2256 = vmatpush1.msra.mxu0 0.0
        %2257 = vmatprep.subr.mxu0 0.0
        %2258 = vmatpush1.msra.mxu0 0.0
        %2259 = vmatprep.subr.mxu0 0.0
        %2260 = vmatpush1.msra.mxu0 0.0
        %2261 = vmatprep.subr.mxu0 0.0
        %2262 = vmatpush1.msra.mxu0 0.0
        %2263 = vmatprep.subr.mxu0 0.0
        %2264 = vmatpush1.msra.mxu0 0.0
        %2265 = vmatprep.subr.mxu0 0.0
        %2266 = vmatpush1.msra.mxu0 0.0
        %2267 = vmatprep.subr.mxu0 0.0
        %2268 = vmatpush1.msra.mxu0 0.0
        %2269 = vmatprep.subr.mxu0 0.0
        %2270 = vmatpush1.msra.mxu0 0.0
        %2271 = vmatprep.subr.mxu0 0.0
        %2272 = vmatpush1.msra.mxu0 0.0
        %2273 = vmatprep.subr.mxu0 0.0
        %2274 = vmatpush1.msra.mxu0 0.0
        %2275 = vmatprep.subr.mxu0 0.0
        %2276 = vmatpush1.msra.mxu0 0.0
        %2277 = vmatprep.subr.mxu0 0.0
        %2278 = vmatpush1.msra.mxu0 %v735
        %2279 = vmatprep.subr.mxu0 0.0
        %2280 = vmatpush1.msra.mxu0 %v730
        %2281 = vmatprep.subr.mxu0 0.0
        %2282 = vmatpush2.msra.mxu0 0.0
        %2283 = vmatprep.subr.mxu0 0.0
        %2284 = vmatpush2.msra.mxu0 0.0
        %2285 = vmatprep.subr.mxu0 0.0
        %2286 = vmatpush2.msra.mxu0 0.0
        %2287 = vmatprep.subr.mxu0 0.0
        %2288 = vmatpush2.msra.mxu0 0.0
        %2289 = vmatprep.subr.mxu0 0.0
        %2290 = vmatpush2.msra.mxu0 0.0
        %2291 = vmatprep.subr.mxu0 0.0
        %2292 = vmatpush2.msra.mxu0 0.0
        %2293 = vmatprep.subr.mxu0 0.0
        %2294 = vmatpush2.msra.mxu0 0.0
        %2295 = vmatprep.subr.mxu0 0.0
        %2296 = vmatpush2.msra.mxu0 0.0
        %2297 = vmatprep.subr.mxu0 0.0
        %2298 = vmatpush2.msra.mxu0 0.0
        %2299 = vmatprep.subr.mxu0 0.0
        %2300 = vmatpush2.msra.mxu0 0.0
        %2301 = vmatprep.subr.mxu0 0.0
        %2302 = vmatpush2.msra.mxu0 0.0
        %2303 = vmatprep.subr.mxu0 0.0
        %2304 = vmatpush2.msra.mxu0 0.0
        %2305 = vmatprep.subr.mxu0 0.0
        %2306 = vmatpush2.msra.mxu0 0.0
        %2307 = vmatprep.subr.mxu0 0.0
        %2308 = vmatpush2.msra.mxu0 0.0
        %2309 = vmatprep.subr.mxu0 0.0
        %2310 = vmatpush2.msra.mxu0 0.0
        %2311 = vmatprep.subr.mxu0 0.0
        %2312 = vmatpush2.msra.mxu0 0.0
        %2313 = vmatprep.mubr.f32.mxu0 0.0
        %2314 = vmatmul.mubr.f32.gmra.mxu0 %v2244
        %v2315 = vpop.f32.mrf.mxu0
        %v2316 = vadd.f32 0.0, %v2315
        %v2317 = vpop.f32.mrf.mxu0
        %2318 = vmatprep.mubr.f32.mxu0 0.0
        %2319 = vmatmul.mubr.f32.gmra.mxu0 %v2247
        %v2320 = vpop.f32.mrf.mxu0
        %v2321 = vadd.f32 0.0, %v2320
        %v2322 = vpop.f32.mrf.mxu0
        %2323 = vdwg.mxu0
        %v2325 = vsel %vm1661, %v1834, 0
        %v2328 = vsel %vm1661, %v1835, 0
        %2330 = vmatprep.subr.mxu0 0.0
        %2331 = vmatpush1.msra.mxu0 0.0
        %2332 = vmatprep.subr.mxu0 0.0
        %2333 = vmatpush1.msra.mxu0 0.0
        %2334 = vmatprep.subr.mxu0 0.0
        %2335 = vmatpush1.msra.mxu0 0.0
        %2336 = vmatprep.subr.mxu0 0.0
        %2337 = vmatpush1.msra.mxu0 0.0
        %2338 = vmatprep.subr.mxu0 0.0
        %2339 = vmatpush1.msra.mxu0 0.0
        %2340 = vmatprep.subr.mxu0 0.0
        %2341 = vmatpush1.msra.mxu0 0.0
        %2342 = vmatprep.subr.mxu0 0.0
        %2343 = vmatpush1.msra.mxu0 0.0
        %2344 = vmatprep.subr.mxu0 0.0
        %2345 = vmatpush1.msra.mxu0 0.0
        %2346 = vmatprep.subr.mxu0 0.0
        %2347 = vmatpush1.msra.mxu0 0.0
        %2348 = vmatprep.subr.mxu0 0.0
        %2349 = vmatpush1.msra.mxu0 0.0
        %2350 = vmatprep.subr.mxu0 0.0
        %2351 = vmatpush1.msra.mxu0 0.0
        %2352 = vmatprep.subr.mxu0 0.0
        %2353 = vmatpush1.msra.mxu0 0.0
        %2354 = vmatprep.subr.mxu0 0.0
        %2355 = vmatpush1.msra.mxu0 0.0
        %2356 = vmatprep.subr.mxu0 0.0
        %2357 = vmatpush1.msra.mxu0 0.0
        %2358 = vmatprep.subr.mxu0 0.0
        %2359 = vmatpush1.msra.mxu0 %v745
        %2360 = vmatprep.subr.mxu0 0.0
        %2361 = vmatpush1.msra.mxu0 %v740
        %2362 = vmatprep.subr.mxu0 0.0
        %2363 = vmatpush2.msra.mxu0 0.0
        %2364 = vmatprep.subr.mxu0 0.0
        %2365 = vmatpush2.msra.mxu0 0.0
        %2366 = vmatprep.subr.mxu0 0.0
        %2367 = vmatpush2.msra.mxu0 0.0
        %2368 = vmatprep.subr.mxu0 0.0
        %2369 = vmatpush2.msra.mxu0 0.0
        %2370 = vmatprep.subr.mxu0 0.0
        %2371 = vmatpush2.msra.mxu0 0.0
        %2372 = vmatprep.subr.mxu0 0.0
        %2373 = vmatpush2.msra.mxu0 0.0
        %2374 = vmatprep.subr.mxu0 0.0
        %2375 = vmatpush2.msra.mxu0 0.0
        %2376 = vmatprep.subr.mxu0 0.0
        %2377 = vmatpush2.msra.mxu0 0.0
        %2378 = vmatprep.subr.mxu0 0.0
        %2379 = vmatpush2.msra.mxu0 0.0
        %2380 = vmatprep.subr.mxu0 0.0
        %2381 = vmatpush2.msra.mxu0 0.0
        %2382 = vmatprep.subr.mxu0 0.0
        %2383 = vmatpush2.msra.mxu0 0.0
        %2384 = vmatprep.subr.mxu0 0.0
        %2385 = vmatpush2.msra.mxu0 0.0
        %2386 = vmatprep.subr.mxu0 0.0
        %2387 = vmatpush2.msra.mxu0 0.0
        %2388 = vmatprep.subr.mxu0 0.0
        %2389 = vmatpush2.msra.mxu0 0.0
        %2390 = vmatprep.subr.mxu0 0.0
        %2391 = vmatpush2.msra.mxu0 0.0
        %2392 = vmatprep.subr.mxu0 0.0
        %2393 = vmatpush2.msra.mxu0 0.0
        %2394 = vmatprep.mubr.f32.mxu0 0.0
        %2395 = vmatmul.mubr.f32.gmra.mxu0 %v2325
        %v2396 = vpop.f32.mrf.mxu0
        %v2397 = vadd.f32 0.0, %v2396
        %v2398 = vpop.f32.mrf.mxu0
        %2399 = vmatprep.mubr.f32.mxu0 0.0
        %2400 = vmatmul.mubr.f32.gmra.mxu0 %v2328
        %v2401 = vpop.f32.mrf.mxu0
        %v2402 = vadd.f32 0.0, %v2401
        %v2403 = vpop.f32.mrf.mxu0
        %2404 = vdwg.mxu0
        %v2406 = vsel %vm1661, %v1836, 0
        %v2409 = vsel %vm1661, %v1837, 0
        %2411 = vmatprep.subr.mxu0 0.0
        %2412 = vmatpush1.msra.mxu0 0.0
        %2413 = vmatprep.subr.mxu0 0.0
        %2414 = vmatpush1.msra.mxu0 0.0
        %2415 = vmatprep.subr.mxu0 0.0
        %2416 = vmatpush1.msra.mxu0 0.0
        %2417 = vmatprep.subr.mxu0 0.0
        %2418 = vmatpush1.msra.mxu0 0.0
        %2419 = vmatprep.subr.mxu0 0.0
        %2420 = vmatpush1.msra.mxu0 0.0
        %2421 = vmatprep.subr.mxu0 0.0
        %2422 = vmatpush1.msra.mxu0 0.0
        %2423 = vmatprep.subr.mxu0 0.0
        %2424 = vmatpush1.msra.mxu0 0.0
        %2425 = vmatprep.subr.mxu0 0.0
        %2426 = vmatpush1.msra.mxu0 0.0
        %2427 = vmatprep.subr.mxu0 0.0
        %2428 = vmatpush1.msra.mxu0 0.0
        %2429 = vmatprep.subr.mxu0 0.0
        %2430 = vmatpush1.msra.mxu0 0.0
        %2431 = vmatprep.subr.mxu0 0.0
        %2432 = vmatpush1.msra.mxu0 0.0
        %2433 = vmatprep.subr.mxu0 0.0
        %2434 = vmatpush1.msra.mxu0 0.0
        %2435 = vmatprep.subr.mxu0 0.0
        %2436 = vmatpush1.msra.mxu0 0.0
        %2437 = vmatprep.subr.mxu0 0.0
        %2438 = vmatpush1.msra.mxu0 0.0
        %2439 = vmatprep.subr.mxu0 0.0
        %2440 = vmatpush1.msra.mxu0 %v755
        %2441 = vmatprep.subr.mxu0 0.0
        %2442 = vmatpush1.msra.mxu0 %v750
        %2443 = vmatprep.subr.mxu0 0.0
        %2444 = vmatpush2.msra.mxu0 0.0
        %2445 = vmatprep.subr.mxu0 0.0
        %2446 = vmatpush2.msra.mxu0 0.0
        %2447 = vmatprep.subr.mxu0 0.0
        %2448 = vmatpush2.msra.mxu0 0.0
        %2449 = vmatprep.subr.mxu0 0.0
        %2450 = vmatpush2.msra.mxu0 0.0
        %2451 = vmatprep.subr.mxu0 0.0
        %2452 = vmatpush2.msra.mxu0 0.0
        %2453 = vmatprep.subr.mxu0 0.0
        %2454 = vmatpush2.msra.mxu0 0.0
        %2455 = vmatprep.subr.mxu0 0.0
        %2456 = vmatpush2.msra.mxu0 0.0
        %2457 = vmatprep.subr.mxu0 0.0
        %2458 = vmatpush2.msra.mxu0 0.0
        %2459 = vmatprep.subr.mxu0 0.0
        %2460 = vmatpush2.msra.mxu0 0.0
        %2461 = vmatprep.subr.mxu0 0.0
        %2462 = vmatpush2.msra.mxu0 0.0
        %2463 = vmatprep.subr.mxu0 0.0
        %2464 = vmatpush2.msra.mxu0 0.0
        %2465 = vmatprep.subr.mxu0 0.0
        %2466 = vmatpush2.msra.mxu0 0.0
        %2467 = vmatprep.subr.mxu0 0.0
        %2468 = vmatpush2.msra.mxu0 0.0
        %2469 = vmatprep.subr.mxu0 0.0
        %2470 = vmatpush2.msra.mxu0 0.0
        %2471 = vmatprep.subr.mxu0 0.0
        %2472 = vmatpush2.msra.mxu0 0.0
        %2473 = vmatprep.subr.mxu0 0.0
        %2474 = vmatpush2.msra.mxu0 0.0
        %2475 = vmatprep.mubr.f32.mxu0 0.0
        %2476 = vmatmul.mubr.f32.gmra.mxu0 %v2406
        %v2477 = vpop.f32.mrf.mxu0
        %v2478 = vadd.f32 0.0, %v2477
        %v2479 = vpop.f32.mrf.mxu0
        %2480 = vmatprep.mubr.f32.mxu0 0.0
        %2481 = vmatmul.mubr.f32.gmra.mxu0 %v2409
        %v2482 = vpop.f32.mrf.mxu0
        %v2483 = vadd.f32 0.0, %v2482
        %v2484 = vpop.f32.mrf.mxu0
        %2485 = vdwg.mxu0
        %v2486 = vld [vmem:[%s6] sm:$0xff]
        %s2487 = scalar_lea.vmem %s2, 32
        %v2488 = vld [vmem:[%s2487] sm:$0xff]
        %v2489 = vld [vmem:[%s2487 + $0x8] sm:$0xff]
        %v2490 = vld [vmem:[%s2487 + $0x10] sm:$0xff]
        %v2491 = vld [vmem:[%s2487 + $0x18] sm:$0xff]
        %2492 = vmatprep.subr.mxu0 0.0
        %2493 = vmatpush1.msra.mxu0 0.0
        %2494 = vmatprep.subr.mxu0 0.0
        %2495 = vmatpush1.msra.mxu0 0.0
        %2496 = vmatprep.subr.mxu0 0.0
        %2497 = vmatpush1.msra.mxu0 0.0
        %2498 = vmatprep.subr.mxu0 0.0
        %2499 = vmatpush1.msra.mxu0 0.0
        %2500 = vmatprep.subr.mxu0 0.0
        %2501 = vmatpush1.msra.mxu0 0.0
        %2502 = vmatprep.subr.mxu0 0.0
        %2503 = vmatpush1.msra.mxu0 0.0
        %2504 = vmatprep.subr.mxu0 0.0
        %2505 = vmatpush1.msra.mxu0 0.0
        %2506 = vmatprep.subr.mxu0 0.0
        %2507 = vmatpush1.msra.mxu0 0.0
        %2508 = vmatprep.subr.mxu0 0.0
        %2509 = vmatpush1.msra.mxu0 0.0
        %2510 = vmatprep.subr.mxu0 0.0
        %2511 = vmatpush1.msra.mxu0 0.0
        %2512 = vmatprep.subr.mxu0 0.0
        %2513 = vmatpush1.msra.mxu0 0.0
        %2514 = vmatprep.subr.mxu0 0.0
        %2515 = vmatpush1.msra.mxu0 0.0
        %2516 = vmatprep.subr.mxu0 0.0
        %2517 = vmatpush1.msra.mxu0 %v2491
        %2518 = vmatprep.subr.mxu0 0.0
        %2519 = vmatpush1.msra.mxu0 %v2490
        %2520 = vmatprep.subr.mxu0 0.0
        %2521 = vmatpush1.msra.mxu0 %v2489
        %2522 = vmatprep.subr.mxu0 0.0
        %2523 = vmatpush1.msra.mxu0 %v2488
        %2524 = vmatprep.subr.mxu0 0.0
        %2525 = vmatpush2.msra.mxu0 0.0
        %2526 = vmatprep.subr.mxu0 0.0
        %2527 = vmatpush2.msra.mxu0 0.0
        %2528 = vmatprep.subr.mxu0 0.0
        %2529 = vmatpush2.msra.mxu0 0.0
        %2530 = vmatprep.subr.mxu0 0.0
        %2531 = vmatpush2.msra.mxu0 0.0
        %2532 = vmatprep.subr.mxu0 0.0
        %2533 = vmatpush2.msra.mxu0 0.0
        %2534 = vmatprep.subr.mxu0 0.0
        %2535 = vmatpush2.msra.mxu0 0.0
        %2536 = vmatprep.subr.mxu0 0.0
        %2537 = vmatpush2.msra.mxu0 0.0
        %2538 = vmatprep.subr.mxu0 0.0
        %2539 = vmatpush2.msra.mxu0 0.0
        %2540 = vmatprep.subr.mxu0 0.0
        %2541 = vmatpush2.msra.mxu0 0.0
        %2542 = vmatprep.subr.mxu0 0.0
        %2543 = vmatpush2.msra.mxu0 0.0
        %2544 = vmatprep.subr.mxu0 0.0
        %2545 = vmatpush2.msra.mxu0 0.0
        %2546 = vmatprep.subr.mxu0 0.0
        %2547 = vmatpush2.msra.mxu0 0.0
        %2548 = vmatprep.subr.mxu0 0.0
        %2549 = vmatpush2.msra.mxu0 0.0
        %2550 = vmatprep.subr.mxu0 0.0
        %2551 = vmatpush2.msra.mxu0 0.0
        %2552 = vmatprep.subr.mxu0 0.0
        %2553 = vmatpush2.msra.mxu0 0.0
        %2554 = vmatprep.subr.mxu0 0.0
        %2555 = vmatpush2.msra.mxu0 0.0
        %2556 = vmatprep.mubr.f32.mxu0 0.0
        %2557 = vmatmul.mubr.f32.gmra.mxu0 %v417
        %v2558 = vpop.f32.mrf.mxu0
        %v2559 = vadd.f32 0.0, %v2558
        %v2560 = vpop.f32.mrf.mxu0
        %2561 = vmatprep.mubr.f32.mxu0 0.0
        %2562 = vmatmul.mubr.f32.gmra.mxu0 %v420
        %v2563 = vpop.f32.mrf.mxu0
        %v2564 = vadd.f32 0.0, %v2563
        %v2565 = vpop.f32.mrf.mxu0
        %2566 = vmatprep.mubr.f32.mxu0 0.0
        %2567 = vmatmul.mubr.f32.gmra.mxu0 %v423
        %v2568 = vpop.f32.mrf.mxu0
        %v2569 = vadd.f32 0.0, %v2568
        %v2570 = vpop.f32.mrf.mxu0
        %2571 = vmatprep.mubr.f32.mxu0 0.0
        %2572 = vmatmul.mubr.f32.gmra.mxu0 %v426
        %v2573 = vpop.f32.mrf.mxu0
        %v2574 = vadd.f32 0.0, %v2573
        %v2575 = vpop.f32.mrf.mxu0
        %2576 = vmatprep.mubr.f32.mxu0 0.0
        %2577 = vmatmul.mubr.f32.gmra.mxu0 %v429
        %v2578 = vpop.f32.mrf.mxu0
        %v2579 = vadd.f32 0.0, %v2578
        %v2580 = vpop.f32.mrf.mxu0
        %2581 = vmatprep.mubr.f32.mxu0 0.0
        %2582 = vmatmul.mubr.f32.gmra.mxu0 %v432
        %v2583 = vpop.f32.mrf.mxu0
        %v2584 = vadd.f32 0.0, %v2583
        %v2585 = vpop.f32.mrf.mxu0
        %2586 = vmatprep.mubr.f32.mxu0 0.0
        %2587 = vmatmul.mubr.f32.gmra.mxu0 %v435
        %v2588 = vpop.f32.mrf.mxu0
        %v2589 = vadd.f32 0.0, %v2588
        %v2590 = vpop.f32.mrf.mxu0
        %2591 = vmatprep.mubr.f32.mxu0 0.0
        %2592 = vmatmul.mubr.f32.gmra.mxu0 %v438
        %v2593 = vpop.f32.mrf.mxu0
        %v2594 = vadd.f32 0.0, %v2593
        %v2595 = vpop.f32.mrf.mxu0
        %2596 = vmatprep.mubr.f32.mxu0 0.0
        %2597 = vmatmul.mubr.f32.gmra.mxu0 %v441
        %v2598 = vpop.f32.mrf.mxu0
        %v2599 = vadd.f32 0.0, %v2598
        %v2600 = vpop.f32.mrf.mxu0
        %2601 = vmatprep.mubr.f32.mxu0 0.0
        %2602 = vmatmul.mubr.f32.gmra.mxu0 %v444
        %v2603 = vpop.f32.mrf.mxu0
        %v2604 = vadd.f32 0.0, %v2603
        %v2605 = vpop.f32.mrf.mxu0
        %2606 = vmatprep.mubr.f32.mxu0 0.0
        %2607 = vmatmul.mubr.f32.gmra.mxu0 %v447
        %v2608 = vpop.f32.mrf.mxu0
        %v2609 = vadd.f32 0.0, %v2608
        %v2610 = vpop.f32.mrf.mxu0
        %2611 = vmatprep.mubr.f32.mxu0 0.0
        %2612 = vmatmul.mubr.f32.gmra.mxu0 %v450
        %v2613 = vpop.f32.mrf.mxu0
        %v2614 = vadd.f32 0.0, %v2613
        %v2615 = vpop.f32.mrf.mxu0
        %2616 = vmatprep.mubr.f32.mxu0 0.0
        %2617 = vmatmul.mubr.f32.gmra.mxu0 %v453
        %v2618 = vpop.f32.mrf.mxu0
        %v2619 = vadd.f32 0.0, %v2618
        %v2620 = vpop.f32.mrf.mxu0
        %2621 = vmatprep.mubr.f32.mxu0 0.0
        %2622 = vmatmul.mubr.f32.gmra.mxu0 %v456
        %v2623 = vpop.f32.mrf.mxu0
        %v2624 = vadd.f32 0.0, %v2623
        %v2625 = vpop.f32.mrf.mxu0
        %2626 = vmatprep.mubr.f32.mxu0 0.0
        %2627 = vmatmul.mubr.f32.gmra.mxu0 %v459
        %v2628 = vpop.f32.mrf.mxu0
        %v2629 = vadd.f32 0.0, %v2628
        %v2630 = vpop.f32.mrf.mxu0
        %2631 = vmatprep.mubr.f32.mxu0 0.0
        %2632 = vmatmul.mubr.f32.gmra.mxu0 %v462
        %v2633 = vpop.f32.mrf.mxu0
        %v2634 = vadd.f32 0.0, %v2633
        %v2635 = vpop.f32.mrf.mxu0
        %2636 = vdwg.mxu0
        %s2637 = scalar_lea.vmem %s3, 32
        %v2638 = vld [vmem:[%s2637] sm:$0xff]
        %v2639 = vld [vmem:[%s2637 + $0x8] sm:$0xff]
        %v2640 = vld [vmem:[%s2637 + $0x10] sm:$0xff]
        %v2641 = vld [vmem:[%s2637 + $0x18] sm:$0xff]
        %2642 = vmatprep.subr.mxu0 0.0
        %2643 = vmatpush1.msra.mxu0 0.0
        %2644 = vmatprep.subr.mxu0 0.0
        %2645 = vmatpush1.msra.mxu0 0.0
        %2646 = vmatprep.subr.mxu0 0.0
        %2647 = vmatpush1.msra.mxu0 0.0
        %2648 = vmatprep.subr.mxu0 0.0
        %2649 = vmatpush1.msra.mxu0 0.0
        %2650 = vmatprep.subr.mxu0 0.0
        %2651 = vmatpush1.msra.mxu0 0.0
        %2652 = vmatprep.subr.mxu0 0.0
        %2653 = vmatpush1.msra.mxu0 0.0
        %2654 = vmatprep.subr.mxu0 0.0
        %2655 = vmatpush1.msra.mxu0 0.0
        %2656 = vmatprep.subr.mxu0 0.0
        %2657 = vmatpush1.msra.mxu0 0.0
        %2658 = vmatprep.subr.mxu0 0.0
        %2659 = vmatpush1.msra.mxu0 0.0
        %2660 = vmatprep.subr.mxu0 0.0
        %2661 = vmatpush1.msra.mxu0 0.0
        %2662 = vmatprep.subr.mxu0 0.0
        %2663 = vmatpush1.msra.mxu0 0.0
        %2664 = vmatprep.subr.mxu0 0.0
        %2665 = vmatpush1.msra.mxu0 0.0
        %2666 = vmatprep.subr.mxu0 0.0
        %2667 = vmatpush1.msra.mxu0 %v2641
        %2668 = vmatprep.subr.mxu0 0.0
        %2669 = vmatpush1.msra.mxu0 %v2640
        %2670 = vmatprep.subr.mxu0 0.0
        %2671 = vmatpush1.msra.mxu0 %v2639
        %2672 = vmatprep.subr.mxu0 0.0
        %2673 = vmatpush1.msra.mxu0 %v2638
        %2674 = vmatprep.subr.mxu0 0.0
        %2675 = vmatpush2.msra.mxu0 0.0
        %2676 = vmatprep.subr.mxu0 0.0
        %2677 = vmatpush2.msra.mxu0 0.0
        %2678 = vmatprep.subr.mxu0 0.0
        %2679 = vmatpush2.msra.mxu0 0.0
        %2680 = vmatprep.subr.mxu0 0.0
        %2681 = vmatpush2.msra.mxu0 0.0
        %2682 = vmatprep.subr.mxu0 0.0
        %2683 = vmatpush2.msra.mxu0 0.0
        %2684 = vmatprep.subr.mxu0 0.0
        %2685 = vmatpush2.msra.mxu0 0.0
        %2686 = vmatprep.subr.mxu0 0.0
        %2687 = vmatpush2.msra.mxu0 0.0
        %2688 = vmatprep.subr.mxu0 0.0
        %2689 = vmatpush2.msra.mxu0 0.0
        %2690 = vmatprep.subr.mxu0 0.0
        %2691 = vmatpush2.msra.mxu0 0.0
        %2692 = vmatprep.subr.mxu0 0.0
        %2693 = vmatpush2.msra.mxu0 0.0
        %2694 = vmatprep.subr.mxu0 0.0
        %2695 = vmatpush2.msra.mxu0 0.0
        %2696 = vmatprep.subr.mxu0 0.0
        %2697 = vmatpush2.msra.mxu0 0.0
        %2698 = vmatprep.subr.mxu0 0.0
        %2699 = vmatpush2.msra.mxu0 0.0
        %2700 = vmatprep.subr.mxu0 0.0
        %2701 = vmatpush2.msra.mxu0 0.0
        %2702 = vmatprep.subr.mxu0 0.0
        %2703 = vmatpush2.msra.mxu0 0.0
        %2704 = vmatprep.subr.mxu0 0.0
        %2705 = vmatpush2.msra.mxu0 0.0
        %2706 = vmatprep.mubr.f32.mxu0 0.0
        %2707 = vmatmul.mubr.f32.gmra.mxu0 %v417
        %v2708 = vpop.f32.mrf.mxu0
        %v2709 = vadd.f32 0.0, %v2708
        %v2710 = vpop.f32.mrf.mxu0
        %2711 = vmatprep.mubr.f32.mxu0 0.0
        %2712 = vmatmul.mubr.f32.gmra.mxu0 %v420
        %v2713 = vpop.f32.mrf.mxu0
        %v2714 = vadd.f32 0.0, %v2713
        %v2715 = vpop.f32.mrf.mxu0
        %2716 = vmatprep.mubr.f32.mxu0 0.0
        %2717 = vmatmul.mubr.f32.gmra.mxu0 %v423
        %v2718 = vpop.f32.mrf.mxu0
        %v2719 = vadd.f32 0.0, %v2718
        %v2720 = vpop.f32.mrf.mxu0
        %2721 = vmatprep.mubr.f32.mxu0 0.0
        %2722 = vmatmul.mubr.f32.gmra.mxu0 %v426
        %v2723 = vpop.f32.mrf.mxu0
        %v2724 = vadd.f32 0.0, %v2723
        %v2725 = vpop.f32.mrf.mxu0
        %2726 = vmatprep.mubr.f32.mxu0 0.0
        %2727 = vmatmul.mubr.f32.gmra.mxu0 %v429
        %v2728 = vpop.f32.mrf.mxu0
        %v2729 = vadd.f32 0.0, %v2728
        %v2730 = vpop.f32.mrf.mxu0
        %2731 = vmatprep.mubr.f32.mxu0 0.0
        %2732 = vmatmul.mubr.f32.gmra.mxu0 %v432
        %v2733 = vpop.f32.mrf.mxu0
        %v2734 = vadd.f32 0.0, %v2733
        %v2735 = vpop.f32.mrf.mxu0
        %2736 = vmatprep.mubr.f32.mxu0 0.0
        %2737 = vmatmul.mubr.f32.gmra.mxu0 %v435
        %v2738 = vpop.f32.mrf.mxu0
        %v2739 = vadd.f32 0.0, %v2738
        %v2740 = vpop.f32.mrf.mxu0
        %2741 = vmatprep.mubr.f32.mxu0 0.0
        %2742 = vmatmul.mubr.f32.gmra.mxu0 %v438
        %v2743 = vpop.f32.mrf.mxu0
        %v2744 = vadd.f32 0.0, %v2743
        %v2745 = vpop.f32.mrf.mxu0
        %2746 = vmatprep.mubr.f32.mxu0 0.0
        %2747 = vmatmul.mubr.f32.gmra.mxu0 %v441
        %v2748 = vpop.f32.mrf.mxu0
        %v2749 = vadd.f32 0.0, %v2748
        %v2750 = vpop.f32.mrf.mxu0
        %2751 = vmatprep.mubr.f32.mxu0 0.0
        %2752 = vmatmul.mubr.f32.gmra.mxu0 %v444
        %v2753 = vpop.f32.mrf.mxu0
        %v2754 = vadd.f32 0.0, %v2753
        %v2755 = vpop.f32.mrf.mxu0
        %2756 = vmatprep.mubr.f32.mxu0 0.0
        %2757 = vmatmul.mubr.f32.gmra.mxu0 %v447
        %v2758 = vpop.f32.mrf.mxu0
        %v2759 = vadd.f32 0.0, %v2758
        %v2760 = vpop.f32.mrf.mxu0
        %2761 = vmatprep.mubr.f32.mxu0 0.0
        %2762 = vmatmul.mubr.f32.gmra.mxu0 %v450
        %v2763 = vpop.f32.mrf.mxu0
        %v2764 = vadd.f32 0.0, %v2763
        %v2765 = vpop.f32.mrf.mxu0
        %2766 = vmatprep.mubr.f32.mxu0 0.0
        %2767 = vmatmul.mubr.f32.gmra.mxu0 %v453
        %v2768 = vpop.f32.mrf.mxu0
        %v2769 = vadd.f32 0.0, %v2768
        %v2770 = vpop.f32.mrf.mxu0
        %2771 = vmatprep.mubr.f32.mxu0 0.0
        %2772 = vmatmul.mubr.f32.gmra.mxu0 %v456
        %v2773 = vpop.f32.mrf.mxu0
        %v2774 = vadd.f32 0.0, %v2773
        %v2775 = vpop.f32.mrf.mxu0
        %2776 = vmatprep.mubr.f32.mxu0 0.0
        %2777 = vmatmul.mubr.f32.gmra.mxu0 %v459
        %v2778 = vpop.f32.mrf.mxu0
        %v2779 = vadd.f32 0.0, %v2778
        %v2780 = vpop.f32.mrf.mxu0
        %2781 = vmatprep.mubr.f32.mxu0 0.0
        %2782 = vmatmul.mubr.f32.gmra.mxu0 %v462
        %v2783 = vpop.f32.mrf.mxu0
        %v2784 = vadd.f32 0.0, %v2783
        %v2785 = vpop.f32.mrf.mxu0
        %2786 = vdwg.mxu0
        %s2787 = scalar_lea.vmem %s4, 32
        %v2788 = vld [vmem:[%s2787] sm:$0xff]
        %v2789 = vld [vmem:[%s2787 + $0x8] sm:$0xff]
        %v2790 = vld [vmem:[%s2787 + $0x10] sm:$0xff]
        %v2791 = vld [vmem:[%s2787 + $0x18] sm:$0xff]
        %s2792 = scalar_lea.vmem %s5, 1
        %v2793 = vld [vmem:[%s2792] sm:$0x1]
        %v2795 = vlaneseq
        %v2796 = vshrl.u32 %v2795, 7
        %v2797 = vsub.s32 0, %v2796
        %v2798 = vrot.slane %v2793, %v2797
        %2800 = vmatprep.subr.mxu0 0.0
        %2801 = vmatpush1.msra.mxu0 0.0
        %2802 = vmatprep.subr.mxu0 0.0
        %2803 = vmatpush1.msra.mxu0 0.0
        %2804 = vmatprep.subr.mxu0 0.0
        %2805 = vmatpush1.msra.mxu0 0.0
        %2806 = vmatprep.subr.mxu0 0.0
        %2807 = vmatpush1.msra.mxu0 0.0
        %2808 = vmatprep.subr.mxu0 0.0
        %2809 = vmatpush1.msra.mxu0 0.0
        %2810 = vmatprep.subr.mxu0 0.0
        %2811 = vmatpush1.msra.mxu0 0.0
        %2812 = vmatprep.subr.mxu0 0.0
        %2813 = vmatpush1.msra.mxu0 0.0
        %2814 = vmatprep.subr.mxu0 0.0
        %2815 = vmatpush1.msra.mxu0 0.0
        %2816 = vmatprep.subr.mxu0 0.0
        %2817 = vmatpush1.msra.mxu0 0.0
        %2818 = vmatprep.subr.mxu0 0.0
        %2819 = vmatpush1.msra.mxu0 0.0
        %2820 = vmatprep.subr.mxu0 0.0
        %2821 = vmatpush1.msra.mxu0 0.0
        %2822 = vmatprep.subr.mxu0 0.0
        %2823 = vmatpush1.msra.mxu0 0.0
        %2824 = vmatprep.subr.mxu0 0.0
        %2825 = vmatpush1.msra.mxu0 %v2791
        %2826 = vmatprep.subr.mxu0 0.0
        %2827 = vmatpush1.msra.mxu0 %v2790
        %2828 = vmatprep.subr.mxu0 0.0
        %2829 = vmatpush1.msra.mxu0 %v2789
        %2830 = vmatprep.subr.mxu0 0.0
        %2831 = vmatpush1.msra.mxu0 %v2788
        %2832 = vmatprep.subr.mxu0 0.0
        %2833 = vmatpush2.msra.mxu0 0.0
        %2834 = vmatprep.subr.mxu0 0.0
        %2835 = vmatpush2.msra.mxu0 0.0
        %2836 = vmatprep.subr.mxu0 0.0
        %2837 = vmatpush2.msra.mxu0 0.0
        %2838 = vmatprep.subr.mxu0 0.0
        %2839 = vmatpush2.msra.mxu0 0.0
        %2840 = vmatprep.subr.mxu0 0.0
        %2841 = vmatpush2.msra.mxu0 0.0
        %2842 = vmatprep.subr.mxu0 0.0
        %2843 = vmatpush2.msra.mxu0 0.0
        %2844 = vmatprep.subr.mxu0 0.0
        %2845 = vmatpush2.msra.mxu0 0.0
        %2846 = vmatprep.subr.mxu0 0.0
        %2847 = vmatpush2.msra.mxu0 0.0
        %2848 = vmatprep.subr.mxu0 0.0
        %2849 = vmatpush2.msra.mxu0 0.0
        %2850 = vmatprep.subr.mxu0 0.0
        %2851 = vmatpush2.msra.mxu0 0.0
        %2852 = vmatprep.subr.mxu0 0.0
        %2853 = vmatpush2.msra.mxu0 0.0
        %2854 = vmatprep.subr.mxu0 0.0
        %2855 = vmatpush2.msra.mxu0 0.0
        %2856 = vmatprep.subr.mxu0 0.0
        %2857 = vmatpush2.msra.mxu0 0.0
        %2858 = vmatprep.subr.mxu0 0.0
        %2859 = vmatpush2.msra.mxu0 0.0
        %2860 = vmatprep.subr.mxu0 0.0
        %2861 = vmatpush2.msra.mxu0 0.0
        %2862 = vmatprep.subr.mxu0 0.0
        %2863 = vmatpush2.msra.mxu0 0.0
        %2864 = vmatprep.mubr.f32.mxu0 0.0
        %2865 = vmatmul.mubr.f32.gmra.mxu0 %v770
        %v2866 = vpop.f32.mrf.mxu0
        %v2867 = vadd.f32 %v2798, %v2866
        %v2868 = vpop.f32.mrf.mxu0
        %2869 = vmatprep.mubr.f32.mxu0 0.0
        %2870 = vmatmul.mubr.f32.gmra.mxu0 %v773
        %v2871 = vpop.f32.mrf.mxu0
        %v2872 = vadd.f32 %v2798, %v2871
        %v2873 = vpop.f32.mrf.mxu0
        %2874 = vmatprep.mubr.f32.mxu0 0.0
        %2875 = vmatmul.mubr.f32.gmra.mxu0 %v776
        %v2876 = vpop.f32.mrf.mxu0
        %v2877 = vadd.f32 %v2798, %v2876
        %v2878 = vpop.f32.mrf.mxu0
        %2879 = vmatprep.mubr.f32.mxu0 0.0
        %2880 = vmatmul.mubr.f32.gmra.mxu0 %v779
        %v2881 = vpop.f32.mrf.mxu0
        %v2882 = vadd.f32 %v2798, %v2881
        %v2883 = vpop.f32.mrf.mxu0
        %2884 = vmatprep.mubr.f32.mxu0 0.0
        %2885 = vmatmul.mubr.f32.gmra.mxu0 %v782
        %v2886 = vpop.f32.mrf.mxu0
        %v2887 = vadd.f32 %v2798, %v2886
        %v2888 = vpop.f32.mrf.mxu0
        %2889 = vmatprep.mubr.f32.mxu0 0.0
        %2890 = vmatmul.mubr.f32.gmra.mxu0 %v785
        %v2891 = vpop.f32.mrf.mxu0
        %v2892 = vadd.f32 %v2798, %v2891
        %v2893 = vpop.f32.mrf.mxu0
        %2894 = vmatprep.mubr.f32.mxu0 0.0
        %2895 = vmatmul.mubr.f32.gmra.mxu0 %v788
        %v2896 = vpop.f32.mrf.mxu0
        %v2897 = vadd.f32 %v2798, %v2896
        %v2898 = vpop.f32.mrf.mxu0
        %2899 = vmatprep.mubr.f32.mxu0 0.0
        %2900 = vmatmul.mubr.f32.gmra.mxu0 %v791
        %v2901 = vpop.f32.mrf.mxu0
        %v2902 = vadd.f32 %v2798, %v2901
        %v2903 = vpop.f32.mrf.mxu0
        %2904 = vmatprep.mubr.f32.mxu0 0.0
        %2905 = vmatmul.mubr.f32.gmra.mxu0 %v794
        %v2906 = vpop.f32.mrf.mxu0
        %v2907 = vadd.f32 %v2798, %v2906
        %v2908 = vpop.f32.mrf.mxu0
        %2909 = vmatprep.mubr.f32.mxu0 0.0
        %2910 = vmatmul.mubr.f32.gmra.mxu0 %v797
        %v2911 = vpop.f32.mrf.mxu0
        %v2912 = vadd.f32 %v2798, %v2911
        %v2913 = vpop.f32.mrf.mxu0
        %2914 = vmatprep.mubr.f32.mxu0 0.0
        %2915 = vmatmul.mubr.f32.gmra.mxu0 %v800
        %v2916 = vpop.f32.mrf.mxu0
        %v2917 = vadd.f32 %v2798, %v2916
        %v2918 = vpop.f32.mrf.mxu0
        %2919 = vmatprep.mubr.f32.mxu0 0.0
        %2920 = vmatmul.mubr.f32.gmra.mxu0 %v803
        %v2921 = vpop.f32.mrf.mxu0
        %v2922 = vadd.f32 %v2798, %v2921
        %v2923 = vpop.f32.mrf.mxu0
        %2924 = vmatprep.mubr.f32.mxu0 0.0
        %2925 = vmatmul.mubr.f32.gmra.mxu0 %v806
        %v2926 = vpop.f32.mrf.mxu0
        %v2927 = vadd.f32 %v2798, %v2926
        %v2928 = vpop.f32.mrf.mxu0
        %2929 = vmatprep.mubr.f32.mxu0 0.0
        %2930 = vmatmul.mubr.f32.gmra.mxu0 %v809
        %v2931 = vpop.f32.mrf.mxu0
        %v2932 = vadd.f32 %v2798, %v2931
        %v2933 = vpop.f32.mrf.mxu0
        %2934 = vmatprep.mubr.f32.mxu0 0.0
        %2935 = vmatmul.mubr.f32.gmra.mxu0 %v812
        %v2936 = vpop.f32.mrf.mxu0
        %v2937 = vadd.f32 %v2798, %v2936
        %v2938 = vpop.f32.mrf.mxu0
        %2939 = vmatprep.mubr.f32.mxu0 0.0
        %2940 = vmatmul.mubr.f32.gmra.mxu0 %v815
        %v2941 = vpop.f32.mrf.mxu0
        %v2942 = vadd.f32 %v2798, %v2941
        %v2943 = vpop.f32.mrf.mxu0
        %2944 = vdwg.mxu0
        %s2945 = scalar_lea.vmem %s8, 16
        %v2946 = vld [vmem:[%s2945] sm:$0xff]
        %v2947 = vld [vmem:[%s2945 + $0x8] sm:$0xff]
        %v2949 = vsel %vm964, %v2867, 0
        %v2952 = vsel %vm964, %v2872, 0
        %v2955 = vsel %vm964, %v2559, 0
        %v2958 = vsel %vm964, %v2564, 0
        %2960 = vmatprep.subr.mxu0 0.0
        %2961 = vmatpush1.xpose.msra.mxu0 0.0
        %2962 = vmatprep.subr.mxu0 0.0
        %2963 = vmatpush1.xpose.msra.mxu0 0.0
        %2964 = vmatprep.subr.mxu0 0.0
        %2965 = vmatpush1.xpose.msra.mxu0 0.0
        %2966 = vmatprep.subr.mxu0 0.0
        %2967 = vmatpush1.xpose.msra.mxu0 0.0
        %2968 = vmatprep.subr.mxu0 0.0
        %2969 = vmatpush1.xpose.msra.mxu0 0.0
        %2970 = vmatprep.subr.mxu0 0.0
        %2971 = vmatpush1.xpose.msra.mxu0 0.0
        %2972 = vmatprep.subr.mxu0 0.0
        %2973 = vmatpush1.xpose.msra.mxu0 0.0
        %2974 = vmatprep.subr.mxu0 0.0
        %2975 = vmatpush1.xpose.msra.mxu0 0.0
        %2976 = vmatprep.subr.mxu0 0.0
        %2977 = vmatpush1.xpose.msra.mxu0 0.0
        %2978 = vmatprep.subr.mxu0 0.0
        %2979 = vmatpush1.xpose.msra.mxu0 0.0
        %2980 = vmatprep.subr.mxu0 0.0
        %2981 = vmatpush1.xpose.msra.mxu0 0.0
        %2982 = vmatprep.subr.mxu0 0.0
        %2983 = vmatpush1.xpose.msra.mxu0 0.0
        %2984 = vmatprep.subr.mxu0 0.0
        %2985 = vmatpush1.xpose.msra.mxu0 0.0
        %2986 = vmatprep.subr.mxu0 0.0
        %2987 = vmatpush1.xpose.msra.mxu0 0.0
        %2988 = vmatprep.subr.mxu0 0.0
        %2989 = vmatpush1.xpose.msra.mxu0 %v2958
        %2990 = vmatprep.subr.mxu0 0.0
        %2991 = vmatpush1.xpose.msra.mxu0 %v2955
        %2992 = vmatprep.subr.mxu0 0.0
        %2993 = vmatpush2.xpose.msra.mxu0 0.0
        %2994 = vmatprep.subr.mxu0 0.0
        %2995 = vmatpush2.xpose.msra.mxu0 0.0
        %2996 = vmatprep.subr.mxu0 0.0
        %2997 = vmatpush2.xpose.msra.mxu0 0.0
        %2998 = vmatprep.subr.mxu0 0.0
        %2999 = vmatpush2.xpose.msra.mxu0 0.0
        %3000 = vmatprep.subr.mxu0 0.0
        %3001 = vmatpush2.xpose.msra.mxu0 0.0
        %3002 = vmatprep.subr.mxu0 0.0
        %3003 = vmatpush2.xpose.msra.mxu0 0.0
        %3004 = vmatprep.subr.mxu0 0.0
        %3005 = vmatpush2.xpose.msra.mxu0 0.0
        %3006 = vmatprep.subr.mxu0 0.0
        %3007 = vmatpush2.xpose.msra.mxu0 0.0
        %3008 = vmatprep.subr.mxu0 0.0
        %3009 = vmatpush2.xpose.msra.mxu0 0.0
        %3010 = vmatprep.subr.mxu0 0.0
        %3011 = vmatpush2.xpose.msra.mxu0 0.0
        %3012 = vmatprep.subr.mxu0 0.0
        %3013 = vmatpush2.xpose.msra.mxu0 0.0
        %3014 = vmatprep.subr.mxu0 0.0
        %3015 = vmatpush2.xpose.msra.mxu0 0.0
        %3016 = vmatprep.subr.mxu0 0.0
        %3017 = vmatpush2.xpose.msra.mxu0 0.0
        %3018 = vmatprep.subr.mxu0 0.0
        %3019 = vmatpush2.xpose.msra.mxu0 0.0
        %3020 = vmatprep.subr.mxu0 0.0
        %3021 = vmatpush2.xpose.msra.mxu0 0.0
        %3022 = vmatprep.subr.mxu0 0.0
        %3023 = vmatpush2.xpose.msra.mxu0 0.0
        %3024 = vmatprep.mubr.f32.mxu0 0.0
        %3025 = vmatmul.mubr.f32.gmra.mxu0 %v2949
        %v3026 = vpop.f32.mrf.mxu0
        %v3027 = vadd.f32 %v2946, %v3026
        %v3028 = vpop.f32.mrf.mxu0
        %3029 = vmatprep.mubr.f32.mxu0 0.0
        %3030 = vmatmul.mubr.f32.gmra.mxu0 %v2952
        %v3031 = vpop.f32.mrf.mxu0
        %v3032 = vadd.f32 %v2947, %v3031
        %v3033 = vpop.f32.mrf.mxu0
        %3034 = vdwg.mxu0
        %v3036 = vsel %vm964, %v2877, 0
        %v3039 = vsel %vm964, %v2882, 0
        %v3042 = vsel %vm964, %v2569, 0
        %v3045 = vsel %vm964, %v2574, 0
        %3047 = vmatprep.subr.mxu0 0.0
        %3048 = vmatpush1.xpose.msra.mxu0 0.0
        %3049 = vmatprep.subr.mxu0 0.0
        %3050 = vmatpush1.xpose.msra.mxu0 0.0
        %3051 = vmatprep.subr.mxu0 0.0
        %3052 = vmatpush1.xpose.msra.mxu0 0.0
        %3053 = vmatprep.subr.mxu0 0.0
        %3054 = vmatpush1.xpose.msra.mxu0 0.0
        %3055 = vmatprep.subr.mxu0 0.0
        %3056 = vmatpush1.xpose.msra.mxu0 0.0
        %3057 = vmatprep.subr.mxu0 0.0
        %3058 = vmatpush1.xpose.msra.mxu0 0.0
        %3059 = vmatprep.subr.mxu0 0.0
        %3060 = vmatpush1.xpose.msra.mxu0 0.0
        %3061 = vmatprep.subr.mxu0 0.0
        %3062 = vmatpush1.xpose.msra.mxu0 0.0
        %3063 = vmatprep.subr.mxu0 0.0
        %3064 = vmatpush1.xpose.msra.mxu0 0.0
        %3065 = vmatprep.subr.mxu0 0.0
        %3066 = vmatpush1.xpose.msra.mxu0 0.0
        %3067 = vmatprep.subr.mxu0 0.0
        %3068 = vmatpush1.xpose.msra.mxu0 0.0
        %3069 = vmatprep.subr.mxu0 0.0
        %3070 = vmatpush1.xpose.msra.mxu0 0.0
        %3071 = vmatprep.subr.mxu0 0.0
        %3072 = vmatpush1.xpose.msra.mxu0 0.0
        %3073 = vmatprep.subr.mxu0 0.0
        %3074 = vmatpush1.xpose.msra.mxu0 0.0
        %3075 = vmatprep.subr.mxu0 0.0
        %3076 = vmatpush1.xpose.msra.mxu0 %v3045
        %3077 = vmatprep.subr.mxu0 0.0
        %3078 = vmatpush1.xpose.msra.mxu0 %v3042
        %3079 = vmatprep.subr.mxu0 0.0
        %3080 = vmatpush2.xpose.msra.mxu0 0.0
        %3081 = vmatprep.subr.mxu0 0.0
        %3082 = vmatpush2.xpose.msra.mxu0 0.0
        %3083 = vmatprep.subr.mxu0 0.0
        %3084 = vmatpush2.xpose.msra.mxu0 0.0
        %3085 = vmatprep.subr.mxu0 0.0
        %3086 = vmatpush2.xpose.msra.mxu0 0.0
        %3087 = vmatprep.subr.mxu0 0.0
        %3088 = vmatpush2.xpose.msra.mxu0 0.0
        %3089 = vmatprep.subr.mxu0 0.0
        %3090 = vmatpush2.xpose.msra.mxu0 0.0
        %3091 = vmatprep.subr.mxu0 0.0
        %3092 = vmatpush2.xpose.msra.mxu0 0.0
        %3093 = vmatprep.subr.mxu0 0.0
        %3094 = vmatpush2.xpose.msra.mxu0 0.0
        %3095 = vmatprep.subr.mxu0 0.0
        %3096 = vmatpush2.xpose.msra.mxu0 0.0
        %3097 = vmatprep.subr.mxu0 0.0
        %3098 = vmatpush2.xpose.msra.mxu0 0.0
        %3099 = vmatprep.subr.mxu0 0.0
        %3100 = vmatpush2.xpose.msra.mxu0 0.0
        %3101 = vmatprep.subr.mxu0 0.0
        %3102 = vmatpush2.xpose.msra.mxu0 0.0
        %3103 = vmatprep.subr.mxu0 0.0
        %3104 = vmatpush2.xpose.msra.mxu0 0.0
        %3105 = vmatprep.subr.mxu0 0.0
        %3106 = vmatpush2.xpose.msra.mxu0 0.0
        %3107 = vmatprep.subr.mxu0 0.0
        %3108 = vmatpush2.xpose.msra.mxu0 0.0
        %3109 = vmatprep.subr.mxu0 0.0
        %3110 = vmatpush2.xpose.msra.mxu0 0.0
        %3111 = vmatprep.mubr.f32.mxu0 0.0
        %3112 = vmatmul.mubr.f32.gmra.mxu0 %v3036
        %v3113 = vpop.f32.mrf.mxu0
        %v3114 = vadd.f32 %v2946, %v3113
        %v3115 = vpop.f32.mrf.mxu0
        %3116 = vmatprep.mubr.f32.mxu0 0.0
        %3117 = vmatmul.mubr.f32.gmra.mxu0 %v3039
        %v3118 = vpop.f32.mrf.mxu0
        %v3119 = vadd.f32 %v2947, %v3118
        %v3120 = vpop.f32.mrf.mxu0
        %3121 = vdwg.mxu0
        %v3123 = vsel %vm964, %v2887, 0
        %v3126 = vsel %vm964, %v2892, 0
        %v3129 = vsel %vm964, %v2579, 0
        %v3132 = vsel %vm964, %v2584, 0
        %3134 = vmatprep.subr.mxu0 0.0
        %3135 = vmatpush1.xpose.msra.mxu0 0.0
        %3136 = vmatprep.subr.mxu0 0.0
        %3137 = vmatpush1.xpose.msra.mxu0 0.0
        %3138 = vmatprep.subr.mxu0 0.0
        %3139 = vmatpush1.xpose.msra.mxu0 0.0
        %3140 = vmatprep.subr.mxu0 0.0
        %3141 = vmatpush1.xpose.msra.mxu0 0.0
        %3142 = vmatprep.subr.mxu0 0.0
        %3143 = vmatpush1.xpose.msra.mxu0 0.0
        %3144 = vmatprep.subr.mxu0 0.0
        %3145 = vmatpush1.xpose.msra.mxu0 0.0
        %3146 = vmatprep.subr.mxu0 0.0
        %3147 = vmatpush1.xpose.msra.mxu0 0.0
        %3148 = vmatprep.subr.mxu0 0.0
        %3149 = vmatpush1.xpose.msra.mxu0 0.0
        %3150 = vmatprep.subr.mxu0 0.0
        %3151 = vmatpush1.xpose.msra.mxu0 0.0
        %3152 = vmatprep.subr.mxu0 0.0
        %3153 = vmatpush1.xpose.msra.mxu0 0.0
        %3154 = vmatprep.subr.mxu0 0.0
        %3155 = vmatpush1.xpose.msra.mxu0 0.0
        %3156 = vmatprep.subr.mxu0 0.0
        %3157 = vmatpush1.xpose.msra.mxu0 0.0
        %3158 = vmatprep.subr.mxu0 0.0
        %3159 = vmatpush1.xpose.msra.mxu0 0.0
        %3160 = vmatprep.subr.mxu0 0.0
        %3161 = vmatpush1.xpose.msra.mxu0 0.0
        %3162 = vmatprep.subr.mxu0 0.0
        %3163 = vmatpush1.xpose.msra.mxu0 %v3132
        %3164 = vmatprep.subr.mxu0 0.0
        %3165 = vmatpush1.xpose.msra.mxu0 %v3129
        %3166 = vmatprep.subr.mxu0 0.0
        %3167 = vmatpush2.xpose.msra.mxu0 0.0
        %3168 = vmatprep.subr.mxu0 0.0
        %3169 = vmatpush2.xpose.msra.mxu0 0.0
        %3170 = vmatprep.subr.mxu0 0.0
        %3171 = vmatpush2.xpose.msra.mxu0 0.0
        %3172 = vmatprep.subr.mxu0 0.0
        %3173 = vmatpush2.xpose.msra.mxu0 0.0
        %3174 = vmatprep.subr.mxu0 0.0
        %3175 = vmatpush2.xpose.msra.mxu0 0.0
        %3176 = vmatprep.subr.mxu0 0.0
        %3177 = vmatpush2.xpose.msra.mxu0 0.0
        %3178 = vmatprep.subr.mxu0 0.0
        %3179 = vmatpush2.xpose.msra.mxu0 0.0
        %3180 = vmatprep.subr.mxu0 0.0
        %3181 = vmatpush2.xpose.msra.mxu0 0.0
        %3182 = vmatprep.subr.mxu0 0.0
        %3183 = vmatpush2.xpose.msra.mxu0 0.0
        %3184 = vmatprep.subr.mxu0 0.0
        %3185 = vmatpush2.xpose.msra.mxu0 0.0
        %3186 = vmatprep.subr.mxu0 0.0
        %3187 = vmatpush2.xpose.msra.mxu0 0.0
        %3188 = vmatprep.subr.mxu0 0.0
        %3189 = vmatpush2.xpose.msra.mxu0 0.0
        %3190 = vmatprep.subr.mxu0 0.0
        %3191 = vmatpush2.xpose.msra.mxu0 0.0
        %3192 = vmatprep.subr.mxu0 0.0
        %3193 = vmatpush2.xpose.msra.mxu0 0.0
        %3194 = vmatprep.subr.mxu0 0.0
        %3195 = vmatpush2.xpose.msra.mxu0 0.0
        %3196 = vmatprep.subr.mxu0 0.0
        %3197 = vmatpush2.xpose.msra.mxu0 0.0
        %3198 = vmatprep.mubr.f32.mxu0 0.0
        %3199 = vmatmul.mubr.f32.gmra.mxu0 %v3123
        %v3200 = vpop.f32.mrf.mxu0
        %v3201 = vadd.f32 %v2946, %v3200
        %v3202 = vpop.f32.mrf.mxu0
        %3203 = vmatprep.mubr.f32.mxu0 0.0
        %3204 = vmatmul.mubr.f32.gmra.mxu0 %v3126
        %v3205 = vpop.f32.mrf.mxu0
        %v3206 = vadd.f32 %v2947, %v3205
        %v3207 = vpop.f32.mrf.mxu0
        %3208 = vdwg.mxu0
        %v3210 = vsel %vm964, %v2897, 0
        %v3213 = vsel %vm964, %v2902, 0
        %v3216 = vsel %vm964, %v2589, 0
        %v3219 = vsel %vm964, %v2594, 0
        %3221 = vmatprep.subr.mxu0 0.0
        %3222 = vmatpush1.xpose.msra.mxu0 0.0
        %3223 = vmatprep.subr.mxu0 0.0
        %3224 = vmatpush1.xpose.msra.mxu0 0.0
        %3225 = vmatprep.subr.mxu0 0.0
        %3226 = vmatpush1.xpose.msra.mxu0 0.0
        %3227 = vmatprep.subr.mxu0 0.0
        %3228 = vmatpush1.xpose.msra.mxu0 0.0
        %3229 = vmatprep.subr.mxu0 0.0
        %3230 = vmatpush1.xpose.msra.mxu0 0.0
        %3231 = vmatprep.subr.mxu0 0.0
        %3232 = vmatpush1.xpose.msra.mxu0 0.0
        %3233 = vmatprep.subr.mxu0 0.0
        %3234 = vmatpush1.xpose.msra.mxu0 0.0
        %3235 = vmatprep.subr.mxu0 0.0
        %3236 = vmatpush1.xpose.msra.mxu0 0.0
        %3237 = vmatprep.subr.mxu0 0.0
        %3238 = vmatpush1.xpose.msra.mxu0 0.0
        %3239 = vmatprep.subr.mxu0 0.0
        %3240 = vmatpush1.xpose.msra.mxu0 0.0
        %3241 = vmatprep.subr.mxu0 0.0
        %3242 = vmatpush1.xpose.msra.mxu0 0.0
        %3243 = vmatprep.subr.mxu0 0.0
        %3244 = vmatpush1.xpose.msra.mxu0 0.0
        %3245 = vmatprep.subr.mxu0 0.0
        %3246 = vmatpush1.xpose.msra.mxu0 0.0
        %3247 = vmatprep.subr.mxu0 0.0
        %3248 = vmatpush1.xpose.msra.mxu0 0.0
        %3249 = vmatprep.subr.mxu0 0.0
        %3250 = vmatpush1.xpose.msra.mxu0 %v3219
        %3251 = vmatprep.subr.mxu0 0.0
        %3252 = vmatpush1.xpose.msra.mxu0 %v3216
        %3253 = vmatprep.subr.mxu0 0.0
        %3254 = vmatpush2.xpose.msra.mxu0 0.0
        %3255 = vmatprep.subr.mxu0 0.0
        %3256 = vmatpush2.xpose.msra.mxu0 0.0
        %3257 = vmatprep.subr.mxu0 0.0
        %3258 = vmatpush2.xpose.msra.mxu0 0.0
        %3259 = vmatprep.subr.mxu0 0.0
        %3260 = vmatpush2.xpose.msra.mxu0 0.0
        %3261 = vmatprep.subr.mxu0 0.0
        %3262 = vmatpush2.xpose.msra.mxu0 0.0
        %3263 = vmatprep.subr.mxu0 0.0
        %3264 = vmatpush2.xpose.msra.mxu0 0.0
        %3265 = vmatprep.subr.mxu0 0.0
        %3266 = vmatpush2.xpose.msra.mxu0 0.0
        %3267 = vmatprep.subr.mxu0 0.0
        %3268 = vmatpush2.xpose.msra.mxu0 0.0
        %3269 = vmatprep.subr.mxu0 0.0
        %3270 = vmatpush2.xpose.msra.mxu0 0.0
        %3271 = vmatprep.subr.mxu0 0.0
        %3272 = vmatpush2.xpose.msra.mxu0 0.0
        %3273 = vmatprep.subr.mxu0 0.0
        %3274 = vmatpush2.xpose.msra.mxu0 0.0
        %3275 = vmatprep.subr.mxu0 0.0
        %3276 = vmatpush2.xpose.msra.mxu0 0.0
        %3277 = vmatprep.subr.mxu0 0.0
        %3278 = vmatpush2.xpose.msra.mxu0 0.0
        %3279 = vmatprep.subr.mxu0 0.0
        %3280 = vmatpush2.xpose.msra.mxu0 0.0
        %3281 = vmatprep.subr.mxu0 0.0
        %3282 = vmatpush2.xpose.msra.mxu0 0.0
        %3283 = vmatprep.subr.mxu0 0.0
        %3284 = vmatpush2.xpose.msra.mxu0 0.0
        %3285 = vmatprep.mubr.f32.mxu0 0.0
        %3286 = vmatmul.mubr.f32.gmra.mxu0 %v3210
        %v3287 = vpop.f32.mrf.mxu0
        %v3288 = vadd.f32 %v2946, %v3287
        %v3289 = vpop.f32.mrf.mxu0
        %3290 = vmatprep.mubr.f32.mxu0 0.0
        %3291 = vmatmul.mubr.f32.gmra.mxu0 %v3213
        %v3292 = vpop.f32.mrf.mxu0
        %v3293 = vadd.f32 %v2947, %v3292
        %v3294 = vpop.f32.mrf.mxu0
        %3295 = vdwg.mxu0
        %v3297 = vsel %vm964, %v2907, 0
        %v3300 = vsel %vm964, %v2912, 0
        %v3303 = vsel %vm964, %v2599, 0
        %v3306 = vsel %vm964, %v2604, 0
        %3308 = vmatprep.subr.mxu0 0.0
        %3309 = vmatpush1.xpose.msra.mxu0 0.0
        %3310 = vmatprep.subr.mxu0 0.0
        %3311 = vmatpush1.xpose.msra.mxu0 0.0
        %3312 = vmatprep.subr.mxu0 0.0
        %3313 = vmatpush1.xpose.msra.mxu0 0.0
        %3314 = vmatprep.subr.mxu0 0.0
        %3315 = vmatpush1.xpose.msra.mxu0 0.0
        %3316 = vmatprep.subr.mxu0 0.0
        %3317 = vmatpush1.xpose.msra.mxu0 0.0
        %3318 = vmatprep.subr.mxu0 0.0
        %3319 = vmatpush1.xpose.msra.mxu0 0.0
        %3320 = vmatprep.subr.mxu0 0.0
        %3321 = vmatpush1.xpose.msra.mxu0 0.0
        %3322 = vmatprep.subr.mxu0 0.0
        %3323 = vmatpush1.xpose.msra.mxu0 0.0
        %3324 = vmatprep.subr.mxu0 0.0
        %3325 = vmatpush1.xpose.msra.mxu0 0.0
        %3326 = vmatprep.subr.mxu0 0.0
        %3327 = vmatpush1.xpose.msra.mxu0 0.0
        %3328 = vmatprep.subr.mxu0 0.0
        %3329 = vmatpush1.xpose.msra.mxu0 0.0
        %3330 = vmatprep.subr.mxu0 0.0
        %3331 = vmatpush1.xpose.msra.mxu0 0.0
        %3332 = vmatprep.subr.mxu0 0.0
        %3333 = vmatpush1.xpose.msra.mxu0 0.0
        %3334 = vmatprep.subr.mxu0 0.0
        %3335 = vmatpush1.xpose.msra.mxu0 0.0
        %3336 = vmatprep.subr.mxu0 0.0
        %3337 = vmatpush1.xpose.msra.mxu0 %v3306
        %3338 = vmatprep.subr.mxu0 0.0
        %3339 = vmatpush1.xpose.msra.mxu0 %v3303
        %3340 = vmatprep.subr.mxu0 0.0
        %3341 = vmatpush2.xpose.msra.mxu0 0.0
        %3342 = vmatprep.subr.mxu0 0.0
        %3343 = vmatpush2.xpose.msra.mxu0 0.0
        %3344 = vmatprep.subr.mxu0 0.0
        %3345 = vmatpush2.xpose.msra.mxu0 0.0
        %3346 = vmatprep.subr.mxu0 0.0
        %3347 = vmatpush2.xpose.msra.mxu0 0.0
        %3348 = vmatprep.subr.mxu0 0.0
        %3349 = vmatpush2.xpose.msra.mxu0 0.0
        %3350 = vmatprep.subr.mxu0 0.0
        %3351 = vmatpush2.xpose.msra.mxu0 0.0
        %3352 = vmatprep.subr.mxu0 0.0
        %3353 = vmatpush2.xpose.msra.mxu0 0.0
        %3354 = vmatprep.subr.mxu0 0.0
        %3355 = vmatpush2.xpose.msra.mxu0 0.0
        %3356 = vmatprep.subr.mxu0 0.0
        %3357 = vmatpush2.xpose.msra.mxu0 0.0
        %3358 = vmatprep.subr.mxu0 0.0
        %3359 = vmatpush2.xpose.msra.mxu0 0.0
        %3360 = vmatprep.subr.mxu0 0.0
        %3361 = vmatpush2.xpose.msra.mxu0 0.0
        %3362 = vmatprep.subr.mxu0 0.0
        %3363 = vmatpush2.xpose.msra.mxu0 0.0
        %3364 = vmatprep.subr.mxu0 0.0
        %3365 = vmatpush2.xpose.msra.mxu0 0.0
        %3366 = vmatprep.subr.mxu0 0.0
        %3367 = vmatpush2.xpose.msra.mxu0 0.0
        %3368 = vmatprep.subr.mxu0 0.0
        %3369 = vmatpush2.xpose.msra.mxu0 0.0
        %3370 = vmatprep.subr.mxu0 0.0
        %3371 = vmatpush2.xpose.msra.mxu0 0.0
        %3372 = vmatprep.mubr.f32.mxu0 0.0
        %3373 = vmatmul.mubr.f32.gmra.mxu0 %v3297
        %v3374 = vpop.f32.mrf.mxu0
        %v3375 = vadd.f32 %v2946, %v3374
        %v3376 = vpop.f32.mrf.mxu0
        %3377 = vmatprep.mubr.f32.mxu0 0.0
        %3378 = vmatmul.mubr.f32.gmra.mxu0 %v3300
        %v3379 = vpop.f32.mrf.mxu0
        %v3380 = vadd.f32 %v2947, %v3379
        %v3381 = vpop.f32.mrf.mxu0
        %3382 = vdwg.mxu0
        %v3384 = vsel %vm964, %v2917, 0
        %v3387 = vsel %vm964, %v2922, 0
        %v3390 = vsel %vm964, %v2609, 0
        %v3393 = vsel %vm964, %v2614, 0
        %3395 = vmatprep.subr.mxu0 0.0
        %3396 = vmatpush1.xpose.msra.mxu0 0.0
        %3397 = vmatprep.subr.mxu0 0.0
        %3398 = vmatpush1.xpose.msra.mxu0 0.0
        %3399 = vmatprep.subr.mxu0 0.0
        %3400 = vmatpush1.xpose.msra.mxu0 0.0
        %3401 = vmatprep.subr.mxu0 0.0
        %3402 = vmatpush1.xpose.msra.mxu0 0.0
        %3403 = vmatprep.subr.mxu0 0.0
        %3404 = vmatpush1.xpose.msra.mxu0 0.0
        %3405 = vmatprep.subr.mxu0 0.0
        %3406 = vmatpush1.xpose.msra.mxu0 0.0
        %3407 = vmatprep.subr.mxu0 0.0
        %3408 = vmatpush1.xpose.msra.mxu0 0.0
        %3409 = vmatprep.subr.mxu0 0.0
        %3410 = vmatpush1.xpose.msra.mxu0 0.0
        %3411 = vmatprep.subr.mxu0 0.0
        %3412 = vmatpush1.xpose.msra.mxu0 0.0
        %3413 = vmatprep.subr.mxu0 0.0
        %3414 = vmatpush1.xpose.msra.mxu0 0.0
        %3415 = vmatprep.subr.mxu0 0.0
        %3416 = vmatpush1.xpose.msra.mxu0 0.0
        %3417 = vmatprep.subr.mxu0 0.0
        %3418 = vmatpush1.xpose.msra.mxu0 0.0
        %3419 = vmatprep.subr.mxu0 0.0
        %3420 = vmatpush1.xpose.msra.mxu0 0.0
        %3421 = vmatprep.subr.mxu0 0.0
        %3422 = vmatpush1.xpose.msra.mxu0 0.0
        %3423 = vmatprep.subr.mxu0 0.0
        %3424 = vmatpush1.xpose.msra.mxu0 %v3393
        %3425 = vmatprep.subr.mxu0 0.0
        %3426 = vmatpush1.xpose.msra.mxu0 %v3390
        %3427 = vmatprep.subr.mxu0 0.0
        %3428 = vmatpush2.xpose.msra.mxu0 0.0
        %3429 = vmatprep.subr.mxu0 0.0
        %3430 = vmatpush2.xpose.msra.mxu0 0.0
        %3431 = vmatprep.subr.mxu0 0.0
        %3432 = vmatpush2.xpose.msra.mxu0 0.0
        %3433 = vmatprep.subr.mxu0 0.0
        %3434 = vmatpush2.xpose.msra.mxu0 0.0
        %3435 = vmatprep.subr.mxu0 0.0
        %3436 = vmatpush2.xpose.msra.mxu0 0.0
        %3437 = vmatprep.subr.mxu0 0.0
        %3438 = vmatpush2.xpose.msra.mxu0 0.0
        %3439 = vmatprep.subr.mxu0 0.0
        %3440 = vmatpush2.xpose.msra.mxu0 0.0
        %3441 = vmatprep.subr.mxu0 0.0
        %3442 = vmatpush2.xpose.msra.mxu0 0.0
        %3443 = vmatprep.subr.mxu0 0.0
        %3444 = vmatpush2.xpose.msra.mxu0 0.0
        %3445 = vmatprep.subr.mxu0 0.0
        %3446 = vmatpush2.xpose.msra.mxu0 0.0
        %3447 = vmatprep.subr.mxu0 0.0
        %3448 = vmatpush2.xpose.msra.mxu0 0.0
        %3449 = vmatprep.subr.mxu0 0.0
        %3450 = vmatpush2.xpose.msra.mxu0 0.0
        %3451 = vmatprep.subr.mxu0 0.0
        %3452 = vmatpush2.xpose.msra.mxu0 0.0
        %3453 = vmatprep.subr.mxu0 0.0
        %3454 = vmatpush2.xpose.msra.mxu0 0.0
        %3455 = vmatprep.subr.mxu0 0.0
        %3456 = vmatpush2.xpose.msra.mxu0 0.0
        %3457 = vmatprep.subr.mxu0 0.0
        %3458 = vmatpush2.xpose.msra.mxu0 0.0
        %3459 = vmatprep.mubr.f32.mxu0 0.0
        %3460 = vmatmul.mubr.f32.gmra.mxu0 %v3384
        %v3461 = vpop.f32.mrf.mxu0
        %v3462 = vadd.f32 %v2946, %v3461
        %v3463 = vpop.f32.mrf.mxu0
        %3464 = vmatprep.mubr.f32.mxu0 0.0
        %3465 = vmatmul.mubr.f32.gmra.mxu0 %v3387
        %v3466 = vpop.f32.mrf.mxu0
        %v3467 = vadd.f32 %v2947, %v3466
        %v3468 = vpop.f32.mrf.mxu0
        %3469 = vdwg.mxu0
        %v3471 = vsel %vm964, %v2927, 0
        %v3474 = vsel %vm964, %v2932, 0
        %v3477 = vsel %vm964, %v2619, 0
        %v3480 = vsel %vm964, %v2624, 0
        %3482 = vmatprep.subr.mxu0 0.0
        %3483 = vmatpush1.xpose.msra.mxu0 0.0
        %3484 = vmatprep.subr.mxu0 0.0
        %3485 = vmatpush1.xpose.msra.mxu0 0.0
        %3486 = vmatprep.subr.mxu0 0.0
        %3487 = vmatpush1.xpose.msra.mxu0 0.0
        %3488 = vmatprep.subr.mxu0 0.0
        %3489 = vmatpush1.xpose.msra.mxu0 0.0
        %3490 = vmatprep.subr.mxu0 0.0
        %3491 = vmatpush1.xpose.msra.mxu0 0.0
        %3492 = vmatprep.subr.mxu0 0.0
        %3493 = vmatpush1.xpose.msra.mxu0 0.0
        %3494 = vmatprep.subr.mxu0 0.0
        %3495 = vmatpush1.xpose.msra.mxu0 0.0
        %3496 = vmatprep.subr.mxu0 0.0
        %3497 = vmatpush1.xpose.msra.mxu0 0.0
        %3498 = vmatprep.subr.mxu0 0.0
        %3499 = vmatpush1.xpose.msra.mxu0 0.0
        %3500 = vmatprep.subr.mxu0 0.0
        %3501 = vmatpush1.xpose.msra.mxu0 0.0
        %3502 = vmatprep.subr.mxu0 0.0
        %3503 = vmatpush1.xpose.msra.mxu0 0.0
        %3504 = vmatprep.subr.mxu0 0.0
        %3505 = vmatpush1.xpose.msra.mxu0 0.0
        %3506 = vmatprep.subr.mxu0 0.0
        %3507 = vmatpush1.xpose.msra.mxu0 0.0
        %3508 = vmatprep.subr.mxu0 0.0
        %3509 = vmatpush1.xpose.msra.mxu0 0.0
        %3510 = vmatprep.subr.mxu0 0.0
        %3511 = vmatpush1.xpose.msra.mxu0 %v3480
        %3512 = vmatprep.subr.mxu0 0.0
        %3513 = vmatpush1.xpose.msra.mxu0 %v3477
        %3514 = vmatprep.subr.mxu0 0.0
        %3515 = vmatpush2.xpose.msra.mxu0 0.0
        %3516 = vmatprep.subr.mxu0 0.0
        %3517 = vmatpush2.xpose.msra.mxu0 0.0
        %3518 = vmatprep.subr.mxu0 0.0
        %3519 = vmatpush2.xpose.msra.mxu0 0.0
        %3520 = vmatprep.subr.mxu0 0.0
        %3521 = vmatpush2.xpose.msra.mxu0 0.0
        %3522 = vmatprep.subr.mxu0 0.0
        %3523 = vmatpush2.xpose.msra.mxu0 0.0
        %3524 = vmatprep.subr.mxu0 0.0
        %3525 = vmatpush2.xpose.msra.mxu0 0.0
        %3526 = vmatprep.subr.mxu0 0.0
        %3527 = vmatpush2.xpose.msra.mxu0 0.0
        %3528 = vmatprep.subr.mxu0 0.0
        %3529 = vmatpush2.xpose.msra.mxu0 0.0
        %3530 = vmatprep.subr.mxu0 0.0
        %3531 = vmatpush2.xpose.msra.mxu0 0.0
        %3532 = vmatprep.subr.mxu0 0.0
        %3533 = vmatpush2.xpose.msra.mxu0 0.0
        %3534 = vmatprep.subr.mxu0 0.0
        %3535 = vmatpush2.xpose.msra.mxu0 0.0
        %3536 = vmatprep.subr.mxu0 0.0
        %3537 = vmatpush2.xpose.msra.mxu0 0.0
        %3538 = vmatprep.subr.mxu0 0.0
        %3539 = vmatpush2.xpose.msra.mxu0 0.0
        %3540 = vmatprep.subr.mxu0 0.0
        %3541 = vmatpush2.xpose.msra.mxu0 0.0
        %3542 = vmatprep.subr.mxu0 0.0
        %3543 = vmatpush2.xpose.msra.mxu0 0.0
        %3544 = vmatprep.subr.mxu0 0.0
        %3545 = vmatpush2.xpose.msra.mxu0 0.0
        %3546 = vmatprep.mubr.f32.mxu0 0.0
        %3547 = vmatmul.mubr.f32.gmra.mxu0 %v3471
        %v3548 = vpop.f32.mrf.mxu0
        %v3549 = vadd.f32 %v2946, %v3548
        %v3550 = vpop.f32.mrf.mxu0
        %3551 = vmatprep.mubr.f32.mxu0 0.0
        %3552 = vmatmul.mubr.f32.gmra.mxu0 %v3474
        %v3553 = vpop.f32.mrf.mxu0
        %v3554 = vadd.f32 %v2947, %v3553
        %v3555 = vpop.f32.mrf.mxu0
        %3556 = vdwg.mxu0
        %v3558 = vsel %vm964, %v2937, 0
        %v3561 = vsel %vm964, %v2942, 0
        %v3564 = vsel %vm964, %v2629, 0
        %v3567 = vsel %vm964, %v2634, 0
        %3569 = vmatprep.subr.mxu0 0.0
        %3570 = vmatpush1.xpose.msra.mxu0 0.0
        %3571 = vmatprep.subr.mxu0 0.0
        %3572 = vmatpush1.xpose.msra.mxu0 0.0
        %3573 = vmatprep.subr.mxu0 0.0
        %3574 = vmatpush1.xpose.msra.mxu0 0.0
        %3575 = vmatprep.subr.mxu0 0.0
        %3576 = vmatpush1.xpose.msra.mxu0 0.0
        %3577 = vmatprep.subr.mxu0 0.0
        %3578 = vmatpush1.xpose.msra.mxu0 0.0
        %3579 = vmatprep.subr.mxu0 0.0
        %3580 = vmatpush1.xpose.msra.mxu0 0.0
        %3581 = vmatprep.subr.mxu0 0.0
        %3582 = vmatpush1.xpose.msra.mxu0 0.0
        %3583 = vmatprep.subr.mxu0 0.0
        %3584 = vmatpush1.xpose.msra.mxu0 0.0
        %3585 = vmatprep.subr.mxu0 0.0
        %3586 = vmatpush1.xpose.msra.mxu0 0.0
        %3587 = vmatprep.subr.mxu0 0.0
        %3588 = vmatpush1.xpose.msra.mxu0 0.0
        %3589 = vmatprep.subr.mxu0 0.0
        %3590 = vmatpush1.xpose.msra.mxu0 0.0
        %3591 = vmatprep.subr.mxu0 0.0
        %3592 = vmatpush1.xpose.msra.mxu0 0.0
        %3593 = vmatprep.subr.mxu0 0.0
        %3594 = vmatpush1.xpose.msra.mxu0 0.0
        %3595 = vmatprep.subr.mxu0 0.0
        %3596 = vmatpush1.xpose.msra.mxu0 0.0
        %3597 = vmatprep.subr.mxu0 0.0
        %3598 = vmatpush1.xpose.msra.mxu0 %v3567
        %3599 = vmatprep.subr.mxu0 0.0
        %3600 = vmatpush1.xpose.msra.mxu0 %v3564
        %3601 = vmatprep.subr.mxu0 0.0
        %3602 = vmatpush2.xpose.msra.mxu0 0.0
        %3603 = vmatprep.subr.mxu0 0.0
        %3604 = vmatpush2.xpose.msra.mxu0 0.0
        %3605 = vmatprep.subr.mxu0 0.0
        %3606 = vmatpush2.xpose.msra.mxu0 0.0
        %3607 = vmatprep.subr.mxu0 0.0
        %3608 = vmatpush2.xpose.msra.mxu0 0.0
        %3609 = vmatprep.subr.mxu0 0.0
        %3610 = vmatpush2.xpose.msra.mxu0 0.0
        %3611 = vmatprep.subr.mxu0 0.0
        %3612 = vmatpush2.xpose.msra.mxu0 0.0
        %3613 = vmatprep.subr.mxu0 0.0
        %3614 = vmatpush2.xpose.msra.mxu0 0.0
        %3615 = vmatprep.subr.mxu0 0.0
        %3616 = vmatpush2.xpose.msra.mxu0 0.0
        %3617 = vmatprep.subr.mxu0 0.0
        %3618 = vmatpush2.xpose.msra.mxu0 0.0
        %3619 = vmatprep.subr.mxu0 0.0
        %3620 = vmatpush2.xpose.msra.mxu0 0.0
        %3621 = vmatprep.subr.mxu0 0.0
        %3622 = vmatpush2.xpose.msra.mxu0 0.0
        %3623 = vmatprep.subr.mxu0 0.0
        %3624 = vmatpush2.xpose.msra.mxu0 0.0
        %3625 = vmatprep.subr.mxu0 0.0
        %3626 = vmatpush2.xpose.msra.mxu0 0.0
        %3627 = vmatprep.subr.mxu0 0.0
        %3628 = vmatpush2.xpose.msra.mxu0 0.0
        %3629 = vmatprep.subr.mxu0 0.0
        %3630 = vmatpush2.xpose.msra.mxu0 0.0
        %3631 = vmatprep.subr.mxu0 0.0
        %3632 = vmatpush2.xpose.msra.mxu0 0.0
        %3633 = vmatprep.mubr.f32.mxu0 0.0
        %3634 = vmatmul.mubr.f32.gmra.mxu0 %v3558
        %v3635 = vpop.f32.mrf.mxu0
        %v3636 = vadd.f32 %v2946, %v3635
        %v3637 = vpop.f32.mrf.mxu0
        %3638 = vmatprep.mubr.f32.mxu0 0.0
        %3639 = vmatmul.mubr.f32.gmra.mxu0 %v3561
        %v3640 = vpop.f32.mrf.mxu0
        %v3641 = vadd.f32 %v2947, %v3640
        %v3642 = vpop.f32.mrf.mxu0
        %3643 = vdwg.mxu0
        %v3644 = vsel %vm1661, %v3027, -inf
        %3645 = vmax.xlane.f32.xlu0 %v3644
        %v3646 = vpop.xlane.xlu0 %3645
        %v3647 = vsel %vm1661, %v3032, -inf
        %3648 = vmax.xlane.f32.xlu0 %v3647
        %v3649 = vpop.xlane.xlu0 %3648
        %v3650 = vsel %vm1661, %v3114, -inf
        %3651 = vmax.xlane.f32.xlu0 %v3650
        %v3652 = vpop.xlane.xlu0 %3651
        %v3653 = vsel %vm1661, %v3119, -inf
        %3654 = vmax.xlane.f32.xlu0 %v3653
        %v3655 = vpop.xlane.xlu0 %3654
        %v3656 = vsel %vm1661, %v3201, -inf
        %3657 = vmax.xlane.f32.xlu0 %v3656
        %v3658 = vpop.xlane.xlu0 %3657
        %v3659 = vsel %vm1661, %v3206, -inf
        %3660 = vmax.xlane.f32.xlu0 %v3659
        %v3661 = vpop.xlane.xlu0 %3660
        %v3662 = vsel %vm1661, %v3288, -inf
        %3663 = vmax.xlane.f32.xlu0 %v3662
        %v3664 = vpop.xlane.xlu0 %3663
        %v3665 = vsel %vm1661, %v3293, -inf
        %3666 = vmax.xlane.f32.xlu0 %v3665
        %v3667 = vpop.xlane.xlu0 %3666
        %v3668 = vsel %vm1661, %v3375, -inf
        %3669 = vmax.xlane.f32.xlu0 %v3668
        %v3670 = vpop.xlane.xlu0 %3669
        %v3671 = vsel %vm1661, %v3380, -inf
        %3672 = vmax.xlane.f32.xlu0 %v3671
        %v3673 = vpop.xlane.xlu0 %3672
        %v3674 = vsel %vm1661, %v3462, -inf
        %3675 = vmax.xlane.f32.xlu0 %v3674
        %v3676 = vpop.xlane.xlu0 %3675
        %v3677 = vsel %vm1661, %v3467, -inf
        %3678 = vmax.xlane.f32.xlu0 %v3677
        %v3679 = vpop.xlane.xlu0 %3678
        %v3680 = vsel %vm1661, %v3549, -inf
        %3681 = vmax.xlane.f32.xlu0 %v3680
        %v3682 = vpop.xlane.xlu0 %3681
        %v3683 = vsel %vm1661, %v3554, -inf
        %3684 = vmax.xlane.f32.xlu0 %v3683
        %v3685 = vpop.xlane.xlu0 %3684
        %v3686 = vsel %vm1661, %v3636, -inf
        %3687 = vmax.xlane.f32.xlu0 %v3686
        %v3688 = vpop.xlane.xlu0 %3687
        %v3689 = vsel %vm1661, %v3641, -inf
        %3690 = vmax.xlane.f32.xlu0 %v3689
        %v3691 = vpop.xlane.xlu0 %3690
        %v3692 = vsub.f32 %v3027, %v3646
        %v3693 = vsub.f32 %v3032, %v3649
        %v3694 = vsub.f32 %v3114, %v3652
        %v3695 = vsub.f32 %v3119, %v3655
        %v3696 = vsub.f32 %v3201, %v3658
        %v3697 = vsub.f32 %v3206, %v3661
        %v3698 = vsub.f32 %v3288, %v3664
        %v3699 = vsub.f32 %v3293, %v3667
        %v3700 = vsub.f32 %v3375, %v3670
        %v3701 = vsub.f32 %v3380, %v3673
        %v3702 = vsub.f32 %v3462, %v3676
        %v3703 = vsub.f32 %v3467, %v3679
        %v3704 = vsub.f32 %v3549, %v3682
        %v3705 = vsub.f32 %v3554, %v3685
        %v3706 = vsub.f32 %v3636, %v3688
        %v3707 = vsub.f32 %v3641, %v3691
        %v3708 = vmul.f32 %v3692, 1.442695
        %v3709 = vpow.pop %v3708
        %v3710 = vmul.f32 %v3693, 1.442695
        %v3711 = vpow.pop %v3710
        %v3712 = vmul.f32 %v3694, 1.442695
        %v3713 = vpow.pop %v3712
        %v3714 = vmul.f32 %v3695, 1.442695
        %v3715 = vpow.pop %v3714
        %v3716 = vmul.f32 %v3696, 1.442695
        %v3717 = vpow.pop %v3716
        %v3718 = vmul.f32 %v3697, 1.442695
        %v3719 = vpow.pop %v3718
        %v3720 = vmul.f32 %v3698, 1.442695
        %v3721 = vpow.pop %v3720
        %v3722 = vmul.f32 %v3699, 1.442695
        %v3723 = vpow.pop %v3722
        %v3724 = vmul.f32 %v3700, 1.442695
        %v3725 = vpow.pop %v3724
        %v3726 = vmul.f32 %v3701, 1.442695
        %v3727 = vpow.pop %v3726
        %v3728 = vmul.f32 %v3702, 1.442695
        %v3729 = vpow.pop %v3728
        %v3730 = vmul.f32 %v3703, 1.442695
        %v3731 = vpow.pop %v3730
        %v3732 = vmul.f32 %v3704, 1.442695
        %v3733 = vpow.pop %v3732
        %v3734 = vmul.f32 %v3705, 1.442695
        %v3735 = vpow.pop %v3734
        %v3736 = vmul.f32 %v3706, 1.442695
        %v3737 = vpow.pop %v3736
        %v3738 = vmul.f32 %v3707, 1.442695
        %v3739 = vpow.pop %v3738
        %v3740 = vsel %vm1661, %v3709, 0.0
        %3741 = vadd.xlane.f32.xlu0 %v3740
        %v3742 = vpop.xlane.xlu0 %3741
        %v3743 = vsel %vm1661, %v3711, 0.0
        %3744 = vadd.xlane.f32.xlu0 %v3743
        %v3745 = vpop.xlane.xlu0 %3744
        %v3746 = vsel %vm1661, %v3713, 0.0
        %3747 = vadd.xlane.f32.xlu0 %v3746
        %v3748 = vpop.xlane.xlu0 %3747
        %v3749 = vsel %vm1661, %v3715, 0.0
        %3750 = vadd.xlane.f32.xlu0 %v3749
        %v3751 = vpop.xlane.xlu0 %3750
        %v3752 = vsel %vm1661, %v3717, 0.0
        %3753 = vadd.xlane.f32.xlu0 %v3752
        %v3754 = vpop.xlane.xlu0 %3753
        %v3755 = vsel %vm1661, %v3719, 0.0
        %3756 = vadd.xlane.f32.xlu0 %v3755
        %v3757 = vpop.xlane.xlu0 %3756
        %v3758 = vsel %vm1661, %v3721, 0.0
        %3759 = vadd.xlane.f32.xlu0 %v3758
        %v3760 = vpop.xlane.xlu0 %3759
        %v3761 = vsel %vm1661, %v3723, 0.0
        %3762 = vadd.xlane.f32.xlu0 %v3761
        %v3763 = vpop.xlane.xlu0 %3762
        %v3764 = vsel %vm1661, %v3725, 0.0
        %3765 = vadd.xlane.f32.xlu0 %v3764
        %v3766 = vpop.xlane.xlu0 %3765
        %v3767 = vsel %vm1661, %v3727, 0.0
        %3768 = vadd.xlane.f32.xlu0 %v3767
        %v3769 = vpop.xlane.xlu0 %3768
        %v3770 = vsel %vm1661, %v3729, 0.0
        %3771 = vadd.xlane.f32.xlu0 %v3770
        %v3772 = vpop.xlane.xlu0 %3771
        %v3773 = vsel %vm1661, %v3731, 0.0
        %3774 = vadd.xlane.f32.xlu0 %v3773
        %v3775 = vpop.xlane.xlu0 %3774
        %v3776 = vsel %vm1661, %v3733, 0.0
        %3777 = vadd.xlane.f32.xlu0 %v3776
        %v3778 = vpop.xlane.xlu0 %3777
        %v3779 = vsel %vm1661, %v3735, 0.0
        %3780 = vadd.xlane.f32.xlu0 %v3779
        %v3781 = vpop.xlane.xlu0 %3780
        %v3782 = vsel %vm1661, %v3737, 0.0
        %3783 = vadd.xlane.f32.xlu0 %v3782
        %v3784 = vpop.xlane.xlu0 %3783
        %v3785 = vsel %vm1661, %v3739, 0.0
        %3786 = vadd.xlane.f32.xlu0 %v3785
        %v3787 = vpop.xlane.xlu0 %3786
        %v3788 = vrcp.pop %v3742
        %v3789 = vrcp.pop %v3745
        %v3790 = vrcp.pop %v3748
        %v3791 = vrcp.pop %v3751
        %v3792 = vrcp.pop %v3754
        %v3793 = vrcp.pop %v3757
        %v3794 = vrcp.pop %v3760
        %v3795 = vrcp.pop %v3763
        %v3796 = vrcp.pop %v3766
        %v3797 = vrcp.pop %v3769
        %v3798 = vrcp.pop %v3772
        %v3799 = vrcp.pop %v3775
        %v3800 = vrcp.pop %v3778
        %v3801 = vrcp.pop %v3781
        %v3802 = vrcp.pop %v3784
        %v3803 = vrcp.pop %v3787
        %v3804 = vmul.f32 %v3709, %v3788
        %v3805 = vmul.f32 %v3711, %v3789
        %v3806 = vmul.f32 %v3713, %v3790
        %v3807 = vmul.f32 %v3715, %v3791
        %v3808 = vmul.f32 %v3717, %v3792
        %v3809 = vmul.f32 %v3719, %v3793
        %v3810 = vmul.f32 %v3721, %v3794
        %v3811 = vmul.f32 %v3723, %v3795
        %v3812 = vmul.f32 %v3725, %v3796
        %v3813 = vmul.f32 %v3727, %v3797
        %v3814 = vmul.f32 %v3729, %v3798
        %v3815 = vmul.f32 %v3731, %v3799
        %v3816 = vmul.f32 %v3733, %v3800
        %v3817 = vmul.f32 %v3735, %v3801
        %v3818 = vmul.f32 %v3737, %v3802
        %v3819 = vmul.f32 %v3739, %v3803
        %v3821 = vsel %vm1661, %v3804, 0
        %v3824 = vsel %vm1661, %v3805, 0
        %3826 = vmatprep.subr.mxu0 0.0
        %3827 = vmatpush1.msra.mxu0 0.0
        %3828 = vmatprep.subr.mxu0 0.0
        %3829 = vmatpush1.msra.mxu0 0.0
        %3830 = vmatprep.subr.mxu0 0.0
        %3831 = vmatpush1.msra.mxu0 0.0
        %3832 = vmatprep.subr.mxu0 0.0
        %3833 = vmatpush1.msra.mxu0 0.0
        %3834 = vmatprep.subr.mxu0 0.0
        %3835 = vmatpush1.msra.mxu0 0.0
        %3836 = vmatprep.subr.mxu0 0.0
        %3837 = vmatpush1.msra.mxu0 0.0
        %3838 = vmatprep.subr.mxu0 0.0
        %3839 = vmatpush1.msra.mxu0 0.0
        %3840 = vmatprep.subr.mxu0 0.0
        %3841 = vmatpush1.msra.mxu0 0.0
        %3842 = vmatprep.subr.mxu0 0.0
        %3843 = vmatpush1.msra.mxu0 0.0
        %3844 = vmatprep.subr.mxu0 0.0
        %3845 = vmatpush1.msra.mxu0 0.0
        %3846 = vmatprep.subr.mxu0 0.0
        %3847 = vmatpush1.msra.mxu0 0.0
        %3848 = vmatprep.subr.mxu0 0.0
        %3849 = vmatpush1.msra.mxu0 0.0
        %3850 = vmatprep.subr.mxu0 0.0
        %3851 = vmatpush1.msra.mxu0 0.0
        %3852 = vmatprep.subr.mxu0 0.0
        %3853 = vmatpush1.msra.mxu0 0.0
        %3854 = vmatprep.subr.mxu0 0.0
        %3855 = vmatpush1.msra.mxu0 %v2714
        %3856 = vmatprep.subr.mxu0 0.0
        %3857 = vmatpush1.msra.mxu0 %v2709
        %3858 = vmatprep.subr.mxu0 0.0
        %3859 = vmatpush2.msra.mxu0 0.0
        %3860 = vmatprep.subr.mxu0 0.0
        %3861 = vmatpush2.msra.mxu0 0.0
        %3862 = vmatprep.subr.mxu0 0.0
        %3863 = vmatpush2.msra.mxu0 0.0
        %3864 = vmatprep.subr.mxu0 0.0
        %3865 = vmatpush2.msra.mxu0 0.0
        %3866 = vmatprep.subr.mxu0 0.0
        %3867 = vmatpush2.msra.mxu0 0.0
        %3868 = vmatprep.subr.mxu0 0.0
        %3869 = vmatpush2.msra.mxu0 0.0
        %3870 = vmatprep.subr.mxu0 0.0
        %3871 = vmatpush2.msra.mxu0 0.0
        %3872 = vmatprep.subr.mxu0 0.0
        %3873 = vmatpush2.msra.mxu0 0.0
        %3874 = vmatprep.subr.mxu0 0.0
        %3875 = vmatpush2.msra.mxu0 0.0
        %3876 = vmatprep.subr.mxu0 0.0
        %3877 = vmatpush2.msra.mxu0 0.0
        %3878 = vmatprep.subr.mxu0 0.0
        %3879 = vmatpush2.msra.mxu0 0.0
        %3880 = vmatprep.subr.mxu0 0.0
        %3881 = vmatpush2.msra.mxu0 0.0
        %3882 = vmatprep.subr.mxu0 0.0
        %3883 = vmatpush2.msra.mxu0 0.0
        %3884 = vmatprep.subr.mxu0 0.0
        %3885 = vmatpush2.msra.mxu0 0.0
        %3886 = vmatprep.subr.mxu0 0.0
        %3887 = vmatpush2.msra.mxu0 0.0
        %3888 = vmatprep.subr.mxu0 0.0
        %3889 = vmatpush2.msra.mxu0 0.0
        %3890 = vmatprep.mubr.f32.mxu0 0.0
        %3891 = vmatmul.mubr.f32.gmra.mxu0 %v3821
        %v3892 = vpop.f32.mrf.mxu0
        %v3893 = vadd.f32 0.0, %v3892
        %v3894 = vpop.f32.mrf.mxu0
        %3895 = vmatprep.mubr.f32.mxu0 0.0
        %3896 = vmatmul.mubr.f32.gmra.mxu0 %v3824
        %v3897 = vpop.f32.mrf.mxu0
        %v3898 = vadd.f32 0.0, %v3897
        %v3899 = vpop.f32.mrf.mxu0
        %3900 = vdwg.mxu0
        %v3902 = vsel %vm1661, %v3806, 0
        %v3905 = vsel %vm1661, %v3807, 0
        %3907 = vmatprep.subr.mxu0 0.0
        %3908 = vmatpush1.msra.mxu0 0.0
        %3909 = vmatprep.subr.mxu0 0.0
        %3910 = vmatpush1.msra.mxu0 0.0
        %3911 = vmatprep.subr.mxu0 0.0
        %3912 = vmatpush1.msra.mxu0 0.0
        %3913 = vmatprep.subr.mxu0 0.0
        %3914 = vmatpush1.msra.mxu0 0.0
        %3915 = vmatprep.subr.mxu0 0.0
        %3916 = vmatpush1.msra.mxu0 0.0
        %3917 = vmatprep.subr.mxu0 0.0
        %3918 = vmatpush1.msra.mxu0 0.0
        %3919 = vmatprep.subr.mxu0 0.0
        %3920 = vmatpush1.msra.mxu0 0.0
        %3921 = vmatprep.subr.mxu0 0.0
        %3922 = vmatpush1.msra.mxu0 0.0
        %3923 = vmatprep.subr.mxu0 0.0
        %3924 = vmatpush1.msra.mxu0 0.0
        %3925 = vmatprep.subr.mxu0 0.0
        %3926 = vmatpush1.msra.mxu0 0.0
        %3927 = vmatprep.subr.mxu0 0.0
        %3928 = vmatpush1.msra.mxu0 0.0
        %3929 = vmatprep.subr.mxu0 0.0
        %3930 = vmatpush1.msra.mxu0 0.0
        %3931 = vmatprep.subr.mxu0 0.0
        %3932 = vmatpush1.msra.mxu0 0.0
        %3933 = vmatprep.subr.mxu0 0.0
        %3934 = vmatpush1.msra.mxu0 0.0
        %3935 = vmatprep.subr.mxu0 0.0
        %3936 = vmatpush1.msra.mxu0 %v2724
        %3937 = vmatprep.subr.mxu0 0.0
        %3938 = vmatpush1.msra.mxu0 %v2719
        %3939 = vmatprep.subr.mxu0 0.0
        %3940 = vmatpush2.msra.mxu0 0.0
        %3941 = vmatprep.subr.mxu0 0.0
        %3942 = vmatpush2.msra.mxu0 0.0
        %3943 = vmatprep.subr.mxu0 0.0
        %3944 = vmatpush2.msra.mxu0 0.0
        %3945 = vmatprep.subr.mxu0 0.0
        %3946 = vmatpush2.msra.mxu0 0.0
        %3947 = vmatprep.subr.mxu0 0.0
        %3948 = vmatpush2.msra.mxu0 0.0
        %3949 = vmatprep.subr.mxu0 0.0
        %3950 = vmatpush2.msra.mxu0 0.0
        %3951 = vmatprep.subr.mxu0 0.0
        %3952 = vmatpush2.msra.mxu0 0.0
        %3953 = vmatprep.subr.mxu0 0.0
        %3954 = vmatpush2.msra.mxu0 0.0
        %3955 = vmatprep.subr.mxu0 0.0
        %3956 = vmatpush2.msra.mxu0 0.0
        %3957 = vmatprep.subr.mxu0 0.0
        %3958 = vmatpush2.msra.mxu0 0.0
        %3959 = vmatprep.subr.mxu0 0.0
        %3960 = vmatpush2.msra.mxu0 0.0
        %3961 = vmatprep.subr.mxu0 0.0
        %3962 = vmatpush2.msra.mxu0 0.0
        %3963 = vmatprep.subr.mxu0 0.0
        %3964 = vmatpush2.msra.mxu0 0.0
        %3965 = vmatprep.subr.mxu0 0.0
        %3966 = vmatpush2.msra.mxu0 0.0
        %3967 = vmatprep.subr.mxu0 0.0
        %3968 = vmatpush2.msra.mxu0 0.0
        %3969 = vmatprep.subr.mxu0 0.0
        %3970 = vmatpush2.msra.mxu0 0.0
        %3971 = vmatprep.mubr.f32.mxu0 0.0
        %3972 = vmatmul.mubr.f32.gmra.mxu0 %v3902
        %v3973 = vpop.f32.mrf.mxu0
        %v3974 = vadd.f32 0.0, %v3973
        %v3975 = vpop.f32.mrf.mxu0
        %3976 = vmatprep.mubr.f32.mxu0 0.0
        %3977 = vmatmul.mubr.f32.gmra.mxu0 %v3905
        %v3978 = vpop.f32.mrf.mxu0
        %v3979 = vadd.f32 0.0, %v3978
        %v3980 = vpop.f32.mrf.mxu0
        %3981 = vdwg.mxu0
        %v3983 = vsel %vm1661, %v3808, 0
        %v3986 = vsel %vm1661, %v3809, 0
        %3988 = vmatprep.subr.mxu0 0.0
        %3989 = vmatpush1.msra.mxu0 0.0
        %3990 = vmatprep.subr.mxu0 0.0
        %3991 = vmatpush1.msra.mxu0 0.0
        %3992 = vmatprep.subr.mxu0 0.0
        %3993 = vmatpush1.msra.mxu0 0.0
        %3994 = vmatprep.subr.mxu0 0.0
        %3995 = vmatpush1.msra.mxu0 0.0
        %3996 = vmatprep.subr.mxu0 0.0
        %3997 = vmatpush1.msra.mxu0 0.0
        %3998 = vmatprep.subr.mxu0 0.0
        %3999 = vmatpush1.msra.mxu0 0.0
        %4000 = vmatprep.subr.mxu0 0.0
        %4001 = vmatpush1.msra.mxu0 0.0
        %4002 = vmatprep.subr.mxu0 0.0
        %4003 = vmatpush1.msra.mxu0 0.0
        %4004 = vmatprep.subr.mxu0 0.0
        %4005 = vmatpush1.msra.mxu0 0.0
        %4006 = vmatprep.subr.mxu0 0.0
        %4007 = vmatpush1.msra.mxu0 0.0
        %4008 = vmatprep.subr.mxu0 0.0
        %4009 = vmatpush1.msra.mxu0 0.0
        %4010 = vmatprep.subr.mxu0 0.0
        %4011 = vmatpush1.msra.mxu0 0.0
        %4012 = vmatprep.subr.mxu0 0.0
        %4013 = vmatpush1.msra.mxu0 0.0
        %4014 = vmatprep.subr.mxu0 0.0
        %4015 = vmatpush1.msra.mxu0 0.0
        %4016 = vmatprep.subr.mxu0 0.0
        %4017 = vmatpush1.msra.mxu0 %v2734
        %4018 = vmatprep.subr.mxu0 0.0
        %4019 = vmatpush1.msra.mxu0 %v2729
        %4020 = vmatprep.subr.mxu0 0.0
        %4021 = vmatpush2.msra.mxu0 0.0
        %4022 = vmatprep.subr.mxu0 0.0
        %4023 = vmatpush2.msra.mxu0 0.0
        %4024 = vmatprep.subr.mxu0 0.0
        %4025 = vmatpush2.msra.mxu0 0.0
        %4026 = vmatprep.subr.mxu0 0.0
        %4027 = vmatpush2.msra.mxu0 0.0
        %4028 = vmatprep.subr.mxu0 0.0
        %4029 = vmatpush2.msra.mxu0 0.0
        %4030 = vmatprep.subr.mxu0 0.0
        %4031 = vmatpush2.msra.mxu0 0.0
        %4032 = vmatprep.subr.mxu0 0.0
        %4033 = vmatpush2.msra.mxu0 0.0
        %4034 = vmatprep.subr.mxu0 0.0
        %4035 = vmatpush2.msra.mxu0 0.0
        %4036 = vmatprep.subr.mxu0 0.0
        %4037 = vmatpush2.msra.mxu0 0.0
        %4038 = vmatprep.subr.mxu0 0.0
        %4039 = vmatpush2.msra.mxu0 0.0
        %4040 = vmatprep.subr.mxu0 0.0
        %4041 = vmatpush2.msra.mxu0 0.0
        %4042 = vmatprep.subr.mxu0 0.0
        %4043 = vmatpush2.msra.mxu0 0.0
        %4044 = vmatprep.subr.mxu0 0.0
        %4045 = vmatpush2.msra.mxu0 0.0
        %4046 = vmatprep.subr.mxu0 0.0
        %4047 = vmatpush2.msra.mxu0 0.0
        %4048 = vmatprep.subr.mxu0 0.0
        %4049 = vmatpush2.msra.mxu0 0.0
        %4050 = vmatprep.subr.mxu0 0.0
        %4051 = vmatpush2.msra.mxu0 0.0
        %4052 = vmatprep.mubr.f32.mxu0 0.0
        %4053 = vmatmul.mubr.f32.gmra.mxu0 %v3983
        %v4054 = vpop.f32.mrf.mxu0
        %v4055 = vadd.f32 0.0, %v4054
        %v4056 = vpop.f32.mrf.mxu0
        %4057 = vmatprep.mubr.f32.mxu0 0.0
        %4058 = vmatmul.mubr.f32.gmra.mxu0 %v3986
        %v4059 = vpop.f32.mrf.mxu0
        %v4060 = vadd.f32 0.0, %v4059
        %v4061 = vpop.f32.mrf.mxu0
        %4062 = vdwg.mxu0
        %v4064 = vsel %vm1661, %v3810, 0
        %v4067 = vsel %vm1661, %v3811, 0
        %4069 = vmatprep.subr.mxu0 0.0
        %4070 = vmatpush1.msra.mxu0 0.0
        %4071 = vmatprep.subr.mxu0 0.0
        %4072 = vmatpush1.msra.mxu0 0.0
        %4073 = vmatprep.subr.mxu0 0.0
        %4074 = vmatpush1.msra.mxu0 0.0
        %4075 = vmatprep.subr.mxu0 0.0
        %4076 = vmatpush1.msra.mxu0 0.0
        %4077 = vmatprep.subr.mxu0 0.0
        %4078 = vmatpush1.msra.mxu0 0.0
        %4079 = vmatprep.subr.mxu0 0.0
        %4080 = vmatpush1.msra.mxu0 0.0
        %4081 = vmatprep.subr.mxu0 0.0
        %4082 = vmatpush1.msra.mxu0 0.0
        %4083 = vmatprep.subr.mxu0 0.0
        %4084 = vmatpush1.msra.mxu0 0.0
        %4085 = vmatprep.subr.mxu0 0.0
        %4086 = vmatpush1.msra.mxu0 0.0
        %4087 = vmatprep.subr.mxu0 0.0
        %4088 = vmatpush1.msra.mxu0 0.0
        %4089 = vmatprep.subr.mxu0 0.0
        %4090 = vmatpush1.msra.mxu0 0.0
        %4091 = vmatprep.subr.mxu0 0.0
        %4092 = vmatpush1.msra.mxu0 0.0
        %4093 = vmatprep.subr.mxu0 0.0
        %4094 = vmatpush1.msra.mxu0 0.0
        %4095 = vmatprep.subr.mxu0 0.0
        %4096 = vmatpush1.msra.mxu0 0.0
        %4097 = vmatprep.subr.mxu0 0.0
        %4098 = vmatpush1.msra.mxu0 %v2744
        %4099 = vmatprep.subr.mxu0 0.0
        %4100 = vmatpush1.msra.mxu0 %v2739
        %4101 = vmatprep.subr.mxu0 0.0
        %4102 = vmatpush2.msra.mxu0 0.0
        %4103 = vmatprep.subr.mxu0 0.0
        %4104 = vmatpush2.msra.mxu0 0.0
        %4105 = vmatprep.subr.mxu0 0.0
        %4106 = vmatpush2.msra.mxu0 0.0
        %4107 = vmatprep.subr.mxu0 0.0
        %4108 = vmatpush2.msra.mxu0 0.0
        %4109 = vmatprep.subr.mxu0 0.0
        %4110 = vmatpush2.msra.mxu0 0.0
        %4111 = vmatprep.subr.mxu0 0.0
        %4112 = vmatpush2.msra.mxu0 0.0
        %4113 = vmatprep.subr.mxu0 0.0
        %4114 = vmatpush2.msra.mxu0 0.0
        %4115 = vmatprep.subr.mxu0 0.0
        %4116 = vmatpush2.msra.mxu0 0.0
        %4117 = vmatprep.subr.mxu0 0.0
        %4118 = vmatpush2.msra.mxu0 0.0
        %4119 = vmatprep.subr.mxu0 0.0
        %4120 = vmatpush2.msra.mxu0 0.0
        %4121 = vmatprep.subr.mxu0 0.0
        %4122 = vmatpush2.msra.mxu0 0.0
        %4123 = vmatprep.subr.mxu0 0.0
        %4124 = vmatpush2.msra.mxu0 0.0
        %4125 = vmatprep.subr.mxu0 0.0
        %4126 = vmatpush2.msra.mxu0 0.0
        %4127 = vmatprep.subr.mxu0 0.0
        %4128 = vmatpush2.msra.mxu0 0.0
        %4129 = vmatprep.subr.mxu0 0.0
        %4130 = vmatpush2.msra.mxu0 0.0
        %4131 = vmatprep.subr.mxu0 0.0
        %4132 = vmatpush2.msra.mxu0 0.0
        %4133 = vmatprep.mubr.f32.mxu0 0.0
        %4134 = vmatmul.mubr.f32.gmra.mxu0 %v4064
        %v4135 = vpop.f32.mrf.mxu0
        %v4136 = vadd.f32 0.0, %v4135
        %v4137 = vpop.f32.mrf.mxu0
        %4138 = vmatprep.mubr.f32.mxu0 0.0
        %4139 = vmatmul.mubr.f32.gmra.mxu0 %v4067
        %v4140 = vpop.f32.mrf.mxu0
        %v4141 = vadd.f32 0.0, %v4140
        %v4142 = vpop.f32.mrf.mxu0
        %4143 = vdwg.mxu0
        %v4145 = vsel %vm1661, %v3812, 0
        %v4148 = vsel %vm1661, %v3813, 0
        %4150 = vmatprep.subr.mxu0 0.0
        %4151 = vmatpush1.msra.mxu0 0.0
        %4152 = vmatprep.subr.mxu0 0.0
        %4153 = vmatpush1.msra.mxu0 0.0
        %4154 = vmatprep.subr.mxu0 0.0
        %4155 = vmatpush1.msra.mxu0 0.0
        %4156 = vmatprep.subr.mxu0 0.0
        %4157 = vmatpush1.msra.mxu0 0.0
        %4158 = vmatprep.subr.mxu0 0.0
        %4159 = vmatpush1.msra.mxu0 0.0
        %4160 = vmatprep.subr.mxu0 0.0
        %4161 = vmatpush1.msra.mxu0 0.0
        %4162 = vmatprep.subr.mxu0 0.0
        %4163 = vmatpush1.msra.mxu0 0.0
        %4164 = vmatprep.subr.mxu0 0.0
        %4165 = vmatpush1.msra.mxu0 0.0
        %4166 = vmatprep.subr.mxu0 0.0
        %4167 = vmatpush1.msra.mxu0 0.0
        %4168 = vmatprep.subr.mxu0 0.0
        %4169 = vmatpush1.msra.mxu0 0.0
        %4170 = vmatprep.subr.mxu0 0.0
        %4171 = vmatpush1.msra.mxu0 0.0
        %4172 = vmatprep.subr.mxu0 0.0
        %4173 = vmatpush1.msra.mxu0 0.0
        %4174 = vmatprep.subr.mxu0 0.0
        %4175 = vmatpush1.msra.mxu0 0.0
        %4176 = vmatprep.subr.mxu0 0.0
        %4177 = vmatpush1.msra.mxu0 0.0
        %4178 = vmatprep.subr.mxu0 0.0
        %4179 = vmatpush1.msra.mxu0 %v2754
        %4180 = vmatprep.subr.mxu0 0.0
        %4181 = vmatpush1.msra.mxu0 %v2749
        %4182 = vmatprep.subr.mxu0 0.0
        %4183 = vmatpush2.msra.mxu0 0.0
        %4184 = vmatprep.subr.mxu0 0.0
        %4185 = vmatpush2.msra.mxu0 0.0
        %4186 = vmatprep.subr.mxu0 0.0
        %4187 = vmatpush2.msra.mxu0 0.0
        %4188 = vmatprep.subr.mxu0 0.0
        %4189 = vmatpush2.msra.mxu0 0.0
        %4190 = vmatprep.subr.mxu0 0.0
        %4191 = vmatpush2.msra.mxu0 0.0
        %4192 = vmatprep.subr.mxu0 0.0
        %4193 = vmatpush2.msra.mxu0 0.0
        %4194 = vmatprep.subr.mxu0 0.0
        %4195 = vmatpush2.msra.mxu0 0.0
        %4196 = vmatprep.subr.mxu0 0.0
        %4197 = vmatpush2.msra.mxu0 0.0
        %4198 = vmatprep.subr.mxu0 0.0
        %4199 = vmatpush2.msra.mxu0 0.0
        %4200 = vmatprep.subr.mxu0 0.0
        %4201 = vmatpush2.msra.mxu0 0.0
        %4202 = vmatprep.subr.mxu0 0.0
        %4203 = vmatpush2.msra.mxu0 0.0
        %4204 = vmatprep.subr.mxu0 0.0
        %4205 = vmatpush2.msra.mxu0 0.0
        %4206 = vmatprep.subr.mxu0 0.0
        %4207 = vmatpush2.msra.mxu0 0.0
        %4208 = vmatprep.subr.mxu0 0.0
        %4209 = vmatpush2.msra.mxu0 0.0
        %4210 = vmatprep.subr.mxu0 0.0
        %4211 = vmatpush2.msra.mxu0 0.0
        %4212 = vmatprep.subr.mxu0 0.0
        %4213 = vmatpush2.msra.mxu0 0.0
        %4214 = vmatprep.mubr.f32.mxu0 0.0
        %4215 = vmatmul.mubr.f32.gmra.mxu0 %v4145
        %v4216 = vpop.f32.mrf.mxu0
        %v4217 = vadd.f32 0.0, %v4216
        %v4218 = vpop.f32.mrf.mxu0
        %4219 = vmatprep.mubr.f32.mxu0 0.0
        %4220 = vmatmul.mubr.f32.gmra.mxu0 %v4148
        %v4221 = vpop.f32.mrf.mxu0
        %v4222 = vadd.f32 0.0, %v4221
        %v4223 = vpop.f32.mrf.mxu0
        %4224 = vdwg.mxu0
        %v4226 = vsel %vm1661, %v3814, 0
        %v4229 = vsel %vm1661, %v3815, 0
        %4231 = vmatprep.subr.mxu0 0.0
        %4232 = vmatpush1.msra.mxu0 0.0
        %4233 = vmatprep.subr.mxu0 0.0
        %4234 = vmatpush1.msra.mxu0 0.0
        %4235 = vmatprep.subr.mxu0 0.0
        %4236 = vmatpush1.msra.mxu0 0.0
        %4237 = vmatprep.subr.mxu0 0.0
        %4238 = vmatpush1.msra.mxu0 0.0
        %4239 = vmatprep.subr.mxu0 0.0
        %4240 = vmatpush1.msra.mxu0 0.0
        %4241 = vmatprep.subr.mxu0 0.0
        %4242 = vmatpush1.msra.mxu0 0.0
        %4243 = vmatprep.subr.mxu0 0.0
        %4244 = vmatpush1.msra.mxu0 0.0
        %4245 = vmatprep.subr.mxu0 0.0
        %4246 = vmatpush1.msra.mxu0 0.0
        %4247 = vmatprep.subr.mxu0 0.0
        %4248 = vmatpush1.msra.mxu0 0.0
        %4249 = vmatprep.subr.mxu0 0.0
        %4250 = vmatpush1.msra.mxu0 0.0
        %4251 = vmatprep.subr.mxu0 0.0
        %4252 = vmatpush1.msra.mxu0 0.0
        %4253 = vmatprep.subr.mxu0 0.0
        %4254 = vmatpush1.msra.mxu0 0.0
        %4255 = vmatprep.subr.mxu0 0.0
        %4256 = vmatpush1.msra.mxu0 0.0
        %4257 = vmatprep.subr.mxu0 0.0
        %4258 = vmatpush1.msra.mxu0 0.0
        %4259 = vmatprep.subr.mxu0 0.0
        %4260 = vmatpush1.msra.mxu0 %v2764
        %4261 = vmatprep.subr.mxu0 0.0
        %4262 = vmatpush1.msra.mxu0 %v2759
        %4263 = vmatprep.subr.mxu0 0.0
        %4264 = vmatpush2.msra.mxu0 0.0
        %4265 = vmatprep.subr.mxu0 0.0
        %4266 = vmatpush2.msra.mxu0 0.0
        %4267 = vmatprep.subr.mxu0 0.0
        %4268 = vmatpush2.msra.mxu0 0.0
        %4269 = vmatprep.subr.mxu0 0.0
        %4270 = vmatpush2.msra.mxu0 0.0
        %4271 = vmatprep.subr.mxu0 0.0
        %4272 = vmatpush2.msra.mxu0 0.0
        %4273 = vmatprep.subr.mxu0 0.0
        %4274 = vmatpush2.msra.mxu0 0.0
        %4275 = vmatprep.subr.mxu0 0.0
        %4276 = vmatpush2.msra.mxu0 0.0
        %4277 = vmatprep.subr.mxu0 0.0
        %4278 = vmatpush2.msra.mxu0 0.0
        %4279 = vmatprep.subr.mxu0 0.0
        %4280 = vmatpush2.msra.mxu0 0.0
        %4281 = vmatprep.subr.mxu0 0.0
        %4282 = vmatpush2.msra.mxu0 0.0
        %4283 = vmatprep.subr.mxu0 0.0
        %4284 = vmatpush2.msra.mxu0 0.0
        %4285 = vmatprep.subr.mxu0 0.0
        %4286 = vmatpush2.msra.mxu0 0.0
        %4287 = vmatprep.subr.mxu0 0.0
        %4288 = vmatpush2.msra.mxu0 0.0
        %4289 = vmatprep.subr.mxu0 0.0
        %4290 = vmatpush2.msra.mxu0 0.0
        %4291 = vmatprep.subr.mxu0 0.0
        %4292 = vmatpush2.msra.mxu0 0.0
        %4293 = vmatprep.subr.mxu0 0.0
        %4294 = vmatpush2.msra.mxu0 0.0
        %4295 = vmatprep.mubr.f32.mxu0 0.0
        %4296 = vmatmul.mubr.f32.gmra.mxu0 %v4226
        %v4297 = vpop.f32.mrf.mxu0
        %v4298 = vadd.f32 0.0, %v4297
        %v4299 = vpop.f32.mrf.mxu0
        %4300 = vmatprep.mubr.f32.mxu0 0.0
        %4301 = vmatmul.mubr.f32.gmra.mxu0 %v4229
        %v4302 = vpop.f32.mrf.mxu0
        %v4303 = vadd.f32 0.0, %v4302
        %v4304 = vpop.f32.mrf.mxu0
        %4305 = vdwg.mxu0
        %v4307 = vsel %vm1661, %v3816, 0
        %v4310 = vsel %vm1661, %v3817, 0
        %4312 = vmatprep.subr.mxu0 0.0
        %4313 = vmatpush1.msra.mxu0 0.0
        %4314 = vmatprep.subr.mxu0 0.0
        %4315 = vmatpush1.msra.mxu0 0.0
        %4316 = vmatprep.subr.mxu0 0.0
        %4317 = vmatpush1.msra.mxu0 0.0
        %4318 = vmatprep.subr.mxu0 0.0
        %4319 = vmatpush1.msra.mxu0 0.0
        %4320 = vmatprep.subr.mxu0 0.0
        %4321 = vmatpush1.msra.mxu0 0.0
        %4322 = vmatprep.subr.mxu0 0.0
        %4323 = vmatpush1.msra.mxu0 0.0
        %4324 = vmatprep.subr.mxu0 0.0
        %4325 = vmatpush1.msra.mxu0 0.0
        %4326 = vmatprep.subr.mxu0 0.0
        %4327 = vmatpush1.msra.mxu0 0.0
        %4328 = vmatprep.subr.mxu0 0.0
        %4329 = vmatpush1.msra.mxu0 0.0
        %4330 = vmatprep.subr.mxu0 0.0
        %4331 = vmatpush1.msra.mxu0 0.0
        %4332 = vmatprep.subr.mxu0 0.0
        %4333 = vmatpush1.msra.mxu0 0.0
        %4334 = vmatprep.subr.mxu0 0.0
        %4335 = vmatpush1.msra.mxu0 0.0
        %4336 = vmatprep.subr.mxu0 0.0
        %4337 = vmatpush1.msra.mxu0 0.0
        %4338 = vmatprep.subr.mxu0 0.0
        %4339 = vmatpush1.msra.mxu0 0.0
        %4340 = vmatprep.subr.mxu0 0.0
        %4341 = vmatpush1.msra.mxu0 %v2774
        %4342 = vmatprep.subr.mxu0 0.0
        %4343 = vmatpush1.msra.mxu0 %v2769
        %4344 = vmatprep.subr.mxu0 0.0
        %4345 = vmatpush2.msra.mxu0 0.0
        %4346 = vmatprep.subr.mxu0 0.0
        %4347 = vmatpush2.msra.mxu0 0.0
        %4348 = vmatprep.subr.mxu0 0.0
        %4349 = vmatpush2.msra.mxu0 0.0
        %4350 = vmatprep.subr.mxu0 0.0
        %4351 = vmatpush2.msra.mxu0 0.0
        %4352 = vmatprep.subr.mxu0 0.0
        %4353 = vmatpush2.msra.mxu0 0.0
        %4354 = vmatprep.subr.mxu0 0.0
        %4355 = vmatpush2.msra.mxu0 0.0
        %4356 = vmatprep.subr.mxu0 0.0
        %4357 = vmatpush2.msra.mxu0 0.0
        %4358 = vmatprep.subr.mxu0 0.0
        %4359 = vmatpush2.msra.mxu0 0.0
        %4360 = vmatprep.subr.mxu0 0.0
        %4361 = vmatpush2.msra.mxu0 0.0
        %4362 = vmatprep.subr.mxu0 0.0
        %4363 = vmatpush2.msra.mxu0 0.0
        %4364 = vmatprep.subr.mxu0 0.0
        %4365 = vmatpush2.msra.mxu0 0.0
        %4366 = vmatprep.subr.mxu0 0.0
        %4367 = vmatpush2.msra.mxu0 0.0
        %4368 = vmatprep.subr.mxu0 0.0
        %4369 = vmatpush2.msra.mxu0 0.0
        %4370 = vmatprep.subr.mxu0 0.0
        %4371 = vmatpush2.msra.mxu0 0.0
        %4372 = vmatprep.subr.mxu0 0.0
        %4373 = vmatpush2.msra.mxu0 0.0
        %4374 = vmatprep.subr.mxu0 0.0
        %4375 = vmatpush2.msra.mxu0 0.0
        %4376 = vmatprep.mubr.f32.mxu0 0.0
        %4377 = vmatmul.mubr.f32.gmra.mxu0 %v4307
        %v4378 = vpop.f32.mrf.mxu0
        %v4379 = vadd.f32 0.0, %v4378
        %v4380 = vpop.f32.mrf.mxu0
        %4381 = vmatprep.mubr.f32.mxu0 0.0
        %4382 = vmatmul.mubr.f32.gmra.mxu0 %v4310
        %v4383 = vpop.f32.mrf.mxu0
        %v4384 = vadd.f32 0.0, %v4383
        %v4385 = vpop.f32.mrf.mxu0
        %4386 = vdwg.mxu0
        %v4388 = vsel %vm1661, %v3818, 0
        %v4391 = vsel %vm1661, %v3819, 0
        %4393 = vmatprep.subr.mxu0 0.0
        %4394 = vmatpush1.msra.mxu0 0.0
        %4395 = vmatprep.subr.mxu0 0.0
        %4396 = vmatpush1.msra.mxu0 0.0
        %4397 = vmatprep.subr.mxu0 0.0
        %4398 = vmatpush1.msra.mxu0 0.0
        %4399 = vmatprep.subr.mxu0 0.0
        %4400 = vmatpush1.msra.mxu0 0.0
        %4401 = vmatprep.subr.mxu0 0.0
        %4402 = vmatpush1.msra.mxu0 0.0
        %4403 = vmatprep.subr.mxu0 0.0
        %4404 = vmatpush1.msra.mxu0 0.0
        %4405 = vmatprep.subr.mxu0 0.0
        %4406 = vmatpush1.msra.mxu0 0.0
        %4407 = vmatprep.subr.mxu0 0.0
        %4408 = vmatpush1.msra.mxu0 0.0
        %4409 = vmatprep.subr.mxu0 0.0
        %4410 = vmatpush1.msra.mxu0 0.0
        %4411 = vmatprep.subr.mxu0 0.0
        %4412 = vmatpush1.msra.mxu0 0.0
        %4413 = vmatprep.subr.mxu0 0.0
        %4414 = vmatpush1.msra.mxu0 0.0
        %4415 = vmatprep.subr.mxu0 0.0
        %4416 = vmatpush1.msra.mxu0 0.0
        %4417 = vmatprep.subr.mxu0 0.0
        %4418 = vmatpush1.msra.mxu0 0.0
        %4419 = vmatprep.subr.mxu0 0.0
        %4420 = vmatpush1.msra.mxu0 0.0
        %4421 = vmatprep.subr.mxu0 0.0
        %4422 = vmatpush1.msra.mxu0 %v2784
        %4423 = vmatprep.subr.mxu0 0.0
        %4424 = vmatpush1.msra.mxu0 %v2779
        %4425 = vmatprep.subr.mxu0 0.0
        %4426 = vmatpush2.msra.mxu0 0.0
        %4427 = vmatprep.subr.mxu0 0.0
        %4428 = vmatpush2.msra.mxu0 0.0
        %4429 = vmatprep.subr.mxu0 0.0
        %4430 = vmatpush2.msra.mxu0 0.0
        %4431 = vmatprep.subr.mxu0 0.0
        %4432 = vmatpush2.msra.mxu0 0.0
        %4433 = vmatprep.subr.mxu0 0.0
        %4434 = vmatpush2.msra.mxu0 0.0
        %4435 = vmatprep.subr.mxu0 0.0
        %4436 = vmatpush2.msra.mxu0 0.0
        %4437 = vmatprep.subr.mxu0 0.0
        %4438 = vmatpush2.msra.mxu0 0.0
        %4439 = vmatprep.subr.mxu0 0.0
        %4440 = vmatpush2.msra.mxu0 0.0
        %4441 = vmatprep.subr.mxu0 0.0
        %4442 = vmatpush2.msra.mxu0 0.0
        %4443 = vmatprep.subr.mxu0 0.0
        %4444 = vmatpush2.msra.mxu0 0.0
        %4445 = vmatprep.subr.mxu0 0.0
        %4446 = vmatpush2.msra.mxu0 0.0
        %4447 = vmatprep.subr.mxu0 0.0
        %4448 = vmatpush2.msra.mxu0 0.0
        %4449 = vmatprep.subr.mxu0 0.0
        %4450 = vmatpush2.msra.mxu0 0.0
        %4451 = vmatprep.subr.mxu0 0.0
        %4452 = vmatpush2.msra.mxu0 0.0
        %4453 = vmatprep.subr.mxu0 0.0
        %4454 = vmatpush2.msra.mxu0 0.0
        %4455 = vmatprep.subr.mxu0 0.0
        %4456 = vmatpush2.msra.mxu0 0.0
        %4457 = vmatprep.mubr.f32.mxu0 0.0
        %4458 = vmatmul.mubr.f32.gmra.mxu0 %v4388
        %v4459 = vpop.f32.mrf.mxu0
        %v4460 = vadd.f32 0.0, %v4459
        %v4461 = vpop.f32.mrf.mxu0
        %4462 = vmatprep.mubr.f32.mxu0 0.0
        %4463 = vmatmul.mubr.f32.gmra.mxu0 %v4391
        %v4464 = vpop.f32.mrf.mxu0
        %v4465 = vadd.f32 0.0, %v4464
        %v4466 = vpop.f32.mrf.mxu0
        %4467 = vdwg.mxu0
        %s4468 = scalar_lea.vmem %s6, 8
        %v4469 = vld [vmem:[%s4468] sm:$0xff]
        %v4471 = vsel %vm964, %v3893, 0
        %v4474 = vsel %vm964, %v3898, 0
        %v4477 = vsel %vm964, %v3974, 0
        %v4480 = vsel %vm964, %v3979, 0
        %v4483 = vsel %vm964, %v4055, 0
        %v4486 = vsel %vm964, %v4060, 0
        %v4489 = vsel %vm964, %v4136, 0
        %v4492 = vsel %vm964, %v4141, 0
        %v4495 = vsel %vm964, %v4217, 0
        %v4498 = vsel %vm964, %v4222, 0
        %v4501 = vsel %vm964, %v4298, 0
        %v4504 = vsel %vm964, %v4303, 0
        %v4507 = vsel %vm964, %v4379, 0
        %v4510 = vsel %vm964, %v4384, 0
        %v4513 = vsel %vm964, %v4460, 0
        %v4516 = vsel %vm964, %v4465, 0
        %4518 = vmatprep.subr.mxu0 0.0
        %4519 = vmatpush1.msra.mxu0 0.0
        %4520 = vmatprep.subr.mxu0 0.0
        %4521 = vmatpush1.msra.mxu0 0.0
        %4522 = vmatprep.subr.mxu0 0.0
        %4523 = vmatpush1.msra.mxu0 0.0
        %4524 = vmatprep.subr.mxu0 0.0
        %4525 = vmatpush1.msra.mxu0 0.0
        %4526 = vmatprep.subr.mxu0 0.0
        %4527 = vmatpush1.msra.mxu0 0.0
        %4528 = vmatprep.subr.mxu0 0.0
        %4529 = vmatpush1.msra.mxu0 0.0
        %4530 = vmatprep.subr.mxu0 0.0
        %4531 = vmatpush1.msra.mxu0 0.0
        %4532 = vmatprep.subr.mxu0 0.0
        %4533 = vmatpush1.msra.mxu0 0.0
        %4534 = vmatprep.subr.mxu0 0.0
        %4535 = vmatpush1.msra.mxu0 0.0
        %4536 = vmatprep.subr.mxu0 0.0
        %4537 = vmatpush1.msra.mxu0 0.0
        %4538 = vmatprep.subr.mxu0 0.0
        %4539 = vmatpush1.msra.mxu0 0.0
        %4540 = vmatprep.subr.mxu0 0.0
        %4541 = vmatpush1.msra.mxu0 0.0
        %4542 = vmatprep.subr.mxu0 0.0
        %4543 = vmatpush1.msra.mxu0 0.0
        %4544 = vmatprep.subr.mxu0 0.0
        %4545 = vmatpush1.msra.mxu0 0.0
        %4546 = vmatprep.subr.mxu0 0.0
        %4547 = vmatpush1.msra.mxu0 0.0
        %4548 = vmatprep.subr.mxu0 0.0
        %4549 = vmatpush1.msra.mxu0 %v4469
        %4550 = vmatprep.subr.mxu0 0.0
        %4551 = vmatpush2.msra.mxu0 0.0
        %4552 = vmatprep.subr.mxu0 0.0
        %4553 = vmatpush2.msra.mxu0 0.0
        %4554 = vmatprep.subr.mxu0 0.0
        %4555 = vmatpush2.msra.mxu0 0.0
        %4556 = vmatprep.subr.mxu0 0.0
        %4557 = vmatpush2.msra.mxu0 0.0
        %4558 = vmatprep.subr.mxu0 0.0
        %4559 = vmatpush2.msra.mxu0 0.0
        %4560 = vmatprep.subr.mxu0 0.0
        %4561 = vmatpush2.msra.mxu0 0.0
        %4562 = vmatprep.subr.mxu0 0.0
        %4563 = vmatpush2.msra.mxu0 0.0
        %4564 = vmatprep.subr.mxu0 0.0
        %4565 = vmatpush2.msra.mxu0 0.0
        %4566 = vmatprep.subr.mxu0 0.0
        %4567 = vmatpush2.msra.mxu0 0.0
        %4568 = vmatprep.subr.mxu0 0.0
        %4569 = vmatpush2.msra.mxu0 0.0
        %4570 = vmatprep.subr.mxu0 0.0
        %4571 = vmatpush2.msra.mxu0 0.0
        %4572 = vmatprep.subr.mxu0 0.0
        %4573 = vmatpush2.msra.mxu0 0.0
        %4574 = vmatprep.subr.mxu0 0.0
        %4575 = vmatpush2.msra.mxu0 0.0
        %4576 = vmatprep.subr.mxu0 0.0
        %4577 = vmatpush2.msra.mxu0 0.0
        %4578 = vmatprep.subr.mxu0 0.0
        %4579 = vmatpush2.msra.mxu0 0.0
        %4580 = vmatprep.subr.mxu0 0.0
        %4581 = vmatpush2.msra.mxu0 0.0
        %4582 = vmatprep.mubr.f32.mxu0 0.0
        %4583 = vmatmul.mubr.f32.gmra.mxu0 %v4471
        %v4584 = vpop.f32.mrf.mxu0
        %v4585 = vadd.f32 0.0, %v4584
        %v4586 = vpop.f32.mrf.mxu0
        %4587 = vmatprep.mubr.f32.mxu0 0.0
        %4588 = vmatmul.mubr.f32.gmra.mxu0 %v4474
        %v4589 = vpop.f32.mrf.mxu0
        %v4590 = vadd.f32 0.0, %v4589
        %v4591 = vpop.f32.mrf.mxu0
        %4592 = vmatprep.mubr.f32.mxu0 0.0
        %4593 = vmatmul.mubr.f32.gmra.mxu0 %v4477
        %v4594 = vpop.f32.mrf.mxu0
        %v4595 = vadd.f32 0.0, %v4594
        %v4596 = vpop.f32.mrf.mxu0
        %4597 = vmatprep.mubr.f32.mxu0 0.0
        %4598 = vmatmul.mubr.f32.gmra.mxu0 %v4480
        %v4599 = vpop.f32.mrf.mxu0
        %v4600 = vadd.f32 0.0, %v4599
        %v4601 = vpop.f32.mrf.mxu0
        %4602 = vmatprep.mubr.f32.mxu0 0.0
        %4603 = vmatmul.mubr.f32.gmra.mxu0 %v4483
        %v4604 = vpop.f32.mrf.mxu0
        %v4605 = vadd.f32 0.0, %v4604
        %v4606 = vpop.f32.mrf.mxu0
        %4607 = vmatprep.mubr.f32.mxu0 0.0
        %4608 = vmatmul.mubr.f32.gmra.mxu0 %v4486
        %v4609 = vpop.f32.mrf.mxu0
        %v4610 = vadd.f32 0.0, %v4609
        %v4611 = vpop.f32.mrf.mxu0
        %4612 = vmatprep.mubr.f32.mxu0 0.0
        %4613 = vmatmul.mubr.f32.gmra.mxu0 %v4489
        %v4614 = vpop.f32.mrf.mxu0
        %v4615 = vadd.f32 0.0, %v4614
        %v4616 = vpop.f32.mrf.mxu0
        %4617 = vmatprep.mubr.f32.mxu0 0.0
        %4618 = vmatmul.mubr.f32.gmra.mxu0 %v4492
        %v4619 = vpop.f32.mrf.mxu0
        %v4620 = vadd.f32 0.0, %v4619
        %v4621 = vpop.f32.mrf.mxu0
        %4622 = vmatprep.mubr.f32.mxu0 0.0
        %4623 = vmatmul.mubr.f32.gmra.mxu0 %v4495
        %v4624 = vpop.f32.mrf.mxu0
        %v4625 = vadd.f32 0.0, %v4624
        %v4626 = vpop.f32.mrf.mxu0
        %4627 = vmatprep.mubr.f32.mxu0 0.0
        %4628 = vmatmul.mubr.f32.gmra.mxu0 %v4498
        %v4629 = vpop.f32.mrf.mxu0
        %v4630 = vadd.f32 0.0, %v4629
        %v4631 = vpop.f32.mrf.mxu0
        %4632 = vmatprep.mubr.f32.mxu0 0.0
        %4633 = vmatmul.mubr.f32.gmra.mxu0 %v4501
        %v4634 = vpop.f32.mrf.mxu0
        %v4635 = vadd.f32 0.0, %v4634
        %v4636 = vpop.f32.mrf.mxu0
        %4637 = vmatprep.mubr.f32.mxu0 0.0
        %4638 = vmatmul.mubr.f32.gmra.mxu0 %v4504
        %v4639 = vpop.f32.mrf.mxu0
        %v4640 = vadd.f32 0.0, %v4639
        %v4641 = vpop.f32.mrf.mxu0
        %4642 = vmatprep.mubr.f32.mxu0 0.0
        %4643 = vmatmul.mubr.f32.gmra.mxu0 %v4507
        %v4644 = vpop.f32.mrf.mxu0
        %v4645 = vadd.f32 0.0, %v4644
        %v4646 = vpop.f32.mrf.mxu0
        %4647 = vmatprep.mubr.f32.mxu0 0.0
        %4648 = vmatmul.mubr.f32.gmra.mxu0 %v4510
        %v4649 = vpop.f32.mrf.mxu0
        %v4650 = vadd.f32 0.0, %v4649
        %v4651 = vpop.f32.mrf.mxu0
        %4652 = vmatprep.mubr.f32.mxu0 0.0
        %4653 = vmatmul.mubr.f32.gmra.mxu0 %v4513
        %v4654 = vpop.f32.mrf.mxu0
        %v4655 = vadd.f32 0.0, %v4654
        %v4656 = vpop.f32.mrf.mxu0
        %4657 = vmatprep.mubr.f32.mxu0 0.0
        %4658 = vmatmul.mubr.f32.gmra.mxu0 %v4516
        %v4659 = vpop.f32.mrf.mxu0
        %v4660 = vadd.f32 0.0, %v4659
        %v4661 = vpop.f32.mrf.mxu0
        %4662 = vdwg.mxu0
        %v4664 = vsel %vm964, %v1911, 0
        %v4667 = vsel %vm964, %v1916, 0
        %v4670 = vsel %vm964, %v1992, 0
        %v4673 = vsel %vm964, %v1997, 0
        %v4676 = vsel %vm964, %v2073, 0
        %v4679 = vsel %vm964, %v2078, 0
        %v4682 = vsel %vm964, %v2154, 0
        %v4685 = vsel %vm964, %v2159, 0
        %v4688 = vsel %vm964, %v2235, 0
        %v4691 = vsel %vm964, %v2240, 0
        %v4694 = vsel %vm964, %v2316, 0
        %v4697 = vsel %vm964, %v2321, 0
        %v4700 = vsel %vm964, %v2397, 0
        %v4703 = vsel %vm964, %v2402, 0
        %v4706 = vsel %vm964, %v2478, 0
        %v4709 = vsel %vm964, %v2483, 0
        %4711 = vmatprep.subr.mxu0 0.0
        %4712 = vmatpush1.msra.mxu0 0.0
        %4713 = vmatprep.subr.mxu0 0.0
        %4714 = vmatpush1.msra.mxu0 0.0
        %4715 = vmatprep.subr.mxu0 0.0
        %4716 = vmatpush1.msra.mxu0 0.0
        %4717 = vmatprep.subr.mxu0 0.0
        %4718 = vmatpush1.msra.mxu0 0.0
        %4719 = vmatprep.subr.mxu0 0.0
        %4720 = vmatpush1.msra.mxu0 0.0
        %4721 = vmatprep.subr.mxu0 0.0
        %4722 = vmatpush1.msra.mxu0 0.0
        %4723 = vmatprep.subr.mxu0 0.0
        %4724 = vmatpush1.msra.mxu0 0.0
        %4725 = vmatprep.subr.mxu0 0.0
        %4726 = vmatpush1.msra.mxu0 0.0
        %4727 = vmatprep.subr.mxu0 0.0
        %4728 = vmatpush1.msra.mxu0 0.0
        %4729 = vmatprep.subr.mxu0 0.0
        %4730 = vmatpush1.msra.mxu0 0.0
        %4731 = vmatprep.subr.mxu0 0.0
        %4732 = vmatpush1.msra.mxu0 0.0
        %4733 = vmatprep.subr.mxu0 0.0
        %4734 = vmatpush1.msra.mxu0 0.0
        %4735 = vmatprep.subr.mxu0 0.0
        %4736 = vmatpush1.msra.mxu0 0.0
        %4737 = vmatprep.subr.mxu0 0.0
        %4738 = vmatpush1.msra.mxu0 0.0
        %4739 = vmatprep.subr.mxu0 0.0
        %4740 = vmatpush1.msra.mxu0 0.0
        %4741 = vmatprep.subr.mxu0 0.0
        %4742 = vmatpush1.msra.mxu0 %v2486
        %4743 = vmatprep.subr.mxu0 0.0
        %4744 = vmatpush2.msra.mxu0 0.0
        %4745 = vmatprep.subr.mxu0 0.0
        %4746 = vmatpush2.msra.mxu0 0.0
        %4747 = vmatprep.subr.mxu0 0.0
        %4748 = vmatpush2.msra.mxu0 0.0
        %4749 = vmatprep.subr.mxu0 0.0
        %4750 = vmatpush2.msra.mxu0 0.0
        %4751 = vmatprep.subr.mxu0 0.0
        %4752 = vmatpush2.msra.mxu0 0.0
        %4753 = vmatprep.subr.mxu0 0.0
        %4754 = vmatpush2.msra.mxu0 0.0
        %4755 = vmatprep.subr.mxu0 0.0
        %4756 = vmatpush2.msra.mxu0 0.0
        %4757 = vmatprep.subr.mxu0 0.0
        %4758 = vmatpush2.msra.mxu0 0.0
        %4759 = vmatprep.subr.mxu0 0.0
        %4760 = vmatpush2.msra.mxu0 0.0
        %4761 = vmatprep.subr.mxu0 0.0
        %4762 = vmatpush2.msra.mxu0 0.0
        %4763 = vmatprep.subr.mxu0 0.0
        %4764 = vmatpush2.msra.mxu0 0.0
        %4765 = vmatprep.subr.mxu0 0.0
        %4766 = vmatpush2.msra.mxu0 0.0
        %4767 = vmatprep.subr.mxu0 0.0
        %4768 = vmatpush2.msra.mxu0 0.0
        %4769 = vmatprep.subr.mxu0 0.0
        %4770 = vmatpush2.msra.mxu0 0.0
        %4771 = vmatprep.subr.mxu0 0.0
        %4772 = vmatpush2.msra.mxu0 0.0
        %4773 = vmatprep.subr.mxu0 0.0
        %4774 = vmatpush2.msra.mxu0 0.0
        %4775 = vmatprep.mubr.f32.mxu0 0.0
        %4776 = vmatmul.mubr.f32.gmra.mxu0 %v4664
        %v4777 = vpop.f32.mrf.mxu0
        %v4778 = vadd.f32 %v4585, %v4777
        %v4779 = vpop.f32.mrf.mxu0
        %4780 = vmatprep.mubr.f32.mxu0 0.0
        %4781 = vmatmul.mubr.f32.gmra.mxu0 %v4667
        %v4782 = vpop.f32.mrf.mxu0
        %v4783 = vadd.f32 %v4590, %v4782
        %v4784 = vpop.f32.mrf.mxu0
        %4785 = vmatprep.mubr.f32.mxu0 0.0
        %4786 = vmatmul.mubr.f32.gmra.mxu0 %v4670
        %v4787 = vpop.f32.mrf.mxu0
        %v4788 = vadd.f32 %v4595, %v4787
        %v4789 = vpop.f32.mrf.mxu0
        %4790 = vmatprep.mubr.f32.mxu0 0.0
        %4791 = vmatmul.mubr.f32.gmra.mxu0 %v4673
        %v4792 = vpop.f32.mrf.mxu0
        %v4793 = vadd.f32 %v4600, %v4792
        %v4794 = vpop.f32.mrf.mxu0
        %4795 = vmatprep.mubr.f32.mxu0 0.0
        %4796 = vmatmul.mubr.f32.gmra.mxu0 %v4676
        %v4797 = vpop.f32.mrf.mxu0
        %v4798 = vadd.f32 %v4605, %v4797
        %v4799 = vpop.f32.mrf.mxu0
        %4800 = vmatprep.mubr.f32.mxu0 0.0
        %4801 = vmatmul.mubr.f32.gmra.mxu0 %v4679
        %v4802 = vpop.f32.mrf.mxu0
        %v4803 = vadd.f32 %v4610, %v4802
        %v4804 = vpop.f32.mrf.mxu0
        %4805 = vmatprep.mubr.f32.mxu0 0.0
        %4806 = vmatmul.mubr.f32.gmra.mxu0 %v4682
        %v4807 = vpop.f32.mrf.mxu0
        %v4808 = vadd.f32 %v4615, %v4807
        %v4809 = vpop.f32.mrf.mxu0
        %4810 = vmatprep.mubr.f32.mxu0 0.0
        %4811 = vmatmul.mubr.f32.gmra.mxu0 %v4685
        %v4812 = vpop.f32.mrf.mxu0
        %v4813 = vadd.f32 %v4620, %v4812
        %v4814 = vpop.f32.mrf.mxu0
        %4815 = vmatprep.mubr.f32.mxu0 0.0
        %4816 = vmatmul.mubr.f32.gmra.mxu0 %v4688
        %v4817 = vpop.f32.mrf.mxu0
        %v4818 = vadd.f32 %v4625, %v4817
        %v4819 = vpop.f32.mrf.mxu0
        %4820 = vmatprep.mubr.f32.mxu0 0.0
        %4821 = vmatmul.mubr.f32.gmra.mxu0 %v4691
        %v4822 = vpop.f32.mrf.mxu0
        %v4823 = vadd.f32 %v4630, %v4822
        %v4824 = vpop.f32.mrf.mxu0
        %4825 = vmatprep.mubr.f32.mxu0 0.0
        %4826 = vmatmul.mubr.f32.gmra.mxu0 %v4694
        %v4827 = vpop.f32.mrf.mxu0
        %v4828 = vadd.f32 %v4635, %v4827
        %v4829 = vpop.f32.mrf.mxu0
        %4830 = vmatprep.mubr.f32.mxu0 0.0
        %4831 = vmatmul.mubr.f32.gmra.mxu0 %v4697
        %v4832 = vpop.f32.mrf.mxu0
        %v4833 = vadd.f32 %v4640, %v4832
        %v4834 = vpop.f32.mrf.mxu0
        %4835 = vmatprep.mubr.f32.mxu0 0.0
        %4836 = vmatmul.mubr.f32.gmra.mxu0 %v4700
        %v4837 = vpop.f32.mrf.mxu0
        %v4838 = vadd.f32 %v4645, %v4837
        %v4839 = vpop.f32.mrf.mxu0
        %4840 = vmatprep.mubr.f32.mxu0 0.0
        %4841 = vmatmul.mubr.f32.gmra.mxu0 %v4703
        %v4842 = vpop.f32.mrf.mxu0
        %v4843 = vadd.f32 %v4650, %v4842
        %v4844 = vpop.f32.mrf.mxu0
        %4845 = vmatprep.mubr.f32.mxu0 0.0
        %4846 = vmatmul.mubr.f32.gmra.mxu0 %v4706
        %v4847 = vpop.f32.mrf.mxu0
        %v4848 = vadd.f32 %v4655, %v4847
        %v4849 = vpop.f32.mrf.mxu0
        %4850 = vmatprep.mubr.f32.mxu0 0.0
        %4851 = vmatmul.mubr.f32.gmra.mxu0 %v4709
        %v4852 = vpop.f32.mrf.mxu0
        %v4853 = vadd.f32 %v4660, %v4852
        %v4854 = vpop.f32.mrf.mxu0
        %4855 = vdwg.mxu0
        %s4856 = scalar_lea.vmem %s2, 64
        %v4857 = vld [vmem:[%s4856] sm:$0xff]
        %v4858 = vld [vmem:[%s4856 + $0x8] sm:$0xff]
        %v4859 = vld [vmem:[%s4856 + $0x10] sm:$0xff]
        %v4860 = vld [vmem:[%s4856 + $0x18] sm:$0xff]
        %4861 = vmatprep.subr.mxu0 0.0
        %4862 = vmatpush1.msra.mxu0 0.0
        %4863 = vmatprep.subr.mxu0 0.0
        %4864 = vmatpush1.msra.mxu0 0.0
        %4865 = vmatprep.subr.mxu0 0.0
        %4866 = vmatpush1.msra.mxu0 0.0
        %4867 = vmatprep.subr.mxu0 0.0
        %4868 = vmatpush1.msra.mxu0 0.0
        %4869 = vmatprep.subr.mxu0 0.0
        %4870 = vmatpush1.msra.mxu0 0.0
        %4871 = vmatprep.subr.mxu0 0.0
        %4872 = vmatpush1.msra.mxu0 0.0
        %4873 = vmatprep.subr.mxu0 0.0
        %4874 = vmatpush1.msra.mxu0 0.0
        %4875 = vmatprep.subr.mxu0 0.0
        %4876 = vmatpush1.msra.mxu0 0.0
        %4877 = vmatprep.subr.mxu0 0.0
        %4878 = vmatpush1.msra.mxu0 0.0
        %4879 = vmatprep.subr.mxu0 0.0
        %4880 = vmatpush1.msra.mxu0 0.0
        %4881 = vmatprep.subr.mxu0 0.0
        %4882 = vmatpush1.msra.mxu0 0.0
        %4883 = vmatprep.subr.mxu0 0.0
        %4884 = vmatpush1.msra.mxu0 0.0
        %4885 = vmatprep.subr.mxu0 0.0
        %4886 = vmatpush1.msra.mxu0 %v4860
        %4887 = vmatprep.subr.mxu0 0.0
        %4888 = vmatpush1.msra.mxu0 %v4859
        %4889 = vmatprep.subr.mxu0 0.0
        %4890 = vmatpush1.msra.mxu0 %v4858
        %4891 = vmatprep.subr.mxu0 0.0
        %4892 = vmatpush1.msra.mxu0 %v4857
        %4893 = vmatprep.subr.mxu0 0.0
        %4894 = vmatpush2.msra.mxu0 0.0
        %4895 = vmatprep.subr.mxu0 0.0
        %4896 = vmatpush2.msra.mxu0 0.0
        %4897 = vmatprep.subr.mxu0 0.0
        %4898 = vmatpush2.msra.mxu0 0.0
        %4899 = vmatprep.subr.mxu0 0.0
        %4900 = vmatpush2.msra.mxu0 0.0
        %4901 = vmatprep.subr.mxu0 0.0
        %4902 = vmatpush2.msra.mxu0 0.0
        %4903 = vmatprep.subr.mxu0 0.0
        %4904 = vmatpush2.msra.mxu0 0.0
        %4905 = vmatprep.subr.mxu0 0.0
        %4906 = vmatpush2.msra.mxu0 0.0
        %4907 = vmatprep.subr.mxu0 0.0
        %4908 = vmatpush2.msra.mxu0 0.0
        %4909 = vmatprep.subr.mxu0 0.0
        %4910 = vmatpush2.msra.mxu0 0.0
        %4911 = vmatprep.subr.mxu0 0.0
        %4912 = vmatpush2.msra.mxu0 0.0
        %4913 = vmatprep.subr.mxu0 0.0
        %4914 = vmatpush2.msra.mxu0 0.0
        %4915 = vmatprep.subr.mxu0 0.0
        %4916 = vmatpush2.msra.mxu0 0.0
        %4917 = vmatprep.subr.mxu0 0.0
        %4918 = vmatpush2.msra.mxu0 0.0
        %4919 = vmatprep.subr.mxu0 0.0
        %4920 = vmatpush2.msra.mxu0 0.0
        %4921 = vmatprep.subr.mxu0 0.0
        %4922 = vmatpush2.msra.mxu0 0.0
        %4923 = vmatprep.subr.mxu0 0.0
        %4924 = vmatpush2.msra.mxu0 0.0
        %4925 = vmatprep.mubr.f32.mxu0 0.0
        %4926 = vmatmul.mubr.f32.gmra.mxu0 %v417
        %v4927 = vpop.f32.mrf.mxu0
        %v4928 = vadd.f32 0.0, %v4927
        %v4929 = vpop.f32.mrf.mxu0
        %4930 = vmatprep.mubr.f32.mxu0 0.0
        %4931 = vmatmul.mubr.f32.gmra.mxu0 %v420
        %v4932 = vpop.f32.mrf.mxu0
        %v4933 = vadd.f32 0.0, %v4932
        %v4934 = vpop.f32.mrf.mxu0
        %4935 = vmatprep.mubr.f32.mxu0 0.0
        %4936 = vmatmul.mubr.f32.gmra.mxu0 %v423
        %v4937 = vpop.f32.mrf.mxu0
        %v4938 = vadd.f32 0.0, %v4937
        %v4939 = vpop.f32.mrf.mxu0
        %4940 = vmatprep.mubr.f32.mxu0 0.0
        %4941 = vmatmul.mubr.f32.gmra.mxu0 %v426
        %v4942 = vpop.f32.mrf.mxu0
        %v4943 = vadd.f32 0.0, %v4942
        %v4944 = vpop.f32.mrf.mxu0
        %4945 = vmatprep.mubr.f32.mxu0 0.0
        %4946 = vmatmul.mubr.f32.gmra.mxu0 %v429
        %v4947 = vpop.f32.mrf.mxu0
        %v4948 = vadd.f32 0.0, %v4947
        %v4949 = vpop.f32.mrf.mxu0
        %4950 = vmatprep.mubr.f32.mxu0 0.0
        %4951 = vmatmul.mubr.f32.gmra.mxu0 %v432
        %v4952 = vpop.f32.mrf.mxu0
        %v4953 = vadd.f32 0.0, %v4952
        %v4954 = vpop.f32.mrf.mxu0
        %4955 = vmatprep.mubr.f32.mxu0 0.0
        %4956 = vmatmul.mubr.f32.gmra.mxu0 %v435
        %v4957 = vpop.f32.mrf.mxu0
        %v4958 = vadd.f32 0.0, %v4957
        %v4959 = vpop.f32.mrf.mxu0
        %4960 = vmatprep.mubr.f32.mxu0 0.0
        %4961 = vmatmul.mubr.f32.gmra.mxu0 %v438
        %v4962 = vpop.f32.mrf.mxu0
        %v4963 = vadd.f32 0.0, %v4962
        %v4964 = vpop.f32.mrf.mxu0
        %4965 = vmatprep.mubr.f32.mxu0 0.0
        %4966 = vmatmul.mubr.f32.gmra.mxu0 %v441
        %v4967 = vpop.f32.mrf.mxu0
        %v4968 = vadd.f32 0.0, %v4967
        %v4969 = vpop.f32.mrf.mxu0
        %4970 = vmatprep.mubr.f32.mxu0 0.0
        %4971 = vmatmul.mubr.f32.gmra.mxu0 %v444
        %v4972 = vpop.f32.mrf.mxu0
        %v4973 = vadd.f32 0.0, %v4972
        %v4974 = vpop.f32.mrf.mxu0
        %4975 = vmatprep.mubr.f32.mxu0 0.0
        %4976 = vmatmul.mubr.f32.gmra.mxu0 %v447
        %v4977 = vpop.f32.mrf.mxu0
        %v4978 = vadd.f32 0.0, %v4977
        %v4979 = vpop.f32.mrf.mxu0
        %4980 = vmatprep.mubr.f32.mxu0 0.0
        %4981 = vmatmul.mubr.f32.gmra.mxu0 %v450
        %v4982 = vpop.f32.mrf.mxu0
        %v4983 = vadd.f32 0.0, %v4982
        %v4984 = vpop.f32.mrf.mxu0
        %4985 = vmatprep.mubr.f32.mxu0 0.0
        %4986 = vmatmul.mubr.f32.gmra.mxu0 %v453
        %v4987 = vpop.f32.mrf.mxu0
        %v4988 = vadd.f32 0.0, %v4987
        %v4989 = vpop.f32.mrf.mxu0
        %4990 = vmatprep.mubr.f32.mxu0 0.0
        %4991 = vmatmul.mubr.f32.gmra.mxu0 %v456
        %v4992 = vpop.f32.mrf.mxu0
        %v4993 = vadd.f32 0.0, %v4992
        %v4994 = vpop.f32.mrf.mxu0
        %4995 = vmatprep.mubr.f32.mxu0 0.0
        %4996 = vmatmul.mubr.f32.gmra.mxu0 %v459
        %v4997 = vpop.f32.mrf.mxu0
        %v4998 = vadd.f32 0.0, %v4997
        %v4999 = vpop.f32.mrf.mxu0
        %5000 = vmatprep.mubr.f32.mxu0 0.0
        %5001 = vmatmul.mubr.f32.gmra.mxu0 %v462
        %v5002 = vpop.f32.mrf.mxu0
        %v5003 = vadd.f32 0.0, %v5002
        %v5004 = vpop.f32.mrf.mxu0
        %5005 = vdwg.mxu0
        %s5006 = scalar_lea.vmem %s3, 64
        %v5007 = vld [vmem:[%s5006] sm:$0xff]
        %v5008 = vld [vmem:[%s5006 + $0x8] sm:$0xff]
        %v5009 = vld [vmem:[%s5006 + $0x10] sm:$0xff]
        %v5010 = vld [vmem:[%s5006 + $0x18] sm:$0xff]
        %5011 = vmatprep.subr.mxu0 0.0
        %5012 = vmatpush1.msra.mxu0 0.0
        %5013 = vmatprep.subr.mxu0 0.0
        %5014 = vmatpush1.msra.mxu0 0.0
        %5015 = vmatprep.subr.mxu0 0.0
        %5016 = vmatpush1.msra.mxu0 0.0
        %5017 = vmatprep.subr.mxu0 0.0
        %5018 = vmatpush1.msra.mxu0 0.0
        %5019 = vmatprep.subr.mxu0 0.0
        %5020 = vmatpush1.msra.mxu0 0.0
        %5021 = vmatprep.subr.mxu0 0.0
        %5022 = vmatpush1.msra.mxu0 0.0
        %5023 = vmatprep.subr.mxu0 0.0
        %5024 = vmatpush1.msra.mxu0 0.0
        %5025 = vmatprep.subr.mxu0 0.0
        %5026 = vmatpush1.msra.mxu0 0.0
        %5027 = vmatprep.subr.mxu0 0.0
        %5028 = vmatpush1.msra.mxu0 0.0
        %5029 = vmatprep.subr.mxu0 0.0
        %5030 = vmatpush1.msra.mxu0 0.0
        %5031 = vmatprep.subr.mxu0 0.0
        %5032 = vmatpush1.msra.mxu0 0.0
        %5033 = vmatprep.subr.mxu0 0.0
        %5034 = vmatpush1.msra.mxu0 0.0
        %5035 = vmatprep.subr.mxu0 0.0
        %5036 = vmatpush1.msra.mxu0 %v5010
        %5037 = vmatprep.subr.mxu0 0.0
        %5038 = vmatpush1.msra.mxu0 %v5009
        %5039 = vmatprep.subr.mxu0 0.0
        %5040 = vmatpush1.msra.mxu0 %v5008
        %5041 = vmatprep.subr.mxu0 0.0
        %5042 = vmatpush1.msra.mxu0 %v5007
        %5043 = vmatprep.subr.mxu0 0.0
        %5044 = vmatpush2.msra.mxu0 0.0
        %5045 = vmatprep.subr.mxu0 0.0
        %5046 = vmatpush2.msra.mxu0 0.0
        %5047 = vmatprep.subr.mxu0 0.0
        %5048 = vmatpush2.msra.mxu0 0.0
        %5049 = vmatprep.subr.mxu0 0.0
        %5050 = vmatpush2.msra.mxu0 0.0
        %5051 = vmatprep.subr.mxu0 0.0
        %5052 = vmatpush2.msra.mxu0 0.0
        %5053 = vmatprep.subr.mxu0 0.0
        %5054 = vmatpush2.msra.mxu0 0.0
        %5055 = vmatprep.subr.mxu0 0.0
        %5056 = vmatpush2.msra.mxu0 0.0
        %5057 = vmatprep.subr.mxu0 0.0
        %5058 = vmatpush2.msra.mxu0 0.0
        %5059 = vmatprep.subr.mxu0 0.0
        %5060 = vmatpush2.msra.mxu0 0.0
        %5061 = vmatprep.subr.mxu0 0.0
        %5062 = vmatpush2.msra.mxu0 0.0
        %5063 = vmatprep.subr.mxu0 0.0
        %5064 = vmatpush2.msra.mxu0 0.0
        %5065 = vmatprep.subr.mxu0 0.0
        %5066 = vmatpush2.msra.mxu0 0.0
        %5067 = vmatprep.subr.mxu0 0.0
        %5068 = vmatpush2.msra.mxu0 0.0
        %5069 = vmatprep.subr.mxu0 0.0
        %5070 = vmatpush2.msra.mxu0 0.0
        %5071 = vmatprep.subr.mxu0 0.0
        %5072 = vmatpush2.msra.mxu0 0.0
        %5073 = vmatprep.subr.mxu0 0.0
        %5074 = vmatpush2.msra.mxu0 0.0
        %5075 = vmatprep.mubr.f32.mxu0 0.0
        %5076 = vmatmul.mubr.f32.gmra.mxu0 %v417
        %v5077 = vpop.f32.mrf.mxu0
        %v5078 = vadd.f32 0.0, %v5077
        %v5079 = vpop.f32.mrf.mxu0
        %5080 = vmatprep.mubr.f32.mxu0 0.0
        %5081 = vmatmul.mubr.f32.gmra.mxu0 %v420
        %v5082 = vpop.f32.mrf.mxu0
        %v5083 = vadd.f32 0.0, %v5082
        %v5084 = vpop.f32.mrf.mxu0
        %5085 = vmatprep.mubr.f32.mxu0 0.0
        %5086 = vmatmul.mubr.f32.gmra.mxu0 %v423
        %v5087 = vpop.f32.mrf.mxu0
        %v5088 = vadd.f32 0.0, %v5087
        %v5089 = vpop.f32.mrf.mxu0
        %5090 = vmatprep.mubr.f32.mxu0 0.0
        %5091 = vmatmul.mubr.f32.gmra.mxu0 %v426
        %v5092 = vpop.f32.mrf.mxu0
        %v5093 = vadd.f32 0.0, %v5092
        %v5094 = vpop.f32.mrf.mxu0
        %5095 = vmatprep.mubr.f32.mxu0 0.0
        %5096 = vmatmul.mubr.f32.gmra.mxu0 %v429
        %v5097 = vpop.f32.mrf.mxu0
        %v5098 = vadd.f32 0.0, %v5097
        %v5099 = vpop.f32.mrf.mxu0
        %5100 = vmatprep.mubr.f32.mxu0 0.0
        %5101 = vmatmul.mubr.f32.gmra.mxu0 %v432
        %v5102 = vpop.f32.mrf.mxu0
        %v5103 = vadd.f32 0.0, %v5102
        %v5104 = vpop.f32.mrf.mxu0
        %5105 = vmatprep.mubr.f32.mxu0 0.0
        %5106 = vmatmul.mubr.f32.gmra.mxu0 %v435
        %v5107 = vpop.f32.mrf.mxu0
        %v5108 = vadd.f32 0.0, %v5107
        %v5109 = vpop.f32.mrf.mxu0
        %5110 = vmatprep.mubr.f32.mxu0 0.0
        %5111 = vmatmul.mubr.f32.gmra.mxu0 %v438
        %v5112 = vpop.f32.mrf.mxu0
        %v5113 = vadd.f32 0.0, %v5112
        %v5114 = vpop.f32.mrf.mxu0
        %5115 = vmatprep.mubr.f32.mxu0 0.0
        %5116 = vmatmul.mubr.f32.gmra.mxu0 %v441
        %v5117 = vpop.f32.mrf.mxu0
        %v5118 = vadd.f32 0.0, %v5117
        %v5119 = vpop.f32.mrf.mxu0
        %5120 = vmatprep.mubr.f32.mxu0 0.0
        %5121 = vmatmul.mubr.f32.gmra.mxu0 %v444
        %v5122 = vpop.f32.mrf.mxu0
        %v5123 = vadd.f32 0.0, %v5122
        %v5124 = vpop.f32.mrf.mxu0
        %5125 = vmatprep.mubr.f32.mxu0 0.0
        %5126 = vmatmul.mubr.f32.gmra.mxu0 %v447
        %v5127 = vpop.f32.mrf.mxu0
        %v5128 = vadd.f32 0.0, %v5127
        %v5129 = vpop.f32.mrf.mxu0
        %5130 = vmatprep.mubr.f32.mxu0 0.0
        %5131 = vmatmul.mubr.f32.gmra.mxu0 %v450
        %v5132 = vpop.f32.mrf.mxu0
        %v5133 = vadd.f32 0.0, %v5132
        %v5134 = vpop.f32.mrf.mxu0
        %5135 = vmatprep.mubr.f32.mxu0 0.0
        %5136 = vmatmul.mubr.f32.gmra.mxu0 %v453
        %v5137 = vpop.f32.mrf.mxu0
        %v5138 = vadd.f32 0.0, %v5137
        %v5139 = vpop.f32.mrf.mxu0
        %5140 = vmatprep.mubr.f32.mxu0 0.0
        %5141 = vmatmul.mubr.f32.gmra.mxu0 %v456
        %v5142 = vpop.f32.mrf.mxu0
        %v5143 = vadd.f32 0.0, %v5142
        %v5144 = vpop.f32.mrf.mxu0
        %5145 = vmatprep.mubr.f32.mxu0 0.0
        %5146 = vmatmul.mubr.f32.gmra.mxu0 %v459
        %v5147 = vpop.f32.mrf.mxu0
        %v5148 = vadd.f32 0.0, %v5147
        %v5149 = vpop.f32.mrf.mxu0
        %5150 = vmatprep.mubr.f32.mxu0 0.0
        %5151 = vmatmul.mubr.f32.gmra.mxu0 %v462
        %v5152 = vpop.f32.mrf.mxu0
        %v5153 = vadd.f32 0.0, %v5152
        %v5154 = vpop.f32.mrf.mxu0
        %5155 = vdwg.mxu0
        %s5156 = scalar_lea.vmem %s4, 64
        %v5157 = vld [vmem:[%s5156] sm:$0xff]
        %v5158 = vld [vmem:[%s5156 + $0x8] sm:$0xff]
        %v5159 = vld [vmem:[%s5156 + $0x10] sm:$0xff]
        %v5160 = vld [vmem:[%s5156 + $0x18] sm:$0xff]
        %s5161 = scalar_lea.vmem %s5, 2
        %v5162 = vld [vmem:[%s5161] sm:$0x1]
        %v5164 = vlaneseq
        %v5165 = vshrl.u32 %v5164, 7
        %v5166 = vsub.s32 0, %v5165
        %v5167 = vrot.slane %v5162, %v5166
        %5169 = vmatprep.subr.mxu0 0.0
        %5170 = vmatpush1.msra.mxu0 0.0
        %5171 = vmatprep.subr.mxu0 0.0
        %5172 = vmatpush1.msra.mxu0 0.0
        %5173 = vmatprep.subr.mxu0 0.0
        %5174 = vmatpush1.msra.mxu0 0.0
        %5175 = vmatprep.subr.mxu0 0.0
        %5176 = vmatpush1.msra.mxu0 0.0
        %5177 = vmatprep.subr.mxu0 0.0
        %5178 = vmatpush1.msra.mxu0 0.0
        %5179 = vmatprep.subr.mxu0 0.0
        %5180 = vmatpush1.msra.mxu0 0.0
        %5181 = vmatprep.subr.mxu0 0.0
        %5182 = vmatpush1.msra.mxu0 0.0
        %5183 = vmatprep.subr.mxu0 0.0
        %5184 = vmatpush1.msra.mxu0 0.0
        %5185 = vmatprep.subr.mxu0 0.0
        %5186 = vmatpush1.msra.mxu0 0.0
        %5187 = vmatprep.subr.mxu0 0.0
        %5188 = vmatpush1.msra.mxu0 0.0
        %5189 = vmatprep.subr.mxu0 0.0
        %5190 = vmatpush1.msra.mxu0 0.0
        %5191 = vmatprep.subr.mxu0 0.0
        %5192 = vmatpush1.msra.mxu0 0.0
        %5193 = vmatprep.subr.mxu0 0.0
        %5194 = vmatpush1.msra.mxu0 %v5160
        %5195 = vmatprep.subr.mxu0 0.0
        %5196 = vmatpush1.msra.mxu0 %v5159
        %5197 = vmatprep.subr.mxu0 0.0
        %5198 = vmatpush1.msra.mxu0 %v5158
        %5199 = vmatprep.subr.mxu0 0.0
        %5200 = vmatpush1.msra.mxu0 %v5157
        %5201 = vmatprep.subr.mxu0 0.0
        %5202 = vmatpush2.msra.mxu0 0.0
        %5203 = vmatprep.subr.mxu0 0.0
        %5204 = vmatpush2.msra.mxu0 0.0
        %5205 = vmatprep.subr.mxu0 0.0
        %5206 = vmatpush2.msra.mxu0 0.0
        %5207 = vmatprep.subr.mxu0 0.0
        %5208 = vmatpush2.msra.mxu0 0.0
        %5209 = vmatprep.subr.mxu0 0.0
        %5210 = vmatpush2.msra.mxu0 0.0
        %5211 = vmatprep.subr.mxu0 0.0
        %5212 = vmatpush2.msra.mxu0 0.0
        %5213 = vmatprep.subr.mxu0 0.0
        %5214 = vmatpush2.msra.mxu0 0.0
        %5215 = vmatprep.subr.mxu0 0.0
        %5216 = vmatpush2.msra.mxu0 0.0
        %5217 = vmatprep.subr.mxu0 0.0
        %5218 = vmatpush2.msra.mxu0 0.0
        %5219 = vmatprep.subr.mxu0 0.0
        %5220 = vmatpush2.msra.mxu0 0.0
        %5221 = vmatprep.subr.mxu0 0.0
        %5222 = vmatpush2.msra.mxu0 0.0
        %5223 = vmatprep.subr.mxu0 0.0
        %5224 = vmatpush2.msra.mxu0 0.0
        %5225 = vmatprep.subr.mxu0 0.0
        %5226 = vmatpush2.msra.mxu0 0.0
        %5227 = vmatprep.subr.mxu0 0.0
        %5228 = vmatpush2.msra.mxu0 0.0
        %5229 = vmatprep.subr.mxu0 0.0
        %5230 = vmatpush2.msra.mxu0 0.0
        %5231 = vmatprep.subr.mxu0 0.0
        %5232 = vmatpush2.msra.mxu0 0.0
        %5233 = vmatprep.mubr.f32.mxu0 0.0
        %5234 = vmatmul.mubr.f32.gmra.mxu0 %v770
        %v5235 = vpop.f32.mrf.mxu0
        %v5236 = vadd.f32 %v5167, %v5235
        %v5237 = vpop.f32.mrf.mxu0
        %5238 = vmatprep.mubr.f32.mxu0 0.0
        %5239 = vmatmul.mubr.f32.gmra.mxu0 %v773
        %v5240 = vpop.f32.mrf.mxu0
        %v5241 = vadd.f32 %v5167, %v5240
        %v5242 = vpop.f32.mrf.mxu0
        %5243 = vmatprep.mubr.f32.mxu0 0.0
        %5244 = vmatmul.mubr.f32.gmra.mxu0 %v776
        %v5245 = vpop.f32.mrf.mxu0
        %v5246 = vadd.f32 %v5167, %v5245
        %v5247 = vpop.f32.mrf.mxu0
        %5248 = vmatprep.mubr.f32.mxu0 0.0
        %5249 = vmatmul.mubr.f32.gmra.mxu0 %v779
        %v5250 = vpop.f32.mrf.mxu0
        %v5251 = vadd.f32 %v5167, %v5250
        %v5252 = vpop.f32.mrf.mxu0
        %5253 = vmatprep.mubr.f32.mxu0 0.0
        %5254 = vmatmul.mubr.f32.gmra.mxu0 %v782
        %v5255 = vpop.f32.mrf.mxu0
        %v5256 = vadd.f32 %v5167, %v5255
        %v5257 = vpop.f32.mrf.mxu0
        %5258 = vmatprep.mubr.f32.mxu0 0.0
        %5259 = vmatmul.mubr.f32.gmra.mxu0 %v785
        %v5260 = vpop.f32.mrf.mxu0
        %v5261 = vadd.f32 %v5167, %v5260
        %v5262 = vpop.f32.mrf.mxu0
        %5263 = vmatprep.mubr.f32.mxu0 0.0
        %5264 = vmatmul.mubr.f32.gmra.mxu0 %v788
        %v5265 = vpop.f32.mrf.mxu0
        %v5266 = vadd.f32 %v5167, %v5265
        %v5267 = vpop.f32.mrf.mxu0
        %5268 = vmatprep.mubr.f32.mxu0 0.0
        %5269 = vmatmul.mubr.f32.gmra.mxu0 %v791
        %v5270 = vpop.f32.mrf.mxu0
        %v5271 = vadd.f32 %v5167, %v5270
        %v5272 = vpop.f32.mrf.mxu0
        %5273 = vmatprep.mubr.f32.mxu0 0.0
        %5274 = vmatmul.mubr.f32.gmra.mxu0 %v794
        %v5275 = vpop.f32.mrf.mxu0
        %v5276 = vadd.f32 %v5167, %v5275
        %v5277 = vpop.f32.mrf.mxu0
        %5278 = vmatprep.mubr.f32.mxu0 0.0
        %5279 = vmatmul.mubr.f32.gmra.mxu0 %v797
        %v5280 = vpop.f32.mrf.mxu0
        %v5281 = vadd.f32 %v5167, %v5280
        %v5282 = vpop.f32.mrf.mxu0
        %5283 = vmatprep.mubr.f32.mxu0 0.0
        %5284 = vmatmul.mubr.f32.gmra.mxu0 %v800
        %v5285 = vpop.f32.mrf.mxu0
        %v5286 = vadd.f32 %v5167, %v5285
        %v5287 = vpop.f32.mrf.mxu0
        %5288 = vmatprep.mubr.f32.mxu0 0.0
        %5289 = vmatmul.mubr.f32.gmra.mxu0 %v803
        %v5290 = vpop.f32.mrf.mxu0
        %v5291 = vadd.f32 %v5167, %v5290
        %v5292 = vpop.f32.mrf.mxu0
        %5293 = vmatprep.mubr.f32.mxu0 0.0
        %5294 = vmatmul.mubr.f32.gmra.mxu0 %v806
        %v5295 = vpop.f32.mrf.mxu0
        %v5296 = vadd.f32 %v5167, %v5295
        %v5297 = vpop.f32.mrf.mxu0
        %5298 = vmatprep.mubr.f32.mxu0 0.0
        %5299 = vmatmul.mubr.f32.gmra.mxu0 %v809
        %v5300 = vpop.f32.mrf.mxu0
        %v5301 = vadd.f32 %v5167, %v5300
        %v5302 = vpop.f32.mrf.mxu0
        %5303 = vmatprep.mubr.f32.mxu0 0.0
        %5304 = vmatmul.mubr.f32.gmra.mxu0 %v812
        %v5305 = vpop.f32.mrf.mxu0
        %v5306 = vadd.f32 %v5167, %v5305
        %v5307 = vpop.f32.mrf.mxu0
        %5308 = vmatprep.mubr.f32.mxu0 0.0
        %5309 = vmatmul.mubr.f32.gmra.mxu0 %v815
        %v5310 = vpop.f32.mrf.mxu0
        %v5311 = vadd.f32 %v5167, %v5310
        %v5312 = vpop.f32.mrf.mxu0
        %5313 = vdwg.mxu0
        %s5314 = scalar_lea.vmem %s8, 32
        %v5315 = vld [vmem:[%s5314] sm:$0xff]
        %v5316 = vld [vmem:[%s5314 + $0x8] sm:$0xff]
        %v5318 = vsel %vm964, %v5236, 0
        %v5321 = vsel %vm964, %v5241, 0
        %v5324 = vsel %vm964, %v4928, 0
        %v5327 = vsel %vm964, %v4933, 0
        %5329 = vmatprep.subr.mxu0 0.0
        %5330 = vmatpush1.xpose.msra.mxu0 0.0
        %5331 = vmatprep.subr.mxu0 0.0
        %5332 = vmatpush1.xpose.msra.mxu0 0.0
        %5333 = vmatprep.subr.mxu0 0.0
        %5334 = vmatpush1.xpose.msra.mxu0 0.0
        %5335 = vmatprep.subr.mxu0 0.0
        %5336 = vmatpush1.xpose.msra.mxu0 0.0
        %5337 = vmatprep.subr.mxu0 0.0
        %5338 = vmatpush1.xpose.msra.mxu0 0.0
        %5339 = vmatprep.subr.mxu0 0.0
        %5340 = vmatpush1.xpose.msra.mxu0 0.0
        %5341 = vmatprep.subr.mxu0 0.0
        %5342 = vmatpush1.xpose.msra.mxu0 0.0
        %5343 = vmatprep.subr.mxu0 0.0
        %5344 = vmatpush1.xpose.msra.mxu0 0.0
        %5345 = vmatprep.subr.mxu0 0.0
        %5346 = vmatpush1.xpose.msra.mxu0 0.0
        %5347 = vmatprep.subr.mxu0 0.0
        %5348 = vmatpush1.xpose.msra.mxu0 0.0
        %5349 = vmatprep.subr.mxu0 0.0
        %5350 = vmatpush1.xpose.msra.mxu0 0.0
        %5351 = vmatprep.subr.mxu0 0.0
        %5352 = vmatpush1.xpose.msra.mxu0 0.0
        %5353 = vmatprep.subr.mxu0 0.0
        %5354 = vmatpush1.xpose.msra.mxu0 0.0
        %5355 = vmatprep.subr.mxu0 0.0
        %5356 = vmatpush1.xpose.msra.mxu0 0.0
        %5357 = vmatprep.subr.mxu0 0.0
        %5358 = vmatpush1.xpose.msra.mxu0 %v5327
        %5359 = vmatprep.subr.mxu0 0.0
        %5360 = vmatpush1.xpose.msra.mxu0 %v5324
        %5361 = vmatprep.subr.mxu0 0.0
        %5362 = vmatpush2.xpose.msra.mxu0 0.0
        %5363 = vmatprep.subr.mxu0 0.0
        %5364 = vmatpush2.xpose.msra.mxu0 0.0
        %5365 = vmatprep.subr.mxu0 0.0
        %5366 = vmatpush2.xpose.msra.mxu0 0.0
        %5367 = vmatprep.subr.mxu0 0.0
        %5368 = vmatpush2.xpose.msra.mxu0 0.0
        %5369 = vmatprep.subr.mxu0 0.0
        %5370 = vmatpush2.xpose.msra.mxu0 0.0
        %5371 = vmatprep.subr.mxu0 0.0
        %5372 = vmatpush2.xpose.msra.mxu0 0.0
        %5373 = vmatprep.subr.mxu0 0.0
        %5374 = vmatpush2.xpose.msra.mxu0 0.0
        %5375 = vmatprep.subr.mxu0 0.0
        %5376 = vmatpush2.xpose.msra.mxu0 0.0
        %5377 = vmatprep.subr.mxu0 0.0
        %5378 = vmatpush2.xpose.msra.mxu0 0.0
        %5379 = vmatprep.subr.mxu0 0.0
        %5380 = vmatpush2.xpose.msra.mxu0 0.0
        %5381 = vmatprep.subr.mxu0 0.0
        %5382 = vmatpush2.xpose.msra.mxu0 0.0
        %5383 = vmatprep.subr.mxu0 0.0
        %5384 = vmatpush2.xpose.msra.mxu0 0.0
        %5385 = vmatprep.subr.mxu0 0.0
        %5386 = vmatpush2.xpose.msra.mxu0 0.0
        %5387 = vmatprep.subr.mxu0 0.0
        %5388 = vmatpush2.xpose.msra.mxu0 0.0
        %5389 = vmatprep.subr.mxu0 0.0
        %5390 = vmatpush2.xpose.msra.mxu0 0.0
        %5391 = vmatprep.subr.mxu0 0.0
        %5392 = vmatpush2.xpose.msra.mxu0 0.0
        %5393 = vmatprep.mubr.f32.mxu0 0.0
        %5394 = vmatmul.mubr.f32.gmra.mxu0 %v5318
        %v5395 = vpop.f32.mrf.mxu0
        %v5396 = vadd.f32 %v5315, %v5395
        %v5397 = vpop.f32.mrf.mxu0
        %5398 = vmatprep.mubr.f32.mxu0 0.0
        %5399 = vmatmul.mubr.f32.gmra.mxu0 %v5321
        %v5400 = vpop.f32.mrf.mxu0
        %v5401 = vadd.f32 %v5316, %v5400
        %v5402 = vpop.f32.mrf.mxu0
        %5403 = vdwg.mxu0
        %v5405 = vsel %vm964, %v5246, 0
        %v5408 = vsel %vm964, %v5251, 0
        %v5411 = vsel %vm964, %v4938, 0
        %v5414 = vsel %vm964, %v4943, 0
        %5416 = vmatprep.subr.mxu0 0.0
        %5417 = vmatpush1.xpose.msra.mxu0 0.0
        %5418 = vmatprep.subr.mxu0 0.0
        %5419 = vmatpush1.xpose.msra.mxu0 0.0
        %5420 = vmatprep.subr.mxu0 0.0
        %5421 = vmatpush1.xpose.msra.mxu0 0.0
        %5422 = vmatprep.subr.mxu0 0.0
        %5423 = vmatpush1.xpose.msra.mxu0 0.0
        %5424 = vmatprep.subr.mxu0 0.0
        %5425 = vmatpush1.xpose.msra.mxu0 0.0
        %5426 = vmatprep.subr.mxu0 0.0
        %5427 = vmatpush1.xpose.msra.mxu0 0.0
        %5428 = vmatprep.subr.mxu0 0.0
        %5429 = vmatpush1.xpose.msra.mxu0 0.0
        %5430 = vmatprep.subr.mxu0 0.0
        %5431 = vmatpush1.xpose.msra.mxu0 0.0
        %5432 = vmatprep.subr.mxu0 0.0
        %5433 = vmatpush1.xpose.msra.mxu0 0.0
        %5434 = vmatprep.subr.mxu0 0.0
        %5435 = vmatpush1.xpose.msra.mxu0 0.0
        %5436 = vmatprep.subr.mxu0 0.0
        %5437 = vmatpush1.xpose.msra.mxu0 0.0
        %5438 = vmatprep.subr.mxu0 0.0
        %5439 = vmatpush1.xpose.msra.mxu0 0.0
        %5440 = vmatprep.subr.mxu0 0.0
        %5441 = vmatpush1.xpose.msra.mxu0 0.0
        %5442 = vmatprep.subr.mxu0 0.0
        %5443 = vmatpush1.xpose.msra.mxu0 0.0
        %5444 = vmatprep.subr.mxu0 0.0
        %5445 = vmatpush1.xpose.msra.mxu0 %v5414
        %5446 = vmatprep.subr.mxu0 0.0
        %5447 = vmatpush1.xpose.msra.mxu0 %v5411
        %5448 = vmatprep.subr.mxu0 0.0
        %5449 = vmatpush2.xpose.msra.mxu0 0.0
        %5450 = vmatprep.subr.mxu0 0.0
        %5451 = vmatpush2.xpose.msra.mxu0 0.0
        %5452 = vmatprep.subr.mxu0 0.0
        %5453 = vmatpush2.xpose.msra.mxu0 0.0
        %5454 = vmatprep.subr.mxu0 0.0
        %5455 = vmatpush2.xpose.msra.mxu0 0.0
        %5456 = vmatprep.subr.mxu0 0.0
        %5457 = vmatpush2.xpose.msra.mxu0 0.0
        %5458 = vmatprep.subr.mxu0 0.0
        %5459 = vmatpush2.xpose.msra.mxu0 0.0
        %5460 = vmatprep.subr.mxu0 0.0
        %5461 = vmatpush2.xpose.msra.mxu0 0.0
        %5462 = vmatprep.subr.mxu0 0.0
        %5463 = vmatpush2.xpose.msra.mxu0 0.0
        %5464 = vmatprep.subr.mxu0 0.0
        %5465 = vmatpush2.xpose.msra.mxu0 0.0
        %5466 = vmatprep.subr.mxu0 0.0
        %5467 = vmatpush2.xpose.msra.mxu0 0.0
        %5468 = vmatprep.subr.mxu0 0.0
        %5469 = vmatpush2.xpose.msra.mxu0 0.0
        %5470 = vmatprep.subr.mxu0 0.0
        %5471 = vmatpush2.xpose.msra.mxu0 0.0
        %5472 = vmatprep.subr.mxu0 0.0
        %5473 = vmatpush2.xpose.msra.mxu0 0.0
        %5474 = vmatprep.subr.mxu0 0.0
        %5475 = vmatpush2.xpose.msra.mxu0 0.0
        %5476 = vmatprep.subr.mxu0 0.0
        %5477 = vmatpush2.xpose.msra.mxu0 0.0
        %5478 = vmatprep.subr.mxu0 0.0
        %5479 = vmatpush2.xpose.msra.mxu0 0.0
        %5480 = vmatprep.mubr.f32.mxu0 0.0
        %5481 = vmatmul.mubr.f32.gmra.mxu0 %v5405
        %v5482 = vpop.f32.mrf.mxu0
        %v5483 = vadd.f32 %v5315, %v5482
        %v5484 = vpop.f32.mrf.mxu0
        %5485 = vmatprep.mubr.f32.mxu0 0.0
        %5486 = vmatmul.mubr.f32.gmra.mxu0 %v5408
        %v5487 = vpop.f32.mrf.mxu0
        %v5488 = vadd.f32 %v5316, %v5487
        %v5489 = vpop.f32.mrf.mxu0
        %5490 = vdwg.mxu0
        %v5492 = vsel %vm964, %v5256, 0
        %v5495 = vsel %vm964, %v5261, 0
        %v5498 = vsel %vm964, %v4948, 0
        %v5501 = vsel %vm964, %v4953, 0
        %5503 = vmatprep.subr.mxu0 0.0
        %5504 = vmatpush1.xpose.msra.mxu0 0.0
        %5505 = vmatprep.subr.mxu0 0.0
        %5506 = vmatpush1.xpose.msra.mxu0 0.0
        %5507 = vmatprep.subr.mxu0 0.0
        %5508 = vmatpush1.xpose.msra.mxu0 0.0
        %5509 = vmatprep.subr.mxu0 0.0
        %5510 = vmatpush1.xpose.msra.mxu0 0.0
        %5511 = vmatprep.subr.mxu0 0.0
        %5512 = vmatpush1.xpose.msra.mxu0 0.0
        %5513 = vmatprep.subr.mxu0 0.0
        %5514 = vmatpush1.xpose.msra.mxu0 0.0
        %5515 = vmatprep.subr.mxu0 0.0
        %5516 = vmatpush1.xpose.msra.mxu0 0.0
        %5517 = vmatprep.subr.mxu0 0.0
        %5518 = vmatpush1.xpose.msra.mxu0 0.0
        %5519 = vmatprep.subr.mxu0 0.0
        %5520 = vmatpush1.xpose.msra.mxu0 0.0
        %5521 = vmatprep.subr.mxu0 0.0
        %5522 = vmatpush1.xpose.msra.mxu0 0.0
        %5523 = vmatprep.subr.mxu0 0.0
        %5524 = vmatpush1.xpose.msra.mxu0 0.0
        %5525 = vmatprep.subr.mxu0 0.0
        %5526 = vmatpush1.xpose.msra.mxu0 0.0
        %5527 = vmatprep.subr.mxu0 0.0
        %5528 = vmatpush1.xpose.msra.mxu0 0.0
        %5529 = vmatprep.subr.mxu0 0.0
        %5530 = vmatpush1.xpose.msra.mxu0 0.0
        %5531 = vmatprep.subr.mxu0 0.0
        %5532 = vmatpush1.xpose.msra.mxu0 %v5501
        %5533 = vmatprep.subr.mxu0 0.0
        %5534 = vmatpush1.xpose.msra.mxu0 %v5498
        %5535 = vmatprep.subr.mxu0 0.0
        %5536 = vmatpush2.xpose.msra.mxu0 0.0
        %5537 = vmatprep.subr.mxu0 0.0
        %5538 = vmatpush2.xpose.msra.mxu0 0.0
        %5539 = vmatprep.subr.mxu0 0.0
        %5540 = vmatpush2.xpose.msra.mxu0 0.0
        %5541 = vmatprep.subr.mxu0 0.0
        %5542 = vmatpush2.xpose.msra.mxu0 0.0
        %5543 = vmatprep.subr.mxu0 0.0
        %5544 = vmatpush2.xpose.msra.mxu0 0.0
        %5545 = vmatprep.subr.mxu0 0.0
        %5546 = vmatpush2.xpose.msra.mxu0 0.0
        %5547 = vmatprep.subr.mxu0 0.0
        %5548 = vmatpush2.xpose.msra.mxu0 0.0
        %5549 = vmatprep.subr.mxu0 0.0
        %5550 = vmatpush2.xpose.msra.mxu0 0.0
        %5551 = vmatprep.subr.mxu0 0.0
        %5552 = vmatpush2.xpose.msra.mxu0 0.0
        %5553 = vmatprep.subr.mxu0 0.0
        %5554 = vmatpush2.xpose.msra.mxu0 0.0
        %5555 = vmatprep.subr.mxu0 0.0
        %5556 = vmatpush2.xpose.msra.mxu0 0.0
        %5557 = vmatprep.subr.mxu0 0.0
        %5558 = vmatpush2.xpose.msra.mxu0 0.0
        %5559 = vmatprep.subr.mxu0 0.0
        %5560 = vmatpush2.xpose.msra.mxu0 0.0
        %5561 = vmatprep.subr.mxu0 0.0
        %5562 = vmatpush2.xpose.msra.mxu0 0.0
        %5563 = vmatprep.subr.mxu0 0.0
        %5564 = vmatpush2.xpose.msra.mxu0 0.0
        %5565 = vmatprep.subr.mxu0 0.0
        %5566 = vmatpush2.xpose.msra.mxu0 0.0
        %5567 = vmatprep.mubr.f32.mxu0 0.0
        %5568 = vmatmul.mubr.f32.gmra.mxu0 %v5492
        %v5569 = vpop.f32.mrf.mxu0
        %v5570 = vadd.f32 %v5315, %v5569
        %v5571 = vpop.f32.mrf.mxu0
        %5572 = vmatprep.mubr.f32.mxu0 0.0
        %5573 = vmatmul.mubr.f32.gmra.mxu0 %v5495
        %v5574 = vpop.f32.mrf.mxu0
        %v5575 = vadd.f32 %v5316, %v5574
        %v5576 = vpop.f32.mrf.mxu0
        %5577 = vdwg.mxu0
        %v5579 = vsel %vm964, %v5266, 0
        %v5582 = vsel %vm964, %v5271, 0
        %v5585 = vsel %vm964, %v4958, 0
        %v5588 = vsel %vm964, %v4963, 0
        %5590 = vmatprep.subr.mxu0 0.0
        %5591 = vmatpush1.xpose.msra.mxu0 0.0
        %5592 = vmatprep.subr.mxu0 0.0
        %5593 = vmatpush1.xpose.msra.mxu0 0.0
        %5594 = vmatprep.subr.mxu0 0.0
        %5595 = vmatpush1.xpose.msra.mxu0 0.0
        %5596 = vmatprep.subr.mxu0 0.0
        %5597 = vmatpush1.xpose.msra.mxu0 0.0
        %5598 = vmatprep.subr.mxu0 0.0
        %5599 = vmatpush1.xpose.msra.mxu0 0.0
        %5600 = vmatprep.subr.mxu0 0.0
        %5601 = vmatpush1.xpose.msra.mxu0 0.0
        %5602 = vmatprep.subr.mxu0 0.0
        %5603 = vmatpush1.xpose.msra.mxu0 0.0
        %5604 = vmatprep.subr.mxu0 0.0
        %5605 = vmatpush1.xpose.msra.mxu0 0.0
        %5606 = vmatprep.subr.mxu0 0.0
        %5607 = vmatpush1.xpose.msra.mxu0 0.0
        %5608 = vmatprep.subr.mxu0 0.0
        %5609 = vmatpush1.xpose.msra.mxu0 0.0
        %5610 = vmatprep.subr.mxu0 0.0
        %5611 = vmatpush1.xpose.msra.mxu0 0.0
        %5612 = vmatprep.subr.mxu0 0.0
        %5613 = vmatpush1.xpose.msra.mxu0 0.0
        %5614 = vmatprep.subr.mxu0 0.0
        %5615 = vmatpush1.xpose.msra.mxu0 0.0
        %5616 = vmatprep.subr.mxu0 0.0
        %5617 = vmatpush1.xpose.msra.mxu0 0.0
        %5618 = vmatprep.subr.mxu0 0.0
        %5619 = vmatpush1.xpose.msra.mxu0 %v5588
        %5620 = vmatprep.subr.mxu0 0.0
        %5621 = vmatpush1.xpose.msra.mxu0 %v5585
        %5622 = vmatprep.subr.mxu0 0.0
        %5623 = vmatpush2.xpose.msra.mxu0 0.0
        %5624 = vmatprep.subr.mxu0 0.0
        %5625 = vmatpush2.xpose.msra.mxu0 0.0
        %5626 = vmatprep.subr.mxu0 0.0
        %5627 = vmatpush2.xpose.msra.mxu0 0.0
        %5628 = vmatprep.subr.mxu0 0.0
        %5629 = vmatpush2.xpose.msra.mxu0 0.0
        %5630 = vmatprep.subr.mxu0 0.0
        %5631 = vmatpush2.xpose.msra.mxu0 0.0
        %5632 = vmatprep.subr.mxu0 0.0
        %5633 = vmatpush2.xpose.msra.mxu0 0.0
        %5634 = vmatprep.subr.mxu0 0.0
        %5635 = vmatpush2.xpose.msra.mxu0 0.0
        %5636 = vmatprep.subr.mxu0 0.0
        %5637 = vmatpush2.xpose.msra.mxu0 0.0
        %5638 = vmatprep.subr.mxu0 0.0
        %5639 = vmatpush2.xpose.msra.mxu0 0.0
        %5640 = vmatprep.subr.mxu0 0.0
        %5641 = vmatpush2.xpose.msra.mxu0 0.0
        %5642 = vmatprep.subr.mxu0 0.0
        %5643 = vmatpush2.xpose.msra.mxu0 0.0
        %5644 = vmatprep.subr.mxu0 0.0
        %5645 = vmatpush2.xpose.msra.mxu0 0.0
        %5646 = vmatprep.subr.mxu0 0.0
        %5647 = vmatpush2.xpose.msra.mxu0 0.0
        %5648 = vmatprep.subr.mxu0 0.0
        %5649 = vmatpush2.xpose.msra.mxu0 0.0
        %5650 = vmatprep.subr.mxu0 0.0
        %5651 = vmatpush2.xpose.msra.mxu0 0.0
        %5652 = vmatprep.subr.mxu0 0.0
        %5653 = vmatpush2.xpose.msra.mxu0 0.0
        %5654 = vmatprep.mubr.f32.mxu0 0.0
        %5655 = vmatmul.mubr.f32.gmra.mxu0 %v5579
        %v5656 = vpop.f32.mrf.mxu0
        %v5657 = vadd.f32 %v5315, %v5656
        %v5658 = vpop.f32.mrf.mxu0
        %5659 = vmatprep.mubr.f32.mxu0 0.0
        %5660 = vmatmul.mubr.f32.gmra.mxu0 %v5582
        %v5661 = vpop.f32.mrf.mxu0
        %v5662 = vadd.f32 %v5316, %v5661
        %v5663 = vpop.f32.mrf.mxu0
        %5664 = vdwg.mxu0
        %v5666 = vsel %vm964, %v5276, 0
        %v5669 = vsel %vm964, %v5281, 0
        %v5672 = vsel %vm964, %v4968, 0
        %v5675 = vsel %vm964, %v4973, 0
        %5677 = vmatprep.subr.mxu0 0.0
        %5678 = vmatpush1.xpose.msra.mxu0 0.0
        %5679 = vmatprep.subr.mxu0 0.0
        %5680 = vmatpush1.xpose.msra.mxu0 0.0
        %5681 = vmatprep.subr.mxu0 0.0
        %5682 = vmatpush1.xpose.msra.mxu0 0.0
        %5683 = vmatprep.subr.mxu0 0.0
        %5684 = vmatpush1.xpose.msra.mxu0 0.0
        %5685 = vmatprep.subr.mxu0 0.0
        %5686 = vmatpush1.xpose.msra.mxu0 0.0
        %5687 = vmatprep.subr.mxu0 0.0
        %5688 = vmatpush1.xpose.msra.mxu0 0.0
        %5689 = vmatprep.subr.mxu0 0.0
        %5690 = vmatpush1.xpose.msra.mxu0 0.0
        %5691 = vmatprep.subr.mxu0 0.0
        %5692 = vmatpush1.xpose.msra.mxu0 0.0
        %5693 = vmatprep.subr.mxu0 0.0
        %5694 = vmatpush1.xpose.msra.mxu0 0.0
        %5695 = vmatprep.subr.mxu0 0.0
        %5696 = vmatpush1.xpose.msra.mxu0 0.0
        %5697 = vmatprep.subr.mxu0 0.0
        %5698 = vmatpush1.xpose.msra.mxu0 0.0
        %5699 = vmatprep.subr.mxu0 0.0
        %5700 = vmatpush1.xpose.msra.mxu0 0.0
        %5701 = vmatprep.subr.mxu0 0.0
        %5702 = vmatpush1.xpose.msra.mxu0 0.0
        %5703 = vmatprep.subr.mxu0 0.0
        %5704 = vmatpush1.xpose.msra.mxu0 0.0
        %5705 = vmatprep.subr.mxu0 0.0
        %5706 = vmatpush1.xpose.msra.mxu0 %v5675
        %5707 = vmatprep.subr.mxu0 0.0
        %5708 = vmatpush1.xpose.msra.mxu0 %v5672
        %5709 = vmatprep.subr.mxu0 0.0
        %5710 = vmatpush2.xpose.msra.mxu0 0.0
        %5711 = vmatprep.subr.mxu0 0.0
        %5712 = vmatpush2.xpose.msra.mxu0 0.0
        %5713 = vmatprep.subr.mxu0 0.0
        %5714 = vmatpush2.xpose.msra.mxu0 0.0
        %5715 = vmatprep.subr.mxu0 0.0
        %5716 = vmatpush2.xpose.msra.mxu0 0.0
        %5717 = vmatprep.subr.mxu0 0.0
        %5718 = vmatpush2.xpose.msra.mxu0 0.0
        %5719 = vmatprep.subr.mxu0 0.0
        %5720 = vmatpush2.xpose.msra.mxu0 0.0
        %5721 = vmatprep.subr.mxu0 0.0
        %5722 = vmatpush2.xpose.msra.mxu0 0.0
        %5723 = vmatprep.subr.mxu0 0.0
        %5724 = vmatpush2.xpose.msra.mxu0 0.0
        %5725 = vmatprep.subr.mxu0 0.0
        %5726 = vmatpush2.xpose.msra.mxu0 0.0
        %5727 = vmatprep.subr.mxu0 0.0
        %5728 = vmatpush2.xpose.msra.mxu0 0.0
        %5729 = vmatprep.subr.mxu0 0.0
        %5730 = vmatpush2.xpose.msra.mxu0 0.0
        %5731 = vmatprep.subr.mxu0 0.0
        %5732 = vmatpush2.xpose.msra.mxu0 0.0
        %5733 = vmatprep.subr.mxu0 0.0
        %5734 = vmatpush2.xpose.msra.mxu0 0.0
        %5735 = vmatprep.subr.mxu0 0.0
        %5736 = vmatpush2.xpose.msra.mxu0 0.0
        %5737 = vmatprep.subr.mxu0 0.0
        %5738 = vmatpush2.xpose.msra.mxu0 0.0
        %5739 = vmatprep.subr.mxu0 0.0
        %5740 = vmatpush2.xpose.msra.mxu0 0.0
        %5741 = vmatprep.mubr.f32.mxu0 0.0
        %5742 = vmatmul.mubr.f32.gmra.mxu0 %v5666
        %v5743 = vpop.f32.mrf.mxu0
        %v5744 = vadd.f32 %v5315, %v5743
        %v5745 = vpop.f32.mrf.mxu0
        %5746 = vmatprep.mubr.f32.mxu0 0.0
        %5747 = vmatmul.mubr.f32.gmra.mxu0 %v5669
        %v5748 = vpop.f32.mrf.mxu0
        %v5749 = vadd.f32 %v5316, %v5748
        %v5750 = vpop.f32.mrf.mxu0
        %5751 = vdwg.mxu0
        %v5753 = vsel %vm964, %v5286, 0
        %v5756 = vsel %vm964, %v5291, 0
        %v5759 = vsel %vm964, %v4978, 0
        %v5762 = vsel %vm964, %v4983, 0
        %5764 = vmatprep.subr.mxu0 0.0
        %5765 = vmatpush1.xpose.msra.mxu0 0.0
        %5766 = vmatprep.subr.mxu0 0.0
        %5767 = vmatpush1.xpose.msra.mxu0 0.0
        %5768 = vmatprep.subr.mxu0 0.0
        %5769 = vmatpush1.xpose.msra.mxu0 0.0
        %5770 = vmatprep.subr.mxu0 0.0
        %5771 = vmatpush1.xpose.msra.mxu0 0.0
        %5772 = vmatprep.subr.mxu0 0.0
        %5773 = vmatpush1.xpose.msra.mxu0 0.0
        %5774 = vmatprep.subr.mxu0 0.0
        %5775 = vmatpush1.xpose.msra.mxu0 0.0
        %5776 = vmatprep.subr.mxu0 0.0
        %5777 = vmatpush1.xpose.msra.mxu0 0.0
        %5778 = vmatprep.subr.mxu0 0.0
        %5779 = vmatpush1.xpose.msra.mxu0 0.0
        %5780 = vmatprep.subr.mxu0 0.0
        %5781 = vmatpush1.xpose.msra.mxu0 0.0
        %5782 = vmatprep.subr.mxu0 0.0
        %5783 = vmatpush1.xpose.msra.mxu0 0.0
        %5784 = vmatprep.subr.mxu0 0.0
        %5785 = vmatpush1.xpose.msra.mxu0 0.0
        %5786 = vmatprep.subr.mxu0 0.0
        %5787 = vmatpush1.xpose.msra.mxu0 0.0
        %5788 = vmatprep.subr.mxu0 0.0
        %5789 = vmatpush1.xpose.msra.mxu0 0.0
        %5790 = vmatprep.subr.mxu0 0.0
        %5791 = vmatpush1.xpose.msra.mxu0 0.0
        %5792 = vmatprep.subr.mxu0 0.0
        %5793 = vmatpush1.xpose.msra.mxu0 %v5762
        %5794 = vmatprep.subr.mxu0 0.0
        %5795 = vmatpush1.xpose.msra.mxu0 %v5759
        %5796 = vmatprep.subr.mxu0 0.0
        %5797 = vmatpush2.xpose.msra.mxu0 0.0
        %5798 = vmatprep.subr.mxu0 0.0
        %5799 = vmatpush2.xpose.msra.mxu0 0.0
        %5800 = vmatprep.subr.mxu0 0.0
        %5801 = vmatpush2.xpose.msra.mxu0 0.0
        %5802 = vmatprep.subr.mxu0 0.0
        %5803 = vmatpush2.xpose.msra.mxu0 0.0
        %5804 = vmatprep.subr.mxu0 0.0
        %5805 = vmatpush2.xpose.msra.mxu0 0.0
        %5806 = vmatprep.subr.mxu0 0.0
        %5807 = vmatpush2.xpose.msra.mxu0 0.0
        %5808 = vmatprep.subr.mxu0 0.0
        %5809 = vmatpush2.xpose.msra.mxu0 0.0
        %5810 = vmatprep.subr.mxu0 0.0
        %5811 = vmatpush2.xpose.msra.mxu0 0.0
        %5812 = vmatprep.subr.mxu0 0.0
        %5813 = vmatpush2.xpose.msra.mxu0 0.0
        %5814 = vmatprep.subr.mxu0 0.0
        %5815 = vmatpush2.xpose.msra.mxu0 0.0
        %5816 = vmatprep.subr.mxu0 0.0
        %5817 = vmatpush2.xpose.msra.mxu0 0.0
        %5818 = vmatprep.subr.mxu0 0.0
        %5819 = vmatpush2.xpose.msra.mxu0 0.0
        %5820 = vmatprep.subr.mxu0 0.0
        %5821 = vmatpush2.xpose.msra.mxu0 0.0
        %5822 = vmatprep.subr.mxu0 0.0
        %5823 = vmatpush2.xpose.msra.mxu0 0.0
        %5824 = vmatprep.subr.mxu0 0.0
        %5825 = vmatpush2.xpose.msra.mxu0 0.0
        %5826 = vmatprep.subr.mxu0 0.0
        %5827 = vmatpush2.xpose.msra.mxu0 0.0
        %5828 = vmatprep.mubr.f32.mxu0 0.0
        %5829 = vmatmul.mubr.f32.gmra.mxu0 %v5753
        %v5830 = vpop.f32.mrf.mxu0
        %v5831 = vadd.f32 %v5315, %v5830
        %v5832 = vpop.f32.mrf.mxu0
        %5833 = vmatprep.mubr.f32.mxu0 0.0
        %5834 = vmatmul.mubr.f32.gmra.mxu0 %v5756
        %v5835 = vpop.f32.mrf.mxu0
        %v5836 = vadd.f32 %v5316, %v5835
        %v5837 = vpop.f32.mrf.mxu0
        %5838 = vdwg.mxu0
        %v5840 = vsel %vm964, %v5296, 0
        %v5843 = vsel %vm964, %v5301, 0
        %v5846 = vsel %vm964, %v4988, 0
        %v5849 = vsel %vm964, %v4993, 0
        %5851 = vmatprep.subr.mxu0 0.0
        %5852 = vmatpush1.xpose.msra.mxu0 0.0
        %5853 = vmatprep.subr.mxu0 0.0
        %5854 = vmatpush1.xpose.msra.mxu0 0.0
        %5855 = vmatprep.subr.mxu0 0.0
        %5856 = vmatpush1.xpose.msra.mxu0 0.0
        %5857 = vmatprep.subr.mxu0 0.0
        %5858 = vmatpush1.xpose.msra.mxu0 0.0
        %5859 = vmatprep.subr.mxu0 0.0
        %5860 = vmatpush1.xpose.msra.mxu0 0.0
        %5861 = vmatprep.subr.mxu0 0.0
        %5862 = vmatpush1.xpose.msra.mxu0 0.0
        %5863 = vmatprep.subr.mxu0 0.0
        %5864 = vmatpush1.xpose.msra.mxu0 0.0
        %5865 = vmatprep.subr.mxu0 0.0
        %5866 = vmatpush1.xpose.msra.mxu0 0.0
        %5867 = vmatprep.subr.mxu0 0.0
        %5868 = vmatpush1.xpose.msra.mxu0 0.0
        %5869 = vmatprep.subr.mxu0 0.0
        %5870 = vmatpush1.xpose.msra.mxu0 0.0
        %5871 = vmatprep.subr.mxu0 0.0
        %5872 = vmatpush1.xpose.msra.mxu0 0.0
        %5873 = vmatprep.subr.mxu0 0.0
        %5874 = vmatpush1.xpose.msra.mxu0 0.0
        %5875 = vmatprep.subr.mxu0 0.0
        %5876 = vmatpush1.xpose.msra.mxu0 0.0
        %5877 = vmatprep.subr.mxu0 0.0
        %5878 = vmatpush1.xpose.msra.mxu0 0.0
        %5879 = vmatprep.subr.mxu0 0.0
        %5880 = vmatpush1.xpose.msra.mxu0 %v5849
        %5881 = vmatprep.subr.mxu0 0.0
        %5882 = vmatpush1.xpose.msra.mxu0 %v5846
        %5883 = vmatprep.subr.mxu0 0.0
        %5884 = vmatpush2.xpose.msra.mxu0 0.0
        %5885 = vmatprep.subr.mxu0 0.0
        %5886 = vmatpush2.xpose.msra.mxu0 0.0
        %5887 = vmatprep.subr.mxu0 0.0
        %5888 = vmatpush2.xpose.msra.mxu0 0.0
        %5889 = vmatprep.subr.mxu0 0.0
        %5890 = vmatpush2.xpose.msra.mxu0 0.0
        %5891 = vmatprep.subr.mxu0 0.0
        %5892 = vmatpush2.xpose.msra.mxu0 0.0
        %5893 = vmatprep.subr.mxu0 0.0
        %5894 = vmatpush2.xpose.msra.mxu0 0.0
        %5895 = vmatprep.subr.mxu0 0.0
        %5896 = vmatpush2.xpose.msra.mxu0 0.0
        %5897 = vmatprep.subr.mxu0 0.0
        %5898 = vmatpush2.xpose.msra.mxu0 0.0
        %5899 = vmatprep.subr.mxu0 0.0
        %5900 = vmatpush2.xpose.msra.mxu0 0.0
        %5901 = vmatprep.subr.mxu0 0.0
        %5902 = vmatpush2.xpose.msra.mxu0 0.0
        %5903 = vmatprep.subr.mxu0 0.0
        %5904 = vmatpush2.xpose.msra.mxu0 0.0
        %5905 = vmatprep.subr.mxu0 0.0
        %5906 = vmatpush2.xpose.msra.mxu0 0.0
        %5907 = vmatprep.subr.mxu0 0.0
        %5908 = vmatpush2.xpose.msra.mxu0 0.0
        %5909 = vmatprep.subr.mxu0 0.0
        %5910 = vmatpush2.xpose.msra.mxu0 0.0
        %5911 = vmatprep.subr.mxu0 0.0
        %5912 = vmatpush2.xpose.msra.mxu0 0.0
        %5913 = vmatprep.subr.mxu0 0.0
        %5914 = vmatpush2.xpose.msra.mxu0 0.0
        %5915 = vmatprep.mubr.f32.mxu0 0.0
        %5916 = vmatmul.mubr.f32.gmra.mxu0 %v5840
        %v5917 = vpop.f32.mrf.mxu0
        %v5918 = vadd.f32 %v5315, %v5917
        %v5919 = vpop.f32.mrf.mxu0
        %5920 = vmatprep.mubr.f32.mxu0 0.0
        %5921 = vmatmul.mubr.f32.gmra.mxu0 %v5843
        %v5922 = vpop.f32.mrf.mxu0
        %v5923 = vadd.f32 %v5316, %v5922
        %v5924 = vpop.f32.mrf.mxu0
        %5925 = vdwg.mxu0
        %v5927 = vsel %vm964, %v5306, 0
        %v5930 = vsel %vm964, %v5311, 0
        %v5933 = vsel %vm964, %v4998, 0
        %v5936 = vsel %vm964, %v5003, 0
        %5938 = vmatprep.subr.mxu0 0.0
        %5939 = vmatpush1.xpose.msra.mxu0 0.0
        %5940 = vmatprep.subr.mxu0 0.0
        %5941 = vmatpush1.xpose.msra.mxu0 0.0
        %5942 = vmatprep.subr.mxu0 0.0
        %5943 = vmatpush1.xpose.msra.mxu0 0.0
        %5944 = vmatprep.subr.mxu0 0.0
        %5945 = vmatpush1.xpose.msra.mxu0 0.0
        %5946 = vmatprep.subr.mxu0 0.0
        %5947 = vmatpush1.xpose.msra.mxu0 0.0
        %5948 = vmatprep.subr.mxu0 0.0
        %5949 = vmatpush1.xpose.msra.mxu0 0.0
        %5950 = vmatprep.subr.mxu0 0.0
        %5951 = vmatpush1.xpose.msra.mxu0 0.0
        %5952 = vmatprep.subr.mxu0 0.0
        %5953 = vmatpush1.xpose.msra.mxu0 0.0
        %5954 = vmatprep.subr.mxu0 0.0
        %5955 = vmatpush1.xpose.msra.mxu0 0.0
        %5956 = vmatprep.subr.mxu0 0.0
        %5957 = vmatpush1.xpose.msra.mxu0 0.0
        %5958 = vmatprep.subr.mxu0 0.0
        %5959 = vmatpush1.xpose.msra.mxu0 0.0
        %5960 = vmatprep.subr.mxu0 0.0
        %5961 = vmatpush1.xpose.msra.mxu0 0.0
        %5962 = vmatprep.subr.mxu0 0.0
        %5963 = vmatpush1.xpose.msra.mxu0 0.0
        %5964 = vmatprep.subr.mxu0 0.0
        %5965 = vmatpush1.xpose.msra.mxu0 0.0
        %5966 = vmatprep.subr.mxu0 0.0
        %5967 = vmatpush1.xpose.msra.mxu0 %v5936
        %5968 = vmatprep.subr.mxu0 0.0
        %5969 = vmatpush1.xpose.msra.mxu0 %v5933
        %5970 = vmatprep.subr.mxu0 0.0
        %5971 = vmatpush2.xpose.msra.mxu0 0.0
        %5972 = vmatprep.subr.mxu0 0.0
        %5973 = vmatpush2.xpose.msra.mxu0 0.0
        %5974 = vmatprep.subr.mxu0 0.0
        %5975 = vmatpush2.xpose.msra.mxu0 0.0
        %5976 = vmatprep.subr.mxu0 0.0
        %5977 = vmatpush2.xpose.msra.mxu0 0.0
        %5978 = vmatprep.subr.mxu0 0.0
        %5979 = vmatpush2.xpose.msra.mxu0 0.0
        %5980 = vmatprep.subr.mxu0 0.0
        %5981 = vmatpush2.xpose.msra.mxu0 0.0
        %5982 = vmatprep.subr.mxu0 0.0
        %5983 = vmatpush2.xpose.msra.mxu0 0.0
        %5984 = vmatprep.subr.mxu0 0.0
        %5985 = vmatpush2.xpose.msra.mxu0 0.0
        %5986 = vmatprep.subr.mxu0 0.0
        %5987 = vmatpush2.xpose.msra.mxu0 0.0
        %5988 = vmatprep.subr.mxu0 0.0
        %5989 = vmatpush2.xpose.msra.mxu0 0.0
        %5990 = vmatprep.subr.mxu0 0.0
        %5991 = vmatpush2.xpose.msra.mxu0 0.0
        %5992 = vmatprep.subr.mxu0 0.0
        %5993 = vmatpush2.xpose.msra.mxu0 0.0
        %5994 = vmatprep.subr.mxu0 0.0
        %5995 = vmatpush2.xpose.msra.mxu0 0.0
        %5996 = vmatprep.subr.mxu0 0.0
        %5997 = vmatpush2.xpose.msra.mxu0 0.0
        %5998 = vmatprep.subr.mxu0 0.0
        %5999 = vmatpush2.xpose.msra.mxu0 0.0
        %6000 = vmatprep.subr.mxu0 0.0
        %6001 = vmatpush2.xpose.msra.mxu0 0.0
        %6002 = vmatprep.mubr.f32.mxu0 0.0
        %6003 = vmatmul.mubr.f32.gmra.mxu0 %v5927
        %v6004 = vpop.f32.mrf.mxu0
        %v6005 = vadd.f32 %v5315, %v6004
        %v6006 = vpop.f32.mrf.mxu0
        %6007 = vmatprep.mubr.f32.mxu0 0.0
        %6008 = vmatmul.mubr.f32.gmra.mxu0 %v5930
        %v6009 = vpop.f32.mrf.mxu0
        %v6010 = vadd.f32 %v5316, %v6009
        %v6011 = vpop.f32.mrf.mxu0
        %6012 = vdwg.mxu0
        %v6013 = vsel %vm1661, %v5396, -inf
        %6014 = vmax.xlane.f32.xlu0 %v6013
        %v6015 = vpop.xlane.xlu0 %6014
        %v6016 = vsel %vm1661, %v5401, -inf
        %6017 = vmax.xlane.f32.xlu0 %v6016
        %v6018 = vpop.xlane.xlu0 %6017
        %v6019 = vsel %vm1661, %v5483, -inf
        %6020 = vmax.xlane.f32.xlu0 %v6019
        %v6021 = vpop.xlane.xlu0 %6020
        %v6022 = vsel %vm1661, %v5488, -inf
        %6023 = vmax.xlane.f32.xlu0 %v6022
        %v6024 = vpop.xlane.xlu0 %6023
        %v6025 = vsel %vm1661, %v5570, -inf
        %6026 = vmax.xlane.f32.xlu0 %v6025
        %v6027 = vpop.xlane.xlu0 %6026
        %v6028 = vsel %vm1661, %v5575, -inf
        %6029 = vmax.xlane.f32.xlu0 %v6028
        %v6030 = vpop.xlane.xlu0 %6029
        %v6031 = vsel %vm1661, %v5657, -inf
        %6032 = vmax.xlane.f32.xlu0 %v6031
        %v6033 = vpop.xlane.xlu0 %6032
        %v6034 = vsel %vm1661, %v5662, -inf
        %6035 = vmax.xlane.f32.xlu0 %v6034
        %v6036 = vpop.xlane.xlu0 %6035
        %v6037 = vsel %vm1661, %v5744, -inf
        %6038 = vmax.xlane.f32.xlu0 %v6037
        %v6039 = vpop.xlane.xlu0 %6038
        %v6040 = vsel %vm1661, %v5749, -inf
        %6041 = vmax.xlane.f32.xlu0 %v6040
        %v6042 = vpop.xlane.xlu0 %6041
        %v6043 = vsel %vm1661, %v5831, -inf
        %6044 = vmax.xlane.f32.xlu0 %v6043
        %v6045 = vpop.xlane.xlu0 %6044
        %v6046 = vsel %vm1661, %v5836, -inf
        %6047 = vmax.xlane.f32.xlu0 %v6046
        %v6048 = vpop.xlane.xlu0 %6047
        %v6049 = vsel %vm1661, %v5918, -inf
        %6050 = vmax.xlane.f32.xlu0 %v6049
        %v6051 = vpop.xlane.xlu0 %6050
        %v6052 = vsel %vm1661, %v5923, -inf
        %6053 = vmax.xlane.f32.xlu0 %v6052
        %v6054 = vpop.xlane.xlu0 %6053
        %v6055 = vsel %vm1661, %v6005, -inf
        %6056 = vmax.xlane.f32.xlu0 %v6055
        %v6057 = vpop.xlane.xlu0 %6056
        %v6058 = vsel %vm1661, %v6010, -inf
        %6059 = vmax.xlane.f32.xlu0 %v6058
        %v6060 = vpop.xlane.xlu0 %6059
        %v6061 = vsub.f32 %v5396, %v6015
        %v6062 = vsub.f32 %v5401, %v6018
        %v6063 = vsub.f32 %v5483, %v6021
        %v6064 = vsub.f32 %v5488, %v6024
        %v6065 = vsub.f32 %v5570, %v6027
        %v6066 = vsub.f32 %v5575, %v6030
        %v6067 = vsub.f32 %v5657, %v6033
        %v6068 = vsub.f32 %v5662, %v6036
        %v6069 = vsub.f32 %v5744, %v6039
        %v6070 = vsub.f32 %v5749, %v6042
        %v6071 = vsub.f32 %v5831, %v6045
        %v6072 = vsub.f32 %v5836, %v6048
        %v6073 = vsub.f32 %v5918, %v6051
        %v6074 = vsub.f32 %v5923, %v6054
        %v6075 = vsub.f32 %v6005, %v6057
        %v6076 = vsub.f32 %v6010, %v6060
        %v6077 = vmul.f32 %v6061, 1.442695
        %v6078 = vpow.pop %v6077
        %v6079 = vmul.f32 %v6062, 1.442695
        %v6080 = vpow.pop %v6079
        %v6081 = vmul.f32 %v6063, 1.442695
        %v6082 = vpow.pop %v6081
        %v6083 = vmul.f32 %v6064, 1.442695
        %v6084 = vpow.pop %v6083
        %v6085 = vmul.f32 %v6065, 1.442695
        %v6086 = vpow.pop %v6085
        %v6087 = vmul.f32 %v6066, 1.442695
        %v6088 = vpow.pop %v6087
        %v6089 = vmul.f32 %v6067, 1.442695
        %v6090 = vpow.pop %v6089
        %v6091 = vmul.f32 %v6068, 1.442695
        %v6092 = vpow.pop %v6091
        %v6093 = vmul.f32 %v6069, 1.442695
        %v6094 = vpow.pop %v6093
        %v6095 = vmul.f32 %v6070, 1.442695
        %v6096 = vpow.pop %v6095
        %v6097 = vmul.f32 %v6071, 1.442695
        %v6098 = vpow.pop %v6097
        %v6099 = vmul.f32 %v6072, 1.442695
        %v6100 = vpow.pop %v6099
        %v6101 = vmul.f32 %v6073, 1.442695
        %v6102 = vpow.pop %v6101
        %v6103 = vmul.f32 %v6074, 1.442695
        %v6104 = vpow.pop %v6103
        %v6105 = vmul.f32 %v6075, 1.442695
        %v6106 = vpow.pop %v6105
        %v6107 = vmul.f32 %v6076, 1.442695
        %v6108 = vpow.pop %v6107
        %v6109 = vsel %vm1661, %v6078, 0.0
        %6110 = vadd.xlane.f32.xlu0 %v6109
        %v6111 = vpop.xlane.xlu0 %6110
        %v6112 = vsel %vm1661, %v6080, 0.0
        %6113 = vadd.xlane.f32.xlu0 %v6112
        %v6114 = vpop.xlane.xlu0 %6113
        %v6115 = vsel %vm1661, %v6082, 0.0
        %6116 = vadd.xlane.f32.xlu0 %v6115
        %v6117 = vpop.xlane.xlu0 %6116
        %v6118 = vsel %vm1661, %v6084, 0.0
        %6119 = vadd.xlane.f32.xlu0 %v6118
        %v6120 = vpop.xlane.xlu0 %6119
        %v6121 = vsel %vm1661, %v6086, 0.0
        %6122 = vadd.xlane.f32.xlu0 %v6121
        %v6123 = vpop.xlane.xlu0 %6122
        %v6124 = vsel %vm1661, %v6088, 0.0
        %6125 = vadd.xlane.f32.xlu0 %v6124
        %v6126 = vpop.xlane.xlu0 %6125
        %v6127 = vsel %vm1661, %v6090, 0.0
        %6128 = vadd.xlane.f32.xlu0 %v6127
        %v6129 = vpop.xlane.xlu0 %6128
        %v6130 = vsel %vm1661, %v6092, 0.0
        %6131 = vadd.xlane.f32.xlu0 %v6130
        %v6132 = vpop.xlane.xlu0 %6131
        %v6133 = vsel %vm1661, %v6094, 0.0
        %6134 = vadd.xlane.f32.xlu0 %v6133
        %v6135 = vpop.xlane.xlu0 %6134
        %v6136 = vsel %vm1661, %v6096, 0.0
        %6137 = vadd.xlane.f32.xlu0 %v6136
        %v6138 = vpop.xlane.xlu0 %6137
        %v6139 = vsel %vm1661, %v6098, 0.0
        %6140 = vadd.xlane.f32.xlu0 %v6139
        %v6141 = vpop.xlane.xlu0 %6140
        %v6142 = vsel %vm1661, %v6100, 0.0
        %6143 = vadd.xlane.f32.xlu0 %v6142
        %v6144 = vpop.xlane.xlu0 %6143
        %v6145 = vsel %vm1661, %v6102, 0.0
        %6146 = vadd.xlane.f32.xlu0 %v6145
        %v6147 = vpop.xlane.xlu0 %6146
        %v6148 = vsel %vm1661, %v6104, 0.0
        %6149 = vadd.xlane.f32.xlu0 %v6148
        %v6150 = vpop.xlane.xlu0 %6149
        %v6151 = vsel %vm1661, %v6106, 0.0
        %6152 = vadd.xlane.f32.xlu0 %v6151
        %v6153 = vpop.xlane.xlu0 %6152
        %v6154 = vsel %vm1661, %v6108, 0.0
        %6155 = vadd.xlane.f32.xlu0 %v6154
        %v6156 = vpop.xlane.xlu0 %6155
        %v6157 = vrcp.pop %v6111
        %v6158 = vrcp.pop %v6114
        %v6159 = vrcp.pop %v6117
        %v6160 = vrcp.pop %v6120
        %v6161 = vrcp.pop %v6123
        %v6162 = vrcp.pop %v6126
        %v6163 = vrcp.pop %v6129
        %v6164 = vrcp.pop %v6132
        %v6165 = vrcp.pop %v6135
        %v6166 = vrcp.pop %v6138
        %v6167 = vrcp.pop %v6141
        %v6168 = vrcp.pop %v6144
        %v6169 = vrcp.pop %v6147
        %v6170 = vrcp.pop %v6150
        %v6171 = vrcp.pop %v6153
        %v6172 = vrcp.pop %v6156
        %v6173 = vmul.f32 %v6078, %v6157
        %v6174 = vmul.f32 %v6080, %v6158
        %v6175 = vmul.f32 %v6082, %v6159
        %v6176 = vmul.f32 %v6084, %v6160
        %v6177 = vmul.f32 %v6086, %v6161
        %v6178 = vmul.f32 %v6088, %v6162
        %v6179 = vmul.f32 %v6090, %v6163
        %v6180 = vmul.f32 %v6092, %v6164
        %v6181 = vmul.f32 %v6094, %v6165
        %v6182 = vmul.f32 %v6096, %v6166
        %v6183 = vmul.f32 %v6098, %v6167
        %v6184 = vmul.f32 %v6100, %v6168
        %v6185 = vmul.f32 %v6102, %v6169
        %v6186 = vmul.f32 %v6104, %v6170
        %v6187 = vmul.f32 %v6106, %v6171
        %v6188 = vmul.f32 %v6108, %v6172
        %v6190 = vsel %vm1661, %v6173, 0
        %v6193 = vsel %vm1661, %v6174, 0
        %6195 = vmatprep.subr.mxu0 0.0
        %6196 = vmatpush1.msra.mxu0 0.0
        %6197 = vmatprep.subr.mxu0 0.0
        %6198 = vmatpush1.msra.mxu0 0.0
        %6199 = vmatprep.subr.mxu0 0.0
        %6200 = vmatpush1.msra.mxu0 0.0
        %6201 = vmatprep.subr.mxu0 0.0
        %6202 = vmatpush1.msra.mxu0 0.0
        %6203 = vmatprep.subr.mxu0 0.0
        %6204 = vmatpush1.msra.mxu0 0.0
        %6205 = vmatprep.subr.mxu0 0.0
        %6206 = vmatpush1.msra.mxu0 0.0
        %6207 = vmatprep.subr.mxu0 0.0
        %6208 = vmatpush1.msra.mxu0 0.0
        %6209 = vmatprep.subr.mxu0 0.0
        %6210 = vmatpush1.msra.mxu0 0.0
        %6211 = vmatprep.subr.mxu0 0.0
        %6212 = vmatpush1.msra.mxu0 0.0
        %6213 = vmatprep.subr.mxu0 0.0
        %6214 = vmatpush1.msra.mxu0 0.0
        %6215 = vmatprep.subr.mxu0 0.0
        %6216 = vmatpush1.msra.mxu0 0.0
        %6217 = vmatprep.subr.mxu0 0.0
        %6218 = vmatpush1.msra.mxu0 0.0
        %6219 = vmatprep.subr.mxu0 0.0
        %6220 = vmatpush1.msra.mxu0 0.0
        %6221 = vmatprep.subr.mxu0 0.0
        %6222 = vmatpush1.msra.mxu0 0.0
        %6223 = vmatprep.subr.mxu0 0.0
        %6224 = vmatpush1.msra.mxu0 %v5083
        %6225 = vmatprep.subr.mxu0 0.0
        %6226 = vmatpush1.msra.mxu0 %v5078
        %6227 = vmatprep.subr.mxu0 0.0
        %6228 = vmatpush2.msra.mxu0 0.0
        %6229 = vmatprep.subr.mxu0 0.0
        %6230 = vmatpush2.msra.mxu0 0.0
        %6231 = vmatprep.subr.mxu0 0.0
        %6232 = vmatpush2.msra.mxu0 0.0
        %6233 = vmatprep.subr.mxu0 0.0
        %6234 = vmatpush2.msra.mxu0 0.0
        %6235 = vmatprep.subr.mxu0 0.0
        %6236 = vmatpush2.msra.mxu0 0.0
        %6237 = vmatprep.subr.mxu0 0.0
        %6238 = vmatpush2.msra.mxu0 0.0
        %6239 = vmatprep.subr.mxu0 0.0
        %6240 = vmatpush2.msra.mxu0 0.0
        %6241 = vmatprep.subr.mxu0 0.0
        %6242 = vmatpush2.msra.mxu0 0.0
        %6243 = vmatprep.subr.mxu0 0.0
        %6244 = vmatpush2.msra.mxu0 0.0
        %6245 = vmatprep.subr.mxu0 0.0
        %6246 = vmatpush2.msra.mxu0 0.0
        %6247 = vmatprep.subr.mxu0 0.0
        %6248 = vmatpush2.msra.mxu0 0.0
        %6249 = vmatprep.subr.mxu0 0.0
        %6250 = vmatpush2.msra.mxu0 0.0
        %6251 = vmatprep.subr.mxu0 0.0
        %6252 = vmatpush2.msra.mxu0 0.0
        %6253 = vmatprep.subr.mxu0 0.0
        %6254 = vmatpush2.msra.mxu0 0.0
        %6255 = vmatprep.subr.mxu0 0.0
        %6256 = vmatpush2.msra.mxu0 0.0
        %6257 = vmatprep.subr.mxu0 0.0
        %6258 = vmatpush2.msra.mxu0 0.0
        %6259 = vmatprep.mubr.f32.mxu0 0.0
        %6260 = vmatmul.mubr.f32.gmra.mxu0 %v6190
        %v6261 = vpop.f32.mrf.mxu0
        %v6262 = vadd.f32 0.0, %v6261
        %v6263 = vpop.f32.mrf.mxu0
        %6264 = vmatprep.mubr.f32.mxu0 0.0
        %6265 = vmatmul.mubr.f32.gmra.mxu0 %v6193
        %v6266 = vpop.f32.mrf.mxu0
        %v6267 = vadd.f32 0.0, %v6266
        %v6268 = vpop.f32.mrf.mxu0
        %6269 = vdwg.mxu0
        %v6271 = vsel %vm1661, %v6175, 0
        %v6274 = vsel %vm1661, %v6176, 0
        %6276 = vmatprep.subr.mxu0 0.0
        %6277 = vmatpush1.msra.mxu0 0.0
        %6278 = vmatprep.subr.mxu0 0.0
        %6279 = vmatpush1.msra.mxu0 0.0
        %6280 = vmatprep.subr.mxu0 0.0
        %6281 = vmatpush1.msra.mxu0 0.0
        %6282 = vmatprep.subr.mxu0 0.0
        %6283 = vmatpush1.msra.mxu0 0.0
        %6284 = vmatprep.subr.mxu0 0.0
        %6285 = vmatpush1.msra.mxu0 0.0
        %6286 = vmatprep.subr.mxu0 0.0
        %6287 = vmatpush1.msra.mxu0 0.0
        %6288 = vmatprep.subr.mxu0 0.0
        %6289 = vmatpush1.msra.mxu0 0.0
        %6290 = vmatprep.subr.mxu0 0.0
        %6291 = vmatpush1.msra.mxu0 0.0
        %6292 = vmatprep.subr.mxu0 0.0
        %6293 = vmatpush1.msra.mxu0 0.0
        %6294 = vmatprep.subr.mxu0 0.0
        %6295 = vmatpush1.msra.mxu0 0.0
        %6296 = vmatprep.subr.mxu0 0.0
        %6297 = vmatpush1.msra.mxu0 0.0
        %6298 = vmatprep.subr.mxu0 0.0
        %6299 = vmatpush1.msra.mxu0 0.0
        %6300 = vmatprep.subr.mxu0 0.0
        %6301 = vmatpush1.msra.mxu0 0.0
        %6302 = vmatprep.subr.mxu0 0.0
        %6303 = vmatpush1.msra.mxu0 0.0
        %6304 = vmatprep.subr.mxu0 0.0
        %6305 = vmatpush1.msra.mxu0 %v5093
        %6306 = vmatprep.subr.mxu0 0.0
        %6307 = vmatpush1.msra.mxu0 %v5088
        %6308 = vmatprep.subr.mxu0 0.0
        %6309 = vmatpush2.msra.mxu0 0.0
        %6310 = vmatprep.subr.mxu0 0.0
        %6311 = vmatpush2.msra.mxu0 0.0
        %6312 = vmatprep.subr.mxu0 0.0
        %6313 = vmatpush2.msra.mxu0 0.0
        %6314 = vmatprep.subr.mxu0 0.0
        %6315 = vmatpush2.msra.mxu0 0.0
        %6316 = vmatprep.subr.mxu0 0.0
        %6317 = vmatpush2.msra.mxu0 0.0
        %6318 = vmatprep.subr.mxu0 0.0
        %6319 = vmatpush2.msra.mxu0 0.0
        %6320 = vmatprep.subr.mxu0 0.0
        %6321 = vmatpush2.msra.mxu0 0.0
        %6322 = vmatprep.subr.mxu0 0.0
        %6323 = vmatpush2.msra.mxu0 0.0
        %6324 = vmatprep.subr.mxu0 0.0
        %6325 = vmatpush2.msra.mxu0 0.0
        %6326 = vmatprep.subr.mxu0 0.0
        %6327 = vmatpush2.msra.mxu0 0.0
        %6328 = vmatprep.subr.mxu0 0.0
        %6329 = vmatpush2.msra.mxu0 0.0
        %6330 = vmatprep.subr.mxu0 0.0
        %6331 = vmatpush2.msra.mxu0 0.0
        %6332 = vmatprep.subr.mxu0 0.0
        %6333 = vmatpush2.msra.mxu0 0.0
        %6334 = vmatprep.subr.mxu0 0.0
        %6335 = vmatpush2.msra.mxu0 0.0
        %6336 = vmatprep.subr.mxu0 0.0
        %6337 = vmatpush2.msra.mxu0 0.0
        %6338 = vmatprep.subr.mxu0 0.0
        %6339 = vmatpush2.msra.mxu0 0.0
        %6340 = vmatprep.mubr.f32.mxu0 0.0
        %6341 = vmatmul.mubr.f32.gmra.mxu0 %v6271
        %v6342 = vpop.f32.mrf.mxu0
        %v6343 = vadd.f32 0.0, %v6342
        %v6344 = vpop.f32.mrf.mxu0
        %6345 = vmatprep.mubr.f32.mxu0 0.0
        %6346 = vmatmul.mubr.f32.gmra.mxu0 %v6274
        %v6347 = vpop.f32.mrf.mxu0
        %v6348 = vadd.f32 0.0, %v6347
        %v6349 = vpop.f32.mrf.mxu0
        %6350 = vdwg.mxu0
        %v6352 = vsel %vm1661, %v6177, 0
        %v6355 = vsel %vm1661, %v6178, 0
        %6357 = vmatprep.subr.mxu0 0.0
        %6358 = vmatpush1.msra.mxu0 0.0
        %6359 = vmatprep.subr.mxu0 0.0
        %6360 = vmatpush1.msra.mxu0 0.0
        %6361 = vmatprep.subr.mxu0 0.0
        %6362 = vmatpush1.msra.mxu0 0.0
        %6363 = vmatprep.subr.mxu0 0.0
        %6364 = vmatpush1.msra.mxu0 0.0
        %6365 = vmatprep.subr.mxu0 0.0
        %6366 = vmatpush1.msra.mxu0 0.0
        %6367 = vmatprep.subr.mxu0 0.0
        %6368 = vmatpush1.msra.mxu0 0.0
        %6369 = vmatprep.subr.mxu0 0.0
        %6370 = vmatpush1.msra.mxu0 0.0
        %6371 = vmatprep.subr.mxu0 0.0
        %6372 = vmatpush1.msra.mxu0 0.0
        %6373 = vmatprep.subr.mxu0 0.0
        %6374 = vmatpush1.msra.mxu0 0.0
        %6375 = vmatprep.subr.mxu0 0.0
        %6376 = vmatpush1.msra.mxu0 0.0
        %6377 = vmatprep.subr.mxu0 0.0
        %6378 = vmatpush1.msra.mxu0 0.0
        %6379 = vmatprep.subr.mxu0 0.0
        %6380 = vmatpush1.msra.mxu0 0.0
        %6381 = vmatprep.subr.mxu0 0.0
        %6382 = vmatpush1.msra.mxu0 0.0
        %6383 = vmatprep.subr.mxu0 0.0
        %6384 = vmatpush1.msra.mxu0 0.0
        %6385 = vmatprep.subr.mxu0 0.0
        %6386 = vmatpush1.msra.mxu0 %v5103
        %6387 = vmatprep.subr.mxu0 0.0
        %6388 = vmatpush1.msra.mxu0 %v5098
        %6389 = vmatprep.subr.mxu0 0.0
        %6390 = vmatpush2.msra.mxu0 0.0
        %6391 = vmatprep.subr.mxu0 0.0
        %6392 = vmatpush2.msra.mxu0 0.0
        %6393 = vmatprep.subr.mxu0 0.0
        %6394 = vmatpush2.msra.mxu0 0.0
        %6395 = vmatprep.subr.mxu0 0.0
        %6396 = vmatpush2.msra.mxu0 0.0
        %6397 = vmatprep.subr.mxu0 0.0
        %6398 = vmatpush2.msra.mxu0 0.0
        %6399 = vmatprep.subr.mxu0 0.0
        %6400 = vmatpush2.msra.mxu0 0.0
        %6401 = vmatprep.subr.mxu0 0.0
        %6402 = vmatpush2.msra.mxu0 0.0
        %6403 = vmatprep.subr.mxu0 0.0
        %6404 = vmatpush2.msra.mxu0 0.0
        %6405 = vmatprep.subr.mxu0 0.0
        %6406 = vmatpush2.msra.mxu0 0.0
        %6407 = vmatprep.subr.mxu0 0.0
        %6408 = vmatpush2.msra.mxu0 0.0
        %6409 = vmatprep.subr.mxu0 0.0
        %6410 = vmatpush2.msra.mxu0 0.0
        %6411 = vmatprep.subr.mxu0 0.0
        %6412 = vmatpush2.msra.mxu0 0.0
        %6413 = vmatprep.subr.mxu0 0.0
        %6414 = vmatpush2.msra.mxu0 0.0
        %6415 = vmatprep.subr.mxu0 0.0
        %6416 = vmatpush2.msra.mxu0 0.0
        %6417 = vmatprep.subr.mxu0 0.0
        %6418 = vmatpush2.msra.mxu0 0.0
        %6419 = vmatprep.subr.mxu0 0.0
        %6420 = vmatpush2.msra.mxu0 0.0
        %6421 = vmatprep.mubr.f32.mxu0 0.0
        %6422 = vmatmul.mubr.f32.gmra.mxu0 %v6352
        %v6423 = vpop.f32.mrf.mxu0
        %v6424 = vadd.f32 0.0, %v6423
        %v6425 = vpop.f32.mrf.mxu0
        %6426 = vmatprep.mubr.f32.mxu0 0.0
        %6427 = vmatmul.mubr.f32.gmra.mxu0 %v6355
        %v6428 = vpop.f32.mrf.mxu0
        %v6429 = vadd.f32 0.0, %v6428
        %v6430 = vpop.f32.mrf.mxu0
        %6431 = vdwg.mxu0
        %v6433 = vsel %vm1661, %v6179, 0
        %v6436 = vsel %vm1661, %v6180, 0
        %6438 = vmatprep.subr.mxu0 0.0
        %6439 = vmatpush1.msra.mxu0 0.0
        %6440 = vmatprep.subr.mxu0 0.0
        %6441 = vmatpush1.msra.mxu0 0.0
        %6442 = vmatprep.subr.mxu0 0.0
        %6443 = vmatpush1.msra.mxu0 0.0
        %6444 = vmatprep.subr.mxu0 0.0
        %6445 = vmatpush1.msra.mxu0 0.0
        %6446 = vmatprep.subr.mxu0 0.0
        %6447 = vmatpush1.msra.mxu0 0.0
        %6448 = vmatprep.subr.mxu0 0.0
        %6449 = vmatpush1.msra.mxu0 0.0
        %6450 = vmatprep.subr.mxu0 0.0
        %6451 = vmatpush1.msra.mxu0 0.0
        %6452 = vmatprep.subr.mxu0 0.0
        %6453 = vmatpush1.msra.mxu0 0.0
        %6454 = vmatprep.subr.mxu0 0.0
        %6455 = vmatpush1.msra.mxu0 0.0
        %6456 = vmatprep.subr.mxu0 0.0
        %6457 = vmatpush1.msra.mxu0 0.0
        %6458 = vmatprep.subr.mxu0 0.0
        %6459 = vmatpush1.msra.mxu0 0.0
        %6460 = vmatprep.subr.mxu0 0.0
        %6461 = vmatpush1.msra.mxu0 0.0
        %6462 = vmatprep.subr.mxu0 0.0
        %6463 = vmatpush1.msra.mxu0 0.0
        %6464 = vmatprep.subr.mxu0 0.0
        %6465 = vmatpush1.msra.mxu0 0.0
        %6466 = vmatprep.subr.mxu0 0.0
        %6467 = vmatpush1.msra.mxu0 %v5113
        %6468 = vmatprep.subr.mxu0 0.0
        %6469 = vmatpush1.msra.mxu0 %v5108
        %6470 = vmatprep.subr.mxu0 0.0
        %6471 = vmatpush2.msra.mxu0 0.0
        %6472 = vmatprep.subr.mxu0 0.0
        %6473 = vmatpush2.msra.mxu0 0.0
        %6474 = vmatprep.subr.mxu0 0.0
        %6475 = vmatpush2.msra.mxu0 0.0
        %6476 = vmatprep.subr.mxu0 0.0
        %6477 = vmatpush2.msra.mxu0 0.0
        %6478 = vmatprep.subr.mxu0 0.0
        %6479 = vmatpush2.msra.mxu0 0.0
        %6480 = vmatprep.subr.mxu0 0.0
        %6481 = vmatpush2.msra.mxu0 0.0
        %6482 = vmatprep.subr.mxu0 0.0
        %6483 = vmatpush2.msra.mxu0 0.0
        %6484 = vmatprep.subr.mxu0 0.0
        %6485 = vmatpush2.msra.mxu0 0.0
        %6486 = vmatprep.subr.mxu0 0.0
        %6487 = vmatpush2.msra.mxu0 0.0
        %6488 = vmatprep.subr.mxu0 0.0
        %6489 = vmatpush2.msra.mxu0 0.0
        %6490 = vmatprep.subr.mxu0 0.0
        %6491 = vmatpush2.msra.mxu0 0.0
        %6492 = vmatprep.subr.mxu0 0.0
        %6493 = vmatpush2.msra.mxu0 0.0
        %6494 = vmatprep.subr.mxu0 0.0
        %6495 = vmatpush2.msra.mxu0 0.0
        %6496 = vmatprep.subr.mxu0 0.0
        %6497 = vmatpush2.msra.mxu0 0.0
        %6498 = vmatprep.subr.mxu0 0.0
        %6499 = vmatpush2.msra.mxu0 0.0
        %6500 = vmatprep.subr.mxu0 0.0
        %6501 = vmatpush2.msra.mxu0 0.0
        %6502 = vmatprep.mubr.f32.mxu0 0.0
        %6503 = vmatmul.mubr.f32.gmra.mxu0 %v6433
        %v6504 = vpop.f32.mrf.mxu0
        %v6505 = vadd.f32 0.0, %v6504
        %v6506 = vpop.f32.mrf.mxu0
        %6507 = vmatprep.mubr.f32.mxu0 0.0
        %6508 = vmatmul.mubr.f32.gmra.mxu0 %v6436
        %v6509 = vpop.f32.mrf.mxu0
        %v6510 = vadd.f32 0.0, %v6509
        %v6511 = vpop.f32.mrf.mxu0
        %6512 = vdwg.mxu0
        %v6514 = vsel %vm1661, %v6181, 0
        %v6517 = vsel %vm1661, %v6182, 0
        %6519 = vmatprep.subr.mxu0 0.0
        %6520 = vmatpush1.msra.mxu0 0.0
        %6521 = vmatprep.subr.mxu0 0.0
        %6522 = vmatpush1.msra.mxu0 0.0
        %6523 = vmatprep.subr.mxu0 0.0
        %6524 = vmatpush1.msra.mxu0 0.0
        %6525 = vmatprep.subr.mxu0 0.0
        %6526 = vmatpush1.msra.mxu0 0.0
        %6527 = vmatprep.subr.mxu0 0.0
        %6528 = vmatpush1.msra.mxu0 0.0
        %6529 = vmatprep.subr.mxu0 0.0
        %6530 = vmatpush1.msra.mxu0 0.0
        %6531 = vmatprep.subr.mxu0 0.0
        %6532 = vmatpush1.msra.mxu0 0.0
        %6533 = vmatprep.subr.mxu0 0.0
        %6534 = vmatpush1.msra.mxu0 0.0
        %6535 = vmatprep.subr.mxu0 0.0
        %6536 = vmatpush1.msra.mxu0 0.0
        %6537 = vmatprep.subr.mxu0 0.0
        %6538 = vmatpush1.msra.mxu0 0.0
        %6539 = vmatprep.subr.mxu0 0.0
        %6540 = vmatpush1.msra.mxu0 0.0
        %6541 = vmatprep.subr.mxu0 0.0
        %6542 = vmatpush1.msra.mxu0 0.0
        %6543 = vmatprep.subr.mxu0 0.0
        %6544 = vmatpush1.msra.mxu0 0.0
        %6545 = vmatprep.subr.mxu0 0.0
        %6546 = vmatpush1.msra.mxu0 0.0
        %6547 = vmatprep.subr.mxu0 0.0
        %6548 = vmatpush1.msra.mxu0 %v5123
        %6549 = vmatprep.subr.mxu0 0.0
        %6550 = vmatpush1.msra.mxu0 %v5118
        %6551 = vmatprep.subr.mxu0 0.0
        %6552 = vmatpush2.msra.mxu0 0.0
        %6553 = vmatprep.subr.mxu0 0.0
        %6554 = vmatpush2.msra.mxu0 0.0
        %6555 = vmatprep.subr.mxu0 0.0
        %6556 = vmatpush2.msra.mxu0 0.0
        %6557 = vmatprep.subr.mxu0 0.0
        %6558 = vmatpush2.msra.mxu0 0.0
        %6559 = vmatprep.subr.mxu0 0.0
        %6560 = vmatpush2.msra.mxu0 0.0
        %6561 = vmatprep.subr.mxu0 0.0
        %6562 = vmatpush2.msra.mxu0 0.0
        %6563 = vmatprep.subr.mxu0 0.0
        %6564 = vmatpush2.msra.mxu0 0.0
        %6565 = vmatprep.subr.mxu0 0.0
        %6566 = vmatpush2.msra.mxu0 0.0
        %6567 = vmatprep.subr.mxu0 0.0
        %6568 = vmatpush2.msra.mxu0 0.0
        %6569 = vmatprep.subr.mxu0 0.0
        %6570 = vmatpush2.msra.mxu0 0.0
        %6571 = vmatprep.subr.mxu0 0.0
        %6572 = vmatpush2.msra.mxu0 0.0
        %6573 = vmatprep.subr.mxu0 0.0
        %6574 = vmatpush2.msra.mxu0 0.0
        %6575 = vmatprep.subr.mxu0 0.0
        %6576 = vmatpush2.msra.mxu0 0.0
        %6577 = vmatprep.subr.mxu0 0.0
        %6578 = vmatpush2.msra.mxu0 0.0
        %6579 = vmatprep.subr.mxu0 0.0
        %6580 = vmatpush2.msra.mxu0 0.0
        %6581 = vmatprep.subr.mxu0 0.0
        %6582 = vmatpush2.msra.mxu0 0.0
        %6583 = vmatprep.mubr.f32.mxu0 0.0
        %6584 = vmatmul.mubr.f32.gmra.mxu0 %v6514
        %v6585 = vpop.f32.mrf.mxu0
        %v6586 = vadd.f32 0.0, %v6585
        %v6587 = vpop.f32.mrf.mxu0
        %6588 = vmatprep.mubr.f32.mxu0 0.0
        %6589 = vmatmul.mubr.f32.gmra.mxu0 %v6517
        %v6590 = vpop.f32.mrf.mxu0
        %v6591 = vadd.f32 0.0, %v6590
        %v6592 = vpop.f32.mrf.mxu0
        %6593 = vdwg.mxu0
        %v6595 = vsel %vm1661, %v6183, 0
        %v6598 = vsel %vm1661, %v6184, 0
        %6600 = vmatprep.subr.mxu0 0.0
        %6601 = vmatpush1.msra.mxu0 0.0
        %6602 = vmatprep.subr.mxu0 0.0
        %6603 = vmatpush1.msra.mxu0 0.0
        %6604 = vmatprep.subr.mxu0 0.0
        %6605 = vmatpush1.msra.mxu0 0.0
        %6606 = vmatprep.subr.mxu0 0.0
        %6607 = vmatpush1.msra.mxu0 0.0
        %6608 = vmatprep.subr.mxu0 0.0
        %6609 = vmatpush1.msra.mxu0 0.0
        %6610 = vmatprep.subr.mxu0 0.0
        %6611 = vmatpush1.msra.mxu0 0.0
        %6612 = vmatprep.subr.mxu0 0.0
        %6613 = vmatpush1.msra.mxu0 0.0
        %6614 = vmatprep.subr.mxu0 0.0
        %6615 = vmatpush1.msra.mxu0 0.0
        %6616 = vmatprep.subr.mxu0 0.0
        %6617 = vmatpush1.msra.mxu0 0.0
        %6618 = vmatprep.subr.mxu0 0.0
        %6619 = vmatpush1.msra.mxu0 0.0
        %6620 = vmatprep.subr.mxu0 0.0
        %6621 = vmatpush1.msra.mxu0 0.0
        %6622 = vmatprep.subr.mxu0 0.0
        %6623 = vmatpush1.msra.mxu0 0.0
        %6624 = vmatprep.subr.mxu0 0.0
        %6625 = vmatpush1.msra.mxu0 0.0
        %6626 = vmatprep.subr.mxu0 0.0
        %6627 = vmatpush1.msra.mxu0 0.0
        %6628 = vmatprep.subr.mxu0 0.0
        %6629 = vmatpush1.msra.mxu0 %v5133
        %6630 = vmatprep.subr.mxu0 0.0
        %6631 = vmatpush1.msra.mxu0 %v5128
        %6632 = vmatprep.subr.mxu0 0.0
        %6633 = vmatpush2.msra.mxu0 0.0
        %6634 = vmatprep.subr.mxu0 0.0
        %6635 = vmatpush2.msra.mxu0 0.0
        %6636 = vmatprep.subr.mxu0 0.0
        %6637 = vmatpush2.msra.mxu0 0.0
        %6638 = vmatprep.subr.mxu0 0.0
        %6639 = vmatpush2.msra.mxu0 0.0
        %6640 = vmatprep.subr.mxu0 0.0
        %6641 = vmatpush2.msra.mxu0 0.0
        %6642 = vmatprep.subr.mxu0 0.0
        %6643 = vmatpush2.msra.mxu0 0.0
        %6644 = vmatprep.subr.mxu0 0.0
        %6645 = vmatpush2.msra.mxu0 0.0
        %6646 = vmatprep.subr.mxu0 0.0
        %6647 = vmatpush2.msra.mxu0 0.0
        %6648 = vmatprep.subr.mxu0 0.0
        %6649 = vmatpush2.msra.mxu0 0.0
        %6650 = vmatprep.subr.mxu0 0.0
        %6651 = vmatpush2.msra.mxu0 0.0
        %6652 = vmatprep.subr.mxu0 0.0
        %6653 = vmatpush2.msra.mxu0 0.0
        %6654 = vmatprep.subr.mxu0 0.0
        %6655 = vmatpush2.msra.mxu0 0.0
        %6656 = vmatprep.subr.mxu0 0.0
        %6657 = vmatpush2.msra.mxu0 0.0
        %6658 = vmatprep.subr.mxu0 0.0
        %6659 = vmatpush2.msra.mxu0 0.0
        %6660 = vmatprep.subr.mxu0 0.0
        %6661 = vmatpush2.msra.mxu0 0.0
        %6662 = vmatprep.subr.mxu0 0.0
        %6663 = vmatpush2.msra.mxu0 0.0
        %6664 = vmatprep.mubr.f32.mxu0 0.0
        %6665 = vmatmul.mubr.f32.gmra.mxu0 %v6595
        %v6666 = vpop.f32.mrf.mxu0
        %v6667 = vadd.f32 0.0, %v6666
        %v6668 = vpop.f32.mrf.mxu0
        %6669 = vmatprep.mubr.f32.mxu0 0.0
        %6670 = vmatmul.mubr.f32.gmra.mxu0 %v6598
        %v6671 = vpop.f32.mrf.mxu0
        %v6672 = vadd.f32 0.0, %v6671
        %v6673 = vpop.f32.mrf.mxu0
        %6674 = vdwg.mxu0
        %v6676 = vsel %vm1661, %v6185, 0
        %v6679 = vsel %vm1661, %v6186, 0
        %6681 = vmatprep.subr.mxu0 0.0
        %6682 = vmatpush1.msra.mxu0 0.0
        %6683 = vmatprep.subr.mxu0 0.0
        %6684 = vmatpush1.msra.mxu0 0.0
        %6685 = vmatprep.subr.mxu0 0.0
        %6686 = vmatpush1.msra.mxu0 0.0
        %6687 = vmatprep.subr.mxu0 0.0
        %6688 = vmatpush1.msra.mxu0 0.0
        %6689 = vmatprep.subr.mxu0 0.0
        %6690 = vmatpush1.msra.mxu0 0.0
        %6691 = vmatprep.subr.mxu0 0.0
        %6692 = vmatpush1.msra.mxu0 0.0
        %6693 = vmatprep.subr.mxu0 0.0
        %6694 = vmatpush1.msra.mxu0 0.0
        %6695 = vmatprep.subr.mxu0 0.0
        %6696 = vmatpush1.msra.mxu0 0.0
        %6697 = vmatprep.subr.mxu0 0.0
        %6698 = vmatpush1.msra.mxu0 0.0
        %6699 = vmatprep.subr.mxu0 0.0
        %6700 = vmatpush1.msra.mxu0 0.0
        %6701 = vmatprep.subr.mxu0 0.0
        %6702 = vmatpush1.msra.mxu0 0.0
        %6703 = vmatprep.subr.mxu0 0.0
        %6704 = vmatpush1.msra.mxu0 0.0
        %6705 = vmatprep.subr.mxu0 0.0
        %6706 = vmatpush1.msra.mxu0 0.0
        %6707 = vmatprep.subr.mxu0 0.0
        %6708 = vmatpush1.msra.mxu0 0.0
        %6709 = vmatprep.subr.mxu0 0.0
        %6710 = vmatpush1.msra.mxu0 %v5143
        %6711 = vmatprep.subr.mxu0 0.0
        %6712 = vmatpush1.msra.mxu0 %v5138
        %6713 = vmatprep.subr.mxu0 0.0
        %6714 = vmatpush2.msra.mxu0 0.0
        %6715 = vmatprep.subr.mxu0 0.0
        %6716 = vmatpush2.msra.mxu0 0.0
        %6717 = vmatprep.subr.mxu0 0.0
        %6718 = vmatpush2.msra.mxu0 0.0
        %6719 = vmatprep.subr.mxu0 0.0
        %6720 = vmatpush2.msra.mxu0 0.0
        %6721 = vmatprep.subr.mxu0 0.0
        %6722 = vmatpush2.msra.mxu0 0.0
        %6723 = vmatprep.subr.mxu0 0.0
        %6724 = vmatpush2.msra.mxu0 0.0
        %6725 = vmatprep.subr.mxu0 0.0
        %6726 = vmatpush2.msra.mxu0 0.0
        %6727 = vmatprep.subr.mxu0 0.0
        %6728 = vmatpush2.msra.mxu0 0.0
        %6729 = vmatprep.subr.mxu0 0.0
        %6730 = vmatpush2.msra.mxu0 0.0
        %6731 = vmatprep.subr.mxu0 0.0
        %6732 = vmatpush2.msra.mxu0 0.0
        %6733 = vmatprep.subr.mxu0 0.0
        %6734 = vmatpush2.msra.mxu0 0.0
        %6735 = vmatprep.subr.mxu0 0.0
        %6736 = vmatpush2.msra.mxu0 0.0
        %6737 = vmatprep.subr.mxu0 0.0
        %6738 = vmatpush2.msra.mxu0 0.0
        %6739 = vmatprep.subr.mxu0 0.0
        %6740 = vmatpush2.msra.mxu0 0.0
        %6741 = vmatprep.subr.mxu0 0.0
        %6742 = vmatpush2.msra.mxu0 0.0
        %6743 = vmatprep.subr.mxu0 0.0
        %6744 = vmatpush2.msra.mxu0 0.0
        %6745 = vmatprep.mubr.f32.mxu0 0.0
        %6746 = vmatmul.mubr.f32.gmra.mxu0 %v6676
        %v6747 = vpop.f32.mrf.mxu0
        %v6748 = vadd.f32 0.0, %v6747
        %v6749 = vpop.f32.mrf.mxu0
        %6750 = vmatprep.mubr.f32.mxu0 0.0
        %6751 = vmatmul.mubr.f32.gmra.mxu0 %v6679
        %v6752 = vpop.f32.mrf.mxu0
        %v6753 = vadd.f32 0.0, %v6752
        %v6754 = vpop.f32.mrf.mxu0
        %6755 = vdwg.mxu0
        %v6757 = vsel %vm1661, %v6187, 0
        %v6760 = vsel %vm1661, %v6188, 0
        %6762 = vmatprep.subr.mxu0 0.0
        %6763 = vmatpush1.msra.mxu0 0.0
        %6764 = vmatprep.subr.mxu0 0.0
        %6765 = vmatpush1.msra.mxu0 0.0
        %6766 = vmatprep.subr.mxu0 0.0
        %6767 = vmatpush1.msra.mxu0 0.0
        %6768 = vmatprep.subr.mxu0 0.0
        %6769 = vmatpush1.msra.mxu0 0.0
        %6770 = vmatprep.subr.mxu0 0.0
        %6771 = vmatpush1.msra.mxu0 0.0
        %6772 = vmatprep.subr.mxu0 0.0
        %6773 = vmatpush1.msra.mxu0 0.0
        %6774 = vmatprep.subr.mxu0 0.0
        %6775 = vmatpush1.msra.mxu0 0.0
        %6776 = vmatprep.subr.mxu0 0.0
        %6777 = vmatpush1.msra.mxu0 0.0
        %6778 = vmatprep.subr.mxu0 0.0
        %6779 = vmatpush1.msra.mxu0 0.0
        %6780 = vmatprep.subr.mxu0 0.0
        %6781 = vmatpush1.msra.mxu0 0.0
        %6782 = vmatprep.subr.mxu0 0.0
        %6783 = vmatpush1.msra.mxu0 0.0
        %6784 = vmatprep.subr.mxu0 0.0
        %6785 = vmatpush1.msra.mxu0 0.0
        %6786 = vmatprep.subr.mxu0 0.0
        %6787 = vmatpush1.msra.mxu0 0.0
        %6788 = vmatprep.subr.mxu0 0.0
        %6789 = vmatpush1.msra.mxu0 0.0
        %6790 = vmatprep.subr.mxu0 0.0
        %6791 = vmatpush1.msra.mxu0 %v5153
        %6792 = vmatprep.subr.mxu0 0.0
        %6793 = vmatpush1.msra.mxu0 %v5148
        %6794 = vmatprep.subr.mxu0 0.0
        %6795 = vmatpush2.msra.mxu0 0.0
        %6796 = vmatprep.subr.mxu0 0.0
        %6797 = vmatpush2.msra.mxu0 0.0
        %6798 = vmatprep.subr.mxu0 0.0
        %6799 = vmatpush2.msra.mxu0 0.0
        %6800 = vmatprep.subr.mxu0 0.0
        %6801 = vmatpush2.msra.mxu0 0.0
        %6802 = vmatprep.subr.mxu0 0.0
        %6803 = vmatpush2.msra.mxu0 0.0
        %6804 = vmatprep.subr.mxu0 0.0
        %6805 = vmatpush2.msra.mxu0 0.0
        %6806 = vmatprep.subr.mxu0 0.0
        %6807 = vmatpush2.msra.mxu0 0.0
        %6808 = vmatprep.subr.mxu0 0.0
        %6809 = vmatpush2.msra.mxu0 0.0
        %6810 = vmatprep.subr.mxu0 0.0
        %6811 = vmatpush2.msra.mxu0 0.0
        %6812 = vmatprep.subr.mxu0 0.0
        %6813 = vmatpush2.msra.mxu0 0.0
        %6814 = vmatprep.subr.mxu0 0.0
        %6815 = vmatpush2.msra.mxu0 0.0
        %6816 = vmatprep.subr.mxu0 0.0
        %6817 = vmatpush2.msra.mxu0 0.0
        %6818 = vmatprep.subr.mxu0 0.0
        %6819 = vmatpush2.msra.mxu0 0.0
        %6820 = vmatprep.subr.mxu0 0.0
        %6821 = vmatpush2.msra.mxu0 0.0
        %6822 = vmatprep.subr.mxu0 0.0
        %6823 = vmatpush2.msra.mxu0 0.0
        %6824 = vmatprep.subr.mxu0 0.0
        %6825 = vmatpush2.msra.mxu0 0.0
        %6826 = vmatprep.mubr.f32.mxu0 0.0
        %6827 = vmatmul.mubr.f32.gmra.mxu0 %v6757
        %v6828 = vpop.f32.mrf.mxu0
        %v6829 = vadd.f32 0.0, %v6828
        %v6830 = vpop.f32.mrf.mxu0
        %6831 = vmatprep.mubr.f32.mxu0 0.0
        %6832 = vmatmul.mubr.f32.gmra.mxu0 %v6760
        %v6833 = vpop.f32.mrf.mxu0
        %v6834 = vadd.f32 0.0, %v6833
        %v6835 = vpop.f32.mrf.mxu0
        %6836 = vdwg.mxu0
        %s6837 = scalar_lea.vmem %s6, 16
        %v6838 = vld [vmem:[%s6837] sm:$0xff]
        %v6840 = vsel %vm964, %v6262, 0
        %v6843 = vsel %vm964, %v6267, 0
        %v6846 = vsel %vm964, %v6343, 0
        %v6849 = vsel %vm964, %v6348, 0
        %v6852 = vsel %vm964, %v6424, 0
        %v6855 = vsel %vm964, %v6429, 0
        %v6858 = vsel %vm964, %v6505, 0
        %v6861 = vsel %vm964, %v6510, 0
        %v6864 = vsel %vm964, %v6586, 0
        %v6867 = vsel %vm964, %v6591, 0
        %v6870 = vsel %vm964, %v6667, 0
        %v6873 = vsel %vm964, %v6672, 0
        %v6876 = vsel %vm964, %v6748, 0
        %v6879 = vsel %vm964, %v6753, 0
        %v6882 = vsel %vm964, %v6829, 0
        %v6885 = vsel %vm964, %v6834, 0
        %6887 = vmatprep.subr.mxu0 0.0
        %6888 = vmatpush1.msra.mxu0 0.0
        %6889 = vmatprep.subr.mxu0 0.0
        %6890 = vmatpush1.msra.mxu0 0.0
        %6891 = vmatprep.subr.mxu0 0.0
        %6892 = vmatpush1.msra.mxu0 0.0
        %6893 = vmatprep.subr.mxu0 0.0
        %6894 = vmatpush1.msra.mxu0 0.0
        %6895 = vmatprep.subr.mxu0 0.0
        %6896 = vmatpush1.msra.mxu0 0.0
        %6897 = vmatprep.subr.mxu0 0.0
        %6898 = vmatpush1.msra.mxu0 0.0
        %6899 = vmatprep.subr.mxu0 0.0
        %6900 = vmatpush1.msra.mxu0 0.0
        %6901 = vmatprep.subr.mxu0 0.0
        %6902 = vmatpush1.msra.mxu0 0.0
        %6903 = vmatprep.subr.mxu0 0.0
        %6904 = vmatpush1.msra.mxu0 0.0
        %6905 = vmatprep.subr.mxu0 0.0
        %6906 = vmatpush1.msra.mxu0 0.0
        %6907 = vmatprep.subr.mxu0 0.0
        %6908 = vmatpush1.msra.mxu0 0.0
        %6909 = vmatprep.subr.mxu0 0.0
        %6910 = vmatpush1.msra.mxu0 0.0
        %6911 = vmatprep.subr.mxu0 0.0
        %6912 = vmatpush1.msra.mxu0 0.0
        %6913 = vmatprep.subr.mxu0 0.0
        %6914 = vmatpush1.msra.mxu0 0.0
        %6915 = vmatprep.subr.mxu0 0.0
        %6916 = vmatpush1.msra.mxu0 0.0
        %6917 = vmatprep.subr.mxu0 0.0
        %6918 = vmatpush1.msra.mxu0 %v6838
        %6919 = vmatprep.subr.mxu0 0.0
        %6920 = vmatpush2.msra.mxu0 0.0
        %6921 = vmatprep.subr.mxu0 0.0
        %6922 = vmatpush2.msra.mxu0 0.0
        %6923 = vmatprep.subr.mxu0 0.0
        %6924 = vmatpush2.msra.mxu0 0.0
        %6925 = vmatprep.subr.mxu0 0.0
        %6926 = vmatpush2.msra.mxu0 0.0
        %6927 = vmatprep.subr.mxu0 0.0
        %6928 = vmatpush2.msra.mxu0 0.0
        %6929 = vmatprep.subr.mxu0 0.0
        %6930 = vmatpush2.msra.mxu0 0.0
        %6931 = vmatprep.subr.mxu0 0.0
        %6932 = vmatpush2.msra.mxu0 0.0
        %6933 = vmatprep.subr.mxu0 0.0
        %6934 = vmatpush2.msra.mxu0 0.0
        %6935 = vmatprep.subr.mxu0 0.0
        %6936 = vmatpush2.msra.mxu0 0.0
        %6937 = vmatprep.subr.mxu0 0.0
        %6938 = vmatpush2.msra.mxu0 0.0
        %6939 = vmatprep.subr.mxu0 0.0
        %6940 = vmatpush2.msra.mxu0 0.0
        %6941 = vmatprep.subr.mxu0 0.0
        %6942 = vmatpush2.msra.mxu0 0.0
        %6943 = vmatprep.subr.mxu0 0.0
        %6944 = vmatpush2.msra.mxu0 0.0
        %6945 = vmatprep.subr.mxu0 0.0
        %6946 = vmatpush2.msra.mxu0 0.0
        %6947 = vmatprep.subr.mxu0 0.0
        %6948 = vmatpush2.msra.mxu0 0.0
        %6949 = vmatprep.subr.mxu0 0.0
        %6950 = vmatpush2.msra.mxu0 0.0
        %6951 = vmatprep.mubr.f32.mxu0 0.0
        %6952 = vmatmul.mubr.f32.gmra.mxu0 %v6840
        %v6953 = vpop.f32.mrf.mxu0
        %v6954 = vadd.f32 0.0, %v6953
        %v6955 = vpop.f32.mrf.mxu0
        %6956 = vmatprep.mubr.f32.mxu0 0.0
        %6957 = vmatmul.mubr.f32.gmra.mxu0 %v6843
        %v6958 = vpop.f32.mrf.mxu0
        %v6959 = vadd.f32 0.0, %v6958
        %v6960 = vpop.f32.mrf.mxu0
        %6961 = vmatprep.mubr.f32.mxu0 0.0
        %6962 = vmatmul.mubr.f32.gmra.mxu0 %v6846
        %v6963 = vpop.f32.mrf.mxu0
        %v6964 = vadd.f32 0.0, %v6963
        %v6965 = vpop.f32.mrf.mxu0
        %6966 = vmatprep.mubr.f32.mxu0 0.0
        %6967 = vmatmul.mubr.f32.gmra.mxu0 %v6849
        %v6968 = vpop.f32.mrf.mxu0
        %v6969 = vadd.f32 0.0, %v6968
        %v6970 = vpop.f32.mrf.mxu0
        %6971 = vmatprep.mubr.f32.mxu0 0.0
        %6972 = vmatmul.mubr.f32.gmra.mxu0 %v6852
        %v6973 = vpop.f32.mrf.mxu0
        %v6974 = vadd.f32 0.0, %v6973
        %v6975 = vpop.f32.mrf.mxu0
        %6976 = vmatprep.mubr.f32.mxu0 0.0
        %6977 = vmatmul.mubr.f32.gmra.mxu0 %v6855
        %v6978 = vpop.f32.mrf.mxu0
        %v6979 = vadd.f32 0.0, %v6978
        %v6980 = vpop.f32.mrf.mxu0
        %6981 = vmatprep.mubr.f32.mxu0 0.0
        %6982 = vmatmul.mubr.f32.gmra.mxu0 %v6858
        %v6983 = vpop.f32.mrf.mxu0
        %v6984 = vadd.f32 0.0, %v6983
        %v6985 = vpop.f32.mrf.mxu0
        %6986 = vmatprep.mubr.f32.mxu0 0.0
        %6987 = vmatmul.mubr.f32.gmra.mxu0 %v6861
        %v6988 = vpop.f32.mrf.mxu0
        %v6989 = vadd.f32 0.0, %v6988
        %v6990 = vpop.f32.mrf.mxu0
        %6991 = vmatprep.mubr.f32.mxu0 0.0
        %6992 = vmatmul.mubr.f32.gmra.mxu0 %v6864
        %v6993 = vpop.f32.mrf.mxu0
        %v6994 = vadd.f32 0.0, %v6993
        %v6995 = vpop.f32.mrf.mxu0
        %6996 = vmatprep.mubr.f32.mxu0 0.0
        %6997 = vmatmul.mubr.f32.gmra.mxu0 %v6867
        %v6998 = vpop.f32.mrf.mxu0
        %v6999 = vadd.f32 0.0, %v6998
        %v7000 = vpop.f32.mrf.mxu0
        %7001 = vmatprep.mubr.f32.mxu0 0.0
        %7002 = vmatmul.mubr.f32.gmra.mxu0 %v6870
        %v7003 = vpop.f32.mrf.mxu0
        %v7004 = vadd.f32 0.0, %v7003
        %v7005 = vpop.f32.mrf.mxu0
        %7006 = vmatprep.mubr.f32.mxu0 0.0
        %7007 = vmatmul.mubr.f32.gmra.mxu0 %v6873
        %v7008 = vpop.f32.mrf.mxu0
        %v7009 = vadd.f32 0.0, %v7008
        %v7010 = vpop.f32.mrf.mxu0
        %7011 = vmatprep.mubr.f32.mxu0 0.0
        %7012 = vmatmul.mubr.f32.gmra.mxu0 %v6876
        %v7013 = vpop.f32.mrf.mxu0
        %v7014 = vadd.f32 0.0, %v7013
        %v7015 = vpop.f32.mrf.mxu0
        %7016 = vmatprep.mubr.f32.mxu0 0.0
        %7017 = vmatmul.mubr.f32.gmra.mxu0 %v6879
        %v7018 = vpop.f32.mrf.mxu0
        %v7019 = vadd.f32 0.0, %v7018
        %v7020 = vpop.f32.mrf.mxu0
        %7021 = vmatprep.mubr.f32.mxu0 0.0
        %7022 = vmatmul.mubr.f32.gmra.mxu0 %v6882
        %v7023 = vpop.f32.mrf.mxu0
        %v7024 = vadd.f32 0.0, %v7023
        %v7025 = vpop.f32.mrf.mxu0
        %7026 = vmatprep.mubr.f32.mxu0 0.0
        %7027 = vmatmul.mubr.f32.gmra.mxu0 %v6885
        %v7028 = vpop.f32.mrf.mxu0
        %v7029 = vadd.f32 0.0, %v7028
        %v7030 = vpop.f32.mrf.mxu0
        %7031 = vdwg.mxu0
        %v7032 = vadd.f32 %v4778, %v6954
        %v7033 = vadd.f32 %v4783, %v6959
        %v7034 = vadd.f32 %v4788, %v6964
        %v7035 = vadd.f32 %v4793, %v6969
        %v7036 = vadd.f32 %v4798, %v6974
        %v7037 = vadd.f32 %v4803, %v6979
        %v7038 = vadd.f32 %v4808, %v6984
        %v7039 = vadd.f32 %v4813, %v6989
        %v7040 = vadd.f32 %v4818, %v6994
        %v7041 = vadd.f32 %v4823, %v6999
        %v7042 = vadd.f32 %v4828, %v7004
        %v7043 = vadd.f32 %v4833, %v7009
        %v7044 = vadd.f32 %v4838, %v7014
        %v7045 = vadd.f32 %v4843, %v7019
        %v7046 = vadd.f32 %v4848, %v7024
        %v7047 = vadd.f32 %v4853, %v7029
        %s7048 = scalar_lea.vmem %s2, 96
        %v7049 = vld [vmem:[%s7048] sm:$0xff]
        %v7050 = vld [vmem:[%s7048 + $0x8] sm:$0xff]
        %v7051 = vld [vmem:[%s7048 + $0x10] sm:$0xff]
        %v7052 = vld [vmem:[%s7048 + $0x18] sm:$0xff]
        %7053 = vmatprep.subr.mxu0 0.0
        %7054 = vmatpush1.msra.mxu0 0.0
        %7055 = vmatprep.subr.mxu0 0.0
        %7056 = vmatpush1.msra.mxu0 0.0
        %7057 = vmatprep.subr.mxu0 0.0
        %7058 = vmatpush1.msra.mxu0 0.0
        %7059 = vmatprep.subr.mxu0 0.0
        %7060 = vmatpush1.msra.mxu0 0.0
        %7061 = vmatprep.subr.mxu0 0.0
        %7062 = vmatpush1.msra.mxu0 0.0
        %7063 = vmatprep.subr.mxu0 0.0
        %7064 = vmatpush1.msra.mxu0 0.0
        %7065 = vmatprep.subr.mxu0 0.0
        %7066 = vmatpush1.msra.mxu0 0.0
        %7067 = vmatprep.subr.mxu0 0.0
        %7068 = vmatpush1.msra.mxu0 0.0
        %7069 = vmatprep.subr.mxu0 0.0
        %7070 = vmatpush1.msra.mxu0 0.0
        %7071 = vmatprep.subr.mxu0 0.0
        %7072 = vmatpush1.msra.mxu0 0.0
        %7073 = vmatprep.subr.mxu0 0.0
        %7074 = vmatpush1.msra.mxu0 0.0
        %7075 = vmatprep.subr.mxu0 0.0
        %7076 = vmatpush1.msra.mxu0 0.0
        %7077 = vmatprep.subr.mxu0 0.0
        %7078 = vmatpush1.msra.mxu0 %v7052
        %7079 = vmatprep.subr.mxu0 0.0
        %7080 = vmatpush1.msra.mxu0 %v7051
        %7081 = vmatprep.subr.mxu0 0.0
        %7082 = vmatpush1.msra.mxu0 %v7050
        %7083 = vmatprep.subr.mxu0 0.0
        %7084 = vmatpush1.msra.mxu0 %v7049
        %7085 = vmatprep.subr.mxu0 0.0
        %7086 = vmatpush2.msra.mxu0 0.0
        %7087 = vmatprep.subr.mxu0 0.0
        %7088 = vmatpush2.msra.mxu0 0.0
        %7089 = vmatprep.subr.mxu0 0.0
        %7090 = vmatpush2.msra.mxu0 0.0
        %7091 = vmatprep.subr.mxu0 0.0
        %7092 = vmatpush2.msra.mxu0 0.0
        %7093 = vmatprep.subr.mxu0 0.0
        %7094 = vmatpush2.msra.mxu0 0.0
        %7095 = vmatprep.subr.mxu0 0.0
        %7096 = vmatpush2.msra.mxu0 0.0
        %7097 = vmatprep.subr.mxu0 0.0
        %7098 = vmatpush2.msra.mxu0 0.0
        %7099 = vmatprep.subr.mxu0 0.0
        %7100 = vmatpush2.msra.mxu0 0.0
        %7101 = vmatprep.subr.mxu0 0.0
        %7102 = vmatpush2.msra.mxu0 0.0
        %7103 = vmatprep.subr.mxu0 0.0
        %7104 = vmatpush2.msra.mxu0 0.0
        %7105 = vmatprep.subr.mxu0 0.0
        %7106 = vmatpush2.msra.mxu0 0.0
        %7107 = vmatprep.subr.mxu0 0.0
        %7108 = vmatpush2.msra.mxu0 0.0
        %7109 = vmatprep.subr.mxu0 0.0
        %7110 = vmatpush2.msra.mxu0 0.0
        %7111 = vmatprep.subr.mxu0 0.0
        %7112 = vmatpush2.msra.mxu0 0.0
        %7113 = vmatprep.subr.mxu0 0.0
        %7114 = vmatpush2.msra.mxu0 0.0
        %7115 = vmatprep.subr.mxu0 0.0
        %7116 = vmatpush2.msra.mxu0 0.0
        %7117 = vmatprep.mubr.f32.mxu0 0.0
        %7118 = vmatmul.mubr.f32.gmra.mxu0 %v417
        %v7119 = vpop.f32.mrf.mxu0
        %v7120 = vadd.f32 0.0, %v7119
        %v7121 = vpop.f32.mrf.mxu0
        %7122 = vmatprep.mubr.f32.mxu0 0.0
        %7123 = vmatmul.mubr.f32.gmra.mxu0 %v420
        %v7124 = vpop.f32.mrf.mxu0
        %v7125 = vadd.f32 0.0, %v7124
        %v7126 = vpop.f32.mrf.mxu0
        %7127 = vmatprep.mubr.f32.mxu0 0.0
        %7128 = vmatmul.mubr.f32.gmra.mxu0 %v423
        %v7129 = vpop.f32.mrf.mxu0
        %v7130 = vadd.f32 0.0, %v7129
        %v7131 = vpop.f32.mrf.mxu0
        %7132 = vmatprep.mubr.f32.mxu0 0.0
        %7133 = vmatmul.mubr.f32.gmra.mxu0 %v426
        %v7134 = vpop.f32.mrf.mxu0
        %v7135 = vadd.f32 0.0, %v7134
        %v7136 = vpop.f32.mrf.mxu0
        %7137 = vmatprep.mubr.f32.mxu0 0.0
        %7138 = vmatmul.mubr.f32.gmra.mxu0 %v429
        %v7139 = vpop.f32.mrf.mxu0
        %v7140 = vadd.f32 0.0, %v7139
        %v7141 = vpop.f32.mrf.mxu0
        %7142 = vmatprep.mubr.f32.mxu0 0.0
        %7143 = vmatmul.mubr.f32.gmra.mxu0 %v432
        %v7144 = vpop.f32.mrf.mxu0
        %v7145 = vadd.f32 0.0, %v7144
        %v7146 = vpop.f32.mrf.mxu0
        %7147 = vmatprep.mubr.f32.mxu0 0.0
        %7148 = vmatmul.mubr.f32.gmra.mxu0 %v435
        %v7149 = vpop.f32.mrf.mxu0
        %v7150 = vadd.f32 0.0, %v7149
        %v7151 = vpop.f32.mrf.mxu0
        %7152 = vmatprep.mubr.f32.mxu0 0.0
        %7153 = vmatmul.mubr.f32.gmra.mxu0 %v438
        %v7154 = vpop.f32.mrf.mxu0
        %v7155 = vadd.f32 0.0, %v7154
        %v7156 = vpop.f32.mrf.mxu0
        %7157 = vmatprep.mubr.f32.mxu0 0.0
        %7158 = vmatmul.mubr.f32.gmra.mxu0 %v441
        %v7159 = vpop.f32.mrf.mxu0
        %v7160 = vadd.f32 0.0, %v7159
        %v7161 = vpop.f32.mrf.mxu0
        %7162 = vmatprep.mubr.f32.mxu0 0.0
        %7163 = vmatmul.mubr.f32.gmra.mxu0 %v444
        %v7164 = vpop.f32.mrf.mxu0
        %v7165 = vadd.f32 0.0, %v7164
        %v7166 = vpop.f32.mrf.mxu0
        %7167 = vmatprep.mubr.f32.mxu0 0.0
        %7168 = vmatmul.mubr.f32.gmra.mxu0 %v447
        %v7169 = vpop.f32.mrf.mxu0
        %v7170 = vadd.f32 0.0, %v7169
        %v7171 = vpop.f32.mrf.mxu0
        %7172 = vmatprep.mubr.f32.mxu0 0.0
        %7173 = vmatmul.mubr.f32.gmra.mxu0 %v450
        %v7174 = vpop.f32.mrf.mxu0
        %v7175 = vadd.f32 0.0, %v7174
        %v7176 = vpop.f32.mrf.mxu0
        %7177 = vmatprep.mubr.f32.mxu0 0.0
        %7178 = vmatmul.mubr.f32.gmra.mxu0 %v453
        %v7179 = vpop.f32.mrf.mxu0
        %v7180 = vadd.f32 0.0, %v7179
        %v7181 = vpop.f32.mrf.mxu0
        %7182 = vmatprep.mubr.f32.mxu0 0.0
        %7183 = vmatmul.mubr.f32.gmra.mxu0 %v456
        %v7184 = vpop.f32.mrf.mxu0
        %v7185 = vadd.f32 0.0, %v7184
        %v7186 = vpop.f32.mrf.mxu0
        %7187 = vmatprep.mubr.f32.mxu0 0.0
        %7188 = vmatmul.mubr.f32.gmra.mxu0 %v459
        %v7189 = vpop.f32.mrf.mxu0
        %v7190 = vadd.f32 0.0, %v7189
        %v7191 = vpop.f32.mrf.mxu0
        %7192 = vmatprep.mubr.f32.mxu0 0.0
        %7193 = vmatmul.mubr.f32.gmra.mxu0 %v462
        %v7194 = vpop.f32.mrf.mxu0
        %v7195 = vadd.f32 0.0, %v7194
        %v7196 = vpop.f32.mrf.mxu0
        %7197 = vdwg.mxu0
        %s7198 = scalar_lea.vmem %s3, 96
        %v7199 = vld [vmem:[%s7198] sm:$0xff]
        %v7200 = vld [vmem:[%s7198 + $0x8] sm:$0xff]
        %v7201 = vld [vmem:[%s7198 + $0x10] sm:$0xff]
        %v7202 = vld [vmem:[%s7198 + $0x18] sm:$0xff]
        %7203 = vmatprep.subr.mxu0 0.0
        %7204 = vmatpush1.msra.mxu0 0.0
        %7205 = vmatprep.subr.mxu0 0.0
        %7206 = vmatpush1.msra.mxu0 0.0
        %7207 = vmatprep.subr.mxu0 0.0
        %7208 = vmatpush1.msra.mxu0 0.0
        %7209 = vmatprep.subr.mxu0 0.0
        %7210 = vmatpush1.msra.mxu0 0.0
        %7211 = vmatprep.subr.mxu0 0.0
        %7212 = vmatpush1.msra.mxu0 0.0
        %7213 = vmatprep.subr.mxu0 0.0
        %7214 = vmatpush1.msra.mxu0 0.0
        %7215 = vmatprep.subr.mxu0 0.0
        %7216 = vmatpush1.msra.mxu0 0.0
        %7217 = vmatprep.subr.mxu0 0.0
        %7218 = vmatpush1.msra.mxu0 0.0
        %7219 = vmatprep.subr.mxu0 0.0
        %7220 = vmatpush1.msra.mxu0 0.0
        %7221 = vmatprep.subr.mxu0 0.0
        %7222 = vmatpush1.msra.mxu0 0.0
        %7223 = vmatprep.subr.mxu0 0.0
        %7224 = vmatpush1.msra.mxu0 0.0
        %7225 = vmatprep.subr.mxu0 0.0
        %7226 = vmatpush1.msra.mxu0 0.0
        %7227 = vmatprep.subr.mxu0 0.0
        %7228 = vmatpush1.msra.mxu0 %v7202
        %7229 = vmatprep.subr.mxu0 0.0
        %7230 = vmatpush1.msra.mxu0 %v7201
        %7231 = vmatprep.subr.mxu0 0.0
        %7232 = vmatpush1.msra.mxu0 %v7200
        %7233 = vmatprep.subr.mxu0 0.0
        %7234 = vmatpush1.msra.mxu0 %v7199
        %7235 = vmatprep.subr.mxu0 0.0
        %7236 = vmatpush2.msra.mxu0 0.0
        %7237 = vmatprep.subr.mxu0 0.0
        %7238 = vmatpush2.msra.mxu0 0.0
        %7239 = vmatprep.subr.mxu0 0.0
        %7240 = vmatpush2.msra.mxu0 0.0
        %7241 = vmatprep.subr.mxu0 0.0
        %7242 = vmatpush2.msra.mxu0 0.0
        %7243 = vmatprep.subr.mxu0 0.0
        %7244 = vmatpush2.msra.mxu0 0.0
        %7245 = vmatprep.subr.mxu0 0.0
        %7246 = vmatpush2.msra.mxu0 0.0
        %7247 = vmatprep.subr.mxu0 0.0
        %7248 = vmatpush2.msra.mxu0 0.0
        %7249 = vmatprep.subr.mxu0 0.0
        %7250 = vmatpush2.msra.mxu0 0.0
        %7251 = vmatprep.subr.mxu0 0.0
        %7252 = vmatpush2.msra.mxu0 0.0
        %7253 = vmatprep.subr.mxu0 0.0
        %7254 = vmatpush2.msra.mxu0 0.0
        %7255 = vmatprep.subr.mxu0 0.0
        %7256 = vmatpush2.msra.mxu0 0.0
        %7257 = vmatprep.subr.mxu0 0.0
        %7258 = vmatpush2.msra.mxu0 0.0
        %7259 = vmatprep.subr.mxu0 0.0
        %7260 = vmatpush2.msra.mxu0 0.0
        %7261 = vmatprep.subr.mxu0 0.0
        %7262 = vmatpush2.msra.mxu0 0.0
        %7263 = vmatprep.subr.mxu0 0.0
        %7264 = vmatpush2.msra.mxu0 0.0
        %7265 = vmatprep.subr.mxu0 0.0
        %7266 = vmatpush2.msra.mxu0 0.0
        %7267 = vmatprep.mubr.f32.mxu0 0.0
        %7268 = vmatmul.mubr.f32.gmra.mxu0 %v417
        %v7269 = vpop.f32.mrf.mxu0
        %v7270 = vadd.f32 0.0, %v7269
        %v7271 = vpop.f32.mrf.mxu0
        %7272 = vmatprep.mubr.f32.mxu0 0.0
        %7273 = vmatmul.mubr.f32.gmra.mxu0 %v420
        %v7274 = vpop.f32.mrf.mxu0
        %v7275 = vadd.f32 0.0, %v7274
        %v7276 = vpop.f32.mrf.mxu0
        %7277 = vmatprep.mubr.f32.mxu0 0.0
        %7278 = vmatmul.mubr.f32.gmra.mxu0 %v423
        %v7279 = vpop.f32.mrf.mxu0
        %v7280 = vadd.f32 0.0, %v7279
        %v7281 = vpop.f32.mrf.mxu0
        %7282 = vmatprep.mubr.f32.mxu0 0.0
        %7283 = vmatmul.mubr.f32.gmra.mxu0 %v426
        %v7284 = vpop.f32.mrf.mxu0
        %v7285 = vadd.f32 0.0, %v7284
        %v7286 = vpop.f32.mrf.mxu0
        %7287 = vmatprep.mubr.f32.mxu0 0.0
        %7288 = vmatmul.mubr.f32.gmra.mxu0 %v429
        %v7289 = vpop.f32.mrf.mxu0
        %v7290 = vadd.f32 0.0, %v7289
        %v7291 = vpop.f32.mrf.mxu0
        %7292 = vmatprep.mubr.f32.mxu0 0.0
        %7293 = vmatmul.mubr.f32.gmra.mxu0 %v432
        %v7294 = vpop.f32.mrf.mxu0
        %v7295 = vadd.f32 0.0, %v7294
        %v7296 = vpop.f32.mrf.mxu0
        %7297 = vmatprep.mubr.f32.mxu0 0.0
        %7298 = vmatmul.mubr.f32.gmra.mxu0 %v435
        %v7299 = vpop.f32.mrf.mxu0
        %v7300 = vadd.f32 0.0, %v7299
        %v7301 = vpop.f32.mrf.mxu0
        %7302 = vmatprep.mubr.f32.mxu0 0.0
        %7303 = vmatmul.mubr.f32.gmra.mxu0 %v438
        %v7304 = vpop.f32.mrf.mxu0
        %v7305 = vadd.f32 0.0, %v7304
        %v7306 = vpop.f32.mrf.mxu0
        %7307 = vmatprep.mubr.f32.mxu0 0.0
        %7308 = vmatmul.mubr.f32.gmra.mxu0 %v441
        %v7309 = vpop.f32.mrf.mxu0
        %v7310 = vadd.f32 0.0, %v7309
        %v7311 = vpop.f32.mrf.mxu0
        %7312 = vmatprep.mubr.f32.mxu0 0.0
        %7313 = vmatmul.mubr.f32.gmra.mxu0 %v444
        %v7314 = vpop.f32.mrf.mxu0
        %v7315 = vadd.f32 0.0, %v7314
        %v7316 = vpop.f32.mrf.mxu0
        %7317 = vmatprep.mubr.f32.mxu0 0.0
        %7318 = vmatmul.mubr.f32.gmra.mxu0 %v447
        %v7319 = vpop.f32.mrf.mxu0
        %v7320 = vadd.f32 0.0, %v7319
        %v7321 = vpop.f32.mrf.mxu0
        %7322 = vmatprep.mubr.f32.mxu0 0.0
        %7323 = vmatmul.mubr.f32.gmra.mxu0 %v450
        %v7324 = vpop.f32.mrf.mxu0
        %v7325 = vadd.f32 0.0, %v7324
        %v7326 = vpop.f32.mrf.mxu0
        %7327 = vmatprep.mubr.f32.mxu0 0.0
        %7328 = vmatmul.mubr.f32.gmra.mxu0 %v453
        %v7329 = vpop.f32.mrf.mxu0
        %v7330 = vadd.f32 0.0, %v7329
        %v7331 = vpop.f32.mrf.mxu0
        %7332 = vmatprep.mubr.f32.mxu0 0.0
        %7333 = vmatmul.mubr.f32.gmra.mxu0 %v456
        %v7334 = vpop.f32.mrf.mxu0
        %v7335 = vadd.f32 0.0, %v7334
        %v7336 = vpop.f32.mrf.mxu0
        %7337 = vmatprep.mubr.f32.mxu0 0.0
        %7338 = vmatmul.mubr.f32.gmra.mxu0 %v459
        %v7339 = vpop.f32.mrf.mxu0
        %v7340 = vadd.f32 0.0, %v7339
        %v7341 = vpop.f32.mrf.mxu0
        %7342 = vmatprep.mubr.f32.mxu0 0.0
        %7343 = vmatmul.mubr.f32.gmra.mxu0 %v462
        %v7344 = vpop.f32.mrf.mxu0
        %v7345 = vadd.f32 0.0, %v7344
        %v7346 = vpop.f32.mrf.mxu0
        %7347 = vdwg.mxu0
        %s7348 = scalar_lea.vmem %s4, 96
        %v7349 = vld [vmem:[%s7348] sm:$0xff]
        %v7350 = vld [vmem:[%s7348 + $0x8] sm:$0xff]
        %v7351 = vld [vmem:[%s7348 + $0x10] sm:$0xff]
        %v7352 = vld [vmem:[%s7348 + $0x18] sm:$0xff]
        %s7353 = scalar_lea.vmem %s5, 3
        %v7354 = vld [vmem:[%s7353] sm:$0x1]
        %v7356 = vlaneseq
        %v7357 = vshrl.u32 %v7356, 7
        %v7358 = vsub.s32 0, %v7357
        %v7359 = vrot.slane %v7354, %v7358
        %7361 = vmatprep.subr.mxu0 0.0
        %7362 = vmatpush1.msra.mxu0 0.0
        %7363 = vmatprep.subr.mxu0 0.0
        %7364 = vmatpush1.msra.mxu0 0.0
        %7365 = vmatprep.subr.mxu0 0.0
        %7366 = vmatpush1.msra.mxu0 0.0
        %7367 = vmatprep.subr.mxu0 0.0
        %7368 = vmatpush1.msra.mxu0 0.0
        %7369 = vmatprep.subr.mxu0 0.0
        %7370 = vmatpush1.msra.mxu0 0.0
        %7371 = vmatprep.subr.mxu0 0.0
        %7372 = vmatpush1.msra.mxu0 0.0
        %7373 = vmatprep.subr.mxu0 0.0
        %7374 = vmatpush1.msra.mxu0 0.0
        %7375 = vmatprep.subr.mxu0 0.0
        %7376 = vmatpush1.msra.mxu0 0.0
        %7377 = vmatprep.subr.mxu0 0.0
        %7378 = vmatpush1.msra.mxu0 0.0
        %7379 = vmatprep.subr.mxu0 0.0
        %7380 = vmatpush1.msra.mxu0 0.0
        %7381 = vmatprep.subr.mxu0 0.0
        %7382 = vmatpush1.msra.mxu0 0.0
        %7383 = vmatprep.subr.mxu0 0.0
        %7384 = vmatpush1.msra.mxu0 0.0
        %7385 = vmatprep.subr.mxu0 0.0
        %7386 = vmatpush1.msra.mxu0 %v7352
        %7387 = vmatprep.subr.mxu0 0.0
        %7388 = vmatpush1.msra.mxu0 %v7351
        %7389 = vmatprep.subr.mxu0 0.0
        %7390 = vmatpush1.msra.mxu0 %v7350
        %7391 = vmatprep.subr.mxu0 0.0
        %7392 = vmatpush1.msra.mxu0 %v7349
        %7393 = vmatprep.subr.mxu0 0.0
        %7394 = vmatpush2.msra.mxu0 0.0
        %7395 = vmatprep.subr.mxu0 0.0
        %7396 = vmatpush2.msra.mxu0 0.0
        %7397 = vmatprep.subr.mxu0 0.0
        %7398 = vmatpush2.msra.mxu0 0.0
        %7399 = vmatprep.subr.mxu0 0.0
        %7400 = vmatpush2.msra.mxu0 0.0
        %7401 = vmatprep.subr.mxu0 0.0
        %7402 = vmatpush2.msra.mxu0 0.0
        %7403 = vmatprep.subr.mxu0 0.0
        %7404 = vmatpush2.msra.mxu0 0.0
        %7405 = vmatprep.subr.mxu0 0.0
        %7406 = vmatpush2.msra.mxu0 0.0
        %7407 = vmatprep.subr.mxu0 0.0
        %7408 = vmatpush2.msra.mxu0 0.0
        %7409 = vmatprep.subr.mxu0 0.0
        %7410 = vmatpush2.msra.mxu0 0.0
        %7411 = vmatprep.subr.mxu0 0.0
        %7412 = vmatpush2.msra.mxu0 0.0
        %7413 = vmatprep.subr.mxu0 0.0
        %7414 = vmatpush2.msra.mxu0 0.0
        %7415 = vmatprep.subr.mxu0 0.0
        %7416 = vmatpush2.msra.mxu0 0.0
        %7417 = vmatprep.subr.mxu0 0.0
        %7418 = vmatpush2.msra.mxu0 0.0
        %7419 = vmatprep.subr.mxu0 0.0
        %7420 = vmatpush2.msra.mxu0 0.0
        %7421 = vmatprep.subr.mxu0 0.0
        %7422 = vmatpush2.msra.mxu0 0.0
        %7423 = vmatprep.subr.mxu0 0.0
        %7424 = vmatpush2.msra.mxu0 0.0
        %7425 = vmatprep.mubr.f32.mxu0 0.0
        %7426 = vmatmul.mubr.f32.gmra.mxu0 %v770
        %v7427 = vpop.f32.mrf.mxu0
        %v7428 = vadd.f32 %v7359, %v7427
        %v7429 = vpop.f32.mrf.mxu0
        %7430 = vmatprep.mubr.f32.mxu0 0.0
        %7431 = vmatmul.mubr.f32.gmra.mxu0 %v773
        %v7432 = vpop.f32.mrf.mxu0
        %v7433 = vadd.f32 %v7359, %v7432
        %v7434 = vpop.f32.mrf.mxu0
        %7435 = vmatprep.mubr.f32.mxu0 0.0
        %7436 = vmatmul.mubr.f32.gmra.mxu0 %v776
        %v7437 = vpop.f32.mrf.mxu0
        %v7438 = vadd.f32 %v7359, %v7437
        %v7439 = vpop.f32.mrf.mxu0
        %7440 = vmatprep.mubr.f32.mxu0 0.0
        %7441 = vmatmul.mubr.f32.gmra.mxu0 %v779
        %v7442 = vpop.f32.mrf.mxu0
        %v7443 = vadd.f32 %v7359, %v7442
        %v7444 = vpop.f32.mrf.mxu0
        %7445 = vmatprep.mubr.f32.mxu0 0.0
        %7446 = vmatmul.mubr.f32.gmra.mxu0 %v782
        %v7447 = vpop.f32.mrf.mxu0
        %v7448 = vadd.f32 %v7359, %v7447
        %v7449 = vpop.f32.mrf.mxu0
        %7450 = vmatprep.mubr.f32.mxu0 0.0
        %7451 = vmatmul.mubr.f32.gmra.mxu0 %v785
        %v7452 = vpop.f32.mrf.mxu0
        %v7453 = vadd.f32 %v7359, %v7452
        %v7454 = vpop.f32.mrf.mxu0
        %7455 = vmatprep.mubr.f32.mxu0 0.0
        %7456 = vmatmul.mubr.f32.gmra.mxu0 %v788
        %v7457 = vpop.f32.mrf.mxu0
        %v7458 = vadd.f32 %v7359, %v7457
        %v7459 = vpop.f32.mrf.mxu0
        %7460 = vmatprep.mubr.f32.mxu0 0.0
        %7461 = vmatmul.mubr.f32.gmra.mxu0 %v791
        %v7462 = vpop.f32.mrf.mxu0
        %v7463 = vadd.f32 %v7359, %v7462
        %v7464 = vpop.f32.mrf.mxu0
        %7465 = vmatprep.mubr.f32.mxu0 0.0
        %7466 = vmatmul.mubr.f32.gmra.mxu0 %v794
        %v7467 = vpop.f32.mrf.mxu0
        %v7468 = vadd.f32 %v7359, %v7467
        %v7469 = vpop.f32.mrf.mxu0
        %7470 = vmatprep.mubr.f32.mxu0 0.0
        %7471 = vmatmul.mubr.f32.gmra.mxu0 %v797
        %v7472 = vpop.f32.mrf.mxu0
        %v7473 = vadd.f32 %v7359, %v7472
        %v7474 = vpop.f32.mrf.mxu0
        %7475 = vmatprep.mubr.f32.mxu0 0.0
        %7476 = vmatmul.mubr.f32.gmra.mxu0 %v800
        %v7477 = vpop.f32.mrf.mxu0
        %v7478 = vadd.f32 %v7359, %v7477
        %v7479 = vpop.f32.mrf.mxu0
        %7480 = vmatprep.mubr.f32.mxu0 0.0
        %7481 = vmatmul.mubr.f32.gmra.mxu0 %v803
        %v7482 = vpop.f32.mrf.mxu0
        %v7483 = vadd.f32 %v7359, %v7482
        %v7484 = vpop.f32.mrf.mxu0
        %7485 = vmatprep.mubr.f32.mxu0 0.0
        %7486 = vmatmul.mubr.f32.gmra.mxu0 %v806
        %v7487 = vpop.f32.mrf.mxu0
        %v7488 = vadd.f32 %v7359, %v7487
        %v7489 = vpop.f32.mrf.mxu0
        %7490 = vmatprep.mubr.f32.mxu0 0.0
        %7491 = vmatmul.mubr.f32.gmra.mxu0 %v809
        %v7492 = vpop.f32.mrf.mxu0
        %v7493 = vadd.f32 %v7359, %v7492
        %v7494 = vpop.f32.mrf.mxu0
        %7495 = vmatprep.mubr.f32.mxu0 0.0
        %7496 = vmatmul.mubr.f32.gmra.mxu0 %v812
        %v7497 = vpop.f32.mrf.mxu0
        %v7498 = vadd.f32 %v7359, %v7497
        %v7499 = vpop.f32.mrf.mxu0
        %7500 = vmatprep.mubr.f32.mxu0 0.0
        %7501 = vmatmul.mubr.f32.gmra.mxu0 %v815
        %v7502 = vpop.f32.mrf.mxu0
        %v7503 = vadd.f32 %v7359, %v7502
        %v7504 = vpop.f32.mrf.mxu0
        %7505 = vdwg.mxu0
        %s7506 = scalar_lea.vmem %s8, 48
        %v7507 = vld [vmem:[%s7506] sm:$0xff]
        %v7508 = vld [vmem:[%s7506 + $0x8] sm:$0xff]
        %v7510 = vsel %vm964, %v7428, 0
        %v7513 = vsel %vm964, %v7433, 0
        %v7516 = vsel %vm964, %v7120, 0
        %v7519 = vsel %vm964, %v7125, 0
        %7521 = vmatprep.subr.mxu0 0.0
        %7522 = vmatpush1.xpose.msra.mxu0 0.0
        %7523 = vmatprep.subr.mxu0 0.0
        %7524 = vmatpush1.xpose.msra.mxu0 0.0
        %7525 = vmatprep.subr.mxu0 0.0
        %7526 = vmatpush1.xpose.msra.mxu0 0.0
        %7527 = vmatprep.subr.mxu0 0.0
        %7528 = vmatpush1.xpose.msra.mxu0 0.0
        %7529 = vmatprep.subr.mxu0 0.0
        %7530 = vmatpush1.xpose.msra.mxu0 0.0
        %7531 = vmatprep.subr.mxu0 0.0
        %7532 = vmatpush1.xpose.msra.mxu0 0.0
        %7533 = vmatprep.subr.mxu0 0.0
        %7534 = vmatpush1.xpose.msra.mxu0 0.0
        %7535 = vmatprep.subr.mxu0 0.0
        %7536 = vmatpush1.xpose.msra.mxu0 0.0
        %7537 = vmatprep.subr.mxu0 0.0
        %7538 = vmatpush1.xpose.msra.mxu0 0.0
        %7539 = vmatprep.subr.mxu0 0.0
        %7540 = vmatpush1.xpose.msra.mxu0 0.0
        %7541 = vmatprep.subr.mxu0 0.0
        %7542 = vmatpush1.xpose.msra.mxu0 0.0
        %7543 = vmatprep.subr.mxu0 0.0
        %7544 = vmatpush1.xpose.msra.mxu0 0.0
        %7545 = vmatprep.subr.mxu0 0.0
        %7546 = vmatpush1.xpose.msra.mxu0 0.0
        %7547 = vmatprep.subr.mxu0 0.0
        %7548 = vmatpush1.xpose.msra.mxu0 0.0
        %7549 = vmatprep.subr.mxu0 0.0
        %7550 = vmatpush1.xpose.msra.mxu0 %v7519
        %7551 = vmatprep.subr.mxu0 0.0
        %7552 = vmatpush1.xpose.msra.mxu0 %v7516
        %7553 = vmatprep.subr.mxu0 0.0
        %7554 = vmatpush2.xpose.msra.mxu0 0.0
        %7555 = vmatprep.subr.mxu0 0.0
        %7556 = vmatpush2.xpose.msra.mxu0 0.0
        %7557 = vmatprep.subr.mxu0 0.0
        %7558 = vmatpush2.xpose.msra.mxu0 0.0
        %7559 = vmatprep.subr.mxu0 0.0
        %7560 = vmatpush2.xpose.msra.mxu0 0.0
        %7561 = vmatprep.subr.mxu0 0.0
        %7562 = vmatpush2.xpose.msra.mxu0 0.0
        %7563 = vmatprep.subr.mxu0 0.0
        %7564 = vmatpush2.xpose.msra.mxu0 0.0
        %7565 = vmatprep.subr.mxu0 0.0
        %7566 = vmatpush2.xpose.msra.mxu0 0.0
        %7567 = vmatprep.subr.mxu0 0.0
        %7568 = vmatpush2.xpose.msra.mxu0 0.0
        %7569 = vmatprep.subr.mxu0 0.0
        %7570 = vmatpush2.xpose.msra.mxu0 0.0
        %7571 = vmatprep.subr.mxu0 0.0
        %7572 = vmatpush2.xpose.msra.mxu0 0.0
        %7573 = vmatprep.subr.mxu0 0.0
        %7574 = vmatpush2.xpose.msra.mxu0 0.0
        %7575 = vmatprep.subr.mxu0 0.0
        %7576 = vmatpush2.xpose.msra.mxu0 0.0
        %7577 = vmatprep.subr.mxu0 0.0
        %7578 = vmatpush2.xpose.msra.mxu0 0.0
        %7579 = vmatprep.subr.mxu0 0.0
        %7580 = vmatpush2.xpose.msra.mxu0 0.0
        %7581 = vmatprep.subr.mxu0 0.0
        %7582 = vmatpush2.xpose.msra.mxu0 0.0
        %7583 = vmatprep.subr.mxu0 0.0
        %7584 = vmatpush2.xpose.msra.mxu0 0.0
        %7585 = vmatprep.mubr.f32.mxu0 0.0
        %7586 = vmatmul.mubr.f32.gmra.mxu0 %v7510
        %v7587 = vpop.f32.mrf.mxu0
        %v7588 = vadd.f32 %v7507, %v7587
        %v7589 = vpop.f32.mrf.mxu0
        %7590 = vmatprep.mubr.f32.mxu0 0.0
        %7591 = vmatmul.mubr.f32.gmra.mxu0 %v7513
        %v7592 = vpop.f32.mrf.mxu0
        %v7593 = vadd.f32 %v7508, %v7592
        %v7594 = vpop.f32.mrf.mxu0
        %7595 = vdwg.mxu0
        %v7597 = vsel %vm964, %v7438, 0
        %v7600 = vsel %vm964, %v7443, 0
        %v7603 = vsel %vm964, %v7130, 0
        %v7606 = vsel %vm964, %v7135, 0
        %7608 = vmatprep.subr.mxu0 0.0
        %7609 = vmatpush1.xpose.msra.mxu0 0.0
        %7610 = vmatprep.subr.mxu0 0.0
        %7611 = vmatpush1.xpose.msra.mxu0 0.0
        %7612 = vmatprep.subr.mxu0 0.0
        %7613 = vmatpush1.xpose.msra.mxu0 0.0
        %7614 = vmatprep.subr.mxu0 0.0
        %7615 = vmatpush1.xpose.msra.mxu0 0.0
        %7616 = vmatprep.subr.mxu0 0.0
        %7617 = vmatpush1.xpose.msra.mxu0 0.0
        %7618 = vmatprep.subr.mxu0 0.0
        %7619 = vmatpush1.xpose.msra.mxu0 0.0
        %7620 = vmatprep.subr.mxu0 0.0
        %7621 = vmatpush1.xpose.msra.mxu0 0.0
        %7622 = vmatprep.subr.mxu0 0.0
        %7623 = vmatpush1.xpose.msra.mxu0 0.0
        %7624 = vmatprep.subr.mxu0 0.0
        %7625 = vmatpush1.xpose.msra.mxu0 0.0
        %7626 = vmatprep.subr.mxu0 0.0
        %7627 = vmatpush1.xpose.msra.mxu0 0.0
        %7628 = vmatprep.subr.mxu0 0.0
        %7629 = vmatpush1.xpose.msra.mxu0 0.0
        %7630 = vmatprep.subr.mxu0 0.0
        %7631 = vmatpush1.xpose.msra.mxu0 0.0
        %7632 = vmatprep.subr.mxu0 0.0
        %7633 = vmatpush1.xpose.msra.mxu0 0.0
        %7634 = vmatprep.subr.mxu0 0.0
        %7635 = vmatpush1.xpose.msra.mxu0 0.0
        %7636 = vmatprep.subr.mxu0 0.0
        %7637 = vmatpush1.xpose.msra.mxu0 %v7606
        %7638 = vmatprep.subr.mxu0 0.0
        %7639 = vmatpush1.xpose.msra.mxu0 %v7603
        %7640 = vmatprep.subr.mxu0 0.0
        %7641 = vmatpush2.xpose.msra.mxu0 0.0
        %7642 = vmatprep.subr.mxu0 0.0
        %7643 = vmatpush2.xpose.msra.mxu0 0.0
        %7644 = vmatprep.subr.mxu0 0.0
        %7645 = vmatpush2.xpose.msra.mxu0 0.0
        %7646 = vmatprep.subr.mxu0 0.0
        %7647 = vmatpush2.xpose.msra.mxu0 0.0
        %7648 = vmatprep.subr.mxu0 0.0
        %7649 = vmatpush2.xpose.msra.mxu0 0.0
        %7650 = vmatprep.subr.mxu0 0.0
        %7651 = vmatpush2.xpose.msra.mxu0 0.0
        %7652 = vmatprep.subr.mxu0 0.0
        %7653 = vmatpush2.xpose.msra.mxu0 0.0
        %7654 = vmatprep.subr.mxu0 0.0
        %7655 = vmatpush2.xpose.msra.mxu0 0.0
        %7656 = vmatprep.subr.mxu0 0.0
        %7657 = vmatpush2.xpose.msra.mxu0 0.0
        %7658 = vmatprep.subr.mxu0 0.0
        %7659 = vmatpush2.xpose.msra.mxu0 0.0
        %7660 = vmatprep.subr.mxu0 0.0
        %7661 = vmatpush2.xpose.msra.mxu0 0.0
        %7662 = vmatprep.subr.mxu0 0.0
        %7663 = vmatpush2.xpose.msra.mxu0 0.0
        %7664 = vmatprep.subr.mxu0 0.0
        %7665 = vmatpush2.xpose.msra.mxu0 0.0
        %7666 = vmatprep.subr.mxu0 0.0
        %7667 = vmatpush2.xpose.msra.mxu0 0.0
        %7668 = vmatprep.subr.mxu0 0.0
        %7669 = vmatpush2.xpose.msra.mxu0 0.0
        %7670 = vmatprep.subr.mxu0 0.0
        %7671 = vmatpush2.xpose.msra.mxu0 0.0
        %7672 = vmatprep.mubr.f32.mxu0 0.0
        %7673 = vmatmul.mubr.f32.gmra.mxu0 %v7597
        %v7674 = vpop.f32.mrf.mxu0
        %v7675 = vadd.f32 %v7507, %v7674
        %v7676 = vpop.f32.mrf.mxu0
        %7677 = vmatprep.mubr.f32.mxu0 0.0
        %7678 = vmatmul.mubr.f32.gmra.mxu0 %v7600
        %v7679 = vpop.f32.mrf.mxu0
        %v7680 = vadd.f32 %v7508, %v7679
        %v7681 = vpop.f32.mrf.mxu0
        %7682 = vdwg.mxu0
        %v7684 = vsel %vm964, %v7448, 0
        %v7687 = vsel %vm964, %v7453, 0
        %v7690 = vsel %vm964, %v7140, 0
        %v7693 = vsel %vm964, %v7145, 0
        %7695 = vmatprep.subr.mxu0 0.0
        %7696 = vmatpush1.xpose.msra.mxu0 0.0
        %7697 = vmatprep.subr.mxu0 0.0
        %7698 = vmatpush1.xpose.msra.mxu0 0.0
        %7699 = vmatprep.subr.mxu0 0.0
        %7700 = vmatpush1.xpose.msra.mxu0 0.0
        %7701 = vmatprep.subr.mxu0 0.0
        %7702 = vmatpush1.xpose.msra.mxu0 0.0
        %7703 = vmatprep.subr.mxu0 0.0
        %7704 = vmatpush1.xpose.msra.mxu0 0.0
        %7705 = vmatprep.subr.mxu0 0.0
        %7706 = vmatpush1.xpose.msra.mxu0 0.0
        %7707 = vmatprep.subr.mxu0 0.0
        %7708 = vmatpush1.xpose.msra.mxu0 0.0
        %7709 = vmatprep.subr.mxu0 0.0
        %7710 = vmatpush1.xpose.msra.mxu0 0.0
        %7711 = vmatprep.subr.mxu0 0.0
        %7712 = vmatpush1.xpose.msra.mxu0 0.0
        %7713 = vmatprep.subr.mxu0 0.0
        %7714 = vmatpush1.xpose.msra.mxu0 0.0
        %7715 = vmatprep.subr.mxu0 0.0
        %7716 = vmatpush1.xpose.msra.mxu0 0.0
        %7717 = vmatprep.subr.mxu0 0.0
        %7718 = vmatpush1.xpose.msra.mxu0 0.0
        %7719 = vmatprep.subr.mxu0 0.0
        %7720 = vmatpush1.xpose.msra.mxu0 0.0
        %7721 = vmatprep.subr.mxu0 0.0
        %7722 = vmatpush1.xpose.msra.mxu0 0.0
        %7723 = vmatprep.subr.mxu0 0.0
        %7724 = vmatpush1.xpose.msra.mxu0 %v7693
        %7725 = vmatprep.subr.mxu0 0.0
        %7726 = vmatpush1.xpose.msra.mxu0 %v7690
        %7727 = vmatprep.subr.mxu0 0.0
        %7728 = vmatpush2.xpose.msra.mxu0 0.0
        %7729 = vmatprep.subr.mxu0 0.0
        %7730 = vmatpush2.xpose.msra.mxu0 0.0
        %7731 = vmatprep.subr.mxu0 0.0
        %7732 = vmatpush2.xpose.msra.mxu0 0.0
        %7733 = vmatprep.subr.mxu0 0.0
        %7734 = vmatpush2.xpose.msra.mxu0 0.0
        %7735 = vmatprep.subr.mxu0 0.0
        %7736 = vmatpush2.xpose.msra.mxu0 0.0
        %7737 = vmatprep.subr.mxu0 0.0
        %7738 = vmatpush2.xpose.msra.mxu0 0.0
        %7739 = vmatprep.subr.mxu0 0.0
        %7740 = vmatpush2.xpose.msra.mxu0 0.0
        %7741 = vmatprep.subr.mxu0 0.0
        %7742 = vmatpush2.xpose.msra.mxu0 0.0
        %7743 = vmatprep.subr.mxu0 0.0
        %7744 = vmatpush2.xpose.msra.mxu0 0.0
        %7745 = vmatprep.subr.mxu0 0.0
        %7746 = vmatpush2.xpose.msra.mxu0 0.0
        %7747 = vmatprep.subr.mxu0 0.0
        %7748 = vmatpush2.xpose.msra.mxu0 0.0
        %7749 = vmatprep.subr.mxu0 0.0
        %7750 = vmatpush2.xpose.msra.mxu0 0.0
        %7751 = vmatprep.subr.mxu0 0.0
        %7752 = vmatpush2.xpose.msra.mxu0 0.0
        %7753 = vmatprep.subr.mxu0 0.0
        %7754 = vmatpush2.xpose.msra.mxu0 0.0
        %7755 = vmatprep.subr.mxu0 0.0
        %7756 = vmatpush2.xpose.msra.mxu0 0.0
        %7757 = vmatprep.subr.mxu0 0.0
        %7758 = vmatpush2.xpose.msra.mxu0 0.0
        %7759 = vmatprep.mubr.f32.mxu0 0.0
        %7760 = vmatmul.mubr.f32.gmra.mxu0 %v7684
        %v7761 = vpop.f32.mrf.mxu0
        %v7762 = vadd.f32 %v7507, %v7761
        %v7763 = vpop.f32.mrf.mxu0
        %7764 = vmatprep.mubr.f32.mxu0 0.0
        %7765 = vmatmul.mubr.f32.gmra.mxu0 %v7687
        %v7766 = vpop.f32.mrf.mxu0
        %v7767 = vadd.f32 %v7508, %v7766
        %v7768 = vpop.f32.mrf.mxu0
        %7769 = vdwg.mxu0
        %v7771 = vsel %vm964, %v7458, 0
        %v7774 = vsel %vm964, %v7463, 0
        %v7777 = vsel %vm964, %v7150, 0
        %v7780 = vsel %vm964, %v7155, 0
        %7782 = vmatprep.subr.mxu0 0.0
        %7783 = vmatpush1.xpose.msra.mxu0 0.0
        %7784 = vmatprep.subr.mxu0 0.0
        %7785 = vmatpush1.xpose.msra.mxu0 0.0
        %7786 = vmatprep.subr.mxu0 0.0
        %7787 = vmatpush1.xpose.msra.mxu0 0.0
        %7788 = vmatprep.subr.mxu0 0.0
        %7789 = vmatpush1.xpose.msra.mxu0 0.0
        %7790 = vmatprep.subr.mxu0 0.0
        %7791 = vmatpush1.xpose.msra.mxu0 0.0
        %7792 = vmatprep.subr.mxu0 0.0
        %7793 = vmatpush1.xpose.msra.mxu0 0.0
        %7794 = vmatprep.subr.mxu0 0.0
        %7795 = vmatpush1.xpose.msra.mxu0 0.0
        %7796 = vmatprep.subr.mxu0 0.0
        %7797 = vmatpush1.xpose.msra.mxu0 0.0
        %7798 = vmatprep.subr.mxu0 0.0
        %7799 = vmatpush1.xpose.msra.mxu0 0.0
        %7800 = vmatprep.subr.mxu0 0.0
        %7801 = vmatpush1.xpose.msra.mxu0 0.0
        %7802 = vmatprep.subr.mxu0 0.0
        %7803 = vmatpush1.xpose.msra.mxu0 0.0
        %7804 = vmatprep.subr.mxu0 0.0
        %7805 = vmatpush1.xpose.msra.mxu0 0.0
        %7806 = vmatprep.subr.mxu0 0.0
        %7807 = vmatpush1.xpose.msra.mxu0 0.0
        %7808 = vmatprep.subr.mxu0 0.0
        %7809 = vmatpush1.xpose.msra.mxu0 0.0
        %7810 = vmatprep.subr.mxu0 0.0
        %7811 = vmatpush1.xpose.msra.mxu0 %v7780
        %7812 = vmatprep.subr.mxu0 0.0
        %7813 = vmatpush1.xpose.msra.mxu0 %v7777
        %7814 = vmatprep.subr.mxu0 0.0
        %7815 = vmatpush2.xpose.msra.mxu0 0.0
        %7816 = vmatprep.subr.mxu0 0.0
        %7817 = vmatpush2.xpose.msra.mxu0 0.0
        %7818 = vmatprep.subr.mxu0 0.0
        %7819 = vmatpush2.xpose.msra.mxu0 0.0
        %7820 = vmatprep.subr.mxu0 0.0
        %7821 = vmatpush2.xpose.msra.mxu0 0.0
        %7822 = vmatprep.subr.mxu0 0.0
        %7823 = vmatpush2.xpose.msra.mxu0 0.0
        %7824 = vmatprep.subr.mxu0 0.0
        %7825 = vmatpush2.xpose.msra.mxu0 0.0
        %7826 = vmatprep.subr.mxu0 0.0
        %7827 = vmatpush2.xpose.msra.mxu0 0.0
        %7828 = vmatprep.subr.mxu0 0.0
        %7829 = vmatpush2.xpose.msra.mxu0 0.0
        %7830 = vmatprep.subr.mxu0 0.0
        %7831 = vmatpush2.xpose.msra.mxu0 0.0
        %7832 = vmatprep.subr.mxu0 0.0
        %7833 = vmatpush2.xpose.msra.mxu0 0.0
        %7834 = vmatprep.subr.mxu0 0.0
        %7835 = vmatpush2.xpose.msra.mxu0 0.0
        %7836 = vmatprep.subr.mxu0 0.0
        %7837 = vmatpush2.xpose.msra.mxu0 0.0
        %7838 = vmatprep.subr.mxu0 0.0
        %7839 = vmatpush2.xpose.msra.mxu0 0.0
        %7840 = vmatprep.subr.mxu0 0.0
        %7841 = vmatpush2.xpose.msra.mxu0 0.0
        %7842 = vmatprep.subr.mxu0 0.0
        %7843 = vmatpush2.xpose.msra.mxu0 0.0
        %7844 = vmatprep.subr.mxu0 0.0
        %7845 = vmatpush2.xpose.msra.mxu0 0.0
        %7846 = vmatprep.mubr.f32.mxu0 0.0
        %7847 = vmatmul.mubr.f32.gmra.mxu0 %v7771
        %v7848 = vpop.f32.mrf.mxu0
        %v7849 = vadd.f32 %v7507, %v7848
        %v7850 = vpop.f32.mrf.mxu0
        %7851 = vmatprep.mubr.f32.mxu0 0.0
        %7852 = vmatmul.mubr.f32.gmra.mxu0 %v7774
        %v7853 = vpop.f32.mrf.mxu0
        %v7854 = vadd.f32 %v7508, %v7853
        %v7855 = vpop.f32.mrf.mxu0
        %7856 = vdwg.mxu0
        %v7858 = vsel %vm964, %v7468, 0
        %v7861 = vsel %vm964, %v7473, 0
        %v7864 = vsel %vm964, %v7160, 0
        %v7867 = vsel %vm964, %v7165, 0
        %7869 = vmatprep.subr.mxu0 0.0
        %7870 = vmatpush1.xpose.msra.mxu0 0.0
        %7871 = vmatprep.subr.mxu0 0.0
        %7872 = vmatpush1.xpose.msra.mxu0 0.0
        %7873 = vmatprep.subr.mxu0 0.0
        %7874 = vmatpush1.xpose.msra.mxu0 0.0
        %7875 = vmatprep.subr.mxu0 0.0
        %7876 = vmatpush1.xpose.msra.mxu0 0.0
        %7877 = vmatprep.subr.mxu0 0.0
        %7878 = vmatpush1.xpose.msra.mxu0 0.0
        %7879 = vmatprep.subr.mxu0 0.0
        %7880 = vmatpush1.xpose.msra.mxu0 0.0
        %7881 = vmatprep.subr.mxu0 0.0
        %7882 = vmatpush1.xpose.msra.mxu0 0.0
        %7883 = vmatprep.subr.mxu0 0.0
        %7884 = vmatpush1.xpose.msra.mxu0 0.0
        %7885 = vmatprep.subr.mxu0 0.0
        %7886 = vmatpush1.xpose.msra.mxu0 0.0
        %7887 = vmatprep.subr.mxu0 0.0
        %7888 = vmatpush1.xpose.msra.mxu0 0.0
        %7889 = vmatprep.subr.mxu0 0.0
        %7890 = vmatpush1.xpose.msra.mxu0 0.0
        %7891 = vmatprep.subr.mxu0 0.0
        %7892 = vmatpush1.xpose.msra.mxu0 0.0
        %7893 = vmatprep.subr.mxu0 0.0
        %7894 = vmatpush1.xpose.msra.mxu0 0.0
        %7895 = vmatprep.subr.mxu0 0.0
        %7896 = vmatpush1.xpose.msra.mxu0 0.0
        %7897 = vmatprep.subr.mxu0 0.0
        %7898 = vmatpush1.xpose.msra.mxu0 %v7867
        %7899 = vmatprep.subr.mxu0 0.0
        %7900 = vmatpush1.xpose.msra.mxu0 %v7864
        %7901 = vmatprep.subr.mxu0 0.0
        %7902 = vmatpush2.xpose.msra.mxu0 0.0
        %7903 = vmatprep.subr.mxu0 0.0
        %7904 = vmatpush2.xpose.msra.mxu0 0.0
        %7905 = vmatprep.subr.mxu0 0.0
        %7906 = vmatpush2.xpose.msra.mxu0 0.0
        %7907 = vmatprep.subr.mxu0 0.0
        %7908 = vmatpush2.xpose.msra.mxu0 0.0
        %7909 = vmatprep.subr.mxu0 0.0
        %7910 = vmatpush2.xpose.msra.mxu0 0.0
        %7911 = vmatprep.subr.mxu0 0.0
        %7912 = vmatpush2.xpose.msra.mxu0 0.0
        %7913 = vmatprep.subr.mxu0 0.0
        %7914 = vmatpush2.xpose.msra.mxu0 0.0
        %7915 = vmatprep.subr.mxu0 0.0
        %7916 = vmatpush2.xpose.msra.mxu0 0.0
        %7917 = vmatprep.subr.mxu0 0.0
        %7918 = vmatpush2.xpose.msra.mxu0 0.0
        %7919 = vmatprep.subr.mxu0 0.0
        %7920 = vmatpush2.xpose.msra.mxu0 0.0
        %7921 = vmatprep.subr.mxu0 0.0
        %7922 = vmatpush2.xpose.msra.mxu0 0.0
        %7923 = vmatprep.subr.mxu0 0.0
        %7924 = vmatpush2.xpose.msra.mxu0 0.0
        %7925 = vmatprep.subr.mxu0 0.0
        %7926 = vmatpush2.xpose.msra.mxu0 0.0
        %7927 = vmatprep.subr.mxu0 0.0
        %7928 = vmatpush2.xpose.msra.mxu0 0.0
        %7929 = vmatprep.subr.mxu0 0.0
        %7930 = vmatpush2.xpose.msra.mxu0 0.0
        %7931 = vmatprep.subr.mxu0 0.0
        %7932 = vmatpush2.xpose.msra.mxu0 0.0
        %7933 = vmatprep.mubr.f32.mxu0 0.0
        %7934 = vmatmul.mubr.f32.gmra.mxu0 %v7858
        %v7935 = vpop.f32.mrf.mxu0
        %v7936 = vadd.f32 %v7507, %v7935
        %v7937 = vpop.f32.mrf.mxu0
        %7938 = vmatprep.mubr.f32.mxu0 0.0
        %7939 = vmatmul.mubr.f32.gmra.mxu0 %v7861
        %v7940 = vpop.f32.mrf.mxu0
        %v7941 = vadd.f32 %v7508, %v7940
        %v7942 = vpop.f32.mrf.mxu0
        %7943 = vdwg.mxu0
        %v7945 = vsel %vm964, %v7478, 0
        %v7948 = vsel %vm964, %v7483, 0
        %v7951 = vsel %vm964, %v7170, 0
        %v7954 = vsel %vm964, %v7175, 0
        %7956 = vmatprep.subr.mxu0 0.0
        %7957 = vmatpush1.xpose.msra.mxu0 0.0
        %7958 = vmatprep.subr.mxu0 0.0
        %7959 = vmatpush1.xpose.msra.mxu0 0.0
        %7960 = vmatprep.subr.mxu0 0.0
        %7961 = vmatpush1.xpose.msra.mxu0 0.0
        %7962 = vmatprep.subr.mxu0 0.0
        %7963 = vmatpush1.xpose.msra.mxu0 0.0
        %7964 = vmatprep.subr.mxu0 0.0
        %7965 = vmatpush1.xpose.msra.mxu0 0.0
        %7966 = vmatprep.subr.mxu0 0.0
        %7967 = vmatpush1.xpose.msra.mxu0 0.0
        %7968 = vmatprep.subr.mxu0 0.0
        %7969 = vmatpush1.xpose.msra.mxu0 0.0
        %7970 = vmatprep.subr.mxu0 0.0
        %7971 = vmatpush1.xpose.msra.mxu0 0.0
        %7972 = vmatprep.subr.mxu0 0.0
        %7973 = vmatpush1.xpose.msra.mxu0 0.0
        %7974 = vmatprep.subr.mxu0 0.0
        %7975 = vmatpush1.xpose.msra.mxu0 0.0
        %7976 = vmatprep.subr.mxu0 0.0
        %7977 = vmatpush1.xpose.msra.mxu0 0.0
        %7978 = vmatprep.subr.mxu0 0.0
        %7979 = vmatpush1.xpose.msra.mxu0 0.0
        %7980 = vmatprep.subr.mxu0 0.0
        %7981 = vmatpush1.xpose.msra.mxu0 0.0
        %7982 = vmatprep.subr.mxu0 0.0
        %7983 = vmatpush1.xpose.msra.mxu0 0.0
        %7984 = vmatprep.subr.mxu0 0.0
        %7985 = vmatpush1.xpose.msra.mxu0 %v7954
        %7986 = vmatprep.subr.mxu0 0.0
        %7987 = vmatpush1.xpose.msra.mxu0 %v7951
        %7988 = vmatprep.subr.mxu0 0.0
        %7989 = vmatpush2.xpose.msra.mxu0 0.0
        %7990 = vmatprep.subr.mxu0 0.0
        %7991 = vmatpush2.xpose.msra.mxu0 0.0
        %7992 = vmatprep.subr.mxu0 0.0
        %7993 = vmatpush2.xpose.msra.mxu0 0.0
        %7994 = vmatprep.subr.mxu0 0.0
        %7995 = vmatpush2.xpose.msra.mxu0 0.0
        %7996 = vmatprep.subr.mxu0 0.0
        %7997 = vmatpush2.xpose.msra.mxu0 0.0
        %7998 = vmatprep.subr.mxu0 0.0
        %7999 = vmatpush2.xpose.msra.mxu0 0.0
        %8000 = vmatprep.subr.mxu0 0.0
        %8001 = vmatpush2.xpose.msra.mxu0 0.0
        %8002 = vmatprep.subr.mxu0 0.0
        %8003 = vmatpush2.xpose.msra.mxu0 0.0
        %8004 = vmatprep.subr.mxu0 0.0
        %8005 = vmatpush2.xpose.msra.mxu0 0.0
        %8006 = vmatprep.subr.mxu0 0.0
        %8007 = vmatpush2.xpose.msra.mxu0 0.0
        %8008 = vmatprep.subr.mxu0 0.0
        %8009 = vmatpush2.xpose.msra.mxu0 0.0
        %8010 = vmatprep.subr.mxu0 0.0
        %8011 = vmatpush2.xpose.msra.mxu0 0.0
        %8012 = vmatprep.subr.mxu0 0.0
        %8013 = vmatpush2.xpose.msra.mxu0 0.0
        %8014 = vmatprep.subr.mxu0 0.0
        %8015 = vmatpush2.xpose.msra.mxu0 0.0
        %8016 = vmatprep.subr.mxu0 0.0
        %8017 = vmatpush2.xpose.msra.mxu0 0.0
        %8018 = vmatprep.subr.mxu0 0.0
        %8019 = vmatpush2.xpose.msra.mxu0 0.0
        %8020 = vmatprep.mubr.f32.mxu0 0.0
        %8021 = vmatmul.mubr.f32.gmra.mxu0 %v7945
        %v8022 = vpop.f32.mrf.mxu0
        %v8023 = vadd.f32 %v7507, %v8022
        %v8024 = vpop.f32.mrf.mxu0
        %8025 = vmatprep.mubr.f32.mxu0 0.0
        %8026 = vmatmul.mubr.f32.gmra.mxu0 %v7948
        %v8027 = vpop.f32.mrf.mxu0
        %v8028 = vadd.f32 %v7508, %v8027
        %v8029 = vpop.f32.mrf.mxu0
        %8030 = vdwg.mxu0
        %v8032 = vsel %vm964, %v7488, 0
        %v8035 = vsel %vm964, %v7493, 0
        %v8038 = vsel %vm964, %v7180, 0
        %v8041 = vsel %vm964, %v7185, 0
        %8043 = vmatprep.subr.mxu0 0.0
        %8044 = vmatpush1.xpose.msra.mxu0 0.0
        %8045 = vmatprep.subr.mxu0 0.0
        %8046 = vmatpush1.xpose.msra.mxu0 0.0
        %8047 = vmatprep.subr.mxu0 0.0
        %8048 = vmatpush1.xpose.msra.mxu0 0.0
        %8049 = vmatprep.subr.mxu0 0.0
        %8050 = vmatpush1.xpose.msra.mxu0 0.0
        %8051 = vmatprep.subr.mxu0 0.0
        %8052 = vmatpush1.xpose.msra.mxu0 0.0
        %8053 = vmatprep.subr.mxu0 0.0
        %8054 = vmatpush1.xpose.msra.mxu0 0.0
        %8055 = vmatprep.subr.mxu0 0.0
        %8056 = vmatpush1.xpose.msra.mxu0 0.0
        %8057 = vmatprep.subr.mxu0 0.0
        %8058 = vmatpush1.xpose.msra.mxu0 0.0
        %8059 = vmatprep.subr.mxu0 0.0
        %8060 = vmatpush1.xpose.msra.mxu0 0.0
        %8061 = vmatprep.subr.mxu0 0.0
        %8062 = vmatpush1.xpose.msra.mxu0 0.0
        %8063 = vmatprep.subr.mxu0 0.0
        %8064 = vmatpush1.xpose.msra.mxu0 0.0
        %8065 = vmatprep.subr.mxu0 0.0
        %8066 = vmatpush1.xpose.msra.mxu0 0.0
        %8067 = vmatprep.subr.mxu0 0.0
        %8068 = vmatpush1.xpose.msra.mxu0 0.0
        %8069 = vmatprep.subr.mxu0 0.0
        %8070 = vmatpush1.xpose.msra.mxu0 0.0
        %8071 = vmatprep.subr.mxu0 0.0
        %8072 = vmatpush1.xpose.msra.mxu0 %v8041
        %8073 = vmatprep.subr.mxu0 0.0
        %8074 = vmatpush1.xpose.msra.mxu0 %v8038
        %8075 = vmatprep.subr.mxu0 0.0
        %8076 = vmatpush2.xpose.msra.mxu0 0.0
        %8077 = vmatprep.subr.mxu0 0.0
        %8078 = vmatpush2.xpose.msra.mxu0 0.0
        %8079 = vmatprep.subr.mxu0 0.0
        %8080 = vmatpush2.xpose.msra.mxu0 0.0
        %8081 = vmatprep.subr.mxu0 0.0
        %8082 = vmatpush2.xpose.msra.mxu0 0.0
        %8083 = vmatprep.subr.mxu0 0.0
        %8084 = vmatpush2.xpose.msra.mxu0 0.0
        %8085 = vmatprep.subr.mxu0 0.0
        %8086 = vmatpush2.xpose.msra.mxu0 0.0
        %8087 = vmatprep.subr.mxu0 0.0
        %8088 = vmatpush2.xpose.msra.mxu0 0.0
        %8089 = vmatprep.subr.mxu0 0.0
        %8090 = vmatpush2.xpose.msra.mxu0 0.0
        %8091 = vmatprep.subr.mxu0 0.0
        %8092 = vmatpush2.xpose.msra.mxu0 0.0
        %8093 = vmatprep.subr.mxu0 0.0
        %8094 = vmatpush2.xpose.msra.mxu0 0.0
        %8095 = vmatprep.subr.mxu0 0.0
        %8096 = vmatpush2.xpose.msra.mxu0 0.0
        %8097 = vmatprep.subr.mxu0 0.0
        %8098 = vmatpush2.xpose.msra.mxu0 0.0
        %8099 = vmatprep.subr.mxu0 0.0
        %8100 = vmatpush2.xpose.msra.mxu0 0.0
        %8101 = vmatprep.subr.mxu0 0.0
        %8102 = vmatpush2.xpose.msra.mxu0 0.0
        %8103 = vmatprep.subr.mxu0 0.0
        %8104 = vmatpush2.xpose.msra.mxu0 0.0
        %8105 = vmatprep.subr.mxu0 0.0
        %8106 = vmatpush2.xpose.msra.mxu0 0.0
        %8107 = vmatprep.mubr.f32.mxu0 0.0
        %8108 = vmatmul.mubr.f32.gmra.mxu0 %v8032
        %v8109 = vpop.f32.mrf.mxu0
        %v8110 = vadd.f32 %v7507, %v8109
        %v8111 = vpop.f32.mrf.mxu0
        %8112 = vmatprep.mubr.f32.mxu0 0.0
        %8113 = vmatmul.mubr.f32.gmra.mxu0 %v8035
        %v8114 = vpop.f32.mrf.mxu0
        %v8115 = vadd.f32 %v7508, %v8114
        %v8116 = vpop.f32.mrf.mxu0
        %8117 = vdwg.mxu0
        %v8119 = vsel %vm964, %v7498, 0
        %v8122 = vsel %vm964, %v7503, 0
        %v8125 = vsel %vm964, %v7190, 0
        %v8128 = vsel %vm964, %v7195, 0
        %8130 = vmatprep.subr.mxu0 0.0
        %8131 = vmatpush1.xpose.msra.mxu0 0.0
        %8132 = vmatprep.subr.mxu0 0.0
        %8133 = vmatpush1.xpose.msra.mxu0 0.0
        %8134 = vmatprep.subr.mxu0 0.0
        %8135 = vmatpush1.xpose.msra.mxu0 0.0
        %8136 = vmatprep.subr.mxu0 0.0
        %8137 = vmatpush1.xpose.msra.mxu0 0.0
        %8138 = vmatprep.subr.mxu0 0.0
        %8139 = vmatpush1.xpose.msra.mxu0 0.0
        %8140 = vmatprep.subr.mxu0 0.0
        %8141 = vmatpush1.xpose.msra.mxu0 0.0
        %8142 = vmatprep.subr.mxu0 0.0
        %8143 = vmatpush1.xpose.msra.mxu0 0.0
        %8144 = vmatprep.subr.mxu0 0.0
        %8145 = vmatpush1.xpose.msra.mxu0 0.0
        %8146 = vmatprep.subr.mxu0 0.0
        %8147 = vmatpush1.xpose.msra.mxu0 0.0
        %8148 = vmatprep.subr.mxu0 0.0
        %8149 = vmatpush1.xpose.msra.mxu0 0.0
        %8150 = vmatprep.subr.mxu0 0.0
        %8151 = vmatpush1.xpose.msra.mxu0 0.0
        %8152 = vmatprep.subr.mxu0 0.0
        %8153 = vmatpush1.xpose.msra.mxu0 0.0
        %8154 = vmatprep.subr.mxu0 0.0
        %8155 = vmatpush1.xpose.msra.mxu0 0.0
        %8156 = vmatprep.subr.mxu0 0.0
        %8157 = vmatpush1.xpose.msra.mxu0 0.0
        %8158 = vmatprep.subr.mxu0 0.0
        %8159 = vmatpush1.xpose.msra.mxu0 %v8128
        %8160 = vmatprep.subr.mxu0 0.0
        %8161 = vmatpush1.xpose.msra.mxu0 %v8125
        %8162 = vmatprep.subr.mxu0 0.0
        %8163 = vmatpush2.xpose.msra.mxu0 0.0
        %8164 = vmatprep.subr.mxu0 0.0
        %8165 = vmatpush2.xpose.msra.mxu0 0.0
        %8166 = vmatprep.subr.mxu0 0.0
        %8167 = vmatpush2.xpose.msra.mxu0 0.0
        %8168 = vmatprep.subr.mxu0 0.0
        %8169 = vmatpush2.xpose.msra.mxu0 0.0
        %8170 = vmatprep.subr.mxu0 0.0
        %8171 = vmatpush2.xpose.msra.mxu0 0.0
        %8172 = vmatprep.subr.mxu0 0.0
        %8173 = vmatpush2.xpose.msra.mxu0 0.0
        %8174 = vmatprep.subr.mxu0 0.0
        %8175 = vmatpush2.xpose.msra.mxu0 0.0
        %8176 = vmatprep.subr.mxu0 0.0
        %8177 = vmatpush2.xpose.msra.mxu0 0.0
        %8178 = vmatprep.subr.mxu0 0.0
        %8179 = vmatpush2.xpose.msra.mxu0 0.0
        %8180 = vmatprep.subr.mxu0 0.0
        %8181 = vmatpush2.xpose.msra.mxu0 0.0
        %8182 = vmatprep.subr.mxu0 0.0
        %8183 = vmatpush2.xpose.msra.mxu0 0.0
        %8184 = vmatprep.subr.mxu0 0.0
        %8185 = vmatpush2.xpose.msra.mxu0 0.0
        %8186 = vmatprep.subr.mxu0 0.0
        %8187 = vmatpush2.xpose.msra.mxu0 0.0
        %8188 = vmatprep.subr.mxu0 0.0
        %8189 = vmatpush2.xpose.msra.mxu0 0.0
        %8190 = vmatprep.subr.mxu0 0.0
        %8191 = vmatpush2.xpose.msra.mxu0 0.0
        %8192 = vmatprep.subr.mxu0 0.0
        %8193 = vmatpush2.xpose.msra.mxu0 0.0
        %8194 = vmatprep.mubr.f32.mxu0 0.0
        %8195 = vmatmul.mubr.f32.gmra.mxu0 %v8119
        %v8196 = vpop.f32.mrf.mxu0
        %v8197 = vadd.f32 %v7507, %v8196
        %v8198 = vpop.f32.mrf.mxu0
        %8199 = vmatprep.mubr.f32.mxu0 0.0
        %8200 = vmatmul.mubr.f32.gmra.mxu0 %v8122
        %v8201 = vpop.f32.mrf.mxu0
        %v8202 = vadd.f32 %v7508, %v8201
        %v8203 = vpop.f32.mrf.mxu0
        %8204 = vdwg.mxu0
        %v8205 = vsel %vm1661, %v7588, -inf
        %8206 = vmax.xlane.f32.xlu0 %v8205
        %v8207 = vpop.xlane.xlu0 %8206
        %v8208 = vsel %vm1661, %v7593, -inf
        %8209 = vmax.xlane.f32.xlu0 %v8208
        %v8210 = vpop.xlane.xlu0 %8209
        %v8211 = vsel %vm1661, %v7675, -inf
        %8212 = vmax.xlane.f32.xlu0 %v8211
        %v8213 = vpop.xlane.xlu0 %8212
        %v8214 = vsel %vm1661, %v7680, -inf
        %8215 = vmax.xlane.f32.xlu0 %v8214
        %v8216 = vpop.xlane.xlu0 %8215
        %v8217 = vsel %vm1661, %v7762, -inf
        %8218 = vmax.xlane.f32.xlu0 %v8217
        %v8219 = vpop.xlane.xlu0 %8218
        %v8220 = vsel %vm1661, %v7767, -inf
        %8221 = vmax.xlane.f32.xlu0 %v8220
        %v8222 = vpop.xlane.xlu0 %8221
        %v8223 = vsel %vm1661, %v7849, -inf
        %8224 = vmax.xlane.f32.xlu0 %v8223
        %v8225 = vpop.xlane.xlu0 %8224
        %v8226 = vsel %vm1661, %v7854, -inf
        %8227 = vmax.xlane.f32.xlu0 %v8226
        %v8228 = vpop.xlane.xlu0 %8227
        %v8229 = vsel %vm1661, %v7936, -inf
        %8230 = vmax.xlane.f32.xlu0 %v8229
        %v8231 = vpop.xlane.xlu0 %8230
        %v8232 = vsel %vm1661, %v7941, -inf
        %8233 = vmax.xlane.f32.xlu0 %v8232
        %v8234 = vpop.xlane.xlu0 %8233
        %v8235 = vsel %vm1661, %v8023, -inf
        %8236 = vmax.xlane.f32.xlu0 %v8235
        %v8237 = vpop.xlane.xlu0 %8236
        %v8238 = vsel %vm1661, %v8028, -inf
        %8239 = vmax.xlane.f32.xlu0 %v8238
        %v8240 = vpop.xlane.xlu0 %8239
        %v8241 = vsel %vm1661, %v8110, -inf
        %8242 = vmax.xlane.f32.xlu0 %v8241
        %v8243 = vpop.xlane.xlu0 %8242
        %v8244 = vsel %vm1661, %v8115, -inf
        %8245 = vmax.xlane.f32.xlu0 %v8244
        %v8246 = vpop.xlane.xlu0 %8245
        %v8247 = vsel %vm1661, %v8197, -inf
        %8248 = vmax.xlane.f32.xlu0 %v8247
        %v8249 = vpop.xlane.xlu0 %8248
        %v8250 = vsel %vm1661, %v8202, -inf
        %8251 = vmax.xlane.f32.xlu0 %v8250
        %v8252 = vpop.xlane.xlu0 %8251
        %v8253 = vsub.f32 %v7588, %v8207
        %v8254 = vsub.f32 %v7593, %v8210
        %v8255 = vsub.f32 %v7675, %v8213
        %v8256 = vsub.f32 %v7680, %v8216
        %v8257 = vsub.f32 %v7762, %v8219
        %v8258 = vsub.f32 %v7767, %v8222
        %v8259 = vsub.f32 %v7849, %v8225
        %v8260 = vsub.f32 %v7854, %v8228
        %v8261 = vsub.f32 %v7936, %v8231
        %v8262 = vsub.f32 %v7941, %v8234
        %v8263 = vsub.f32 %v8023, %v8237
        %v8264 = vsub.f32 %v8028, %v8240
        %v8265 = vsub.f32 %v8110, %v8243
        %v8266 = vsub.f32 %v8115, %v8246
        %v8267 = vsub.f32 %v8197, %v8249
        %v8268 = vsub.f32 %v8202, %v8252
        %v8269 = vmul.f32 %v8253, 1.442695
        %v8270 = vpow.pop %v8269
        %v8271 = vmul.f32 %v8254, 1.442695
        %v8272 = vpow.pop %v8271
        %v8273 = vmul.f32 %v8255, 1.442695
        %v8274 = vpow.pop %v8273
        %v8275 = vmul.f32 %v8256, 1.442695
        %v8276 = vpow.pop %v8275
        %v8277 = vmul.f32 %v8257, 1.442695
        %v8278 = vpow.pop %v8277
        %v8279 = vmul.f32 %v8258, 1.442695
        %v8280 = vpow.pop %v8279
        %v8281 = vmul.f32 %v8259, 1.442695
        %v8282 = vpow.pop %v8281
        %v8283 = vmul.f32 %v8260, 1.442695
        %v8284 = vpow.pop %v8283
        %v8285 = vmul.f32 %v8261, 1.442695
        %v8286 = vpow.pop %v8285
        %v8287 = vmul.f32 %v8262, 1.442695
        %v8288 = vpow.pop %v8287
        %v8289 = vmul.f32 %v8263, 1.442695
        %v8290 = vpow.pop %v8289
        %v8291 = vmul.f32 %v8264, 1.442695
        %v8292 = vpow.pop %v8291
        %v8293 = vmul.f32 %v8265, 1.442695
        %v8294 = vpow.pop %v8293
        %v8295 = vmul.f32 %v8266, 1.442695
        %v8296 = vpow.pop %v8295
        %v8297 = vmul.f32 %v8267, 1.442695
        %v8298 = vpow.pop %v8297
        %v8299 = vmul.f32 %v8268, 1.442695
        %v8300 = vpow.pop %v8299
        %v8301 = vsel %vm1661, %v8270, 0.0
        %8302 = vadd.xlane.f32.xlu0 %v8301
        %v8303 = vpop.xlane.xlu0 %8302
        %v8304 = vsel %vm1661, %v8272, 0.0
        %8305 = vadd.xlane.f32.xlu0 %v8304
        %v8306 = vpop.xlane.xlu0 %8305
        %v8307 = vsel %vm1661, %v8274, 0.0
        %8308 = vadd.xlane.f32.xlu0 %v8307
        %v8309 = vpop.xlane.xlu0 %8308
        %v8310 = vsel %vm1661, %v8276, 0.0
        %8311 = vadd.xlane.f32.xlu0 %v8310
        %v8312 = vpop.xlane.xlu0 %8311
        %v8313 = vsel %vm1661, %v8278, 0.0
        %8314 = vadd.xlane.f32.xlu0 %v8313
        %v8315 = vpop.xlane.xlu0 %8314
        %v8316 = vsel %vm1661, %v8280, 0.0
        %8317 = vadd.xlane.f32.xlu0 %v8316
        %v8318 = vpop.xlane.xlu0 %8317
        %v8319 = vsel %vm1661, %v8282, 0.0
        %8320 = vadd.xlane.f32.xlu0 %v8319
        %v8321 = vpop.xlane.xlu0 %8320
        %v8322 = vsel %vm1661, %v8284, 0.0
        %8323 = vadd.xlane.f32.xlu0 %v8322
        %v8324 = vpop.xlane.xlu0 %8323
        %v8325 = vsel %vm1661, %v8286, 0.0
        %8326 = vadd.xlane.f32.xlu0 %v8325
        %v8327 = vpop.xlane.xlu0 %8326
        %v8328 = vsel %vm1661, %v8288, 0.0
        %8329 = vadd.xlane.f32.xlu0 %v8328
        %v8330 = vpop.xlane.xlu0 %8329
        %v8331 = vsel %vm1661, %v8290, 0.0
        %8332 = vadd.xlane.f32.xlu0 %v8331
        %v8333 = vpop.xlane.xlu0 %8332
        %v8334 = vsel %vm1661, %v8292, 0.0
        %8335 = vadd.xlane.f32.xlu0 %v8334
        %v8336 = vpop.xlane.xlu0 %8335
        %v8337 = vsel %vm1661, %v8294, 0.0
        %8338 = vadd.xlane.f32.xlu0 %v8337
        %v8339 = vpop.xlane.xlu0 %8338
        %v8340 = vsel %vm1661, %v8296, 0.0
        %8341 = vadd.xlane.f32.xlu0 %v8340
        %v8342 = vpop.xlane.xlu0 %8341
        %v8343 = vsel %vm1661, %v8298, 0.0
        %8344 = vadd.xlane.f32.xlu0 %v8343
        %v8345 = vpop.xlane.xlu0 %8344
        %v8346 = vsel %vm1661, %v8300, 0.0
        %8347 = vadd.xlane.f32.xlu0 %v8346
        %v8348 = vpop.xlane.xlu0 %8347
        %v8349 = vrcp.pop %v8303
        %v8350 = vrcp.pop %v8306
        %v8351 = vrcp.pop %v8309
        %v8352 = vrcp.pop %v8312
        %v8353 = vrcp.pop %v8315
        %v8354 = vrcp.pop %v8318
        %v8355 = vrcp.pop %v8321
        %v8356 = vrcp.pop %v8324
        %v8357 = vrcp.pop %v8327
        %v8358 = vrcp.pop %v8330
        %v8359 = vrcp.pop %v8333
        %v8360 = vrcp.pop %v8336
        %v8361 = vrcp.pop %v8339
        %v8362 = vrcp.pop %v8342
        %v8363 = vrcp.pop %v8345
        %v8364 = vrcp.pop %v8348
        %v8365 = vmul.f32 %v8270, %v8349
        %v8366 = vmul.f32 %v8272, %v8350
        %v8367 = vmul.f32 %v8274, %v8351
        %v8368 = vmul.f32 %v8276, %v8352
        %v8369 = vmul.f32 %v8278, %v8353
        %v8370 = vmul.f32 %v8280, %v8354
        %v8371 = vmul.f32 %v8282, %v8355
        %v8372 = vmul.f32 %v8284, %v8356
        %v8373 = vmul.f32 %v8286, %v8357
        %v8374 = vmul.f32 %v8288, %v8358
        %v8375 = vmul.f32 %v8290, %v8359
        %v8376 = vmul.f32 %v8292, %v8360
        %v8377 = vmul.f32 %v8294, %v8361
        %v8378 = vmul.f32 %v8296, %v8362
        %v8379 = vmul.f32 %v8298, %v8363
        %v8380 = vmul.f32 %v8300, %v8364
        %v8382 = vsel %vm1661, %v8365, 0
        %v8385 = vsel %vm1661, %v8366, 0
        %8387 = vmatprep.subr.mxu0 0.0
        %8388 = vmatpush1.msra.mxu0 0.0
        %8389 = vmatprep.subr.mxu0 0.0
        %8390 = vmatpush1.msra.mxu0 0.0
        %8391 = vmatprep.subr.mxu0 0.0
        %8392 = vmatpush1.msra.mxu0 0.0
        %8393 = vmatprep.subr.mxu0 0.0
        %8394 = vmatpush1.msra.mxu0 0.0
        %8395 = vmatprep.subr.mxu0 0.0
        %8396 = vmatpush1.msra.mxu0 0.0
        %8397 = vmatprep.subr.mxu0 0.0
        %8398 = vmatpush1.msra.mxu0 0.0
        %8399 = vmatprep.subr.mxu0 0.0
        %8400 = vmatpush1.msra.mxu0 0.0
        %8401 = vmatprep.subr.mxu0 0.0
        %8402 = vmatpush1.msra.mxu0 0.0
        %8403 = vmatprep.subr.mxu0 0.0
        %8404 = vmatpush1.msra.mxu0 0.0
        %8405 = vmatprep.subr.mxu0 0.0
        %8406 = vmatpush1.msra.mxu0 0.0
        %8407 = vmatprep.subr.mxu0 0.0
        %8408 = vmatpush1.msra.mxu0 0.0
        %8409 = vmatprep.subr.mxu0 0.0
        %8410 = vmatpush1.msra.mxu0 0.0
        %8411 = vmatprep.subr.mxu0 0.0
        %8412 = vmatpush1.msra.mxu0 0.0
        %8413 = vmatprep.subr.mxu0 0.0
        %8414 = vmatpush1.msra.mxu0 0.0
        %8415 = vmatprep.subr.mxu0 0.0
        %8416 = vmatpush1.msra.mxu0 %v7275
        %8417 = vmatprep.subr.mxu0 0.0
        %8418 = vmatpush1.msra.mxu0 %v7270
        %8419 = vmatprep.subr.mxu0 0.0
        %8420 = vmatpush2.msra.mxu0 0.0
        %8421 = vmatprep.subr.mxu0 0.0
        %8422 = vmatpush2.msra.mxu0 0.0
        %8423 = vmatprep.subr.mxu0 0.0
        %8424 = vmatpush2.msra.mxu0 0.0
        %8425 = vmatprep.subr.mxu0 0.0
        %8426 = vmatpush2.msra.mxu0 0.0
        %8427 = vmatprep.subr.mxu0 0.0
        %8428 = vmatpush2.msra.mxu0 0.0
        %8429 = vmatprep.subr.mxu0 0.0
        %8430 = vmatpush2.msra.mxu0 0.0
        %8431 = vmatprep.subr.mxu0 0.0
        %8432 = vmatpush2.msra.mxu0 0.0
        %8433 = vmatprep.subr.mxu0 0.0
        %8434 = vmatpush2.msra.mxu0 0.0
        %8435 = vmatprep.subr.mxu0 0.0
        %8436 = vmatpush2.msra.mxu0 0.0
        %8437 = vmatprep.subr.mxu0 0.0
        %8438 = vmatpush2.msra.mxu0 0.0
        %8439 = vmatprep.subr.mxu0 0.0
        %8440 = vmatpush2.msra.mxu0 0.0
        %8441 = vmatprep.subr.mxu0 0.0
        %8442 = vmatpush2.msra.mxu0 0.0
        %8443 = vmatprep.subr.mxu0 0.0
        %8444 = vmatpush2.msra.mxu0 0.0
        %8445 = vmatprep.subr.mxu0 0.0
        %8446 = vmatpush2.msra.mxu0 0.0
        %8447 = vmatprep.subr.mxu0 0.0
        %8448 = vmatpush2.msra.mxu0 0.0
        %8449 = vmatprep.subr.mxu0 0.0
        %8450 = vmatpush2.msra.mxu0 0.0
        %8451 = vmatprep.mubr.f32.mxu0 0.0
        %8452 = vmatmul.mubr.f32.gmra.mxu0 %v8382
        %v8453 = vpop.f32.mrf.mxu0
        %v8454 = vadd.f32 0.0, %v8453
        %v8455 = vpop.f32.mrf.mxu0
        %8456 = vmatprep.mubr.f32.mxu0 0.0
        %8457 = vmatmul.mubr.f32.gmra.mxu0 %v8385
        %v8458 = vpop.f32.mrf.mxu0
        %v8459 = vadd.f32 0.0, %v8458
        %v8460 = vpop.f32.mrf.mxu0
        %8461 = vdwg.mxu0
        %v8463 = vsel %vm1661, %v8367, 0
        %v8466 = vsel %vm1661, %v8368, 0
        %8468 = vmatprep.subr.mxu0 0.0
        %8469 = vmatpush1.msra.mxu0 0.0
        %8470 = vmatprep.subr.mxu0 0.0
        %8471 = vmatpush1.msra.mxu0 0.0
        %8472 = vmatprep.subr.mxu0 0.0
        %8473 = vmatpush1.msra.mxu0 0.0
        %8474 = vmatprep.subr.mxu0 0.0
        %8475 = vmatpush1.msra.mxu0 0.0
        %8476 = vmatprep.subr.mxu0 0.0
        %8477 = vmatpush1.msra.mxu0 0.0
        %8478 = vmatprep.subr.mxu0 0.0
        %8479 = vmatpush1.msra.mxu0 0.0
        %8480 = vmatprep.subr.mxu0 0.0
        %8481 = vmatpush1.msra.mxu0 0.0
        %8482 = vmatprep.subr.mxu0 0.0
        %8483 = vmatpush1.msra.mxu0 0.0
        %8484 = vmatprep.subr.mxu0 0.0
        %8485 = vmatpush1.msra.mxu0 0.0
        %8486 = vmatprep.subr.mxu0 0.0
        %8487 = vmatpush1.msra.mxu0 0.0
        %8488 = vmatprep.subr.mxu0 0.0
        %8489 = vmatpush1.msra.mxu0 0.0
        %8490 = vmatprep.subr.mxu0 0.0
        %8491 = vmatpush1.msra.mxu0 0.0
        %8492 = vmatprep.subr.mxu0 0.0
        %8493 = vmatpush1.msra.mxu0 0.0
        %8494 = vmatprep.subr.mxu0 0.0
        %8495 = vmatpush1.msra.mxu0 0.0
        %8496 = vmatprep.subr.mxu0 0.0
        %8497 = vmatpush1.msra.mxu0 %v7285
        %8498 = vmatprep.subr.mxu0 0.0
        %8499 = vmatpush1.msra.mxu0 %v7280
        %8500 = vmatprep.subr.mxu0 0.0
        %8501 = vmatpush2.msra.mxu0 0.0
        %8502 = vmatprep.subr.mxu0 0.0
        %8503 = vmatpush2.msra.mxu0 0.0
        %8504 = vmatprep.subr.mxu0 0.0
        %8505 = vmatpush2.msra.mxu0 0.0
        %8506 = vmatprep.subr.mxu0 0.0
        %8507 = vmatpush2.msra.mxu0 0.0
        %8508 = vmatprep.subr.mxu0 0.0
        %8509 = vmatpush2.msra.mxu0 0.0
        %8510 = vmatprep.subr.mxu0 0.0
        %8511 = vmatpush2.msra.mxu0 0.0
        %8512 = vmatprep.subr.mxu0 0.0
        %8513 = vmatpush2.msra.mxu0 0.0
        %8514 = vmatprep.subr.mxu0 0.0
        %8515 = vmatpush2.msra.mxu0 0.0
        %8516 = vmatprep.subr.mxu0 0.0
        %8517 = vmatpush2.msra.mxu0 0.0
        %8518 = vmatprep.subr.mxu0 0.0
        %8519 = vmatpush2.msra.mxu0 0.0
        %8520 = vmatprep.subr.mxu0 0.0
        %8521 = vmatpush2.msra.mxu0 0.0
        %8522 = vmatprep.subr.mxu0 0.0
        %8523 = vmatpush2.msra.mxu0 0.0
        %8524 = vmatprep.subr.mxu0 0.0
        %8525 = vmatpush2.msra.mxu0 0.0
        %8526 = vmatprep.subr.mxu0 0.0
        %8527 = vmatpush2.msra.mxu0 0.0
        %8528 = vmatprep.subr.mxu0 0.0
        %8529 = vmatpush2.msra.mxu0 0.0
        %8530 = vmatprep.subr.mxu0 0.0
        %8531 = vmatpush2.msra.mxu0 0.0
        %8532 = vmatprep.mubr.f32.mxu0 0.0
        %8533 = vmatmul.mubr.f32.gmra.mxu0 %v8463
        %v8534 = vpop.f32.mrf.mxu0
        %v8535 = vadd.f32 0.0, %v8534
        %v8536 = vpop.f32.mrf.mxu0
        %8537 = vmatprep.mubr.f32.mxu0 0.0
        %8538 = vmatmul.mubr.f32.gmra.mxu0 %v8466
        %v8539 = vpop.f32.mrf.mxu0
        %v8540 = vadd.f32 0.0, %v8539
        %v8541 = vpop.f32.mrf.mxu0
        %8542 = vdwg.mxu0
        %v8544 = vsel %vm1661, %v8369, 0
        %v8547 = vsel %vm1661, %v8370, 0
        %8549 = vmatprep.subr.mxu0 0.0
        %8550 = vmatpush1.msra.mxu0 0.0
        %8551 = vmatprep.subr.mxu0 0.0
        %8552 = vmatpush1.msra.mxu0 0.0
        %8553 = vmatprep.subr.mxu0 0.0
        %8554 = vmatpush1.msra.mxu0 0.0
        %8555 = vmatprep.subr.mxu0 0.0
        %8556 = vmatpush1.msra.mxu0 0.0
        %8557 = vmatprep.subr.mxu0 0.0
        %8558 = vmatpush1.msra.mxu0 0.0
        %8559 = vmatprep.subr.mxu0 0.0
        %8560 = vmatpush1.msra.mxu0 0.0
        %8561 = vmatprep.subr.mxu0 0.0
        %8562 = vmatpush1.msra.mxu0 0.0
        %8563 = vmatprep.subr.mxu0 0.0
        %8564 = vmatpush1.msra.mxu0 0.0
        %8565 = vmatprep.subr.mxu0 0.0
        %8566 = vmatpush1.msra.mxu0 0.0
        %8567 = vmatprep.subr.mxu0 0.0
        %8568 = vmatpush1.msra.mxu0 0.0
        %8569 = vmatprep.subr.mxu0 0.0
        %8570 = vmatpush1.msra.mxu0 0.0
        %8571 = vmatprep.subr.mxu0 0.0
        %8572 = vmatpush1.msra.mxu0 0.0
        %8573 = vmatprep.subr.mxu0 0.0
        %8574 = vmatpush1.msra.mxu0 0.0
        %8575 = vmatprep.subr.mxu0 0.0
        %8576 = vmatpush1.msra.mxu0 0.0
        %8577 = vmatprep.subr.mxu0 0.0
        %8578 = vmatpush1.msra.mxu0 %v7295
        %8579 = vmatprep.subr.mxu0 0.0
        %8580 = vmatpush1.msra.mxu0 %v7290
        %8581 = vmatprep.subr.mxu0 0.0
        %8582 = vmatpush2.msra.mxu0 0.0
        %8583 = vmatprep.subr.mxu0 0.0
        %8584 = vmatpush2.msra.mxu0 0.0
        %8585 = vmatprep.subr.mxu0 0.0
        %8586 = vmatpush2.msra.mxu0 0.0
        %8587 = vmatprep.subr.mxu0 0.0
        %8588 = vmatpush2.msra.mxu0 0.0
        %8589 = vmatprep.subr.mxu0 0.0
        %8590 = vmatpush2.msra.mxu0 0.0
        %8591 = vmatprep.subr.mxu0 0.0
        %8592 = vmatpush2.msra.mxu0 0.0
        %8593 = vmatprep.subr.mxu0 0.0
        %8594 = vmatpush2.msra.mxu0 0.0
        %8595 = vmatprep.subr.mxu0 0.0
        %8596 = vmatpush2.msra.mxu0 0.0
        %8597 = vmatprep.subr.mxu0 0.0
        %8598 = vmatpush2.msra.mxu0 0.0
        %8599 = vmatprep.subr.mxu0 0.0
        %8600 = vmatpush2.msra.mxu0 0.0
        %8601 = vmatprep.subr.mxu0 0.0
        %8602 = vmatpush2.msra.mxu0 0.0
        %8603 = vmatprep.subr.mxu0 0.0
        %8604 = vmatpush2.msra.mxu0 0.0
        %8605 = vmatprep.subr.mxu0 0.0
        %8606 = vmatpush2.msra.mxu0 0.0
        %8607 = vmatprep.subr.mxu0 0.0
        %8608 = vmatpush2.msra.mxu0 0.0
        %8609 = vmatprep.subr.mxu0 0.0
        %8610 = vmatpush2.msra.mxu0 0.0
        %8611 = vmatprep.subr.mxu0 0.0
        %8612 = vmatpush2.msra.mxu0 0.0
        %8613 = vmatprep.mubr.f32.mxu0 0.0
        %8614 = vmatmul.mubr.f32.gmra.mxu0 %v8544
        %v8615 = vpop.f32.mrf.mxu0
        %v8616 = vadd.f32 0.0, %v8615
        %v8617 = vpop.f32.mrf.mxu0
        %8618 = vmatprep.mubr.f32.mxu0 0.0
        %8619 = vmatmul.mubr.f32.gmra.mxu0 %v8547
        %v8620 = vpop.f32.mrf.mxu0
        %v8621 = vadd.f32 0.0, %v8620
        %v8622 = vpop.f32.mrf.mxu0
        %8623 = vdwg.mxu0
        %v8625 = vsel %vm1661, %v8371, 0
        %v8628 = vsel %vm1661, %v8372, 0
        %8630 = vmatprep.subr.mxu0 0.0
        %8631 = vmatpush1.msra.mxu0 0.0
        %8632 = vmatprep.subr.mxu0 0.0
        %8633 = vmatpush1.msra.mxu0 0.0
        %8634 = vmatprep.subr.mxu0 0.0
        %8635 = vmatpush1.msra.mxu0 0.0
        %8636 = vmatprep.subr.mxu0 0.0
        %8637 = vmatpush1.msra.mxu0 0.0
        %8638 = vmatprep.subr.mxu0 0.0
        %8639 = vmatpush1.msra.mxu0 0.0
        %8640 = vmatprep.subr.mxu0 0.0
        %8641 = vmatpush1.msra.mxu0 0.0
        %8642 = vmatprep.subr.mxu0 0.0
        %8643 = vmatpush1.msra.mxu0 0.0
        %8644 = vmatprep.subr.mxu0 0.0
        %8645 = vmatpush1.msra.mxu0 0.0
        %8646 = vmatprep.subr.mxu0 0.0
        %8647 = vmatpush1.msra.mxu0 0.0
        %8648 = vmatprep.subr.mxu0 0.0
        %8649 = vmatpush1.msra.mxu0 0.0
        %8650 = vmatprep.subr.mxu0 0.0
        %8651 = vmatpush1.msra.mxu0 0.0
        %8652 = vmatprep.subr.mxu0 0.0
        %8653 = vmatpush1.msra.mxu0 0.0
        %8654 = vmatprep.subr.mxu0 0.0
        %8655 = vmatpush1.msra.mxu0 0.0
        %8656 = vmatprep.subr.mxu0 0.0
        %8657 = vmatpush1.msra.mxu0 0.0
        %8658 = vmatprep.subr.mxu0 0.0
        %8659 = vmatpush1.msra.mxu0 %v7305
        %8660 = vmatprep.subr.mxu0 0.0
        %8661 = vmatpush1.msra.mxu0 %v7300
        %8662 = vmatprep.subr.mxu0 0.0
        %8663 = vmatpush2.msra.mxu0 0.0
        %8664 = vmatprep.subr.mxu0 0.0
        %8665 = vmatpush2.msra.mxu0 0.0
        %8666 = vmatprep.subr.mxu0 0.0
        %8667 = vmatpush2.msra.mxu0 0.0
        %8668 = vmatprep.subr.mxu0 0.0
        %8669 = vmatpush2.msra.mxu0 0.0
        %8670 = vmatprep.subr.mxu0 0.0
        %8671 = vmatpush2.msra.mxu0 0.0
        %8672 = vmatprep.subr.mxu0 0.0
        %8673 = vmatpush2.msra.mxu0 0.0
        %8674 = vmatprep.subr.mxu0 0.0
        %8675 = vmatpush2.msra.mxu0 0.0
        %8676 = vmatprep.subr.mxu0 0.0
        %8677 = vmatpush2.msra.mxu0 0.0
        %8678 = vmatprep.subr.mxu0 0.0
        %8679 = vmatpush2.msra.mxu0 0.0
        %8680 = vmatprep.subr.mxu0 0.0
        %8681 = vmatpush2.msra.mxu0 0.0
        %8682 = vmatprep.subr.mxu0 0.0
        %8683 = vmatpush2.msra.mxu0 0.0
        %8684 = vmatprep.subr.mxu0 0.0
        %8685 = vmatpush2.msra.mxu0 0.0
        %8686 = vmatprep.subr.mxu0 0.0
        %8687 = vmatpush2.msra.mxu0 0.0
        %8688 = vmatprep.subr.mxu0 0.0
        %8689 = vmatpush2.msra.mxu0 0.0
        %8690 = vmatprep.subr.mxu0 0.0
        %8691 = vmatpush2.msra.mxu0 0.0
        %8692 = vmatprep.subr.mxu0 0.0
        %8693 = vmatpush2.msra.mxu0 0.0
        %8694 = vmatprep.mubr.f32.mxu0 0.0
        %8695 = vmatmul.mubr.f32.gmra.mxu0 %v8625
        %v8696 = vpop.f32.mrf.mxu0
        %v8697 = vadd.f32 0.0, %v8696
        %v8698 = vpop.f32.mrf.mxu0
        %8699 = vmatprep.mubr.f32.mxu0 0.0
        %8700 = vmatmul.mubr.f32.gmra.mxu0 %v8628
        %v8701 = vpop.f32.mrf.mxu0
        %v8702 = vadd.f32 0.0, %v8701
        %v8703 = vpop.f32.mrf.mxu0
        %8704 = vdwg.mxu0
        %v8706 = vsel %vm1661, %v8373, 0
        %v8709 = vsel %vm1661, %v8374, 0
        %8711 = vmatprep.subr.mxu0 0.0
        %8712 = vmatpush1.msra.mxu0 0.0
        %8713 = vmatprep.subr.mxu0 0.0
        %8714 = vmatpush1.msra.mxu0 0.0
        %8715 = vmatprep.subr.mxu0 0.0
        %8716 = vmatpush1.msra.mxu0 0.0
        %8717 = vmatprep.subr.mxu0 0.0
        %8718 = vmatpush1.msra.mxu0 0.0
        %8719 = vmatprep.subr.mxu0 0.0
        %8720 = vmatpush1.msra.mxu0 0.0
        %8721 = vmatprep.subr.mxu0 0.0
        %8722 = vmatpush1.msra.mxu0 0.0
        %8723 = vmatprep.subr.mxu0 0.0
        %8724 = vmatpush1.msra.mxu0 0.0
        %8725 = vmatprep.subr.mxu0 0.0
        %8726 = vmatpush1.msra.mxu0 0.0
        %8727 = vmatprep.subr.mxu0 0.0
        %8728 = vmatpush1.msra.mxu0 0.0
        %8729 = vmatprep.subr.mxu0 0.0
        %8730 = vmatpush1.msra.mxu0 0.0
        %8731 = vmatprep.subr.mxu0 0.0
        %8732 = vmatpush1.msra.mxu0 0.0
        %8733 = vmatprep.subr.mxu0 0.0
        %8734 = vmatpush1.msra.mxu0 0.0
        %8735 = vmatprep.subr.mxu0 0.0
        %8736 = vmatpush1.msra.mxu0 0.0
        %8737 = vmatprep.subr.mxu0 0.0
        %8738 = vmatpush1.msra.mxu0 0.0
        %8739 = vmatprep.subr.mxu0 0.0
        %8740 = vmatpush1.msra.mxu0 %v7315
        %8741 = vmatprep.subr.mxu0 0.0
        %8742 = vmatpush1.msra.mxu0 %v7310
        %8743 = vmatprep.subr.mxu0 0.0
        %8744 = vmatpush2.msra.mxu0 0.0
        %8745 = vmatprep.subr.mxu0 0.0
        %8746 = vmatpush2.msra.mxu0 0.0
        %8747 = vmatprep.subr.mxu0 0.0
        %8748 = vmatpush2.msra.mxu0 0.0
        %8749 = vmatprep.subr.mxu0 0.0
        %8750 = vmatpush2.msra.mxu0 0.0
        %8751 = vmatprep.subr.mxu0 0.0
        %8752 = vmatpush2.msra.mxu0 0.0
        %8753 = vmatprep.subr.mxu0 0.0
        %8754 = vmatpush2.msra.mxu0 0.0
        %8755 = vmatprep.subr.mxu0 0.0
        %8756 = vmatpush2.msra.mxu0 0.0
        %8757 = vmatprep.subr.mxu0 0.0
        %8758 = vmatpush2.msra.mxu0 0.0
        %8759 = vmatprep.subr.mxu0 0.0
        %8760 = vmatpush2.msra.mxu0 0.0
        %8761 = vmatprep.subr.mxu0 0.0
        %8762 = vmatpush2.msra.mxu0 0.0
        %8763 = vmatprep.subr.mxu0 0.0
        %8764 = vmatpush2.msra.mxu0 0.0
        %8765 = vmatprep.subr.mxu0 0.0
        %8766 = vmatpush2.msra.mxu0 0.0
        %8767 = vmatprep.subr.mxu0 0.0
        %8768 = vmatpush2.msra.mxu0 0.0
        %8769 = vmatprep.subr.mxu0 0.0
        %8770 = vmatpush2.msra.mxu0 0.0
        %8771 = vmatprep.subr.mxu0 0.0
        %8772 = vmatpush2.msra.mxu0 0.0
        %8773 = vmatprep.subr.mxu0 0.0
        %8774 = vmatpush2.msra.mxu0 0.0
        %8775 = vmatprep.mubr.f32.mxu0 0.0
        %8776 = vmatmul.mubr.f32.gmra.mxu0 %v8706
        %v8777 = vpop.f32.mrf.mxu0
        %v8778 = vadd.f32 0.0, %v8777
        %v8779 = vpop.f32.mrf.mxu0
        %8780 = vmatprep.mubr.f32.mxu0 0.0
        %8781 = vmatmul.mubr.f32.gmra.mxu0 %v8709
        %v8782 = vpop.f32.mrf.mxu0
        %v8783 = vadd.f32 0.0, %v8782
        %v8784 = vpop.f32.mrf.mxu0
        %8785 = vdwg.mxu0
        %v8787 = vsel %vm1661, %v8375, 0
        %v8790 = vsel %vm1661, %v8376, 0
        %8792 = vmatprep.subr.mxu0 0.0
        %8793 = vmatpush1.msra.mxu0 0.0
        %8794 = vmatprep.subr.mxu0 0.0
        %8795 = vmatpush1.msra.mxu0 0.0
        %8796 = vmatprep.subr.mxu0 0.0
        %8797 = vmatpush1.msra.mxu0 0.0
        %8798 = vmatprep.subr.mxu0 0.0
        %8799 = vmatpush1.msra.mxu0 0.0
        %8800 = vmatprep.subr.mxu0 0.0
        %8801 = vmatpush1.msra.mxu0 0.0
        %8802 = vmatprep.subr.mxu0 0.0
        %8803 = vmatpush1.msra.mxu0 0.0
        %8804 = vmatprep.subr.mxu0 0.0
        %8805 = vmatpush1.msra.mxu0 0.0
        %8806 = vmatprep.subr.mxu0 0.0
        %8807 = vmatpush1.msra.mxu0 0.0
        %8808 = vmatprep.subr.mxu0 0.0
        %8809 = vmatpush1.msra.mxu0 0.0
        %8810 = vmatprep.subr.mxu0 0.0
        %8811 = vmatpush1.msra.mxu0 0.0
        %8812 = vmatprep.subr.mxu0 0.0
        %8813 = vmatpush1.msra.mxu0 0.0
        %8814 = vmatprep.subr.mxu0 0.0
        %8815 = vmatpush1.msra.mxu0 0.0
        %8816 = vmatprep.subr.mxu0 0.0
        %8817 = vmatpush1.msra.mxu0 0.0
        %8818 = vmatprep.subr.mxu0 0.0
        %8819 = vmatpush1.msra.mxu0 0.0
        %8820 = vmatprep.subr.mxu0 0.0
        %8821 = vmatpush1.msra.mxu0 %v7325
        %8822 = vmatprep.subr.mxu0 0.0
        %8823 = vmatpush1.msra.mxu0 %v7320
        %8824 = vmatprep.subr.mxu0 0.0
        %8825 = vmatpush2.msra.mxu0 0.0
        %8826 = vmatprep.subr.mxu0 0.0
        %8827 = vmatpush2.msra.mxu0 0.0
        %8828 = vmatprep.subr.mxu0 0.0
        %8829 = vmatpush2.msra.mxu0 0.0
        %8830 = vmatprep.subr.mxu0 0.0
        %8831 = vmatpush2.msra.mxu0 0.0
        %8832 = vmatprep.subr.mxu0 0.0
        %8833 = vmatpush2.msra.mxu0 0.0
        %8834 = vmatprep.subr.mxu0 0.0
        %8835 = vmatpush2.msra.mxu0 0.0
        %8836 = vmatprep.subr.mxu0 0.0
        %8837 = vmatpush2.msra.mxu0 0.0
        %8838 = vmatprep.subr.mxu0 0.0
        %8839 = vmatpush2.msra.mxu0 0.0
        %8840 = vmatprep.subr.mxu0 0.0
        %8841 = vmatpush2.msra.mxu0 0.0
        %8842 = vmatprep.subr.mxu0 0.0
        %8843 = vmatpush2.msra.mxu0 0.0
        %8844 = vmatprep.subr.mxu0 0.0
        %8845 = vmatpush2.msra.mxu0 0.0
        %8846 = vmatprep.subr.mxu0 0.0
        %8847 = vmatpush2.msra.mxu0 0.0
        %8848 = vmatprep.subr.mxu0 0.0
        %8849 = vmatpush2.msra.mxu0 0.0
        %8850 = vmatprep.subr.mxu0 0.0
        %8851 = vmatpush2.msra.mxu0 0.0
        %8852 = vmatprep.subr.mxu0 0.0
        %8853 = vmatpush2.msra.mxu0 0.0
        %8854 = vmatprep.subr.mxu0 0.0
        %8855 = vmatpush2.msra.mxu0 0.0
        %8856 = vmatprep.mubr.f32.mxu0 0.0
        %8857 = vmatmul.mubr.f32.gmra.mxu0 %v8787
        %v8858 = vpop.f32.mrf.mxu0
        %v8859 = vadd.f32 0.0, %v8858
        %v8860 = vpop.f32.mrf.mxu0
        %8861 = vmatprep.mubr.f32.mxu0 0.0
        %8862 = vmatmul.mubr.f32.gmra.mxu0 %v8790
        %v8863 = vpop.f32.mrf.mxu0
        %v8864 = vadd.f32 0.0, %v8863
        %v8865 = vpop.f32.mrf.mxu0
        %8866 = vdwg.mxu0
        %v8868 = vsel %vm1661, %v8377, 0
        %v8871 = vsel %vm1661, %v8378, 0
        %8873 = vmatprep.subr.mxu0 0.0
        %8874 = vmatpush1.msra.mxu0 0.0
        %8875 = vmatprep.subr.mxu0 0.0
        %8876 = vmatpush1.msra.mxu0 0.0
        %8877 = vmatprep.subr.mxu0 0.0
        %8878 = vmatpush1.msra.mxu0 0.0
        %8879 = vmatprep.subr.mxu0 0.0
        %8880 = vmatpush1.msra.mxu0 0.0
        %8881 = vmatprep.subr.mxu0 0.0
        %8882 = vmatpush1.msra.mxu0 0.0
        %8883 = vmatprep.subr.mxu0 0.0
        %8884 = vmatpush1.msra.mxu0 0.0
        %8885 = vmatprep.subr.mxu0 0.0
        %8886 = vmatpush1.msra.mxu0 0.0
        %8887 = vmatprep.subr.mxu0 0.0
        %8888 = vmatpush1.msra.mxu0 0.0
        %8889 = vmatprep.subr.mxu0 0.0
        %8890 = vmatpush1.msra.mxu0 0.0
        %8891 = vmatprep.subr.mxu0 0.0
        %8892 = vmatpush1.msra.mxu0 0.0
        %8893 = vmatprep.subr.mxu0 0.0
        %8894 = vmatpush1.msra.mxu0 0.0
        %8895 = vmatprep.subr.mxu0 0.0
        %8896 = vmatpush1.msra.mxu0 0.0
        %8897 = vmatprep.subr.mxu0 0.0
        %8898 = vmatpush1.msra.mxu0 0.0
        %8899 = vmatprep.subr.mxu0 0.0
        %8900 = vmatpush1.msra.mxu0 0.0
        %8901 = vmatprep.subr.mxu0 0.0
        %8902 = vmatpush1.msra.mxu0 %v7335
        %8903 = vmatprep.subr.mxu0 0.0
        %8904 = vmatpush1.msra.mxu0 %v7330
        %8905 = vmatprep.subr.mxu0 0.0
        %8906 = vmatpush2.msra.mxu0 0.0
        %8907 = vmatprep.subr.mxu0 0.0
        %8908 = vmatpush2.msra.mxu0 0.0
        %8909 = vmatprep.subr.mxu0 0.0
        %8910 = vmatpush2.msra.mxu0 0.0
        %8911 = vmatprep.subr.mxu0 0.0
        %8912 = vmatpush2.msra.mxu0 0.0
        %8913 = vmatprep.subr.mxu0 0.0
        %8914 = vmatpush2.msra.mxu0 0.0
        %8915 = vmatprep.subr.mxu0 0.0
        %8916 = vmatpush2.msra.mxu0 0.0
        %8917 = vmatprep.subr.mxu0 0.0
        %8918 = vmatpush2.msra.mxu0 0.0
        %8919 = vmatprep.subr.mxu0 0.0
        %8920 = vmatpush2.msra.mxu0 0.0
        %8921 = vmatprep.subr.mxu0 0.0
        %8922 = vmatpush2.msra.mxu0 0.0
        %8923 = vmatprep.subr.mxu0 0.0
        %8924 = vmatpush2.msra.mxu0 0.0
        %8925 = vmatprep.subr.mxu0 0.0
        %8926 = vmatpush2.msra.mxu0 0.0
        %8927 = vmatprep.subr.mxu0 0.0
        %8928 = vmatpush2.msra.mxu0 0.0
        %8929 = vmatprep.subr.mxu0 0.0
        %8930 = vmatpush2.msra.mxu0 0.0
        %8931 = vmatprep.subr.mxu0 0.0
        %8932 = vmatpush2.msra.mxu0 0.0
        %8933 = vmatprep.subr.mxu0 0.0
        %8934 = vmatpush2.msra.mxu0 0.0
        %8935 = vmatprep.subr.mxu0 0.0
        %8936 = vmatpush2.msra.mxu0 0.0
        %8937 = vmatprep.mubr.f32.mxu0 0.0
        %8938 = vmatmul.mubr.f32.gmra.mxu0 %v8868
        %v8939 = vpop.f32.mrf.mxu0
        %v8940 = vadd.f32 0.0, %v8939
        %v8941 = vpop.f32.mrf.mxu0
        %8942 = vmatprep.mubr.f32.mxu0 0.0
        %8943 = vmatmul.mubr.f32.gmra.mxu0 %v8871
        %v8944 = vpop.f32.mrf.mxu0
        %v8945 = vadd.f32 0.0, %v8944
        %v8946 = vpop.f32.mrf.mxu0
        %8947 = vdwg.mxu0
        %v8949 = vsel %vm1661, %v8379, 0
        %v8952 = vsel %vm1661, %v8380, 0
        %8954 = vmatprep.subr.mxu0 0.0
        %8955 = vmatpush1.msra.mxu0 0.0
        %8956 = vmatprep.subr.mxu0 0.0
        %8957 = vmatpush1.msra.mxu0 0.0
        %8958 = vmatprep.subr.mxu0 0.0
        %8959 = vmatpush1.msra.mxu0 0.0
        %8960 = vmatprep.subr.mxu0 0.0
        %8961 = vmatpush1.msra.mxu0 0.0
        %8962 = vmatprep.subr.mxu0 0.0
        %8963 = vmatpush1.msra.mxu0 0.0
        %8964 = vmatprep.subr.mxu0 0.0
        %8965 = vmatpush1.msra.mxu0 0.0
        %8966 = vmatprep.subr.mxu0 0.0
        %8967 = vmatpush1.msra.mxu0 0.0
        %8968 = vmatprep.subr.mxu0 0.0
        %8969 = vmatpush1.msra.mxu0 0.0
        %8970 = vmatprep.subr.mxu0 0.0
        %8971 = vmatpush1.msra.mxu0 0.0
        %8972 = vmatprep.subr.mxu0 0.0
        %8973 = vmatpush1.msra.mxu0 0.0
        %8974 = vmatprep.subr.mxu0 0.0
        %8975 = vmatpush1.msra.mxu0 0.0
        %8976 = vmatprep.subr.mxu0 0.0
        %8977 = vmatpush1.msra.mxu0 0.0
        %8978 = vmatprep.subr.mxu0 0.0
        %8979 = vmatpush1.msra.mxu0 0.0
        %8980 = vmatprep.subr.mxu0 0.0
        %8981 = vmatpush1.msra.mxu0 0.0
        %8982 = vmatprep.subr.mxu0 0.0
        %8983 = vmatpush1.msra.mxu0 %v7345
        %8984 = vmatprep.subr.mxu0 0.0
        %8985 = vmatpush1.msra.mxu0 %v7340
        %8986 = vmatprep.subr.mxu0 0.0
        %8987 = vmatpush2.msra.mxu0 0.0
        %8988 = vmatprep.subr.mxu0 0.0
        %8989 = vmatpush2.msra.mxu0 0.0
        %8990 = vmatprep.subr.mxu0 0.0
        %8991 = vmatpush2.msra.mxu0 0.0
        %8992 = vmatprep.subr.mxu0 0.0
        %8993 = vmatpush2.msra.mxu0 0.0
        %8994 = vmatprep.subr.mxu0 0.0
        %8995 = vmatpush2.msra.mxu0 0.0
        %8996 = vmatprep.subr.mxu0 0.0
        %8997 = vmatpush2.msra.mxu0 0.0
        %8998 = vmatprep.subr.mxu0 0.0
        %8999 = vmatpush2.msra.mxu0 0.0
        %9000 = vmatprep.subr.mxu0 0.0
        %9001 = vmatpush2.msra.mxu0 0.0
        %9002 = vmatprep.subr.mxu0 0.0
        %9003 = vmatpush2.msra.mxu0 0.0
        %9004 = vmatprep.subr.mxu0 0.0
        %9005 = vmatpush2.msra.mxu0 0.0
        %9006 = vmatprep.subr.mxu0 0.0
        %9007 = vmatpush2.msra.mxu0 0.0
        %9008 = vmatprep.subr.mxu0 0.0
        %9009 = vmatpush2.msra.mxu0 0.0
        %9010 = vmatprep.subr.mxu0 0.0
        %9011 = vmatpush2.msra.mxu0 0.0
        %9012 = vmatprep.subr.mxu0 0.0
        %9013 = vmatpush2.msra.mxu0 0.0
        %9014 = vmatprep.subr.mxu0 0.0
        %9015 = vmatpush2.msra.mxu0 0.0
        %9016 = vmatprep.subr.mxu0 0.0
        %9017 = vmatpush2.msra.mxu0 0.0
        %9018 = vmatprep.mubr.f32.mxu0 0.0
        %9019 = vmatmul.mubr.f32.gmra.mxu0 %v8949
        %v9020 = vpop.f32.mrf.mxu0
        %v9021 = vadd.f32 0.0, %v9020
        %v9022 = vpop.f32.mrf.mxu0
        %9023 = vmatprep.mubr.f32.mxu0 0.0
        %9024 = vmatmul.mubr.f32.gmra.mxu0 %v8952
        %v9025 = vpop.f32.mrf.mxu0
        %v9026 = vadd.f32 0.0, %v9025
        %v9027 = vpop.f32.mrf.mxu0
        %9028 = vdwg.mxu0
        %s9029 = scalar_lea.vmem %s6, 24
        %v9030 = vld [vmem:[%s9029] sm:$0xff]
        %v9032 = vsel %vm964, %v8454, 0
        %v9035 = vsel %vm964, %v8459, 0
        %v9038 = vsel %vm964, %v8535, 0
        %v9041 = vsel %vm964, %v8540, 0
        %v9044 = vsel %vm964, %v8616, 0
        %v9047 = vsel %vm964, %v8621, 0
        %v9050 = vsel %vm964, %v8697, 0
        %v9053 = vsel %vm964, %v8702, 0
        %v9056 = vsel %vm964, %v8778, 0
        %v9059 = vsel %vm964, %v8783, 0
        %v9062 = vsel %vm964, %v8859, 0
        %v9065 = vsel %vm964, %v8864, 0
        %v9068 = vsel %vm964, %v8940, 0
        %v9071 = vsel %vm964, %v8945, 0
        %v9074 = vsel %vm964, %v9021, 0
        %v9077 = vsel %vm964, %v9026, 0
        %9079 = vmatprep.subr.mxu0 0.0
        %9080 = vmatpush1.msra.mxu0 0.0
        %9081 = vmatprep.subr.mxu0 0.0
        %9082 = vmatpush1.msra.mxu0 0.0
        %9083 = vmatprep.subr.mxu0 0.0
        %9084 = vmatpush1.msra.mxu0 0.0
        %9085 = vmatprep.subr.mxu0 0.0
        %9086 = vmatpush1.msra.mxu0 0.0
        %9087 = vmatprep.subr.mxu0 0.0
        %9088 = vmatpush1.msra.mxu0 0.0
        %9089 = vmatprep.subr.mxu0 0.0
        %9090 = vmatpush1.msra.mxu0 0.0
        %9091 = vmatprep.subr.mxu0 0.0
        %9092 = vmatpush1.msra.mxu0 0.0
        %9093 = vmatprep.subr.mxu0 0.0
        %9094 = vmatpush1.msra.mxu0 0.0
        %9095 = vmatprep.subr.mxu0 0.0
        %9096 = vmatpush1.msra.mxu0 0.0
        %9097 = vmatprep.subr.mxu0 0.0
        %9098 = vmatpush1.msra.mxu0 0.0
        %9099 = vmatprep.subr.mxu0 0.0
        %9100 = vmatpush1.msra.mxu0 0.0
        %9101 = vmatprep.subr.mxu0 0.0
        %9102 = vmatpush1.msra.mxu0 0.0
        %9103 = vmatprep.subr.mxu0 0.0
        %9104 = vmatpush1.msra.mxu0 0.0
        %9105 = vmatprep.subr.mxu0 0.0
        %9106 = vmatpush1.msra.mxu0 0.0
        %9107 = vmatprep.subr.mxu0 0.0
        %9108 = vmatpush1.msra.mxu0 0.0
        %9109 = vmatprep.subr.mxu0 0.0
        %9110 = vmatpush1.msra.mxu0 %v9030
        %9111 = vmatprep.subr.mxu0 0.0
        %9112 = vmatpush2.msra.mxu0 0.0
        %9113 = vmatprep.subr.mxu0 0.0
        %9114 = vmatpush2.msra.mxu0 0.0
        %9115 = vmatprep.subr.mxu0 0.0
        %9116 = vmatpush2.msra.mxu0 0.0
        %9117 = vmatprep.subr.mxu0 0.0
        %9118 = vmatpush2.msra.mxu0 0.0
        %9119 = vmatprep.subr.mxu0 0.0
        %9120 = vmatpush2.msra.mxu0 0.0
        %9121 = vmatprep.subr.mxu0 0.0
        %9122 = vmatpush2.msra.mxu0 0.0
        %9123 = vmatprep.subr.mxu0 0.0
        %9124 = vmatpush2.msra.mxu0 0.0
        %9125 = vmatprep.subr.mxu0 0.0
        %9126 = vmatpush2.msra.mxu0 0.0
        %9127 = vmatprep.subr.mxu0 0.0
        %9128 = vmatpush2.msra.mxu0 0.0
        %9129 = vmatprep.subr.mxu0 0.0
        %9130 = vmatpush2.msra.mxu0 0.0
        %9131 = vmatprep.subr.mxu0 0.0
        %9132 = vmatpush2.msra.mxu0 0.0
        %9133 = vmatprep.subr.mxu0 0.0
        %9134 = vmatpush2.msra.mxu0 0.0
        %9135 = vmatprep.subr.mxu0 0.0
        %9136 = vmatpush2.msra.mxu0 0.0
        %9137 = vmatprep.subr.mxu0 0.0
        %9138 = vmatpush2.msra.mxu0 0.0
        %9139 = vmatprep.subr.mxu0 0.0
        %9140 = vmatpush2.msra.mxu0 0.0
        %9141 = vmatprep.subr.mxu0 0.0
        %9142 = vmatpush2.msra.mxu0 0.0
        %9143 = vmatprep.mubr.f32.mxu0 0.0
        %9144 = vmatmul.mubr.f32.gmra.mxu0 %v9032
        %v9145 = vpop.f32.mrf.mxu0
        %v9146 = vadd.f32 0.0, %v9145
        %v9147 = vpop.f32.mrf.mxu0
        %9148 = vmatprep.mubr.f32.mxu0 0.0
        %9149 = vmatmul.mubr.f32.gmra.mxu0 %v9035
        %v9150 = vpop.f32.mrf.mxu0
        %v9151 = vadd.f32 0.0, %v9150
        %v9152 = vpop.f32.mrf.mxu0
        %9153 = vmatprep.mubr.f32.mxu0 0.0
        %9154 = vmatmul.mubr.f32.gmra.mxu0 %v9038
        %v9155 = vpop.f32.mrf.mxu0
        %v9156 = vadd.f32 0.0, %v9155
        %v9157 = vpop.f32.mrf.mxu0
        %9158 = vmatprep.mubr.f32.mxu0 0.0
        %9159 = vmatmul.mubr.f32.gmra.mxu0 %v9041
        %v9160 = vpop.f32.mrf.mxu0
        %v9161 = vadd.f32 0.0, %v9160
        %v9162 = vpop.f32.mrf.mxu0
        %9163 = vmatprep.mubr.f32.mxu0 0.0
        %9164 = vmatmul.mubr.f32.gmra.mxu0 %v9044
        %v9165 = vpop.f32.mrf.mxu0
        %v9166 = vadd.f32 0.0, %v9165
        %v9167 = vpop.f32.mrf.mxu0
        %9168 = vmatprep.mubr.f32.mxu0 0.0
        %9169 = vmatmul.mubr.f32.gmra.mxu0 %v9047
        %v9170 = vpop.f32.mrf.mxu0
        %v9171 = vadd.f32 0.0, %v9170
        %v9172 = vpop.f32.mrf.mxu0
        %9173 = vmatprep.mubr.f32.mxu0 0.0
        %9174 = vmatmul.mubr.f32.gmra.mxu0 %v9050
        %v9175 = vpop.f32.mrf.mxu0
        %v9176 = vadd.f32 0.0, %v9175
        %v9177 = vpop.f32.mrf.mxu0
        %9178 = vmatprep.mubr.f32.mxu0 0.0
        %9179 = vmatmul.mubr.f32.gmra.mxu0 %v9053
        %v9180 = vpop.f32.mrf.mxu0
        %v9181 = vadd.f32 0.0, %v9180
        %v9182 = vpop.f32.mrf.mxu0
        %9183 = vmatprep.mubr.f32.mxu0 0.0
        %9184 = vmatmul.mubr.f32.gmra.mxu0 %v9056
        %v9185 = vpop.f32.mrf.mxu0
        %v9186 = vadd.f32 0.0, %v9185
        %v9187 = vpop.f32.mrf.mxu0
        %9188 = vmatprep.mubr.f32.mxu0 0.0
        %9189 = vmatmul.mubr.f32.gmra.mxu0 %v9059
        %v9190 = vpop.f32.mrf.mxu0
        %v9191 = vadd.f32 0.0, %v9190
        %v9192 = vpop.f32.mrf.mxu0
        %9193 = vmatprep.mubr.f32.mxu0 0.0
        %9194 = vmatmul.mubr.f32.gmra.mxu0 %v9062
        %v9195 = vpop.f32.mrf.mxu0
        %v9196 = vadd.f32 0.0, %v9195
        %v9197 = vpop.f32.mrf.mxu0
        %9198 = vmatprep.mubr.f32.mxu0 0.0
        %9199 = vmatmul.mubr.f32.gmra.mxu0 %v9065
        %v9200 = vpop.f32.mrf.mxu0
        %v9201 = vadd.f32 0.0, %v9200
        %v9202 = vpop.f32.mrf.mxu0
        %9203 = vmatprep.mubr.f32.mxu0 0.0
        %9204 = vmatmul.mubr.f32.gmra.mxu0 %v9068
        %v9205 = vpop.f32.mrf.mxu0
        %v9206 = vadd.f32 0.0, %v9205
        %v9207 = vpop.f32.mrf.mxu0
        %9208 = vmatprep.mubr.f32.mxu0 0.0
        %9209 = vmatmul.mubr.f32.gmra.mxu0 %v9071
        %v9210 = vpop.f32.mrf.mxu0
        %v9211 = vadd.f32 0.0, %v9210
        %v9212 = vpop.f32.mrf.mxu0
        %9213 = vmatprep.mubr.f32.mxu0 0.0
        %9214 = vmatmul.mubr.f32.gmra.mxu0 %v9074
        %v9215 = vpop.f32.mrf.mxu0
        %v9216 = vadd.f32 0.0, %v9215
        %v9217 = vpop.f32.mrf.mxu0
        %9218 = vmatprep.mubr.f32.mxu0 0.0
        %9219 = vmatmul.mubr.f32.gmra.mxu0 %v9077
        %v9220 = vpop.f32.mrf.mxu0
        %v9221 = vadd.f32 0.0, %v9220
        %v9222 = vpop.f32.mrf.mxu0
        %9223 = vdwg.mxu0
        %v9224 = vadd.f32 %v7032, %v9146
        %v9225 = vadd.f32 %v7033, %v9151
        %v9226 = vadd.f32 %v7034, %v9156
        %v9227 = vadd.f32 %v7035, %v9161
        %v9228 = vadd.f32 %v7036, %v9166
        %v9229 = vadd.f32 %v7037, %v9171
        %v9230 = vadd.f32 %v7038, %v9176
        %v9231 = vadd.f32 %v7039, %v9181
        %v9232 = vadd.f32 %v7040, %v9186
        %v9233 = vadd.f32 %v7041, %v9191
        %v9234 = vadd.f32 %v7042, %v9196
        %v9235 = vadd.f32 %v7043, %v9201
        %v9236 = vadd.f32 %v7044, %v9206
        %v9237 = vadd.f32 %v7045, %v9211
        %v9238 = vadd.f32 %v7046, %v9216
        %v9239 = vadd.f32 %v7047, %v9221
        %v9240 = vld [vmem:[%s7] sm:$0x1]
        %v9242 = vlaneseq
        %v9243 = vshrl.u32 %v9242, 7
        %v9244 = vsub.s32 0, %v9243
        %v9245 = vrot.slane %v9240, %v9244
        %v9247 = vadd.f32 %v9224, %v9245
        %v9248 = vadd.f32 %v9225, %v9245
        %v9249 = vadd.f32 %v9226, %v9245
        %v9250 = vadd.f32 %v9227, %v9245
        %v9251 = vadd.f32 %v9228, %v9245
        %v9252 = vadd.f32 %v9229, %v9245
        %v9253 = vadd.f32 %v9230, %v9245
        %v9254 = vadd.f32 %v9231, %v9245
        %v9255 = vadd.f32 %v9232, %v9245
        %v9256 = vadd.f32 %v9233, %v9245
        %v9257 = vadd.f32 %v9234, %v9245
        %v9258 = vadd.f32 %v9235, %v9245
        %v9259 = vadd.f32 %v9236, %v9245
        %v9260 = vadd.f32 %v9237, %v9245
        %v9261 = vadd.f32 %v9238, %v9245
        %v9262 = vadd.f32 %v9239, %v9245
        %9263 = vst.msk [vmem:[%s369] sm:$0xff] %vm415, %v9247
        %9264 = vst.msk [vmem:[%s369 + $0x8] sm:$0xff] %vm415, %v9248
        %9265 = vst.msk [vmem:[%s369 + $0x10] sm:$0xff] %vm415, %v9249
        %9266 = vst.msk [vmem:[%s369 + $0x18] sm:$0xff] %vm415, %v9250
        %9267 = vst.msk [vmem:[%s369 + $0x20] sm:$0xff] %vm415, %v9251
        %9268 = vst.msk [vmem:[%s369 + $0x28] sm:$0xff] %vm415, %v9252
        %9269 = vst.msk [vmem:[%s369 + $0x30] sm:$0xff] %vm415, %v9253
        %9270 = vst.msk [vmem:[%s369 + $0x38] sm:$0xff] %vm415, %v9254
        %9271 = vst.msk [vmem:[%s369 + $0x40] sm:$0xff] %vm415, %v9255
        %9272 = vst.msk [vmem:[%s369 + $0x48] sm:$0xff] %vm415, %v9256
        %9273 = vst.msk [vmem:[%s369 + $0x50] sm:$0xff] %vm415, %v9257
        %9274 = vst.msk [vmem:[%s369 + $0x58] sm:$0xff] %vm415, %v9258
        %9275 = vst.msk [vmem:[%s369 + $0x60] sm:$0xff] %vm415, %v9259
        %9276 = vst.msk [vmem:[%s369 + $0x68] sm:$0xff] %vm415, %v9260
        %9277 = vst.msk [vmem:[%s369 + $0x70] sm:$0xff] %vm415, %v9261
        %9278 = vst.msk [vmem:[%s369 + $0x78] sm:$0xff] %vm415, %v9262
        %s9279 = sand.u32 %s233, 1
        %s9280 = scalar_lea.sflag [#allocation4], %s9279
        %s9281 = sand.u32 %s233, 1
        %s9282 = smul.addr %s9281, 128
        %s9283 = scalar_lea.vmem [#allocation5], %s9282
        // Predicated region
        $region61: #{tpu_custom_call.1} parent=55 // pred_check
          %p9284 = pneg %p243
        $region62: #{tpu_custom_call.1} parent=55 // pred_check_branch
          %9286 = sbr.rel (%p9284) target = $region64
        $region63: #{tpu_custom_call.1} parent=55 // pred_region
          %s9287 = smul.u32 8, %s26
          %s9289 = ssub.s32 2048, 2048
          %9290 = vsyncadd %s9280, %s9289
          %s9291 = smul.addr %s9287, 2
          %s9292 = smul.addr %s9291, 128
          %s9293 = scalar_lea.hbm %s9, %s9292
          %s9294 = sshll.u32 %s9283, 4
          %s9295 = int_to_ptr.vmem [resolvable:$true] %s9294
          %9300 = dma.vmem_to_hbm [thread:$0]  %s9295, 2048, %s9293, %s9280, 128, 128, 8
        $region64: #{tpu_custom_call.1} parent=55 // pred_fallthru
          _
      $region56: #{tpu_custom_call.1} parent=5 // pred_fallthru
        _
      %p9301 = scmp.le.s32.totalorder 2, %s21
      // Predicated region
      $region65: #{tpu_custom_call.1} parent=5 // pred_check
        %p9302 = pneg %p9301
      $region66: #{tpu_custom_call.1} parent=5 // pred_check_branch
        %9304 = sbr.rel (%p9302) target = $region68
      $region67: #{tpu_custom_call.1} parent=5 // pred_region
        %s9305 = ssub.s32 %s21, 2
        // Predicated region
        $region69: #{tpu_custom_call.1} parent=67 // pred_check
          %p9306 = pneg %p249
        $region70: #{tpu_custom_call.1} parent=67 // pred_check_branch
          %9308 = sbr.rel (%p9306) target = $region72
        $region71: #{tpu_custom_call.1} parent=67 // pred_region
          %s9309 = sand.u32 %s234, 1
          %s9310 = scalar_lea.sflag [#allocation4], %s9309
          %s9311 = sand.u32 %s234, 1
          %s9312 = smul.addr %s9311, 128
          %s9313 = scalar_lea.vmem [#allocation5], %s9312
          %9314 = dma.done %s9310, 2048
        $region72: #{tpu_custom_call.1} parent=67 // pred_fallthru
          _
      $region68: #{tpu_custom_call.1} parent=5 // pred_fallthru
        _
    $region6: #{tpu_custom_call.1} parent=1 // loop_footer
      %s25 = sadd.s32 1, %s21
    $region7: #{tpu_custom_call.1} parent=1 // loop_footer_branch
      %20 = sbr.rel target = $region3
    $region8: #{tpu_custom_call.1} parent=1 // loop_exit
      _
    %9315 = vsyncpa [#allocation3], 1
    %s9316 = scalar_lea.sflag [#allocation3], 1
    %9317 = vsyncpa %s9316, 1
    %9318 = vsyncpa [#allocation4], 1
    %s9319 = scalar_lea.sflag [#allocation4], 1
    %9320 = vsyncpa %s9319, 1

</llo_original>
